<compile_context>
chip_gen: v5e
topology: v5e:2x2
jax: 0.10.0
libtpu: 0.0.40
codegen_flags: <defaults>
</compile_context>

<pallas_src>
import math
from functools import partial

import jax
import jax.numpy as jnp
from jax.experimental import pallas as pl
from jax.experimental.pallas import tpu as pltpu


# -----------------------------------------------------------------------------
# Pallas kernels: fused (patches @ W) * scale + shift [+ skip] [+ ReLU]
# -----------------------------------------------------------------------------
def _conv_mm_kernel(a_ref, w_ref, scale_ref, shift_ref, o_ref, *, relu):
    acc = jnp.dot(a_ref[...], w_ref[...], preferred_element_type=jnp.float32)
    r = acc * scale_ref[...] + shift_ref[...]          # f32 epilogue (v5e-safe)
    if relu:
        r = jnp.maximum(r, 0.0)
    o_ref[...] = r.astype(o_ref.dtype)


def _conv_mm_skip_kernel(a_ref, w_ref, scale_ref, shift_ref, skip_ref, o_ref, *, relu):
    acc = jnp.dot(a_ref[...], w_ref[...], preferred_element_type=jnp.float32)
    r = acc * scale_ref[...] + shift_ref[...] + skip_ref[...]
    if relu:
        r = jnp.maximum(r, 0.0)
    o_ref[...] = r.astype(o_ref.dtype)


def _pick_tm(m):
    # Biggest row tile that divides M and still yields >= 2 programs so the
    # "parallel" grid axis can shard across both v7x TensorCores; falls back to
    # a single full-M block.
    for tm in (512, 256, 128, 64, 32, 16, 8):
        if m % tm == 0 and m // tm >= 2:
            return tm
    return m


def conv_matmul_bn_act(a, w, scale, shift, *, relu, skip=None):
    """[M,K]bf16 @ [K,N]bf16 -> f32, fused BN affine (+skip)(+ReLU).

    K (= Cin*27 <= 1728) and N (= Cout <= 64) are full blocks, so the grid is
    1-D over M row tiles only — no K loop, no accumulator scratch, no padding.
    """
    M, K = a.shape
    K2, N = w.shape
    assert K == K2 and scale.shape == (1, N) and shift.shape == (1, N)
    tm = _pick_tm(M)

    in_specs = [
        pl.BlockSpec((tm, K), lambda i: (i, 0)),
        pl.BlockSpec((K, N), lambda i: (0, 0)),
        pl.BlockSpec((1, N), lambda i: (0, 0)),
        pl.BlockSpec((1, N), lambda i: (0, 0)),
    ]
    args = [a, w, scale, shift]
    if skip is None:
        kernel = partial(_conv_mm_kernel, relu=relu)
    else:
        kernel = partial(_conv_mm_skip_kernel, relu=relu)
        in_specs.append(pl.BlockSpec((tm, N), lambda i: (i, 0)))
        args.append(skip)

    return pl.pallas_call(
        kernel,
        out_shape=jax.ShapeDtypeStruct((M, N), jnp.float32),
        grid_spec=pltpu.PrefetchScalarGridSpec(
            num_scalar_prefetch=0,
            grid=(M // tm,),
            in_specs=in_specs,
            out_specs=pl.BlockSpec((tm, N), lambda i: (i, 0)),
        ),
        compiler_params=pltpu.CompilerParams(
            dimension_semantics=("parallel",)),
    )(*args)


# -----------------------------------------------------------------------------
# Conv3d / ConvTranspose3d built on the fused Pallas matmul (channels-last)
# -----------------------------------------------------------------------------
def _im2col(xpad, stride, do, ho, wo):
    """xpad: [B, Dp, Hp, Wp, C] (bf16, already spatially padded) -> [M, 27*C]."""
    b, _, _, _, c = xpad.shape
    cols = []
    for kd in range(3):
        for kh in range(3):
            for kw in range(3):
                cols.append(xpad[:,
                                 kd:kd + (do - 1) * stride + 1:stride,
                                 kh:kh + (ho - 1) * stride + 1:stride,
                                 kw:kw + (wo - 1) * stride + 1:stride, :])
    patches = jnp.stack(cols, axis=4)          # [B,Do,Ho,Wo,27,C]  (tap-major K)
    return patches.reshape(b * do * ho * wo, 27 * c)


def conv3d_bn_act(p, x, *, stride=1, relu=True, skip=None):
    """Conv3d(k=3, pad=1, bias=False) + folded BN (+skip)(+ReLU), channels-last."""
    b, d, h, w, _ = x.shape
    do = (d - 1) // stride + 1
    ho = (h - 1) // stride + 1
    wo = (w - 1) // stride + 1
    xpad = jnp.pad(x, ((0, 0), (1, 1), (1, 1), (1, 1), (0, 0))).astype(jnp.bfloat16)
    a = _im2col(xpad, stride, do, ho, wo)
    n = p['w'].shape[1]
    skip2 = None if skip is None else skip.reshape(b * do * ho * wo, n)
    out = conv_matmul_bn_act(a, p['w'], p['scale'], p['shift'], relu=relu, skip=skip2)
    return out.reshape(b, do, ho, wo, n)


def _dilate2(x):
    b, d, h, w, c = x.shape
    y = jnp.zeros((b, 2 * d - 1, 2 * h - 1, 2 * w - 1, c), x.dtype)
    return y.at[:, ::2, ::2, ::2, :].set(x)


def deconv3d_bn_act(p, x, *, relu=False, skip=None):
    """ConvTranspose3d(k=3, stride=2, pad=1, output_pad=1) + folded BN
    (+skip)(+ReLU).  Weight was flipped/transposed/packed at init, so this is:
    dilate by 2, pad (1, 2) per spatial dim, stride-1 conv."""
    b, d, h, w, _ = x.shape
    do, ho, wo = 2 * d, 2 * h, 2 * w
    xd = _dilate2(x)
    xpad = jnp.pad(xd, ((0, 0), (1, 2), (1, 2), (1, 2), (0, 0))).astype(jnp.bfloat16)
    a = _im2col(xpad, 1, do, ho, wo)
    n = p['w'].shape[1]
    skip2 = None if skip is None else skip.reshape(b * do * ho * wo, n)
    out = conv_matmul_bn_act(a, p['w'], p['scale'], p['shift'], relu=relu, skip=skip2)
    return out.reshape(b, do, ho, wo, n)


# -----------------------------------------------------------------------------
# Parameter construction (deterministic, synthetic) with weight pre-packing
# -----------------------------------------------------------------------------
def _pack_conv(key, cin, cout, *, transpose=False):
    """Pre-packed weights in im2col layout [27*Cin, Cout] (tap-major, then Cin),
    cast to bf16; BN folded as an eval-mode affine, reshaped to (1, Cout)."""
    k1, k2, k3 = jax.random.split(key, 3)
    fan = 1.0 / math.sqrt(cin * 27)
    if transpose:
        w_t = jax.random.normal(k1, (cin, cout, 3, 3, 3), jnp.float32) * fan
        w_conv = jnp.flip(w_t, axis=(2, 3, 4)).transpose(1, 0, 2, 3, 4)
    else:
        w_conv = jax.random.normal(k1, (cout, cin, 3, 3, 3), jnp.float32) * fan
    w_packed = w_conv.transpose(2, 3, 4, 1, 0).reshape(27 * cin, cout)
    gamma = 1.0 + 0.1 * jax.random.normal(k2, (cout,), jnp.float32)
    beta = 0.1 * jax.random.normal(k3, (cout,), jnp.float32)
    eps = 1e-5
    scale = (gamma / jnp.sqrt(1.0 + eps)).reshape(1, cout)   # running_var = 1
    shift = beta.reshape(1, cout)                            # running_mean = 0
    return dict(w=w_packed.astype(jnp.bfloat16), scale=scale, shift=shift)


def init_hourglass_params(key, in_planes):
    keys = jax.random.split(key, 6)
    p2 = in_planes * 2
    return dict(
        conv1=_pack_conv(keys[0], in_planes, p2),
        conv2=_pack_conv(keys[1], p2, p2),
        conv3=_pack_conv(keys[2], p2, p2),
        conv4=_pack_conv(keys[3], p2, p2),
        conv5=_pack_conv(keys[4], p2, p2, transpose=True),
        conv6=_pack_conv(keys[5], p2, in_planes, transpose=True),
    )


# -----------------------------------------------------------------------------
# Hourglass forward
# -----------------------------------------------------------------------------
def hourglass_forward(params, x, presqu=None, postsqu=None):
    """Channels-last forward.  x: [B, D, H, W, C]."""
    out = conv3d_bn_act(params['conv1'], x, stride=2, relu=True)
    # pre = relu(conv2(out) + postsqu)   (residual + ReLU fused in epilogue)
    pre = conv3d_bn_act(params['conv2'], out, stride=1, relu=True, skip=postsqu)
    out = conv3d_bn_act(params['conv3'], pre, stride=2, relu=True)
    out = conv3d_bn_act(params['conv4'], out, stride=1, relu=True)
    # post = relu(conv5(out) + (presqu if given else pre))
    post = deconv3d_bn_act(params['conv5'], out, relu=True,
                           skip=presqu if presqu is not None else pre)
    out = deconv3d_bn_act(params['conv6'], post, relu=False)
    return out, pre, post


def hourglass_forward_ncdhw(params, x, presqu=None, postsqu=None):
    """NCDHW wrapper matching the PyTorch module interface."""
    to_cl = lambda t: None if t is None else jnp.transpose(t, (0, 2, 3, 4, 1))
    to_ncdhw = lambda t: jnp.transpose(t, (0, 4, 1, 2, 3))
    out, pre, post = hourglass_forward(params, to_cl(x), to_cl(presqu), to_cl(postsqu))
    return to_ncdhw(out), to_ncdhw(pre), to_ncdhw(post)


# -----------------------------------------------------------------------------
# Main
# -----------------------------------------------------------------------------
if __name__ == "__main__":
    key = jax.random.PRNGKey(0)
    k_param, k_in = jax.random.split(key)

    in_planes = 16
    B, D, H, W = 2, 8, 16, 16          # x: [B, in_planes, MaxDisparity, H, W]

    params = init_hourglass_params(k_param, in_planes)
    x = jax.random.normal(k_in, (B, in_planes, D, H, W), jnp.float32)

    fwd_plain = jax.jit(lambda xx: hourglass_forward_ncdhw(params, xx))
    fwd_skips = jax.jit(lambda xx, pre, post: hourglass_forward_ncdhw(params, xx, pre, post))

    # Path 1: presqu = postsqu = None (ReLU-only epilogues).
    out1, pre1, post1 = fwd_plain(x)
    # Path 2: skip tensors provided (fused residual-add epilogues), as used by PSMNet.
    out2, pre2, post2 = fwd_skips(x, pre1, post1)

    results = [jax.block_until_ready(t) for t in (out1, pre1, post1, out2, pre2, post2)]

    p2 = in_planes * 2
    assert out1.shape == (B, in_planes, D, H, W), out1.shape
    assert pre1.shape == (B, p2, D // 2, H // 2, W // 2), pre1.shape
    assert post1.shape == (B, p2, D // 2, H // 2, W // 2), post1.shape
    assert out2.shape == (B, in_planes, D, H, W), out2.shape
    assert all(bool(jnp.all(jnp.isfinite(t))) for t in results)

    print("KERNEL_OK")
</pallas_src>

<mosaic_0001>
module attributes {stable_mosaic.version = 11 : i64} {
  func.func @_conv_mm_kernel(%arg0: i32, %arg1: memref<256x432xbf16, #tpu.memory_space<vmem>>, %arg2: memref<432x32xbf16, #tpu.memory_space<vmem>>, %arg3: memref<1x32xf32, #tpu.memory_space<vmem>>, %arg4: memref<1x32xf32, #tpu.memory_space<vmem>>, %arg5: memref<256x32xf32, #tpu.memory_space<vmem>>) attributes {dimension_semantics = [#tpu.dimension_semantics<parallel>], iteration_bounds = array<i64: 2>, scalar_prefetch = 0 : i64, scratch_operands = 0 : i64, tpu.core_type = #tpu.core_type<tc>, window_params = [{transform_indices = @transform_0, window_bounds = array<i64: 256, 432>}, {pipeline_mode = #tpu.pipeline_mode<synchronous>, transform_indices = @transform_1, window_bounds = array<i64: 432, 32>}, {pipeline_mode = #tpu.pipeline_mode<synchronous>, transform_indices = @transform_2, window_bounds = array<i64: 1, 32>}, {pipeline_mode = #tpu.pipeline_mode<synchronous>, transform_indices = @transform_3, window_bounds = array<i64: 1, 32>}, {transform_indices = @transform_4, window_bounds = array<i64: 256, 32>}]} {
    %c0 = arith.constant 0 : index
    %c0_0 = arith.constant 0 : index
    %0 = vector.load %arg1[%c0, %c0_0] : memref<256x432xbf16, #tpu.memory_space<vmem>>, vector<256x432xbf16>
    %c0_1 = arith.constant 0 : index
    %c0_2 = arith.constant 0 : index
    %1 = vector.load %arg2[%c0_1, %c0_2] : memref<432x32xbf16, #tpu.memory_space<vmem>>, vector<432x32xbf16>
    %cst = arith.constant dense<0.000000e+00> : vector<256x32xf32>
    %2 = tpu.matmul %0, %1, %cst {dimension_numbers = #tpu.dot_dimension_numbers<[1], [0], [0], [1], [0, 0, 1, 1], [], []>} : vector<256x432xbf16>, vector<432x32xbf16>, vector<256x32xf32> -> vector<256x32xf32>
    %c0_3 = arith.constant 0 : index
    %c0_4 = arith.constant 0 : index
    %3 = vector.load %arg3[%c0_3, %c0_4] : memref<1x32xf32, #tpu.memory_space<vmem>>, vector<1x32xf32>
    %4 = vector.broadcast %3 : vector<1x32xf32> to vector<256x32xf32>
    %5 = arith.mulf %2, %4 : vector<256x32xf32>
    %c0_5 = arith.constant 0 : index
    %c0_6 = arith.constant 0 : index
    %6 = vector.load %arg4[%c0_5, %c0_6] : memref<1x32xf32, #tpu.memory_space<vmem>>, vector<1x32xf32>
    %7 = vector.broadcast %6 : vector<1x32xf32> to vector<256x32xf32>
    %8 = arith.addf %5, %7 : vector<256x32xf32>
    %cst_7 = arith.constant 0.000000e+00 : f32
    %9 = vector.broadcast %cst_7 : f32 to vector<256x32xf32>
    %10 = arith.maximumf %8, %9 : vector<256x32xf32>
    %c0_8 = arith.constant 0 : index
    %c0_9 = arith.constant 0 : index
    %11 = vector.load %arg5[%c0_8, %c0_9] : memref<256x32xf32, #tpu.memory_space<vmem>>, vector<256x32xf32>
    tpu.vector_store %arg5[%c0_8, %c0_9], %10 {strides = array<i32>} : memref<256x32xf32, #tpu.memory_space<vmem>>, vector<256x32xf32>,
    return
  }
  func.func @transform_0(%arg0: i32) -> (i32, i32) {
    %c0_i32 = arith.constant 0 : i32
    %c0_i32_0 = arith.constant 0 : i32
    return %arg0, %c0_i32 : i32, i32
  }
  func.func @transform_1(%arg0: i32) -> (i32, i32) {
    %c0_i32 = arith.constant 0 : i32
    %c0_i32_0 = arith.constant 0 : i32
    %c0_i32_1 = arith.constant 0 : i32
    return %c0_i32, %c0_i32_0 : i32, i32
  }
  func.func @transform_2(%arg0: i32) -> (i32, i32) {
    %c0_i32 = arith.constant 0 : i32
    %c0_i32_0 = arith.constant 0 : i32
    %c0_i32_1 = arith.constant 0 : i32
    return %c0_i32, %c0_i32_0 : i32, i32
  }
  func.func @transform_3(%arg0: i32) -> (i32, i32) {
    %c0_i32 = arith.constant 0 : i32
    %c0_i32_0 = arith.constant 0 : i32
    %c0_i32_1 = arith.constant 0 : i32
    return %c0_i32, %c0_i32_0 : i32, i32
  }
  func.func @transform_4(%arg0: i32) -> (i32, i32) {
    %c0_i32 = arith.constant 0 : i32
    %c0_i32_0 = arith.constant 0 : i32
    return %arg0, %c0_i32 : i32, i32
  }
}

module attributes {stable_mosaic.version = 11 : i64} {
  func.func @_conv_mm_kernel(%arg0: i32, %arg1: memref<256x864xbf16, #tpu.memory_space<vmem>>, %arg2: memref<864x32xbf16, #tpu.memory_space<vmem>>, %arg3: memref<1x32xf32, #tpu.memory_space<vmem>>, %arg4: memref<1x32xf32, #tpu.memory_space<vmem>>, %arg5: memref<256x32xf32, #tpu.memory_space<vmem>>) attributes {dimension_semantics = [#tpu.dimension_semantics<parallel>], iteration_bounds = array<i64: 2>, scalar_prefetch = 0 : i64, scratch_operands = 0 : i64, tpu.core_type = #tpu.core_type<tc>, window_params = [{transform_indices = @transform_0, window_bounds = array<i64: 256, 864>}, {pipeline_mode = #tpu.pipeline_mode<synchronous>, transform_indices = @transform_1, window_bounds = array<i64: 864, 32>}, {pipeline_mode = #tpu.pipeline_mode<synchronous>, transform_indices = @transform_2, window_bounds = array<i64: 1, 32>}, {pipeline_mode = #tpu.pipeline_mode<synchronous>, transform_indices = @transform_3, window_bounds = array<i64: 1, 32>}, {transform_indices = @transform_4, window_bounds = array<i64: 256, 32>}]} {
    %c0 = arith.constant 0 : index
    %c0_0 = arith.constant 0 : index
    %0 = vector.load %arg1[%c0, %c0_0] : memref<256x864xbf16, #tpu.memory_space<vmem>>, vector<256x864xbf16>
    %c0_1 = arith.constant 0 : index
    %c0_2 = arith.constant 0 : index
    %1 = vector.load %arg2[%c0_1, %c0_2] : memref<864x32xbf16, #tpu.memory_space<vmem>>, vector<864x32xbf16>
    %cst = arith.constant dense<0.000000e+00> : vector<256x32xf32>
    %2 = tpu.matmul %0, %1, %cst {dimension_numbers = #tpu.dot_dimension_numbers<[1], [0], [0], [1], [0, 0, 1, 1], [], []>} : vector<256x864xbf16>, vector<864x32xbf16>, vector<256x32xf32> -> vector<256x32xf32>
    %c0_3 = arith.constant 0 : index
    %c0_4 = arith.constant 0 : index
    %3 = vector.load %arg3[%c0_3, %c0_4] : memref<1x32xf32, #tpu.memory_space<vmem>>, vector<1x32xf32>
    %4 = vector.broadcast %3 : vector<1x32xf32> to vector<256x32xf32>
    %5 = arith.mulf %2, %4 : vector<256x32xf32>
    %c0_5 = arith.constant 0 : index
    %c0_6 = arith.constant 0 : index
    %6 = vector.load %arg4[%c0_5, %c0_6] : memref<1x32xf32, #tpu.memory_space<vmem>>, vector<1x32xf32>
    %7 = vector.broadcast %6 : vector<1x32xf32> to vector<256x32xf32>
    %8 = arith.addf %5, %7 : vector<256x32xf32>
    %cst_7 = arith.constant 0.000000e+00 : f32
    %9 = vector.broadcast %cst_7 : f32 to vector<256x32xf32>
    %10 = arith.maximumf %8, %9 : vector<256x32xf32>
    %c0_8 = arith.constant 0 : index
    %c0_9 = arith.constant 0 : index
    %11 = vector.load %arg5[%c0_8, %c0_9] : memref<256x32xf32, #tpu.memory_space<vmem>>, vector<256x32xf32>
    tpu.vector_store %arg5[%c0_8, %c0_9], %10 {strides = array<i32>} : memref<256x32xf32, #tpu.memory_space<vmem>>, vector<256x32xf32>,
    return
  }
  func.func @transform_0(%arg0: i32) -> (i32, i32) {
    %c0_i32 = arith.constant 0 : i32
    %c0_i32_0 = arith.constant 0 : i32
    return %arg0, %c0_i32 : i32, i32
  }
  func.func @transform_1(%arg0: i32) -> (i32, i32) {
    %c0_i32 = arith.constant 0 : i32
    %c0_i32_0 = arith.constant 0 : i32
    %c0_i32_1 = arith.constant 0 : i32
    return %c0_i32, %c0_i32_0 : i32, i32
  }
  func.func @transform_2(%arg0: i32) -> (i32, i32) {
    %c0_i32 = arith.constant 0 : i32
    %c0_i32_0 = arith.constant 0 : i32
    %c0_i32_1 = arith.constant 0 : i32
    return %c0_i32, %c0_i32_0 : i32, i32
  }
  func.func @transform_3(%arg0: i32) -> (i32, i32) {
    %c0_i32 = arith.constant 0 : i32
    %c0_i32_0 = arith.constant 0 : i32
    %c0_i32_1 = arith.constant 0 : i32
    return %c0_i32, %c0_i32_0 : i32, i32
  }
  func.func @transform_4(%arg0: i32) -> (i32, i32) {
    %c0_i32 = arith.constant 0 : i32
    %c0_i32_0 = arith.constant 0 : i32
    return %arg0, %c0_i32 : i32, i32
  }
}

module attributes {stable_mosaic.version = 11 : i64} {
  func.func @_conv_mm_kernel(%arg0: i32, %arg1: memref<32x864xbf16, #tpu.memory_space<vmem>>, %arg2: memref<864x32xbf16, #tpu.memory_space<vmem>>, %arg3: memref<1x32xf32, #tpu.memory_space<vmem>>, %arg4: memref<1x32xf32, #tpu.memory_space<vmem>>, %arg5: memref<32x32xf32, #tpu.memory_space<vmem>>) attributes {dimension_semantics = [#tpu.dimension_semantics<parallel>], iteration_bounds = array<i64: 2>, scalar_prefetch = 0 : i64, scratch_operands = 0 : i64, tpu.core_type = #tpu.core_type<tc>, window_params = [{transform_indices = @transform_0, window_bounds = array<i64: 32, 864>}, {pipeline_mode = #tpu.pipeline_mode<synchronous>, transform_indices = @transform_1, window_bounds = array<i64: 864, 32>}, {pipeline_mode = #tpu.pipeline_mode<synchronous>, transform_indices = @transform_2, window_bounds = array<i64: 1, 32>}, {pipeline_mode = #tpu.pipeline_mode<synchronous>, transform_indices = @transform_3, window_bounds = array<i64: 1, 32>}, {transform_indices = @transform_4, window_bounds = array<i64: 32, 32>}]} {
    %c0 = arith.constant 0 : index
    %c0_0 = arith.constant 0 : index
    %0 = vector.load %arg1[%c0, %c0_0] : memref<32x864xbf16, #tpu.memory_space<vmem>>, vector<32x864xbf16>
    %c0_1 = arith.constant 0 : index
    %c0_2 = arith.constant 0 : index
    %1 = vector.load %arg2[%c0_1, %c0_2] : memref<864x32xbf16, #tpu.memory_space<vmem>>, vector<864x32xbf16>
    %cst = arith.constant dense<0.000000e+00> : vector<32x32xf32>
    %2 = tpu.matmul %0, %1, %cst {dimension_numbers = #tpu.dot_dimension_numbers<[1], [0], [0], [1], [0, 0, 1, 1], [], []>} : vector<32x864xbf16>, vector<864x32xbf16>, vector<32x32xf32> -> vector<32x32xf32>
    %c0_3 = arith.constant 0 : index
    %c0_4 = arith.constant 0 : index
    %3 = vector.load %arg3[%c0_3, %c0_4] : memref<1x32xf32, #tpu.memory_space<vmem>>, vector<1x32xf32>
    %4 = vector.broadcast %3 : vector<1x32xf32> to vector<32x32xf32>
    %5 = arith.mulf %2, %4 : vector<32x32xf32>
    %c0_5 = arith.constant 0 : index
    %c0_6 = arith.constant 0 : index
    %6 = vector.load %arg4[%c0_5, %c0_6] : memref<1x32xf32, #tpu.memory_space<vmem>>, vector<1x32xf32>
    %7 = vector.broadcast %6 : vector<1x32xf32> to vector<32x32xf32>
    %8 = arith.addf %5, %7 : vector<32x32xf32>
    %cst_7 = arith.constant 0.000000e+00 : f32
    %9 = vector.broadcast %cst_7 : f32 to vector<32x32xf32>
    %10 = arith.maximumf %8, %9 : vector<32x32xf32>
    %c0_8 = arith.constant 0 : index
    %c0_9 = arith.constant 0 : index
    %11 = vector.load %arg5[%c0_8, %c0_9] : memref<32x32xf32, #tpu.memory_space<vmem>>, vector<32x32xf32>
    tpu.vector_store %arg5[%c0_8, %c0_9], %10 {strides = array<i32>} : memref<32x32xf32, #tpu.memory_space<vmem>>, vector<32x32xf32>,
    return
  }
  func.func @transform_0(%arg0: i32) -> (i32, i32) {
    %c0_i32 = arith.constant 0 : i32
    %c0_i32_0 = arith.constant 0 : i32
    return %arg0, %c0_i32 : i32, i32
  }
  func.func @transform_1(%arg0: i32) -> (i32, i32) {
    %c0_i32 = arith.constant 0 : i32
    %c0_i32_0 = arith.constant 0 : i32
    %c0_i32_1 = arith.constant 0 : i32
    return %c0_i32, %c0_i32_0 : i32, i32
  }
  func.func @transform_2(%arg0: i32) -> (i32, i32) {
    %c0_i32 = arith.constant 0 : i32
    %c0_i32_0 = arith.constant 0 : i32
    %c0_i32_1 = arith.constant 0 : i32
    return %c0_i32, %c0_i32_0 : i32, i32
  }
  func.func @transform_3(%arg0: i32) -> (i32, i32) {
    %c0_i32 = arith.constant 0 : i32
    %c0_i32_0 = arith.constant 0 : i32
    %c0_i32_1 = arith.constant 0 : i32
    return %c0_i32, %c0_i32_0 : i32, i32
  }
  func.func @transform_4(%arg0: i32) -> (i32, i32) {
    %c0_i32 = arith.constant 0 : i32
    %c0_i32_0 = arith.constant 0 : i32
    return %arg0, %c0_i32 : i32, i32
  }
}

module attributes {stable_mosaic.version = 11 : i64} {
  func.func @_conv_mm_skip_kernel(%arg0: i32, %arg1: memref<256x864xbf16, #tpu.memory_space<vmem>>, %arg2: memref<864x32xbf16, #tpu.memory_space<vmem>>, %arg3: memref<1x32xf32, #tpu.memory_space<vmem>>, %arg4: memref<1x32xf32, #tpu.memory_space<vmem>>, %arg5: memref<256x32xf32, #tpu.memory_space<vmem>>, %arg6: memref<256x32xf32, #tpu.memory_space<vmem>>) attributes {dimension_semantics = [#tpu.dimension_semantics<parallel>], iteration_bounds = array<i64: 2>, scalar_prefetch = 0 : i64, scratch_operands = 0 : i64, tpu.core_type = #tpu.core_type<tc>, window_params = [{transform_indices = @transform_0, window_bounds = array<i64: 256, 864>}, {pipeline_mode = #tpu.pipeline_mode<synchronous>, transform_indices = @transform_1, window_bounds = array<i64: 864, 32>}, {pipeline_mode = #tpu.pipeline_mode<synchronous>, transform_indices = @transform_2, window_bounds = array<i64: 1, 32>}, {pipeline_mode = #tpu.pipeline_mode<synchronous>, transform_indices = @transform_3, window_bounds = array<i64: 1, 32>}, {transform_indices = @transform_4, window_bounds = array<i64: 256, 32>}, {transform_indices = @transform_5, window_bounds = array<i64: 256, 32>}]} {
    %c0 = arith.constant 0 : index
    %c0_0 = arith.constant 0 : index
    %0 = vector.load %arg1[%c0, %c0_0] : memref<256x864xbf16, #tpu.memory_space<vmem>>, vector<256x864xbf16>
    %c0_1 = arith.constant 0 : index
    %c0_2 = arith.constant 0 : index
    %1 = vector.load %arg2[%c0_1, %c0_2] : memref<864x32xbf16, #tpu.memory_space<vmem>>, vector<864x32xbf16>
    %cst = arith.constant dense<0.000000e+00> : vector<256x32xf32>
    %2 = tpu.matmul %0, %1, %cst {dimension_numbers = #tpu.dot_dimension_numbers<[1], [0], [0], [1], [0, 0, 1, 1], [], []>} : vector<256x864xbf16>, vector<864x32xbf16>, vector<256x32xf32> -> vector<256x32xf32>
    %c0_3 = arith.constant 0 : index
    %c0_4 = arith.constant 0 : index
    %3 = vector.load %arg3[%c0_3, %c0_4] : memref<1x32xf32, #tpu.memory_space<vmem>>, vector<1x32xf32>
    %4 = vector.broadcast %3 : vector<1x32xf32> to vector<256x32xf32>
    %5 = arith.mulf %2, %4 : vector<256x32xf32>
    %c0_5 = arith.constant 0 : index
    %c0_6 = arith.constant 0 : index
    %6 = vector.load %arg4[%c0_5, %c0_6] : memref<1x32xf32, #tpu.memory_space<vmem>>, vector<1x32xf32>
    %7 = vector.broadcast %6 : vector<1x32xf32> to vector<256x32xf32>
    %8 = arith.addf %5, %7 : vector<256x32xf32>
    %c0_7 = arith.constant 0 : index
    %c0_8 = arith.constant 0 : index
    %9 = vector.load %arg5[%c0_7, %c0_8] : memref<256x32xf32, #tpu.memory_space<vmem>>, vector<256x32xf32>
    %10 = arith.addf %8, %9 : vector<256x32xf32>
    %cst_9 = arith.constant 0.000000e+00 : f32
    %11 = vector.broadcast %cst_9 : f32 to vector<256x32xf32>
    %12 = arith.maximumf %10, %11 : vector<256x32xf32>
    %c0_10 = arith.constant 0 : index
    %c0_11 = arith.constant 0 : index
    %13 = vector.load %arg6[%c0_10, %c0_11] : memref<256x32xf32, #tpu.memory_space<vmem>>, vector<256x32xf32>
    tpu.vector_store %arg6[%c0_10, %c0_11], %12 {strides = array<i32>} : memref<256x32xf32, #tpu.memory_space<vmem>>, vector<256x32xf32>,
    return
  }
  func.func @transform_0(%arg0: i32) -> (i32, i32) {
    %c0_i32 = arith.constant 0 : i32
    %c0_i32_0 = arith.constant 0 : i32
    return %arg0, %c0_i32 : i32, i32
  }
  func.func @transform_1(%arg0: i32) -> (i32, i32) {
    %c0_i32 = arith.constant 0 : i32
    %c0_i32_0 = arith.constant 0 : i32
    %c0_i32_1 = arith.constant 0 : i32
    return %c0_i32, %c0_i32_0 : i32, i32
  }
  func.func @transform_2(%arg0: i32) -> (i32, i32) {
    %c0_i32 = arith.constant 0 : i32
    %c0_i32_0 = arith.constant 0 : i32
    %c0_i32_1 = arith.constant 0 : i32
    return %c0_i32, %c0_i32_0 : i32, i32
  }
  func.func @transform_3(%arg0: i32) -> (i32, i32) {
    %c0_i32 = arith.constant 0 : i32
    %c0_i32_0 = arith.constant 0 : i32
    %c0_i32_1 = arith.constant 0 : i32
    return %c0_i32, %c0_i32_0 : i32, i32
  }
  func.func @transform_4(%arg0: i32) -> (i32, i32) {
    %c0_i32 = arith.constant 0 : i32
    %c0_i32_0 = arith.constant 0 : i32
    return %arg0, %c0_i32 : i32, i32
  }
  func.func @transform_5(%arg0: i32) -> (i32, i32) {
    %c0_i32 = arith.constant 0 : i32
    %c0_i32_0 = arith.constant 0 : i32
    return %arg0, %c0_i32 : i32, i32
  }
}

module attributes {stable_mosaic.version = 11 : i64} {
  func.func @_conv_mm_kernel(%arg0: i32, %arg1: memref<512x864xbf16, #tpu.memory_space<vmem>>, %arg2: memref<864x16xbf16, #tpu.memory_space<vmem>>, %arg3: memref<1x16xf32, #tpu.memory_space<vmem>>, %arg4: memref<1x16xf32, #tpu.memory_space<vmem>>, %arg5: memref<512x16xf32, #tpu.memory_space<vmem>>) attributes {dimension_semantics = [#tpu.dimension_semantics<parallel>], iteration_bounds = array<i64: 8>, scalar_prefetch = 0 : i64, scratch_operands = 0 : i64, tpu.core_type = #tpu.core_type<tc>, window_params = [{transform_indices = @transform_0, window_bounds = array<i64: 512, 864>}, {pipeline_mode = #tpu.pipeline_mode<synchronous>, transform_indices = @transform_1, window_bounds = array<i64: 864, 16>}, {pipeline_mode = #tpu.pipeline_mode<synchronous>, transform_indices = @transform_2, window_bounds = array<i64: 1, 16>}, {pipeline_mode = #tpu.pipeline_mode<synchronous>, transform_indices = @transform_3, window_bounds = array<i64: 1, 16>}, {transform_indices = @transform_4, window_bounds = array<i64: 512, 16>}]} {
    %c0 = arith.constant 0 : index
    %c0_0 = arith.constant 0 : index
    %0 = vector.load %arg1[%c0, %c0_0] : memref<512x864xbf16, #tpu.memory_space<vmem>>, vector<512x864xbf16>
    %c0_1 = arith.constant 0 : index
    %c0_2 = arith.constant 0 : index
    %1 = vector.load %arg2[%c0_1, %c0_2] : memref<864x16xbf16, #tpu.memory_space<vmem>>, vector<864x16xbf16>
    %cst = arith.constant dense<0.000000e+00> : vector<512x16xf32>
    %2 = tpu.matmul %0, %1, %cst {dimension_numbers = #tpu.dot_dimension_numbers<[1], [0], [0], [1], [0, 0, 1, 1], [], []>} : vector<512x864xbf16>, vector<864x16xbf16>, vector<512x16xf32> -> vector<512x16xf32>
    %c0_3 = arith.constant 0 : index
    %c0_4 = arith.constant 0 : index
    %3 = vector.load %arg3[%c0_3, %c0_4] : memref<1x16xf32, #tpu.memory_space<vmem>>, vector<1x16xf32>
    %4 = vector.broadcast %3 : vector<1x16xf32> to vector<512x16xf32>
    %5 = arith.mulf %2, %4 : vector<512x16xf32>
    %c0_5 = arith.constant 0 : index
    %c0_6 = arith.constant 0 : index
    %6 = vector.load %arg4[%c0_5, %c0_6] : memref<1x16xf32, #tpu.memory_space<vmem>>, vector<1x16xf32>
    %7 = vector.broadcast %6 : vector<1x16xf32> to vector<512x16xf32>
    %8 = arith.addf %5, %7 : vector<512x16xf32>
    %c0_7 = arith.constant 0 : index
    %c0_8 = arith.constant 0 : index
    %9 = vector.load %arg5[%c0_7, %c0_8] : memref<512x16xf32, #tpu.memory_space<vmem>>, vector<512x16xf32>
    tpu.vector_store %arg5[%c0_7, %c0_8], %8 {strides = array<i32>} : memref<512x16xf32, #tpu.memory_space<vmem>>, vector<512x16xf32>,
    return
  }
  func.func @transform_0(%arg0: i32) -> (i32, i32) {
    %c0_i32 = arith.constant 0 : i32
    %c0_i32_0 = arith.constant 0 : i32
    return %arg0, %c0_i32 : i32, i32
  }
  func.func @transform_1(%arg0: i32) -> (i32, i32) {
    %c0_i32 = arith.constant 0 : i32
    %c0_i32_0 = arith.constant 0 : i32
    %c0_i32_1 = arith.constant 0 : i32
    return %c0_i32, %c0_i32_0 : i32, i32
  }
  func.func @transform_2(%arg0: i32) -> (i32, i32) {
    %c0_i32 = arith.constant 0 : i32
    %c0_i32_0 = arith.constant 0 : i32
    %c0_i32_1 = arith.constant 0 : i32
    return %c0_i32, %c0_i32_0 : i32, i32
  }
  func.func @transform_3(%arg0: i32) -> (i32, i32) {
    %c0_i32 = arith.constant 0 : i32
    %c0_i32_0 = arith.constant 0 : i32
    %c0_i32_1 = arith.constant 0 : i32
    return %c0_i32, %c0_i32_0 : i32, i32
  }
  func.func @transform_4(%arg0: i32) -> (i32, i32) {
    %c0_i32 = arith.constant 0 : i32
    %c0_i32_0 = arith.constant 0 : i32
    return %arg0, %c0_i32 : i32, i32
  }
}

</mosaic_0001>

<llo_original>
// kernel: _lambda_.6
$region0: #{_lambda_.6}
  #allocation0 [shape = 'u32[]', space=smem, size = 0x4, offset = 0x4, fixed_abs, tag = 'smem constant byte address 0x4 - core index']
  #allocation1 [shape = 'u32[72,128]{1,0:T(1,128)}', space=vmem, size = 0x9000, scoped, tag = 'internal scratch']
  %s0 = inlined_call_operand.vmem [shape: bf16[512,432], index: 0, kind: input, shape index: {}]
  %s1 = inlined_call_operand.vmem [shape: bf16[432,32], index: 1, kind: input, shape index: {}]
  %s2 = inlined_call_operand.vmem [shape: f32[1,32], index: 2, kind: input, shape index: {}]
  %s3 = inlined_call_operand.vmem [shape: f32[1,32], index: 3, kind: input, shape index: {}]
  %s4 = inlined_call_operand.vmem [shape: f32[512,32], index: 4, kind: output, shape index: {}]
  %s5 = sld [smem:[#allocation0]]
  $region49: #{_lambda_.6} parent=0
    _
  %s7 = ssub.s32 1, %s5
  %s8 = scalar_select 0, %s7, %s5
  loop: start=0, step=1, limit=4
  $region2: #{_lambda_.6} parent=0 // loop_pre_header
    _
  $region3: #{_lambda_.6} parent=0 // loop_header
    %s10 = sphi 0, %s14
    %p11 = scmp.ge.s32.totalorder %s10, 4
    %s20 = sphi 0, %s22
    %s23 = sphi 0, %s20
    %s24 = sphi 0, %s23
    %s40 = sphi 0, %s24
    %s44 = sphi 0, %s44
    %s46 = sphi 0, %s44
    %s47 = sphi 0, %s46
    %s61 = sphi 0, %s47
    %s65 = sphi 0, %s65
    %s67 = sphi 0, %s65
    %s68 = sphi 0, %s67
    %s82 = sphi 0, %s68
    %s86 = sphi 0, %s86
    %s88 = sphi 0, %s86
    %s89 = sphi 0, %s88
    %s103 = sphi 0, %s89
    %s109 = sphi 0, %s111
    %s112 = sphi 0, %s109
    %s113 = sphi 0, %s112
    %s129 = sphi 0, %s113
  $region4: #{_lambda_.6} parent=0 // loop_header_branch
    %13 = sbr.rel (%p11) target = $region8
  $region5: #{_lambda_.6} parent=0 // loop_body
    %s15 = ssub.s32 %s10, 1
    %s16 = ssub.s32 %s10, 2
    %s17 = sadd.s32 %s10, 1
    %s18 = ssub.s32 %s10, %s17
    %p19 = scmp.eq.s32.totalorder %s18, 0
    %s21 = sadd.s32 %s20, 1
    %s22 = scalar_select %p19, %s20, %s21
    %p25 = pneg %p19
    %p26 = scmp.eq.s32.totalorder %s10, 1
    %p27 = por %p25, %p26
    %p28 = scmp.ne.s32.totalorder %s20, %s23
    %p29 = scmp.eq.s32.totalorder %s10, 0
    %p30 = por %p28, %p29
    %p31 = scmp.ne.s32.totalorder %s20, %s23
    %p32 = scmp.eq.s32.totalorder %s15, 1
    %p33 = por %p31, %p32
    %p34 = scmp.ne.s32.totalorder %s23, %s24
    %p35 = scmp.eq.s32.totalorder %s15, 0
    %p36 = por %p34, %p35
    %p37 = scmp.ne.s32.totalorder %s23, %s24
    %p38 = scmp.eq.s32.totalorder %s16, 1
    %p39 = por %p37, %p38
    %p41 = scmp.ne.s32.totalorder %s24, %s40
    %p42 = scmp.eq.s32.totalorder %s16, 0
    %p43 = por %p41, %p42
    %s45 = sadd.s32 %s44, 1
    %p48 = scmp.eq.s32.totalorder %s10, 1
    %p49 = scmp.ne.s32.totalorder %s44, %s46
    %p50 = scmp.eq.s32.totalorder %s10, 0
    %p51 = por %p49, %p50
    %p52 = scmp.ne.s32.totalorder %s44, %s46
    %p53 = scmp.eq.s32.totalorder %s15, 1
    %p54 = por %p52, %p53
    %p55 = scmp.ne.s32.totalorder %s46, %s47
    %p56 = scmp.eq.s32.totalorder %s15, 0
    %p57 = por %p55, %p56
    %p58 = scmp.ne.s32.totalorder %s46, %s47
    %p59 = scmp.eq.s32.totalorder %s16, 1
    %p60 = por %p58, %p59
    %p62 = scmp.ne.s32.totalorder %s47, %s61
    %p63 = scmp.eq.s32.totalorder %s16, 0
    %p64 = por %p62, %p63
    %s66 = sadd.s32 %s65, 1
    %p69 = scmp.eq.s32.totalorder %s10, 1
    %p70 = scmp.ne.s32.totalorder %s65, %s67
    %p71 = scmp.eq.s32.totalorder %s10, 0
    %p72 = por %p70, %p71
    %p73 = scmp.ne.s32.totalorder %s65, %s67
    %p74 = scmp.eq.s32.totalorder %s15, 1
    %p75 = por %p73, %p74
    %p76 = scmp.ne.s32.totalorder %s67, %s68
    %p77 = scmp.eq.s32.totalorder %s15, 0
    %p78 = por %p76, %p77
    %p79 = scmp.ne.s32.totalorder %s67, %s68
    %p80 = scmp.eq.s32.totalorder %s16, 1
    %p81 = por %p79, %p80
    %p83 = scmp.ne.s32.totalorder %s68, %s82
    %p84 = scmp.eq.s32.totalorder %s16, 0
    %p85 = por %p83, %p84
    %s87 = sadd.s32 %s86, 1
    %p90 = scmp.eq.s32.totalorder %s10, 1
    %p91 = scmp.ne.s32.totalorder %s86, %s88
    %p92 = scmp.eq.s32.totalorder %s10, 0
    %p93 = por %p91, %p92
    %p94 = scmp.ne.s32.totalorder %s86, %s88
    %p95 = scmp.eq.s32.totalorder %s15, 1
    %p96 = por %p94, %p95
    %p97 = scmp.ne.s32.totalorder %s88, %s89
    %p98 = scmp.eq.s32.totalorder %s15, 0
    %p99 = por %p97, %p98
    %p100 = scmp.ne.s32.totalorder %s88, %s89
    %p101 = scmp.eq.s32.totalorder %s16, 1
    %p102 = por %p100, %p101
    %p104 = scmp.ne.s32.totalorder %s89, %s103
    %p105 = scmp.eq.s32.totalorder %s16, 0
    %p106 = por %p104, %p105
    %s107 = ssub.s32 %s10, %s17
    %p108 = scmp.eq.s32.totalorder %s107, 0
    %s110 = sadd.s32 %s109, 1
    %s111 = scalar_select %p108, %s109, %s110
    %p114 = pneg %p108
    %p115 = scmp.eq.s32.totalorder %s10, 1
    %p116 = por %p114, %p115
    %p117 = scmp.ne.s32.totalorder %s109, %s112
    %p118 = scmp.eq.s32.totalorder %s10, 0
    %p119 = por %p117, %p118
    %p120 = scmp.ne.s32.totalorder %s109, %s112
    %p121 = scmp.eq.s32.totalorder %s15, 1
    %p122 = por %p120, %p121
    %p123 = scmp.ne.s32.totalorder %s112, %s113
    %p124 = scmp.eq.s32.totalorder %s15, 0
    %p125 = por %p123, %p124
    %p126 = scmp.ne.s32.totalorder %s112, %s113
    %p127 = scmp.eq.s32.totalorder %s16, 1
    %p128 = por %p126, %p127
    %p130 = scmp.ne.s32.totalorder %s113, %s129
    %p131 = scmp.eq.s32.totalorder %s16, 0
    %p132 = por %p130, %p131
    %p133 = scmp.le.s32.totalorder 1, %s10
    %p134 = scmp.lt.s32.totalorder %s10, 3
    %p135 = pnand %p133, %p134
    %p136 = pneg %p135
    // Predicated region
    $region9: #{_lambda_.6} parent=5 // pred_check
      _
    $region10: #{_lambda_.6} parent=5 // pred_check_branch
      %138 = sbr.rel (%p135) target = $region12
    $region11: #{_lambda_.6} parent=5 // pred_region
      %s139 = ssub.s32 %s10, 1
      // Predicated region
      $region13: #{_lambda_.6} parent=11 // pred_check
        %p140 = pneg %p57
      $region14: #{_lambda_.6} parent=11 // pred_check_branch
        %142 = sbr.rel (%p140) target = $region16
      $region15: #{_lambda_.6} parent=11 // pred_region
        _
      $region16: #{_lambda_.6} parent=11 // pred_fallthru
        _
      // Predicated region
      $region17: #{_lambda_.6} parent=11 // pred_check
        %p143 = pneg %p78
      $region18: #{_lambda_.6} parent=11 // pred_check_branch
        %145 = sbr.rel (%p143) target = $region20
      $region19: #{_lambda_.6} parent=11 // pred_region
        _
      $region20: #{_lambda_.6} parent=11 // pred_fallthru
        _
      // Predicated region
      $region21: #{_lambda_.6} parent=11 // pred_check
        %p146 = pneg %p99
      $region22: #{_lambda_.6} parent=11 // pred_check_branch
        %148 = sbr.rel (%p146) target = $region24
      $region23: #{_lambda_.6} parent=11 // pred_region
        _
      $region24: #{_lambda_.6} parent=11 // pred_fallthru
        _
    $region12: #{_lambda_.6} parent=5 // pred_fallthru
      _
    %p149 = scmp.lt.s32.totalorder %s10, 2
    // Predicated region
    $region25: #{_lambda_.6} parent=5 // pred_check
      %p150 = pneg %p149
    $region26: #{_lambda_.6} parent=5 // pred_check_branch
      %152 = sbr.rel (%p150) target = $region28
    $region27: #{_lambda_.6} parent=5 // pred_region
      // Predicated region
      $region29: #{_lambda_.6} parent=27 // pred_check
        %p153 = pneg %p30
      $region30: #{_lambda_.6} parent=27 // pred_check_branch
        %155 = sbr.rel (%p153) target = $region32
      $region31: #{_lambda_.6} parent=27 // pred_region
        %s156 = smul.u32 32, %s10
        %p157 = scmp.lt.s32.totalorder %s156, 63
        %s158 = scalar_select %p157, %s156, 63
        %s159 = smul.addr %s158, 4
        %s160 = smul.addr %s159, 4
        %s161 = scalar_lea.vmem %s0, %s160
        %s162 = smul.u32 32, %s10
      $region32: #{_lambda_.6} parent=27 // pred_fallthru
        _
    $region28: #{_lambda_.6} parent=5 // pred_fallthru
      _
    %p163 = scmp.le.s32.totalorder 1, %s10
    %p164 = scmp.lt.s32.totalorder %s10, 3
    %p165 = pnand %p163, %p164
    %p166 = pneg %p165
    // Predicated region
    $region33: #{_lambda_.6} parent=5 // pred_check
      _
    $region34: #{_lambda_.6} parent=5 // pred_check_branch
      %168 = sbr.rel (%p165) target = $region36
    $region35: #{_lambda_.6} parent=5 // pred_region
      %s169 = ssub.s32 %s10, 1
      %s170 = smul.u32 32, %s15
      %p171 = scmp.lt.s32.totalorder %s170, 63
      %s172 = scalar_select %p171, %s170, 63
      %s173 = smul.addr %s172, 4
      %s174 = smul.addr %s173, 4
      %s175 = scalar_lea.vmem %s0, %s174
      %p176 = pneg %p36
      %p177 = pneg %p33
      %p178 = pneg %p57
      %p179 = pneg %p54
      %p180 = pneg %p78
      %p181 = pneg %p75
      %p182 = pneg %p99
      %p183 = pneg %p96
      %p184 = pneg %p125
      %p185 = pneg %p122
      %s186 = smul.u32 32, %s15
      %p187 = scmp.lt.s32.totalorder %s186, 63
      %s188 = scalar_select %p187, %s186, 63
      %s189 = smul.addr %s188, 8
      %s190 = scalar_lea.vmem %s4, %s189
      %s191 = smul.u32 32, %s15
      %p192 = scmp.lt.s32.totalorder %s191, 63
      %s193 = scalar_select %p192, %s191, 63
      %s194 = smul.addr %s193, 4
      %s195 = smul.addr %s194, 4
      %s196 = scalar_lea.vmem %s0, %s195
      %s197 = smul.u32 32, %s15
      %s198 = smul.u32 32, %s15
      %p199 = scmp.lt.s32.totalorder %s198, 63
      %s200 = scalar_select %p199, %s198, 63
      %s201 = smul.addr %s200, 8
      %s202 = scalar_lea.vmem %s4, %s201
      %s203 = smul.u32 32, %s15
      %v205 = vld [vmem:[%s196] sm:$0xff]
      %v206 = vld [vmem:[%s196 + $0x8] sm:$0xff]
      %v207 = vld [vmem:[%s196 + $0x10] sm:$0xff]
      %v208 = vld [vmem:[%s196 + $0x18] sm:$0xff]
      %v209 = vld [vmem:[%s196 + $0x20] sm:$0xff]
      %v210 = vld [vmem:[%s196 + $0x28] sm:$0xff]
      %v211 = vld [vmem:[%s196 + $0x30] sm:$0xff]
      %v212 = vld [vmem:[%s196 + $0x38] sm:$0xff]
      %v213 = vld [vmem:[%s196 + $0x40] sm:$0xff]
      %v214 = vld [vmem:[%s196 + $0x48] sm:$0xff]
      %v215 = vld [vmem:[%s196 + $0x50] sm:$0xff]
      %v216 = vld [vmem:[%s196 + $0x58] sm:$0xff]
      %v217 = vld [vmem:[%s196 + $0x60] sm:$0xff]
      %v218 = vld [vmem:[%s196 + $0x68] sm:$0xff]
      %v219 = vld [vmem:[%s196 + $0x70] sm:$0xff]
      %v220 = vld [vmem:[%s196 + $0x78] sm:$0xff]
      %v221 = vld [vmem:[%s196 + $0x80] sm:$0xff]
      %v222 = vld [vmem:[%s196 + $0x88] sm:$0xff]
      %v223 = vld [vmem:[%s196 + $0x90] sm:$0xff]
      %v224 = vld [vmem:[%s196 + $0x98] sm:$0xff]
      %v225 = vld [vmem:[%s196 + $0xa0] sm:$0xff]
      %v226 = vld [vmem:[%s196 + $0xa8] sm:$0xff]
      %v227 = vld [vmem:[%s196 + $0xb0] sm:$0xff]
      %v228 = vld [vmem:[%s196 + $0xb8] sm:$0xff]
      %v229 = vld [vmem:[%s196 + $0xc0] sm:$0xff]
      %v230 = vld [vmem:[%s196 + $0xc8] sm:$0xff]
      %v231 = vld [vmem:[%s196 + $0xd0] sm:$0xff]
      %v232 = vld [vmem:[%s196 + $0xd8] sm:$0xff]
      %v233 = vld [vmem:[%s196 + $0xe0] sm:$0xff]
      %v234 = vld [vmem:[%s196 + $0xe8] sm:$0xff]
      %v235 = vld [vmem:[%s196 + $0xf0] sm:$0xff]
      %v236 = vld [vmem:[%s196 + $0xf8] sm:$0xff]
      %v237 = vld [vmem:[%s196 + $0x100] sm:$0xff]
      %v238 = vld [vmem:[%s196 + $0x108] sm:$0xff]
      %v239 = vld [vmem:[%s196 + $0x110] sm:$0xff]
      %v240 = vld [vmem:[%s196 + $0x118] sm:$0xff]
      %v241 = vld [vmem:[%s196 + $0x120] sm:$0xff]
      %v242 = vld [vmem:[%s196 + $0x128] sm:$0xff]
      %v243 = vld [vmem:[%s196 + $0x130] sm:$0xff]
      %v244 = vld [vmem:[%s196 + $0x138] sm:$0xff]
      %v245 = vld [vmem:[%s196 + $0x140] sm:$0xff]
      %v246 = vld [vmem:[%s196 + $0x148] sm:$0xff]
      %v247 = vld [vmem:[%s196 + $0x150] sm:$0xff]
      %v248 = vld [vmem:[%s196 + $0x158] sm:$0xff]
      %v249 = vld [vmem:[%s196 + $0x160] sm:$0xff]
      %v250 = vld [vmem:[%s196 + $0x168] sm:$0xff]
      %v251 = vld [vmem:[%s196 + $0x170] sm:$0xff]
      %v252 = vld [vmem:[%s196 + $0x178] sm:$0xff]
      %v253 = vld [vmem:[%s196 + $0x180] sm:$0xff]
      %v254 = vld [vmem:[%s196 + $0x188] sm:$0xff]
      %v255 = vld [vmem:[%s196 + $0x190] sm:$0xff]
      %v256 = vld [vmem:[%s196 + $0x198] sm:$0xff]
      %v257 = vld [vmem:[%s196 + $0x1a0] sm:$0xff]
      %v258 = vld [vmem:[%s196 + $0x1a8] sm:$0xff]
      %v259 = vld [vmem:[%s196 + $0x1b0] sm:$0xff]
      %v260 = vld [vmem:[%s196 + $0x1b8] sm:$0xff]
      %v261 = vld [vmem:[%s196 + $0x1c0] sm:$0xff]
      %v262 = vld [vmem:[%s196 + $0x1c8] sm:$0xff]
      %v263 = vld [vmem:[%s196 + $0x1d0] sm:$0xff]
      %v264 = vld [vmem:[%s196 + $0x1d8] sm:$0xff]
      %v265 = vld [vmem:[%s196 + $0x1e0] sm:$0xff]
      %v266 = vld [vmem:[%s196 + $0x1e8] sm:$0xff]
      %v267 = vld [vmem:[%s196 + $0x1f0] sm:$0xff]
      %v268 = vld [vmem:[%s196 + $0x1f8] sm:$0xff]
      %v269 = vld [vmem:[%s1] sm:$0xf]
      %v270 = vld [vmem:[%s1 + $0x4] sm:$0xf]
      %v271 = vld [vmem:[%s1 + $0x8] sm:$0xf]
      %v272 = vld [vmem:[%s1 + $0xc] sm:$0xf]
      %v273 = vld [vmem:[%s1 + $0x10] sm:$0xf]
      %v274 = vld [vmem:[%s1 + $0x14] sm:$0xf]
      %v275 = vld [vmem:[%s1 + $0x18] sm:$0xf]
      %v276 = vld [vmem:[%s1 + $0x1c] sm:$0xf]
      %v277 = vld [vmem:[%s1 + $0x20] sm:$0xf]
      %v278 = vld [vmem:[%s1 + $0x24] sm:$0xf]
      %v279 = vld [vmem:[%s1 + $0x28] sm:$0xf]
      %v280 = vld [vmem:[%s1 + $0x2c] sm:$0xf]
      %v281 = vld [vmem:[%s1 + $0x30] sm:$0xf]
      %v282 = vld [vmem:[%s1 + $0x34] sm:$0xf]
      %v283 = vld [vmem:[%s1 + $0x38] sm:$0xf]
      %v284 = vld [vmem:[%s1 + $0x3c] sm:$0xf]
      %v285 = vld [vmem:[%s1 + $0x40] sm:$0xf]
      %v286 = vld [vmem:[%s1 + $0x44] sm:$0xf]
      %v287 = vld [vmem:[%s1 + $0x48] sm:$0xf]
      %v288 = vld [vmem:[%s1 + $0x4c] sm:$0xf]
      %v289 = vld [vmem:[%s1 + $0x50] sm:$0xf]
      %v290 = vld [vmem:[%s1 + $0x54] sm:$0xf]
      %v291 = vld [vmem:[%s1 + $0x58] sm:$0xf]
      %v292 = vld [vmem:[%s1 + $0x5c] sm:$0xf]
      %v293 = vld [vmem:[%s1 + $0x60] sm:$0xf]
      %v294 = vld [vmem:[%s1 + $0x64] sm:$0xf]
      %v295 = vld [vmem:[%s1 + $0x68] sm:$0xf]
      %v296 = vld [vmem:[%s1 + $0x6c] sm:$0xf]
      %v297 = vld [vmem:[%s1 + $0x70] sm:$0xf]
      %v298 = vld [vmem:[%s1 + $0x74] sm:$0xf]
      %v299 = vld [vmem:[%s1 + $0x78] sm:$0xf]
      %v300 = vld [vmem:[%s1 + $0x7c] sm:$0xf]
      %v301 = vld [vmem:[%s1 + $0x80] sm:$0xf]
      %v302 = vld [vmem:[%s1 + $0x84] sm:$0xf]
      %v303 = vld [vmem:[%s1 + $0x88] sm:$0xf]
      %v304 = vld [vmem:[%s1 + $0x8c] sm:$0xf]
      %v305 = vld [vmem:[%s1 + $0x90] sm:$0xf]
      %v306 = vld [vmem:[%s1 + $0x94] sm:$0xf]
      %v307 = vld [vmem:[%s1 + $0x98] sm:$0xf]
      %v308 = vld [vmem:[%s1 + $0x9c] sm:$0xf]
      %v309 = vld [vmem:[%s1 + $0xa0] sm:$0xf]
      %v310 = vld [vmem:[%s1 + $0xa4] sm:$0xf]
      %v311 = vld [vmem:[%s1 + $0xa8] sm:$0xf]
      %v312 = vld [vmem:[%s1 + $0xac] sm:$0xf]
      %v313 = vld [vmem:[%s1 + $0xb0] sm:$0xf]
      %v314 = vld [vmem:[%s1 + $0xb4] sm:$0xf]
      %v315 = vld [vmem:[%s1 + $0xb8] sm:$0xf]
      %v316 = vld [vmem:[%s1 + $0xbc] sm:$0xf]
      %v317 = vld [vmem:[%s1 + $0xc0] sm:$0xf]
      %v318 = vld [vmem:[%s1 + $0xc4] sm:$0xf]
      %v319 = vld [vmem:[%s1 + $0xc8] sm:$0xf]
      %v320 = vld [vmem:[%s1 + $0xcc] sm:$0xf]
      %v321 = vld [vmem:[%s1 + $0xd0] sm:$0xf]
      %v322 = vld [vmem:[%s1 + $0xd4] sm:$0xf]
      %v387 = vunpack.c.l.b16 %v205
      %v388 = vunpack.c.h.b16 %v205
      %v389 = vunpack.c.l.b16 %v206
      %v390 = vunpack.c.h.b16 %v206
      %v391 = vunpack.c.l.b16 %v207
      %v392 = vunpack.c.h.b16 %v207
      %v393 = vunpack.c.l.b16 %v208
      %v394 = vunpack.c.h.b16 %v208
      %v395 = vunpack.c.l.b16 %v209
      %v396 = vunpack.c.h.b16 %v209
      %v397 = vunpack.c.l.b16 %v210
      %v398 = vunpack.c.h.b16 %v210
      %v399 = vunpack.c.l.b16 %v211
      %v400 = vunpack.c.h.b16 %v211
      %v401 = vunpack.c.l.b16 %v212
      %v402 = vunpack.c.h.b16 %v212
      %v403 = vunpack.c.l.b16 %v213
      %v404 = vunpack.c.h.b16 %v213
      %v405 = vunpack.c.l.b16 %v214
      %v406 = vunpack.c.h.b16 %v214
      %v407 = vunpack.c.l.b16 %v215
      %v408 = vunpack.c.h.b16 %v215
      %v409 = vunpack.c.l.b16 %v216
      %v410 = vunpack.c.h.b16 %v216
      %v411 = vunpack.c.l.b16 %v217
      %v412 = vunpack.c.h.b16 %v217
      %v413 = vunpack.c.l.b16 %v218
      %v414 = vunpack.c.h.b16 %v218
      %v415 = vunpack.c.l.b16 %v219
      %v416 = vunpack.c.h.b16 %v219
      %v417 = vunpack.c.l.b16 %v220
      %v418 = vunpack.c.h.b16 %v220
      %v419 = vunpack.c.l.b16 %v221
      %v420 = vunpack.c.h.b16 %v221
      %v421 = vunpack.c.l.b16 %v222
      %v422 = vunpack.c.h.b16 %v222
      %v423 = vunpack.c.l.b16 %v223
      %v424 = vunpack.c.h.b16 %v223
      %v425 = vunpack.c.l.b16 %v224
      %v426 = vunpack.c.h.b16 %v224
      %v427 = vunpack.c.l.b16 %v225
      %v428 = vunpack.c.h.b16 %v225
      %v429 = vunpack.c.l.b16 %v226
      %v430 = vunpack.c.h.b16 %v226
      %v431 = vunpack.c.l.b16 %v227
      %v432 = vunpack.c.h.b16 %v227
      %v433 = vunpack.c.l.b16 %v228
      %v434 = vunpack.c.h.b16 %v228
      %v435 = vunpack.c.l.b16 %v229
      %v436 = vunpack.c.h.b16 %v229
      %v437 = vunpack.c.l.b16 %v230
      %v438 = vunpack.c.h.b16 %v230
      %v439 = vunpack.c.l.b16 %v231
      %v440 = vunpack.c.h.b16 %v231
      %v441 = vunpack.c.l.b16 %v232
      %v442 = vunpack.c.h.b16 %v232
      %v443 = vunpack.c.l.b16 %v233
      %v444 = vunpack.c.h.b16 %v233
      %v445 = vunpack.c.l.b16 %v234
      %v446 = vunpack.c.h.b16 %v234
      %v447 = vunpack.c.l.b16 %v235
      %v448 = vunpack.c.h.b16 %v235
      %v449 = vunpack.c.l.b16 %v236
      %v450 = vunpack.c.h.b16 %v236
      %v451 = vunpack.c.l.b16 %v237
      %v452 = vunpack.c.h.b16 %v237
      %v453 = vunpack.c.l.b16 %v238
      %v454 = vunpack.c.h.b16 %v238
      %v455 = vunpack.c.l.b16 %v239
      %v456 = vunpack.c.h.b16 %v239
      %v457 = vunpack.c.l.b16 %v240
      %v458 = vunpack.c.h.b16 %v240
      %v459 = vunpack.c.l.b16 %v241
      %v460 = vunpack.c.h.b16 %v241
      %v461 = vunpack.c.l.b16 %v242
      %v462 = vunpack.c.h.b16 %v242
      %v463 = vunpack.c.l.b16 %v243
      %v464 = vunpack.c.h.b16 %v243
      %v465 = vunpack.c.l.b16 %v244
      %v466 = vunpack.c.h.b16 %v244
      %v467 = vunpack.c.l.b16 %v245
      %v468 = vunpack.c.h.b16 %v245
      %v469 = vunpack.c.l.b16 %v246
      %v470 = vunpack.c.h.b16 %v246
      %v471 = vunpack.c.l.b16 %v247
      %v472 = vunpack.c.h.b16 %v247
      %v473 = vunpack.c.l.b16 %v248
      %v474 = vunpack.c.h.b16 %v248
      %v475 = vunpack.c.l.b16 %v249
      %v476 = vunpack.c.h.b16 %v249
      %v477 = vunpack.c.l.b16 %v250
      %v478 = vunpack.c.h.b16 %v250
      %v479 = vunpack.c.l.b16 %v251
      %v480 = vunpack.c.h.b16 %v251
      %v481 = vunpack.c.l.b16 %v252
      %v482 = vunpack.c.h.b16 %v252
      %v483 = vunpack.c.l.b16 %v253
      %v484 = vunpack.c.h.b16 %v253
      %v485 = vunpack.c.l.b16 %v254
      %v486 = vunpack.c.h.b16 %v254
      %v487 = vunpack.c.l.b16 %v255
      %v488 = vunpack.c.h.b16 %v255
      %v489 = vunpack.c.l.b16 %v256
      %v490 = vunpack.c.h.b16 %v256
      %v491 = vunpack.c.l.b16 %v257
      %v492 = vunpack.c.h.b16 %v257
      %v493 = vunpack.c.l.b16 %v258
      %v494 = vunpack.c.h.b16 %v258
      %v495 = vunpack.c.l.b16 %v259
      %v496 = vunpack.c.h.b16 %v259
      %v497 = vunpack.c.l.b16 %v260
      %v498 = vunpack.c.h.b16 %v260
      %v499 = vunpack.c.l.b16 %v261
      %v500 = vunpack.c.h.b16 %v261
      %v501 = vunpack.c.l.b16 %v262
      %v502 = vunpack.c.h.b16 %v262
      %v503 = vunpack.c.l.b16 %v263
      %v504 = vunpack.c.h.b16 %v263
      %v505 = vunpack.c.l.b16 %v264
      %v506 = vunpack.c.h.b16 %v264
      %v507 = vunpack.c.l.b16 %v265
      %v508 = vunpack.c.h.b16 %v265
      %v509 = vunpack.c.l.b16 %v266
      %v510 = vunpack.c.h.b16 %v266
      %v511 = vunpack.c.l.b16 %v267
      %v512 = vunpack.c.h.b16 %v267
      %v513 = vunpack.c.l.b16 %v268
      %v514 = vunpack.c.h.b16 %v268
      %v515 = vpack.c.b16 %v391, %v387
      %v516 = vpack.c.b16 %v392, %v388
      %v517 = vpack.c.b16 %v393, %v389
      %v518 = vpack.c.b16 %v394, %v390
      %v519 = vpack.c.b16 %v399, %v395
      %v520 = vpack.c.b16 %v400, %v396
      %v521 = vpack.c.b16 %v401, %v397
      %v522 = vpack.c.b16 %v402, %v398
      %v523 = vpack.c.b16 %v407, %v403
      %v524 = vpack.c.b16 %v408, %v404
      %v525 = vpack.c.b16 %v409, %v405
      %v526 = vpack.c.b16 %v410, %v406
      %v527 = vpack.c.b16 %v415, %v411
      %v528 = vpack.c.b16 %v416, %v412
      %v529 = vpack.c.b16 %v417, %v413
      %v530 = vpack.c.b16 %v418, %v414
      %v531 = vpack.c.b16 %v423, %v419
      %v532 = vpack.c.b16 %v424, %v420
      %v533 = vpack.c.b16 %v425, %v421
      %v534 = vpack.c.b16 %v426, %v422
      %v535 = vpack.c.b16 %v431, %v427
      %v536 = vpack.c.b16 %v432, %v428
      %v537 = vpack.c.b16 %v433, %v429
      %v538 = vpack.c.b16 %v434, %v430
      %v539 = vpack.c.b16 %v439, %v435
      %v540 = vpack.c.b16 %v440, %v436
      %v541 = vpack.c.b16 %v441, %v437
      %v542 = vpack.c.b16 %v442, %v438
      %v543 = vpack.c.b16 %v447, %v443
      %v544 = vpack.c.b16 %v448, %v444
      %v545 = vpack.c.b16 %v449, %v445
      %v546 = vpack.c.b16 %v450, %v446
      %v547 = vpack.c.b16 %v455, %v451
      %v548 = vpack.c.b16 %v456, %v452
      %v549 = vpack.c.b16 %v457, %v453
      %v550 = vpack.c.b16 %v458, %v454
      %v551 = vpack.c.b16 %v463, %v459
      %v552 = vpack.c.b16 %v464, %v460
      %v553 = vpack.c.b16 %v465, %v461
      %v554 = vpack.c.b16 %v466, %v462
      %v555 = vpack.c.b16 %v471, %v467
      %v556 = vpack.c.b16 %v472, %v468
      %v557 = vpack.c.b16 %v473, %v469
      %v558 = vpack.c.b16 %v474, %v470
      %v559 = vpack.c.b16 %v479, %v475
      %v560 = vpack.c.b16 %v480, %v476
      %v561 = vpack.c.b16 %v481, %v477
      %v562 = vpack.c.b16 %v482, %v478
      %v563 = vpack.c.b16 %v487, %v483
      %v564 = vpack.c.b16 %v488, %v484
      %v565 = vpack.c.b16 %v489, %v485
      %v566 = vpack.c.b16 %v490, %v486
      %v567 = vpack.c.b16 %v495, %v491
      %v568 = vpack.c.b16 %v496, %v492
      %v569 = vpack.c.b16 %v497, %v493
      %v570 = vpack.c.b16 %v498, %v494
      %v571 = vpack.c.b16 %v503, %v499
      %v572 = vpack.c.b16 %v504, %v500
      %v573 = vpack.c.b16 %v505, %v501
      %v574 = vpack.c.b16 %v506, %v502
      %v575 = vpack.c.b16 %v511, %v507
      %v576 = vpack.c.b16 %v512, %v508
      %v577 = vpack.c.b16 %v513, %v509
      %v578 = vpack.c.b16 %v514, %v510
      %v681 = vunpack.c.l.b16 %v269
      %v682 = vunpack.c.l.b16 %v270
      %v683 = vunpack.c.l.b16 %v271
      %v684 = vunpack.c.l.b16 %v272
      %v685 = vunpack.c.l.b16 %v273
      %v686 = vunpack.c.l.b16 %v274
      %v687 = vunpack.c.l.b16 %v275
      %v688 = vunpack.c.l.b16 %v276
      %v689 = vunpack.c.l.b16 %v277
      %v690 = vunpack.c.l.b16 %v278
      %v691 = vunpack.c.l.b16 %v279
      %v692 = vunpack.c.l.b16 %v280
      %v693 = vunpack.c.l.b16 %v281
      %v694 = vunpack.c.l.b16 %v282
      %v695 = vunpack.c.l.b16 %v283
      %v696 = vunpack.c.l.b16 %v284
      %v697 = vunpack.c.l.b16 %v285
      %v698 = vunpack.c.l.b16 %v286
      %v699 = vunpack.c.l.b16 %v287
      %v700 = vunpack.c.l.b16 %v288
      %v701 = vunpack.c.l.b16 %v289
      %v702 = vunpack.c.l.b16 %v290
      %v703 = vunpack.c.l.b16 %v291
      %v704 = vunpack.c.l.b16 %v292
      %v705 = vunpack.c.l.b16 %v293
      %v706 = vunpack.c.l.b16 %v294
      %v707 = vunpack.c.l.b16 %v295
      %v708 = vunpack.c.l.b16 %v296
      %v709 = vunpack.c.l.b16 %v297
      %v710 = vunpack.c.l.b16 %v298
      %v711 = vunpack.c.l.b16 %v299
      %v712 = vunpack.c.l.b16 %v300
      %v713 = vunpack.c.l.b16 %v301
      %v714 = vunpack.c.l.b16 %v302
      %v715 = vunpack.c.l.b16 %v303
      %v716 = vunpack.c.l.b16 %v304
      %v717 = vunpack.c.l.b16 %v305
      %v718 = vunpack.c.l.b16 %v306
      %v719 = vunpack.c.l.b16 %v307
      %v720 = vunpack.c.l.b16 %v308
      %v721 = vunpack.c.l.b16 %v309
      %v722 = vunpack.c.l.b16 %v310
      %v723 = vunpack.c.l.b16 %v311
      %v724 = vunpack.c.l.b16 %v312
      %v725 = vunpack.c.l.b16 %v313
      %v726 = vunpack.c.l.b16 %v314
      %v727 = vunpack.c.l.b16 %v315
      %v728 = vunpack.c.l.b16 %v316
      %v729 = vunpack.c.l.b16 %v317
      %v730 = vunpack.c.l.b16 %v318
      %v731 = vunpack.c.l.b16 %v319
      %v732 = vunpack.c.l.b16 %v320
      %v733 = vunpack.c.l.b16 %v321
      %v734 = vunpack.c.l.b16 %v322
      %v735 = vpack.c.b16 %v682, %v681
      %v736 = vpack.c.b16 %v684, %v683
      %v737 = vpack.c.b16 %v686, %v685
      %v738 = vpack.c.b16 %v688, %v687
      %v739 = vpack.c.b16 %v690, %v689
      %v740 = vpack.c.b16 %v692, %v691
      %v741 = vpack.c.b16 %v694, %v693
      %v742 = vpack.c.b16 %v696, %v695
      %v743 = vpack.c.b16 %v698, %v697
      %v744 = vpack.c.b16 %v700, %v699
      %v745 = vpack.c.b16 %v702, %v701
      %v746 = vpack.c.b16 %v704, %v703
      %v747 = vpack.c.b16 %v706, %v705
      %v748 = vpack.c.b16 %v708, %v707
      %v749 = vpack.c.b16 %v710, %v709
      %v750 = vpack.c.b16 %v712, %v711
      %v751 = vpack.c.b16 %v714, %v713
      %v752 = vpack.c.b16 %v716, %v715
      %v753 = vpack.c.b16 %v718, %v717
      %v754 = vpack.c.b16 %v720, %v719
      %v755 = vpack.c.b16 %v722, %v721
      %v756 = vpack.c.b16 %v724, %v723
      %v757 = vpack.c.b16 %v726, %v725
      %v758 = vpack.c.b16 %v728, %v727
      %v759 = vpack.c.b16 %v730, %v729
      %v760 = vpack.c.b16 %v732, %v731
      %v761 = vpack.c.b16 %v734, %v733
      %vm789 = vcmask 392192
      %v791 = vsel %vm789, %v518, 0
      %v794 = vsel %vm789, %v522, 0
      %v797 = vsel %vm789, %v526, 0
      %v800 = vsel %vm789, %v530, 0
      %v803 = vsel %vm789, %v534, 0
      %v806 = vsel %vm789, %v538, 0
      %v809 = vsel %vm789, %v542, 0
      %v812 = vsel %vm789, %v546, 0
      %v815 = vsel %vm789, %v550, 0
      %v818 = vsel %vm789, %v554, 0
      %v821 = vsel %vm789, %v558, 0
      %v824 = vsel %vm789, %v562, 0
      %v827 = vsel %vm789, %v566, 0
      %v830 = vsel %vm789, %v570, 0
      %v833 = vsel %vm789, %v574, 0
      %v836 = vsel %vm789, %v578, 0
      %838 = vmatpush.bf16.msra.mxu0 %v742
      %839 = vmatpush.bf16.msra.mxu0 %v741
      %840 = vmatpush.bf16.msra.mxu0 %v740
      %841 = vmatpush.bf16.msra.mxu0 %v739
      %842 = vmatpush.bf16.msra.mxu0 %v738
      %843 = vmatpush.bf16.msra.mxu0 %v737
      %844 = vmatpush.bf16.msra.mxu0 %v736
      %845 = vmatpush.bf16.msra.mxu0 %v735
      %846 = vmatmul.bf16.gmra.mxu0 %v515
      %v847 = vpop.f32.mrf.mxu0
      %v848 = vadd.f32 0.0, %v847
      %v849 = vpop.f32.mrf.mxu0
      %v850 = vadd.f32 0.0, %v849
      %851 = vmatmul.bf16.gmra.mxu0 %v519
      %v852 = vpop.f32.mrf.mxu0
      %v853 = vadd.f32 0.0, %v852
      %v854 = vpop.f32.mrf.mxu0
      %v855 = vadd.f32 0.0, %v854
      %856 = vmatmul.bf16.gmra.mxu0 %v523
      %v857 = vpop.f32.mrf.mxu0
      %v858 = vadd.f32 0.0, %v857
      %v859 = vpop.f32.mrf.mxu0
      %v860 = vadd.f32 0.0, %v859
      %861 = vmatmul.bf16.gmra.mxu0 %v527
      %v862 = vpop.f32.mrf.mxu0
      %v863 = vadd.f32 0.0, %v862
      %v864 = vpop.f32.mrf.mxu0
      %v865 = vadd.f32 0.0, %v864
      %866 = vmatmul.bf16.gmra.mxu0 %v531
      %v867 = vpop.f32.mrf.mxu0
      %v868 = vadd.f32 0.0, %v867
      %v869 = vpop.f32.mrf.mxu0
      %v870 = vadd.f32 0.0, %v869
      %871 = vmatmul.bf16.gmra.mxu0 %v535
      %v872 = vpop.f32.mrf.mxu0
      %v873 = vadd.f32 0.0, %v872
      %v874 = vpop.f32.mrf.mxu0
      %v875 = vadd.f32 0.0, %v874
      %876 = vmatmul.bf16.gmra.mxu0 %v539
      %v877 = vpop.f32.mrf.mxu0
      %v878 = vadd.f32 0.0, %v877
      %v879 = vpop.f32.mrf.mxu0
      %v880 = vadd.f32 0.0, %v879
      %881 = vmatmul.bf16.gmra.mxu0 %v543
      %v882 = vpop.f32.mrf.mxu0
      %v883 = vadd.f32 0.0, %v882
      %v884 = vpop.f32.mrf.mxu0
      %v885 = vadd.f32 0.0, %v884
      %886 = vmatmul.bf16.gmra.mxu0 %v547
      %v887 = vpop.f32.mrf.mxu0
      %v888 = vadd.f32 0.0, %v887
      %v889 = vpop.f32.mrf.mxu0
      %v890 = vadd.f32 0.0, %v889
      %891 = vmatmul.bf16.gmra.mxu0 %v551
      %v892 = vpop.f32.mrf.mxu0
      %v893 = vadd.f32 0.0, %v892
      %v894 = vpop.f32.mrf.mxu0
      %v895 = vadd.f32 0.0, %v894
      %896 = vmatmul.bf16.gmra.mxu0 %v555
      %v897 = vpop.f32.mrf.mxu0
      %v898 = vadd.f32 0.0, %v897
      %v899 = vpop.f32.mrf.mxu0
      %v900 = vadd.f32 0.0, %v899
      %901 = vmatmul.bf16.gmra.mxu0 %v559
      %v902 = vpop.f32.mrf.mxu0
      %v903 = vadd.f32 0.0, %v902
      %v904 = vpop.f32.mrf.mxu0
      %v905 = vadd.f32 0.0, %v904
      %906 = vmatmul.bf16.gmra.mxu0 %v563
      %v907 = vpop.f32.mrf.mxu0
      %v908 = vadd.f32 0.0, %v907
      %v909 = vpop.f32.mrf.mxu0
      %v910 = vadd.f32 0.0, %v909
      %911 = vmatmul.bf16.gmra.mxu0 %v567
      %v912 = vpop.f32.mrf.mxu0
      %v913 = vadd.f32 0.0, %v912
      %v914 = vpop.f32.mrf.mxu0
      %v915 = vadd.f32 0.0, %v914
      %916 = vmatmul.bf16.gmra.mxu0 %v571
      %v917 = vpop.f32.mrf.mxu0
      %v918 = vadd.f32 0.0, %v917
      %v919 = vpop.f32.mrf.mxu0
      %v920 = vadd.f32 0.0, %v919
      %921 = vmatmul.bf16.gmra.mxu0 %v575
      %v922 = vpop.f32.mrf.mxu0
      %v923 = vadd.f32 0.0, %v922
      %v924 = vpop.f32.mrf.mxu0
      %v925 = vadd.f32 0.0, %v924
      %926 = vdwg.mxu0
      %927 = vmatpush.bf16.msra.mxu0 %v750
      %928 = vmatpush.bf16.msra.mxu0 %v749
      %929 = vmatpush.bf16.msra.mxu0 %v748
      %930 = vmatpush.bf16.msra.mxu0 %v747
      %931 = vmatpush.bf16.msra.mxu0 %v746
      %932 = vmatpush.bf16.msra.mxu0 %v745
      %933 = vmatpush.bf16.msra.mxu0 %v744
      %934 = vmatpush.bf16.msra.mxu0 %v743
      %935 = vmatmul.bf16.gmra.mxu0 %v516
      %v936 = vpop.f32.mrf.mxu0
      %v937 = vadd.f32 %v848, %v936
      %v938 = vpop.f32.mrf.mxu0
      %v939 = vadd.f32 %v850, %v938
      %940 = vmatmul.bf16.gmra.mxu0 %v520
      %v941 = vpop.f32.mrf.mxu0
      %v942 = vadd.f32 %v853, %v941
      %v943 = vpop.f32.mrf.mxu0
      %v944 = vadd.f32 %v855, %v943
      %945 = vmatmul.bf16.gmra.mxu0 %v524
      %v946 = vpop.f32.mrf.mxu0
      %v947 = vadd.f32 %v858, %v946
      %v948 = vpop.f32.mrf.mxu0
      %v949 = vadd.f32 %v860, %v948
      %950 = vmatmul.bf16.gmra.mxu0 %v528
      %v951 = vpop.f32.mrf.mxu0
      %v952 = vadd.f32 %v863, %v951
      %v953 = vpop.f32.mrf.mxu0
      %v954 = vadd.f32 %v865, %v953
      %955 = vmatmul.bf16.gmra.mxu0 %v532
      %v956 = vpop.f32.mrf.mxu0
      %v957 = vadd.f32 %v868, %v956
      %v958 = vpop.f32.mrf.mxu0
      %v959 = vadd.f32 %v870, %v958
      %960 = vmatmul.bf16.gmra.mxu0 %v536
      %v961 = vpop.f32.mrf.mxu0
      %v962 = vadd.f32 %v873, %v961
      %v963 = vpop.f32.mrf.mxu0
      %v964 = vadd.f32 %v875, %v963
      %965 = vmatmul.bf16.gmra.mxu0 %v540
      %v966 = vpop.f32.mrf.mxu0
      %v967 = vadd.f32 %v878, %v966
      %v968 = vpop.f32.mrf.mxu0
      %v969 = vadd.f32 %v880, %v968
      %970 = vmatmul.bf16.gmra.mxu0 %v544
      %v971 = vpop.f32.mrf.mxu0
      %v972 = vadd.f32 %v883, %v971
      %v973 = vpop.f32.mrf.mxu0
      %v974 = vadd.f32 %v885, %v973
      %975 = vmatmul.bf16.gmra.mxu0 %v548
      %v976 = vpop.f32.mrf.mxu0
      %v977 = vadd.f32 %v888, %v976
      %v978 = vpop.f32.mrf.mxu0
      %v979 = vadd.f32 %v890, %v978
      %980 = vmatmul.bf16.gmra.mxu0 %v552
      %v981 = vpop.f32.mrf.mxu0
      %v982 = vadd.f32 %v893, %v981
      %v983 = vpop.f32.mrf.mxu0
      %v984 = vadd.f32 %v895, %v983
      %985 = vmatmul.bf16.gmra.mxu0 %v556
      %v986 = vpop.f32.mrf.mxu0
      %v987 = vadd.f32 %v898, %v986
      %v988 = vpop.f32.mrf.mxu0
      %v989 = vadd.f32 %v900, %v988
      %990 = vmatmul.bf16.gmra.mxu0 %v560
      %v991 = vpop.f32.mrf.mxu0
      %v992 = vadd.f32 %v903, %v991
      %v993 = vpop.f32.mrf.mxu0
      %v994 = vadd.f32 %v905, %v993
      %995 = vmatmul.bf16.gmra.mxu0 %v564
      %v996 = vpop.f32.mrf.mxu0
      %v997 = vadd.f32 %v908, %v996
      %v998 = vpop.f32.mrf.mxu0
      %v999 = vadd.f32 %v910, %v998
      %1000 = vmatmul.bf16.gmra.mxu0 %v568
      %v1001 = vpop.f32.mrf.mxu0
      %v1002 = vadd.f32 %v913, %v1001
      %v1003 = vpop.f32.mrf.mxu0
      %v1004 = vadd.f32 %v915, %v1003
      %1005 = vmatmul.bf16.gmra.mxu0 %v572
      %v1006 = vpop.f32.mrf.mxu0
      %v1007 = vadd.f32 %v918, %v1006
      %v1008 = vpop.f32.mrf.mxu0
      %v1009 = vadd.f32 %v920, %v1008
      %1010 = vmatmul.bf16.gmra.mxu0 %v576
      %v1011 = vpop.f32.mrf.mxu0
      %v1012 = vadd.f32 %v923, %v1011
      %v1013 = vpop.f32.mrf.mxu0
      %v1014 = vadd.f32 %v925, %v1013
      %1015 = vdwg.mxu0
      %1016 = vmatpush.bf16.msra.mxu0 %v758
      %1017 = vmatpush.bf16.msra.mxu0 %v757
      %1018 = vmatpush.bf16.msra.mxu0 %v756
      %1019 = vmatpush.bf16.msra.mxu0 %v755
      %1020 = vmatpush.bf16.msra.mxu0 %v754
      %1021 = vmatpush.bf16.msra.mxu0 %v753
      %1022 = vmatpush.bf16.msra.mxu0 %v752
      %1023 = vmatpush.bf16.msra.mxu0 %v751
      %1024 = vmatmul.bf16.gmra.mxu0 %v517
      %v1025 = vpop.f32.mrf.mxu0
      %v1026 = vadd.f32 %v937, %v1025
      %v1027 = vpop.f32.mrf.mxu0
      %v1028 = vadd.f32 %v939, %v1027
      %1029 = vmatmul.bf16.gmra.mxu0 %v521
      %v1030 = vpop.f32.mrf.mxu0
      %v1031 = vadd.f32 %v942, %v1030
      %v1032 = vpop.f32.mrf.mxu0
      %v1033 = vadd.f32 %v944, %v1032
      %1034 = vmatmul.bf16.gmra.mxu0 %v525
      %v1035 = vpop.f32.mrf.mxu0
      %v1036 = vadd.f32 %v947, %v1035
      %v1037 = vpop.f32.mrf.mxu0
      %v1038 = vadd.f32 %v949, %v1037
      %1039 = vmatmul.bf16.gmra.mxu0 %v529
      %v1040 = vpop.f32.mrf.mxu0
      %v1041 = vadd.f32 %v952, %v1040
      %v1042 = vpop.f32.mrf.mxu0
      %v1043 = vadd.f32 %v954, %v1042
      %1044 = vmatmul.bf16.gmra.mxu0 %v533
      %v1045 = vpop.f32.mrf.mxu0
      %v1046 = vadd.f32 %v957, %v1045
      %v1047 = vpop.f32.mrf.mxu0
      %v1048 = vadd.f32 %v959, %v1047
      %1049 = vmatmul.bf16.gmra.mxu0 %v537
      %v1050 = vpop.f32.mrf.mxu0
      %v1051 = vadd.f32 %v962, %v1050
      %v1052 = vpop.f32.mrf.mxu0
      %v1053 = vadd.f32 %v964, %v1052
      %1054 = vmatmul.bf16.gmra.mxu0 %v541
      %v1055 = vpop.f32.mrf.mxu0
      %v1056 = vadd.f32 %v967, %v1055
      %v1057 = vpop.f32.mrf.mxu0
      %v1058 = vadd.f32 %v969, %v1057
      %1059 = vmatmul.bf16.gmra.mxu0 %v545
      %v1060 = vpop.f32.mrf.mxu0
      %v1061 = vadd.f32 %v972, %v1060
      %v1062 = vpop.f32.mrf.mxu0
      %v1063 = vadd.f32 %v974, %v1062
      %1064 = vmatmul.bf16.gmra.mxu0 %v549
      %v1065 = vpop.f32.mrf.mxu0
      %v1066 = vadd.f32 %v977, %v1065
      %v1067 = vpop.f32.mrf.mxu0
      %v1068 = vadd.f32 %v979, %v1067
      %1069 = vmatmul.bf16.gmra.mxu0 %v553
      %v1070 = vpop.f32.mrf.mxu0
      %v1071 = vadd.f32 %v982, %v1070
      %v1072 = vpop.f32.mrf.mxu0
      %v1073 = vadd.f32 %v984, %v1072
      %1074 = vmatmul.bf16.gmra.mxu0 %v557
      %v1075 = vpop.f32.mrf.mxu0
      %v1076 = vadd.f32 %v987, %v1075
      %v1077 = vpop.f32.mrf.mxu0
      %v1078 = vadd.f32 %v989, %v1077
      %1079 = vmatmul.bf16.gmra.mxu0 %v561
      %v1080 = vpop.f32.mrf.mxu0
      %v1081 = vadd.f32 %v992, %v1080
      %v1082 = vpop.f32.mrf.mxu0
      %v1083 = vadd.f32 %v994, %v1082
      %1084 = vmatmul.bf16.gmra.mxu0 %v565
      %v1085 = vpop.f32.mrf.mxu0
      %v1086 = vadd.f32 %v997, %v1085
      %v1087 = vpop.f32.mrf.mxu0
      %v1088 = vadd.f32 %v999, %v1087
      %1089 = vmatmul.bf16.gmra.mxu0 %v569
      %v1090 = vpop.f32.mrf.mxu0
      %v1091 = vadd.f32 %v1002, %v1090
      %v1092 = vpop.f32.mrf.mxu0
      %v1093 = vadd.f32 %v1004, %v1092
      %1094 = vmatmul.bf16.gmra.mxu0 %v573
      %v1095 = vpop.f32.mrf.mxu0
      %v1096 = vadd.f32 %v1007, %v1095
      %v1097 = vpop.f32.mrf.mxu0
      %v1098 = vadd.f32 %v1009, %v1097
      %1099 = vmatmul.bf16.gmra.mxu0 %v577
      %v1100 = vpop.f32.mrf.mxu0
      %v1101 = vadd.f32 %v1012, %v1100
      %v1102 = vpop.f32.mrf.mxu0
      %v1103 = vadd.f32 %v1014, %v1102
      %1104 = vdwg.mxu0
      %1105 = vmatpush.bf16.msra.mxu0 0
      %1106 = vmatpush.bf16.msra.mxu0 0
      %1107 = vmatpush.bf16.msra.mxu0 0
      %1108 = vmatpush.bf16.msra.mxu0 0
      %1109 = vmatpush.bf16.msra.mxu0 0
      %1110 = vmatpush.bf16.msra.mxu0 %v761
      %1111 = vmatpush.bf16.msra.mxu0 %v760
      %1112 = vmatpush.bf16.msra.mxu0 %v759
      %1113 = vmatmul.bf16.gmra.mxu0 %v791
      %v1114 = vpop.f32.mrf.mxu0
      %v1115 = vadd.f32 %v1026, %v1114
      %v1116 = vpop.f32.mrf.mxu0
      %v1117 = vadd.f32 %v1028, %v1116
      %1118 = vmatmul.bf16.gmra.mxu0 %v794
      %v1119 = vpop.f32.mrf.mxu0
      %v1120 = vadd.f32 %v1031, %v1119
      %v1121 = vpop.f32.mrf.mxu0
      %v1122 = vadd.f32 %v1033, %v1121
      %1123 = vmatmul.bf16.gmra.mxu0 %v797
      %v1124 = vpop.f32.mrf.mxu0
      %v1125 = vadd.f32 %v1036, %v1124
      %v1126 = vpop.f32.mrf.mxu0
      %v1127 = vadd.f32 %v1038, %v1126
      %1128 = vmatmul.bf16.gmra.mxu0 %v800
      %v1129 = vpop.f32.mrf.mxu0
      %v1130 = vadd.f32 %v1041, %v1129
      %v1131 = vpop.f32.mrf.mxu0
      %v1132 = vadd.f32 %v1043, %v1131
      %1133 = vmatmul.bf16.gmra.mxu0 %v803
      %v1134 = vpop.f32.mrf.mxu0
      %v1135 = vadd.f32 %v1046, %v1134
      %v1136 = vpop.f32.mrf.mxu0
      %v1137 = vadd.f32 %v1048, %v1136
      %1138 = vmatmul.bf16.gmra.mxu0 %v806
      %v1139 = vpop.f32.mrf.mxu0
      %v1140 = vadd.f32 %v1051, %v1139
      %v1141 = vpop.f32.mrf.mxu0
      %v1142 = vadd.f32 %v1053, %v1141
      %1143 = vmatmul.bf16.gmra.mxu0 %v809
      %v1144 = vpop.f32.mrf.mxu0
      %v1145 = vadd.f32 %v1056, %v1144
      %v1146 = vpop.f32.mrf.mxu0
      %v1147 = vadd.f32 %v1058, %v1146
      %1148 = vmatmul.bf16.gmra.mxu0 %v812
      %v1149 = vpop.f32.mrf.mxu0
      %v1150 = vadd.f32 %v1061, %v1149
      %v1151 = vpop.f32.mrf.mxu0
      %v1152 = vadd.f32 %v1063, %v1151
      %1153 = vmatmul.bf16.gmra.mxu0 %v815
      %v1154 = vpop.f32.mrf.mxu0
      %v1155 = vadd.f32 %v1066, %v1154
      %v1156 = vpop.f32.mrf.mxu0
      %v1157 = vadd.f32 %v1068, %v1156
      %1158 = vmatmul.bf16.gmra.mxu0 %v818
      %v1159 = vpop.f32.mrf.mxu0
      %v1160 = vadd.f32 %v1071, %v1159
      %v1161 = vpop.f32.mrf.mxu0
      %v1162 = vadd.f32 %v1073, %v1161
      %1163 = vmatmul.bf16.gmra.mxu0 %v821
      %v1164 = vpop.f32.mrf.mxu0
      %v1165 = vadd.f32 %v1076, %v1164
      %v1166 = vpop.f32.mrf.mxu0
      %v1167 = vadd.f32 %v1078, %v1166
      %1168 = vmatmul.bf16.gmra.mxu0 %v824
      %v1169 = vpop.f32.mrf.mxu0
      %v1170 = vadd.f32 %v1081, %v1169
      %v1171 = vpop.f32.mrf.mxu0
      %v1172 = vadd.f32 %v1083, %v1171
      %1173 = vmatmul.bf16.gmra.mxu0 %v827
      %v1174 = vpop.f32.mrf.mxu0
      %v1175 = vadd.f32 %v1086, %v1174
      %v1176 = vpop.f32.mrf.mxu0
      %v1177 = vadd.f32 %v1088, %v1176
      %1178 = vmatmul.bf16.gmra.mxu0 %v830
      %v1179 = vpop.f32.mrf.mxu0
      %v1180 = vadd.f32 %v1091, %v1179
      %v1181 = vpop.f32.mrf.mxu0
      %v1182 = vadd.f32 %v1093, %v1181
      %1183 = vmatmul.bf16.gmra.mxu0 %v833
      %v1184 = vpop.f32.mrf.mxu0
      %v1185 = vadd.f32 %v1096, %v1184
      %v1186 = vpop.f32.mrf.mxu0
      %v1187 = vadd.f32 %v1098, %v1186
      %1188 = vmatmul.bf16.gmra.mxu0 %v836
      %v1189 = vpop.f32.mrf.mxu0
      %v1190 = vadd.f32 %v1101, %v1189
      %v1191 = vpop.f32.mrf.mxu0
      %v1192 = vadd.f32 %v1103, %v1191
      %1193 = vdwg.mxu0
      %v1194 = vld [vmem:[%s2] sm:$0x1]
      %v1196 = vperm.slane %v1194, 0
      %v1198 = vmul.f32 %v1115, %v1196
      %v1199 = vmul.f32 %v1117, %v1196
      %v1200 = vmul.f32 %v1120, %v1196
      %v1201 = vmul.f32 %v1122, %v1196
      %v1202 = vmul.f32 %v1125, %v1196
      %v1203 = vmul.f32 %v1127, %v1196
      %v1204 = vmul.f32 %v1130, %v1196
      %v1205 = vmul.f32 %v1132, %v1196
      %v1206 = vmul.f32 %v1135, %v1196
      %v1207 = vmul.f32 %v1137, %v1196
      %v1208 = vmul.f32 %v1140, %v1196
      %v1209 = vmul.f32 %v1142, %v1196
      %v1210 = vmul.f32 %v1145, %v1196
      %v1211 = vmul.f32 %v1147, %v1196
      %v1212 = vmul.f32 %v1150, %v1196
      %v1213 = vmul.f32 %v1152, %v1196
      %v1214 = vmul.f32 %v1155, %v1196
      %v1215 = vmul.f32 %v1157, %v1196
      %v1216 = vmul.f32 %v1160, %v1196
      %v1217 = vmul.f32 %v1162, %v1196
      %v1218 = vmul.f32 %v1165, %v1196
      %v1219 = vmul.f32 %v1167, %v1196
      %v1220 = vmul.f32 %v1170, %v1196
      %v1221 = vmul.f32 %v1172, %v1196
      %v1222 = vmul.f32 %v1175, %v1196
      %v1223 = vmul.f32 %v1177, %v1196
      %v1224 = vmul.f32 %v1180, %v1196
      %v1225 = vmul.f32 %v1182, %v1196
      %v1226 = vmul.f32 %v1185, %v1196
      %v1227 = vmul.f32 %v1187, %v1196
      %v1228 = vmul.f32 %v1190, %v1196
      %v1229 = vmul.f32 %v1192, %v1196
      %v1230 = vld [vmem:[%s3] sm:$0x1]
      %v1232 = vperm.slane %v1230, 0
      %v1234 = vadd.f32 %v1198, %v1232
      %v1235 = vadd.f32 %v1199, %v1232
      %v1236 = vadd.f32 %v1200, %v1232
      %v1237 = vadd.f32 %v1201, %v1232
      %v1238 = vadd.f32 %v1202, %v1232
      %v1239 = vadd.f32 %v1203, %v1232
      %v1240 = vadd.f32 %v1204, %v1232
      %v1241 = vadd.f32 %v1205, %v1232
      %v1242 = vadd.f32 %v1206, %v1232
      %v1243 = vadd.f32 %v1207, %v1232
      %v1244 = vadd.f32 %v1208, %v1232
      %v1245 = vadd.f32 %v1209, %v1232
      %v1246 = vadd.f32 %v1210, %v1232
      %v1247 = vadd.f32 %v1211, %v1232
      %v1248 = vadd.f32 %v1212, %v1232
      %v1249 = vadd.f32 %v1213, %v1232
      %v1250 = vadd.f32 %v1214, %v1232
      %v1251 = vadd.f32 %v1215, %v1232
      %v1252 = vadd.f32 %v1216, %v1232
      %v1253 = vadd.f32 %v1217, %v1232
      %v1254 = vadd.f32 %v1218, %v1232
      %v1255 = vadd.f32 %v1219, %v1232
      %v1256 = vadd.f32 %v1220, %v1232
      %v1257 = vadd.f32 %v1221, %v1232
      %v1258 = vadd.f32 %v1222, %v1232
      %v1259 = vadd.f32 %v1223, %v1232
      %v1260 = vadd.f32 %v1224, %v1232
      %v1261 = vadd.f32 %v1225, %v1232
      %v1262 = vadd.f32 %v1226, %v1232
      %v1263 = vadd.f32 %v1227, %v1232
      %v1264 = vadd.f32 %v1228, %v1232
      %v1265 = vadd.f32 %v1229, %v1232
      %v1266 = vmax.f32 %v1234, 0.0
      %v1267 = vmax.f32 %v1235, 0.0
      %v1268 = vmax.f32 %v1236, 0.0
      %v1269 = vmax.f32 %v1237, 0.0
      %v1270 = vmax.f32 %v1238, 0.0
      %v1271 = vmax.f32 %v1239, 0.0
      %v1272 = vmax.f32 %v1240, 0.0
      %v1273 = vmax.f32 %v1241, 0.0
      %v1274 = vmax.f32 %v1242, 0.0
      %v1275 = vmax.f32 %v1243, 0.0
      %v1276 = vmax.f32 %v1244, 0.0
      %v1277 = vmax.f32 %v1245, 0.0
      %v1278 = vmax.f32 %v1246, 0.0
      %v1279 = vmax.f32 %v1247, 0.0
      %v1280 = vmax.f32 %v1248, 0.0
      %v1281 = vmax.f32 %v1249, 0.0
      %v1282 = vmax.f32 %v1250, 0.0
      %v1283 = vmax.f32 %v1251, 0.0
      %v1284 = vmax.f32 %v1252, 0.0
      %v1285 = vmax.f32 %v1253, 0.0
      %v1286 = vmax.f32 %v1254, 0.0
      %v1287 = vmax.f32 %v1255, 0.0
      %v1288 = vmax.f32 %v1256, 0.0
      %v1289 = vmax.f32 %v1257, 0.0
      %v1290 = vmax.f32 %v1258, 0.0
      %v1291 = vmax.f32 %v1259, 0.0
      %v1292 = vmax.f32 %v1260, 0.0
      %v1293 = vmax.f32 %v1261, 0.0
      %v1294 = vmax.f32 %v1262, 0.0
      %v1295 = vmax.f32 %v1263, 0.0
      %v1296 = vmax.f32 %v1264, 0.0
      %v1297 = vmax.f32 %v1265, 0.0
      %vm1298 = vcmask 261120
      %1299 = vst.msk [vmem:[%s202] sm:$0xff] %vm1298, %v1266
      %1300 = vst.msk [vmem:[%s202 + $0x8] sm:$0xff] %vm1298, %v1267
      %1301 = vst.msk [vmem:[%s202 + $0x10] sm:$0xff] %vm1298, %v1268
      %1302 = vst.msk [vmem:[%s202 + $0x18] sm:$0xff] %vm1298, %v1269
      %1303 = vst.msk [vmem:[%s202 + $0x20] sm:$0xff] %vm1298, %v1270
      %1304 = vst.msk [vmem:[%s202 + $0x28] sm:$0xff] %vm1298, %v1271
      %1305 = vst.msk [vmem:[%s202 + $0x30] sm:$0xff] %vm1298, %v1272
      %1306 = vst.msk [vmem:[%s202 + $0x38] sm:$0xff] %vm1298, %v1273
      %1307 = vst.msk [vmem:[%s202 + $0x40] sm:$0xff] %vm1298, %v1274
      %1308 = vst.msk [vmem:[%s202 + $0x48] sm:$0xff] %vm1298, %v1275
      %1309 = vst.msk [vmem:[%s202 + $0x50] sm:$0xff] %vm1298, %v1276
      %1310 = vst.msk [vmem:[%s202 + $0x58] sm:$0xff] %vm1298, %v1277
      %1311 = vst.msk [vmem:[%s202 + $0x60] sm:$0xff] %vm1298, %v1278
      %1312 = vst.msk [vmem:[%s202 + $0x68] sm:$0xff] %vm1298, %v1279
      %1313 = vst.msk [vmem:[%s202 + $0x70] sm:$0xff] %vm1298, %v1280
      %1314 = vst.msk [vmem:[%s202 + $0x78] sm:$0xff] %vm1298, %v1281
      %1315 = vst.msk [vmem:[%s202 + $0x80] sm:$0xff] %vm1298, %v1282
      %1316 = vst.msk [vmem:[%s202 + $0x88] sm:$0xff] %vm1298, %v1283
      %1317 = vst.msk [vmem:[%s202 + $0x90] sm:$0xff] %vm1298, %v1284
      %1318 = vst.msk [vmem:[%s202 + $0x98] sm:$0xff] %vm1298, %v1285
      %1319 = vst.msk [vmem:[%s202 + $0xa0] sm:$0xff] %vm1298, %v1286
      %1320 = vst.msk [vmem:[%s202 + $0xa8] sm:$0xff] %vm1298, %v1287
      %1321 = vst.msk [vmem:[%s202 + $0xb0] sm:$0xff] %vm1298, %v1288
      %1322 = vst.msk [vmem:[%s202 + $0xb8] sm:$0xff] %vm1298, %v1289
      %1323 = vst.msk [vmem:[%s202 + $0xc0] sm:$0xff] %vm1298, %v1290
      %1324 = vst.msk [vmem:[%s202 + $0xc8] sm:$0xff] %vm1298, %v1291
      %1325 = vst.msk [vmem:[%s202 + $0xd0] sm:$0xff] %vm1298, %v1292
      %1326 = vst.msk [vmem:[%s202 + $0xd8] sm:$0xff] %vm1298, %v1293
      %1327 = vst.msk [vmem:[%s202 + $0xe0] sm:$0xff] %vm1298, %v1294
      %1328 = vst.msk [vmem:[%s202 + $0xe8] sm:$0xff] %vm1298, %v1295
      %1329 = vst.msk [vmem:[%s202 + $0xf0] sm:$0xff] %vm1298, %v1296
      %1330 = vst.msk [vmem:[%s202 + $0xf8] sm:$0xff] %vm1298, %v1297
      %s1331 = smul.u32 32, %s15
      %p1332 = scmp.lt.s32.totalorder %s1331, 63
      %s1333 = scalar_select %p1332, %s1331, 63
      %s1334 = smul.addr %s1333, 8
      %s1335 = scalar_lea.vmem %s4, %s1334
      // Predicated region
      $region37: #{_lambda_.6} parent=35 // pred_check
        %p1336 = pneg %p122
      $region38: #{_lambda_.6} parent=35 // pred_check_branch
        %1338 = sbr.rel (%p1336) target = $region40
      $region39: #{_lambda_.6} parent=35 // pred_region
        %s1339 = smul.u32 32, %s15
      $region40: #{_lambda_.6} parent=35 // pred_fallthru
        _
    $region36: #{_lambda_.6} parent=5 // pred_fallthru
      _
    %p1340 = scmp.le.s32.totalorder 2, %s10
    // Predicated region
    $region41: #{_lambda_.6} parent=5 // pred_check
      %p1341 = pneg %p1340
    $region42: #{_lambda_.6} parent=5 // pred_check_branch
      %1343 = sbr.rel (%p1341) target = $region44
    $region43: #{_lambda_.6} parent=5 // pred_region
      %s1344 = ssub.s32 %s10, 2
      // Predicated region
      $region45: #{_lambda_.6} parent=43 // pred_check
        %p1345 = pneg %p128
      $region46: #{_lambda_.6} parent=43 // pred_check_branch
        %1347 = sbr.rel (%p1345) target = $region48
      $region47: #{_lambda_.6} parent=43 // pred_region
        %s1348 = smul.u32 32, %s16
        %p1349 = scmp.lt.s32.totalorder %s1348, 63
        %s1350 = scalar_select %p1349, %s1348, 63
        %s1351 = smul.addr %s1350, 8
        %s1352 = scalar_lea.vmem %s4, %s1351
      $region48: #{_lambda_.6} parent=43 // pred_fallthru
        _
    $region44: #{_lambda_.6} parent=5 // pred_fallthru
      _
  $region6: #{_lambda_.6} parent=0 // loop_footer
    %s14 = sadd.s32 1, %s10
  $region7: #{_lambda_.6} parent=0 // loop_footer_branch
    %9 = sbr.rel target = $region3
  $region8: #{_lambda_.6} parent=0 // loop_exit
    _

// kernel: _lambda_.7
$region0: #{_lambda_.7}
  #allocation0 [shape = 'u32[]', space=smem, size = 0x4, offset = 0x4, fixed_abs, tag = 'smem constant byte address 0x4 - core index']
  #allocation1 [shape = 'u32[72,128]{1,0:T(1,128)}', space=vmem, size = 0x9000, scoped, tag = 'internal scratch']
  %s0 = inlined_call_operand.vmem [shape: bf16[512,864], index: 0, kind: input, shape index: {}]
  %s1 = inlined_call_operand.vmem [shape: bf16[864,32], index: 1, kind: input, shape index: {}]
  %s2 = inlined_call_operand.vmem [shape: f32[1,32], index: 2, kind: input, shape index: {}]
  %s3 = inlined_call_operand.vmem [shape: f32[1,32], index: 3, kind: input, shape index: {}]
  %s4 = inlined_call_operand.vmem [shape: f32[512,32], index: 4, kind: output, shape index: {}]
  %s5 = sld [smem:[#allocation0]]
  $region49: #{_lambda_.7} parent=0
    _
  %s7 = ssub.s32 1, %s5
  %s8 = scalar_select 0, %s7, %s5
  loop: start=0, step=1, limit=4
  $region2: #{_lambda_.7} parent=0 // loop_pre_header
    _
  $region3: #{_lambda_.7} parent=0 // loop_header
    %s10 = sphi 0, %s14
    %p11 = scmp.ge.s32.totalorder %s10, 4
    %s20 = sphi 0, %s22
    %s23 = sphi 0, %s20
    %s24 = sphi 0, %s23
    %s40 = sphi 0, %s24
    %s44 = sphi 0, %s44
    %s46 = sphi 0, %s44
    %s47 = sphi 0, %s46
    %s61 = sphi 0, %s47
    %s65 = sphi 0, %s65
    %s67 = sphi 0, %s65
    %s68 = sphi 0, %s67
    %s82 = sphi 0, %s68
    %s86 = sphi 0, %s86
    %s88 = sphi 0, %s86
    %s89 = sphi 0, %s88
    %s103 = sphi 0, %s89
    %s109 = sphi 0, %s111
    %s112 = sphi 0, %s109
    %s113 = sphi 0, %s112
    %s129 = sphi 0, %s113
  $region4: #{_lambda_.7} parent=0 // loop_header_branch
    %13 = sbr.rel (%p11) target = $region8
  $region5: #{_lambda_.7} parent=0 // loop_body
    %s15 = ssub.s32 %s10, 1
    %s16 = ssub.s32 %s10, 2
    %s17 = sadd.s32 %s10, 1
    %s18 = ssub.s32 %s10, %s17
    %p19 = scmp.eq.s32.totalorder %s18, 0
    %s21 = sadd.s32 %s20, 1
    %s22 = scalar_select %p19, %s20, %s21
    %p25 = pneg %p19
    %p26 = scmp.eq.s32.totalorder %s10, 1
    %p27 = por %p25, %p26
    %p28 = scmp.ne.s32.totalorder %s20, %s23
    %p29 = scmp.eq.s32.totalorder %s10, 0
    %p30 = por %p28, %p29
    %p31 = scmp.ne.s32.totalorder %s20, %s23
    %p32 = scmp.eq.s32.totalorder %s15, 1
    %p33 = por %p31, %p32
    %p34 = scmp.ne.s32.totalorder %s23, %s24
    %p35 = scmp.eq.s32.totalorder %s15, 0
    %p36 = por %p34, %p35
    %p37 = scmp.ne.s32.totalorder %s23, %s24
    %p38 = scmp.eq.s32.totalorder %s16, 1
    %p39 = por %p37, %p38
    %p41 = scmp.ne.s32.totalorder %s24, %s40
    %p42 = scmp.eq.s32.totalorder %s16, 0
    %p43 = por %p41, %p42
    %s45 = sadd.s32 %s44, 1
    %p48 = scmp.eq.s32.totalorder %s10, 1
    %p49 = scmp.ne.s32.totalorder %s44, %s46
    %p50 = scmp.eq.s32.totalorder %s10, 0
    %p51 = por %p49, %p50
    %p52 = scmp.ne.s32.totalorder %s44, %s46
    %p53 = scmp.eq.s32.totalorder %s15, 1
    %p54 = por %p52, %p53
    %p55 = scmp.ne.s32.totalorder %s46, %s47
    %p56 = scmp.eq.s32.totalorder %s15, 0
    %p57 = por %p55, %p56
    %p58 = scmp.ne.s32.totalorder %s46, %s47
    %p59 = scmp.eq.s32.totalorder %s16, 1
    %p60 = por %p58, %p59
    %p62 = scmp.ne.s32.totalorder %s47, %s61
    %p63 = scmp.eq.s32.totalorder %s16, 0
    %p64 = por %p62, %p63
    %s66 = sadd.s32 %s65, 1
    %p69 = scmp.eq.s32.totalorder %s10, 1
    %p70 = scmp.ne.s32.totalorder %s65, %s67
    %p71 = scmp.eq.s32.totalorder %s10, 0
    %p72 = por %p70, %p71
    %p73 = scmp.ne.s32.totalorder %s65, %s67
    %p74 = scmp.eq.s32.totalorder %s15, 1
    %p75 = por %p73, %p74
    %p76 = scmp.ne.s32.totalorder %s67, %s68
    %p77 = scmp.eq.s32.totalorder %s15, 0
    %p78 = por %p76, %p77
    %p79 = scmp.ne.s32.totalorder %s67, %s68
    %p80 = scmp.eq.s32.totalorder %s16, 1
    %p81 = por %p79, %p80
    %p83 = scmp.ne.s32.totalorder %s68, %s82
    %p84 = scmp.eq.s32.totalorder %s16, 0
    %p85 = por %p83, %p84
    %s87 = sadd.s32 %s86, 1
    %p90 = scmp.eq.s32.totalorder %s10, 1
    %p91 = scmp.ne.s32.totalorder %s86, %s88
    %p92 = scmp.eq.s32.totalorder %s10, 0
    %p93 = por %p91, %p92
    %p94 = scmp.ne.s32.totalorder %s86, %s88
    %p95 = scmp.eq.s32.totalorder %s15, 1
    %p96 = por %p94, %p95
    %p97 = scmp.ne.s32.totalorder %s88, %s89
    %p98 = scmp.eq.s32.totalorder %s15, 0
    %p99 = por %p97, %p98
    %p100 = scmp.ne.s32.totalorder %s88, %s89
    %p101 = scmp.eq.s32.totalorder %s16, 1
    %p102 = por %p100, %p101
    %p104 = scmp.ne.s32.totalorder %s89, %s103
    %p105 = scmp.eq.s32.totalorder %s16, 0
    %p106 = por %p104, %p105
    %s107 = ssub.s32 %s10, %s17
    %p108 = scmp.eq.s32.totalorder %s107, 0
    %s110 = sadd.s32 %s109, 1
    %s111 = scalar_select %p108, %s109, %s110
    %p114 = pneg %p108
    %p115 = scmp.eq.s32.totalorder %s10, 1
    %p116 = por %p114, %p115
    %p117 = scmp.ne.s32.totalorder %s109, %s112
    %p118 = scmp.eq.s32.totalorder %s10, 0
    %p119 = por %p117, %p118
    %p120 = scmp.ne.s32.totalorder %s109, %s112
    %p121 = scmp.eq.s32.totalorder %s15, 1
    %p122 = por %p120, %p121
    %p123 = scmp.ne.s32.totalorder %s112, %s113
    %p124 = scmp.eq.s32.totalorder %s15, 0
    %p125 = por %p123, %p124
    %p126 = scmp.ne.s32.totalorder %s112, %s113
    %p127 = scmp.eq.s32.totalorder %s16, 1
    %p128 = por %p126, %p127
    %p130 = scmp.ne.s32.totalorder %s113, %s129
    %p131 = scmp.eq.s32.totalorder %s16, 0
    %p132 = por %p130, %p131
    %p133 = scmp.le.s32.totalorder 1, %s10
    %p134 = scmp.lt.s32.totalorder %s10, 3
    %p135 = pnand %p133, %p134
    %p136 = pneg %p135
    // Predicated region
    $region9: #{_lambda_.7} parent=5 // pred_check
      _
    $region10: #{_lambda_.7} parent=5 // pred_check_branch
      %138 = sbr.rel (%p135) target = $region12
    $region11: #{_lambda_.7} parent=5 // pred_region
      %s139 = ssub.s32 %s10, 1
      // Predicated region
      $region13: #{_lambda_.7} parent=11 // pred_check
        %p140 = pneg %p57
      $region14: #{_lambda_.7} parent=11 // pred_check_branch
        %142 = sbr.rel (%p140) target = $region16
      $region15: #{_lambda_.7} parent=11 // pred_region
        _
      $region16: #{_lambda_.7} parent=11 // pred_fallthru
        _
      // Predicated region
      $region17: #{_lambda_.7} parent=11 // pred_check
        %p143 = pneg %p78
      $region18: #{_lambda_.7} parent=11 // pred_check_branch
        %145 = sbr.rel (%p143) target = $region20
      $region19: #{_lambda_.7} parent=11 // pred_region
        _
      $region20: #{_lambda_.7} parent=11 // pred_fallthru
        _
      // Predicated region
      $region21: #{_lambda_.7} parent=11 // pred_check
        %p146 = pneg %p99
      $region22: #{_lambda_.7} parent=11 // pred_check_branch
        %148 = sbr.rel (%p146) target = $region24
      $region23: #{_lambda_.7} parent=11 // pred_region
        _
      $region24: #{_lambda_.7} parent=11 // pred_fallthru
        _
    $region12: #{_lambda_.7} parent=5 // pred_fallthru
      _
    %p149 = scmp.lt.s32.totalorder %s10, 2
    // Predicated region
    $region25: #{_lambda_.7} parent=5 // pred_check
      %p150 = pneg %p149
    $region26: #{_lambda_.7} parent=5 // pred_check_branch
      %152 = sbr.rel (%p150) target = $region28
    $region27: #{_lambda_.7} parent=5 // pred_region
      // Predicated region
      $region29: #{_lambda_.7} parent=27 // pred_check
        %p153 = pneg %p30
      $region30: #{_lambda_.7} parent=27 // pred_check_branch
        %155 = sbr.rel (%p153) target = $region32
      $region31: #{_lambda_.7} parent=27 // pred_region
        %s156 = smul.u32 32, %s10
        %p157 = scmp.lt.s32.totalorder %s156, 63
        %s158 = scalar_select %p157, %s156, 63
        %s159 = smul.addr %s158, 7
        %s160 = smul.addr %s159, 4
        %s161 = scalar_lea.vmem %s0, %s160
        %s162 = smul.u32 32, %s10
      $region32: #{_lambda_.7} parent=27 // pred_fallthru
        _
    $region28: #{_lambda_.7} parent=5 // pred_fallthru
      _
    %p163 = scmp.le.s32.totalorder 1, %s10
    %p164 = scmp.lt.s32.totalorder %s10, 3
    %p165 = pnand %p163, %p164
    %p166 = pneg %p165
    // Predicated region
    $region33: #{_lambda_.7} parent=5 // pred_check
      _
    $region34: #{_lambda_.7} parent=5 // pred_check_branch
      %168 = sbr.rel (%p165) target = $region36
    $region35: #{_lambda_.7} parent=5 // pred_region
      %s169 = ssub.s32 %s10, 1
      %s170 = smul.u32 32, %s15
      %p171 = scmp.lt.s32.totalorder %s170, 63
      %s172 = scalar_select %p171, %s170, 63
      %s173 = smul.addr %s172, 7
      %s174 = smul.addr %s173, 4
      %s175 = scalar_lea.vmem %s0, %s174
      %p176 = pneg %p36
      %p177 = pneg %p33
      %p178 = pneg %p57
      %p179 = pneg %p54
      %p180 = pneg %p78
      %p181 = pneg %p75
      %p182 = pneg %p99
      %p183 = pneg %p96
      %p184 = pneg %p125
      %p185 = pneg %p122
      %s186 = smul.u32 32, %s15
      %p187 = scmp.lt.s32.totalorder %s186, 63
      %s188 = scalar_select %p187, %s186, 63
      %s189 = smul.addr %s188, 8
      %s190 = scalar_lea.vmem %s4, %s189
      %s191 = smul.u32 32, %s15
      %p192 = scmp.lt.s32.totalorder %s191, 63
      %s193 = scalar_select %p192, %s191, 63
      %s194 = smul.addr %s193, 7
      %s195 = smul.addr %s194, 4
      %s196 = scalar_lea.vmem %s0, %s195
      %s197 = smul.u32 32, %s15
      %s198 = smul.u32 32, %s15
      %p199 = scmp.lt.s32.totalorder %s198, 63
      %s200 = scalar_select %p199, %s198, 63
      %s201 = smul.addr %s200, 8
      %s202 = scalar_lea.vmem %s4, %s201
      %s203 = smul.u32 32, %s15
      %v205 = vld [vmem:[%s196] sm:$0xff]
      %v206 = vld [vmem:[%s196 + $0x8] sm:$0xff]
      %v207 = vld [vmem:[%s196 + $0x10] sm:$0xff]
      %v208 = vld [vmem:[%s196 + $0x18] sm:$0xf]
      %v209 = vld [vmem:[%s196 + $0x1c] sm:$0xff]
      %v210 = vld [vmem:[%s196 + $0x24] sm:$0xff]
      %v211 = vld [vmem:[%s196 + $0x2c] sm:$0xff]
      %v212 = vld [vmem:[%s196 + $0x34] sm:$0xf]
      %v213 = vld [vmem:[%s196 + $0x38] sm:$0xff]
      %v214 = vld [vmem:[%s196 + $0x40] sm:$0xff]
      %v215 = vld [vmem:[%s196 + $0x48] sm:$0xff]
      %v216 = vld [vmem:[%s196 + $0x50] sm:$0xf]
      %v217 = vld [vmem:[%s196 + $0x54] sm:$0xff]
      %v218 = vld [vmem:[%s196 + $0x5c] sm:$0xff]
      %v219 = vld [vmem:[%s196 + $0x64] sm:$0xff]
      %v220 = vld [vmem:[%s196 + $0x6c] sm:$0xf]
      %v221 = vld [vmem:[%s196 + $0x70] sm:$0xff]
      %v222 = vld [vmem:[%s196 + $0x78] sm:$0xff]
      %v223 = vld [vmem:[%s196 + $0x80] sm:$0xff]
      %v224 = vld [vmem:[%s196 + $0x88] sm:$0xf]
      %v225 = vld [vmem:[%s196 + $0x8c] sm:$0xff]
      %v226 = vld [vmem:[%s196 + $0x94] sm:$0xff]
      %v227 = vld [vmem:[%s196 + $0x9c] sm:$0xff]
      %v228 = vld [vmem:[%s196 + $0xa4] sm:$0xf]
      %v229 = vld [vmem:[%s196 + $0xa8] sm:$0xff]
      %v230 = vld [vmem:[%s196 + $0xb0] sm:$0xff]
      %v231 = vld [vmem:[%s196 + $0xb8] sm:$0xff]
      %v232 = vld [vmem:[%s196 + $0xc0] sm:$0xf]
      %v233 = vld [vmem:[%s196 + $0xc4] sm:$0xff]
      %v234 = vld [vmem:[%s196 + $0xcc] sm:$0xff]
      %v235 = vld [vmem:[%s196 + $0xd4] sm:$0xff]
      %v236 = vld [vmem:[%s196 + $0xdc] sm:$0xf]
      %v237 = vld [vmem:[%s196 + $0xe0] sm:$0xff]
      %v238 = vld [vmem:[%s196 + $0xe8] sm:$0xff]
      %v239 = vld [vmem:[%s196 + $0xf0] sm:$0xff]
      %v240 = vld [vmem:[%s196 + $0xf8] sm:$0xf]
      %v241 = vld [vmem:[%s196 + $0xfc] sm:$0xff]
      %v242 = vld [vmem:[%s196 + $0x104] sm:$0xff]
      %v243 = vld [vmem:[%s196 + $0x10c] sm:$0xff]
      %v244 = vld [vmem:[%s196 + $0x114] sm:$0xf]
      %v245 = vld [vmem:[%s196 + $0x118] sm:$0xff]
      %v246 = vld [vmem:[%s196 + $0x120] sm:$0xff]
      %v247 = vld [vmem:[%s196 + $0x128] sm:$0xff]
      %v248 = vld [vmem:[%s196 + $0x130] sm:$0xf]
      %v249 = vld [vmem:[%s196 + $0x134] sm:$0xff]
      %v250 = vld [vmem:[%s196 + $0x13c] sm:$0xff]
      %v251 = vld [vmem:[%s196 + $0x144] sm:$0xff]
      %v252 = vld [vmem:[%s196 + $0x14c] sm:$0xf]
      %v253 = vld [vmem:[%s196 + $0x150] sm:$0xff]
      %v254 = vld [vmem:[%s196 + $0x158] sm:$0xff]
      %v255 = vld [vmem:[%s196 + $0x160] sm:$0xff]
      %v256 = vld [vmem:[%s196 + $0x168] sm:$0xf]
      %v257 = vld [vmem:[%s196 + $0x16c] sm:$0xff]
      %v258 = vld [vmem:[%s196 + $0x174] sm:$0xff]
      %v259 = vld [vmem:[%s196 + $0x17c] sm:$0xff]
      %v260 = vld [vmem:[%s196 + $0x184] sm:$0xf]
      %v261 = vld [vmem:[%s196 + $0x188] sm:$0xff]
      %v262 = vld [vmem:[%s196 + $0x190] sm:$0xff]
      %v263 = vld [vmem:[%s196 + $0x198] sm:$0xff]
      %v264 = vld [vmem:[%s196 + $0x1a0] sm:$0xf]
      %v265 = vld [vmem:[%s196 + $0x1a4] sm:$0xff]
      %v266 = vld [vmem:[%s196 + $0x1ac] sm:$0xff]
      %v267 = vld [vmem:[%s196 + $0x1b4] sm:$0xff]
      %v268 = vld [vmem:[%s196 + $0x1bc] sm:$0xf]
      %v269 = vld [vmem:[%s196 + $0x1c0] sm:$0xff]
      %v270 = vld [vmem:[%s196 + $0x1c8] sm:$0xff]
      %v271 = vld [vmem:[%s196 + $0x1d0] sm:$0xff]
      %v272 = vld [vmem:[%s196 + $0x1d8] sm:$0xf]
      %v273 = vld [vmem:[%s196 + $0x1dc] sm:$0xff]
      %v274 = vld [vmem:[%s196 + $0x1e4] sm:$0xff]
      %v275 = vld [vmem:[%s196 + $0x1ec] sm:$0xff]
      %v276 = vld [vmem:[%s196 + $0x1f4] sm:$0xf]
      %v277 = vld [vmem:[%s196 + $0x1f8] sm:$0xff]
      %v278 = vld [vmem:[%s196 + $0x200] sm:$0xff]
      %v279 = vld [vmem:[%s196 + $0x208] sm:$0xff]
      %v280 = vld [vmem:[%s196 + $0x210] sm:$0xf]
      %v281 = vld [vmem:[%s196 + $0x214] sm:$0xff]
      %v282 = vld [vmem:[%s196 + $0x21c] sm:$0xff]
      %v283 = vld [vmem:[%s196 + $0x224] sm:$0xff]
      %v284 = vld [vmem:[%s196 + $0x22c] sm:$0xf]
      %v285 = vld [vmem:[%s196 + $0x230] sm:$0xff]
      %v286 = vld [vmem:[%s196 + $0x238] sm:$0xff]
      %v287 = vld [vmem:[%s196 + $0x240] sm:$0xff]
      %v288 = vld [vmem:[%s196 + $0x248] sm:$0xf]
      %v289 = vld [vmem:[%s196 + $0x24c] sm:$0xff]
      %v290 = vld [vmem:[%s196 + $0x254] sm:$0xff]
      %v291 = vld [vmem:[%s196 + $0x25c] sm:$0xff]
      %v292 = vld [vmem:[%s196 + $0x264] sm:$0xf]
      %v293 = vld [vmem:[%s196 + $0x268] sm:$0xff]
      %v294 = vld [vmem:[%s196 + $0x270] sm:$0xff]
      %v295 = vld [vmem:[%s196 + $0x278] sm:$0xff]
      %v296 = vld [vmem:[%s196 + $0x280] sm:$0xf]
      %v297 = vld [vmem:[%s196 + $0x284] sm:$0xff]
      %v298 = vld [vmem:[%s196 + $0x28c] sm:$0xff]
      %v299 = vld [vmem:[%s196 + $0x294] sm:$0xff]
      %v300 = vld [vmem:[%s196 + $0x29c] sm:$0xf]
      %v301 = vld [vmem:[%s196 + $0x2a0] sm:$0xff]
      %v302 = vld [vmem:[%s196 + $0x2a8] sm:$0xff]
      %v303 = vld [vmem:[%s196 + $0x2b0] sm:$0xff]
      %v304 = vld [vmem:[%s196 + $0x2b8] sm:$0xf]
      %v305 = vld [vmem:[%s196 + $0x2bc] sm:$0xff]
      %v306 = vld [vmem:[%s196 + $0x2c4] sm:$0xff]
      %v307 = vld [vmem:[%s196 + $0x2cc] sm:$0xff]
      %v308 = vld [vmem:[%s196 + $0x2d4] sm:$0xf]
      %v309 = vld [vmem:[%s196 + $0x2d8] sm:$0xff]
      %v310 = vld [vmem:[%s196 + $0x2e0] sm:$0xff]
      %v311 = vld [vmem:[%s196 + $0x2e8] sm:$0xff]
      %v312 = vld [vmem:[%s196 + $0x2f0] sm:$0xf]
      %v313 = vld [vmem:[%s196 + $0x2f4] sm:$0xff]
      %v314 = vld [vmem:[%s196 + $0x2fc] sm:$0xff]
      %v315 = vld [vmem:[%s196 + $0x304] sm:$0xff]
      %v316 = vld [vmem:[%s196 + $0x30c] sm:$0xf]
      %v317 = vld [vmem:[%s196 + $0x310] sm:$0xff]
      %v318 = vld [vmem:[%s196 + $0x318] sm:$0xff]
      %v319 = vld [vmem:[%s196 + $0x320] sm:$0xff]
      %v320 = vld [vmem:[%s196 + $0x328] sm:$0xf]
      %v321 = vld [vmem:[%s196 + $0x32c] sm:$0xff]
      %v322 = vld [vmem:[%s196 + $0x334] sm:$0xff]
      %v323 = vld [vmem:[%s196 + $0x33c] sm:$0xff]
      %v324 = vld [vmem:[%s196 + $0x344] sm:$0xf]
      %v325 = vld [vmem:[%s196 + $0x348] sm:$0xff]
      %v326 = vld [vmem:[%s196 + $0x350] sm:$0xff]
      %v327 = vld [vmem:[%s196 + $0x358] sm:$0xff]
      %v328 = vld [vmem:[%s196 + $0x360] sm:$0xf]
      %v329 = vld [vmem:[%s196 + $0x364] sm:$0xff]
      %v330 = vld [vmem:[%s196 + $0x36c] sm:$0xff]
      %v331 = vld [vmem:[%s196 + $0x374] sm:$0xff]
      %v332 = vld [vmem:[%s196 + $0x37c] sm:$0xf]
      %v333 = vld [vmem:[%s1] sm:$0xf]
      %v334 = vld [vmem:[%s1 + $0x4] sm:$0xf]
      %v335 = vld [vmem:[%s1 + $0x8] sm:$0xf]
      %v336 = vld [vmem:[%s1 + $0xc] sm:$0xf]
      %v337 = vld [vmem:[%s1 + $0x10] sm:$0xf]
      %v338 = vld [vmem:[%s1 + $0x14] sm:$0xf]
      %v339 = vld [vmem:[%s1 + $0x18] sm:$0xf]
      %v340 = vld [vmem:[%s1 + $0x1c] sm:$0xf]
      %v341 = vld [vmem:[%s1 + $0x20] sm:$0xf]
      %v342 = vld [vmem:[%s1 + $0x24] sm:$0xf]
      %v343 = vld [vmem:[%s1 + $0x28] sm:$0xf]
      %v344 = vld [vmem:[%s1 + $0x2c] sm:$0xf]
      %v345 = vld [vmem:[%s1 + $0x30] sm:$0xf]
      %v346 = vld [vmem:[%s1 + $0x34] sm:$0xf]
      %v347 = vld [vmem:[%s1 + $0x38] sm:$0xf]
      %v348 = vld [vmem:[%s1 + $0x3c] sm:$0xf]
      %v349 = vld [vmem:[%s1 + $0x40] sm:$0xf]
      %v350 = vld [vmem:[%s1 + $0x44] sm:$0xf]
      %v351 = vld [vmem:[%s1 + $0x48] sm:$0xf]
      %v352 = vld [vmem:[%s1 + $0x4c] sm:$0xf]
      %v353 = vld [vmem:[%s1 + $0x50] sm:$0xf]
      %v354 = vld [vmem:[%s1 + $0x54] sm:$0xf]
      %v355 = vld [vmem:[%s1 + $0x58] sm:$0xf]
      %v356 = vld [vmem:[%s1 + $0x5c] sm:$0xf]
      %v357 = vld [vmem:[%s1 + $0x60] sm:$0xf]
      %v358 = vld [vmem:[%s1 + $0x64] sm:$0xf]
      %v359 = vld [vmem:[%s1 + $0x68] sm:$0xf]
      %v360 = vld [vmem:[%s1 + $0x6c] sm:$0xf]
      %v361 = vld [vmem:[%s1 + $0x70] sm:$0xf]
      %v362 = vld [vmem:[%s1 + $0x74] sm:$0xf]
      %v363 = vld [vmem:[%s1 + $0x78] sm:$0xf]
      %v364 = vld [vmem:[%s1 + $0x7c] sm:$0xf]
      %v365 = vld [vmem:[%s1 + $0x80] sm:$0xf]
      %v366 = vld [vmem:[%s1 + $0x84] sm:$0xf]
      %v367 = vld [vmem:[%s1 + $0x88] sm:$0xf]
      %v368 = vld [vmem:[%s1 + $0x8c] sm:$0xf]
      %v369 = vld [vmem:[%s1 + $0x90] sm:$0xf]
      %v370 = vld [vmem:[%s1 + $0x94] sm:$0xf]
      %v371 = vld [vmem:[%s1 + $0x98] sm:$0xf]
      %v372 = vld [vmem:[%s1 + $0x9c] sm:$0xf]
      %v373 = vld [vmem:[%s1 + $0xa0] sm:$0xf]
      %v374 = vld [vmem:[%s1 + $0xa4] sm:$0xf]
      %v375 = vld [vmem:[%s1 + $0xa8] sm:$0xf]
      %v376 = vld [vmem:[%s1 + $0xac] sm:$0xf]
      %v377 = vld [vmem:[%s1 + $0xb0] sm:$0xf]
      %v378 = vld [vmem:[%s1 + $0xb4] sm:$0xf]
      %v379 = vld [vmem:[%s1 + $0xb8] sm:$0xf]
      %v380 = vld [vmem:[%s1 + $0xbc] sm:$0xf]
      %v381 = vld [vmem:[%s1 + $0xc0] sm:$0xf]
      %v382 = vld [vmem:[%s1 + $0xc4] sm:$0xf]
      %v383 = vld [vmem:[%s1 + $0xc8] sm:$0xf]
      %v384 = vld [vmem:[%s1 + $0xcc] sm:$0xf]
      %v385 = vld [vmem:[%s1 + $0xd0] sm:$0xf]
      %v386 = vld [vmem:[%s1 + $0xd4] sm:$0xf]
      %v387 = vld [vmem:[%s1 + $0xd8] sm:$0xf]
      %v388 = vld [vmem:[%s1 + $0xdc] sm:$0xf]
      %v389 = vld [vmem:[%s1 + $0xe0] sm:$0xf]
      %v390 = vld [vmem:[%s1 + $0xe4] sm:$0xf]
      %v391 = vld [vmem:[%s1 + $0xe8] sm:$0xf]
      %v392 = vld [vmem:[%s1 + $0xec] sm:$0xf]
      %v393 = vld [vmem:[%s1 + $0xf0] sm:$0xf]
      %v394 = vld [vmem:[%s1 + $0xf4] sm:$0xf]
      %v395 = vld [vmem:[%s1 + $0xf8] sm:$0xf]
      %v396 = vld [vmem:[%s1 + $0xfc] sm:$0xf]
      %v397 = vld [vmem:[%s1 + $0x100] sm:$0xf]
      %v398 = vld [vmem:[%s1 + $0x104] sm:$0xf]
      %v399 = vld [vmem:[%s1 + $0x108] sm:$0xf]
      %v400 = vld [vmem:[%s1 + $0x10c] sm:$0xf]
      %v401 = vld [vmem:[%s1 + $0x110] sm:$0xf]
      %v402 = vld [vmem:[%s1 + $0x114] sm:$0xf]
      %v403 = vld [vmem:[%s1 + $0x118] sm:$0xf]
      %v404 = vld [vmem:[%s1 + $0x11c] sm:$0xf]
      %v405 = vld [vmem:[%s1 + $0x120] sm:$0xf]
      %v406 = vld [vmem:[%s1 + $0x124] sm:$0xf]
      %v407 = vld [vmem:[%s1 + $0x128] sm:$0xf]
      %v408 = vld [vmem:[%s1 + $0x12c] sm:$0xf]
      %v409 = vld [vmem:[%s1 + $0x130] sm:$0xf]
      %v410 = vld [vmem:[%s1 + $0x134] sm:$0xf]
      %v411 = vld [vmem:[%s1 + $0x138] sm:$0xf]
      %v412 = vld [vmem:[%s1 + $0x13c] sm:$0xf]
      %v413 = vld [vmem:[%s1 + $0x140] sm:$0xf]
      %v414 = vld [vmem:[%s1 + $0x144] sm:$0xf]
      %v415 = vld [vmem:[%s1 + $0x148] sm:$0xf]
      %v416 = vld [vmem:[%s1 + $0x14c] sm:$0xf]
      %v417 = vld [vmem:[%s1 + $0x150] sm:$0xf]
      %v418 = vld [vmem:[%s1 + $0x154] sm:$0xf]
      %v419 = vld [vmem:[%s1 + $0x158] sm:$0xf]
      %v420 = vld [vmem:[%s1 + $0x15c] sm:$0xf]
      %v421 = vld [vmem:[%s1 + $0x160] sm:$0xf]
      %v422 = vld [vmem:[%s1 + $0x164] sm:$0xf]
      %v423 = vld [vmem:[%s1 + $0x168] sm:$0xf]
      %v424 = vld [vmem:[%s1 + $0x16c] sm:$0xf]
      %v425 = vld [vmem:[%s1 + $0x170] sm:$0xf]
      %v426 = vld [vmem:[%s1 + $0x174] sm:$0xf]
      %v427 = vld [vmem:[%s1 + $0x178] sm:$0xf]
      %v428 = vld [vmem:[%s1 + $0x17c] sm:$0xf]
      %v429 = vld [vmem:[%s1 + $0x180] sm:$0xf]
      %v430 = vld [vmem:[%s1 + $0x184] sm:$0xf]
      %v431 = vld [vmem:[%s1 + $0x188] sm:$0xf]
      %v432 = vld [vmem:[%s1 + $0x18c] sm:$0xf]
      %v433 = vld [vmem:[%s1 + $0x190] sm:$0xf]
      %v434 = vld [vmem:[%s1 + $0x194] sm:$0xf]
      %v435 = vld [vmem:[%s1 + $0x198] sm:$0xf]
      %v436 = vld [vmem:[%s1 + $0x19c] sm:$0xf]
      %v437 = vld [vmem:[%s1 + $0x1a0] sm:$0xf]
      %v438 = vld [vmem:[%s1 + $0x1a4] sm:$0xf]
      %v439 = vld [vmem:[%s1 + $0x1a8] sm:$0xf]
      %v440 = vld [vmem:[%s1 + $0x1ac] sm:$0xf]
      %v569 = vunpack.c.l.b16 %v205
      %v570 = vunpack.c.h.b16 %v205
      %v571 = vunpack.c.l.b16 %v206
      %v572 = vunpack.c.h.b16 %v206
      %v573 = vunpack.c.l.b16 %v207
      %v574 = vunpack.c.h.b16 %v207
      %v575 = vunpack.c.l.b16 %v208
      %v576 = vunpack.c.l.b16 %v209
      %v577 = vunpack.c.h.b16 %v209
      %v578 = vunpack.c.l.b16 %v210
      %v579 = vunpack.c.h.b16 %v210
      %v580 = vunpack.c.l.b16 %v211
      %v581 = vunpack.c.h.b16 %v211
      %v582 = vunpack.c.l.b16 %v212
      %v583 = vunpack.c.l.b16 %v213
      %v584 = vunpack.c.h.b16 %v213
      %v585 = vunpack.c.l.b16 %v214
      %v586 = vunpack.c.h.b16 %v214
      %v587 = vunpack.c.l.b16 %v215
      %v588 = vunpack.c.h.b16 %v215
      %v589 = vunpack.c.l.b16 %v216
      %v590 = vunpack.c.l.b16 %v217
      %v591 = vunpack.c.h.b16 %v217
      %v592 = vunpack.c.l.b16 %v218
      %v593 = vunpack.c.h.b16 %v218
      %v594 = vunpack.c.l.b16 %v219
      %v595 = vunpack.c.h.b16 %v219
      %v596 = vunpack.c.l.b16 %v220
      %v597 = vunpack.c.l.b16 %v221
      %v598 = vunpack.c.h.b16 %v221
      %v599 = vunpack.c.l.b16 %v222
      %v600 = vunpack.c.h.b16 %v222
      %v601 = vunpack.c.l.b16 %v223
      %v602 = vunpack.c.h.b16 %v223
      %v603 = vunpack.c.l.b16 %v224
      %v604 = vunpack.c.l.b16 %v225
      %v605 = vunpack.c.h.b16 %v225
      %v606 = vunpack.c.l.b16 %v226
      %v607 = vunpack.c.h.b16 %v226
      %v608 = vunpack.c.l.b16 %v227
      %v609 = vunpack.c.h.b16 %v227
      %v610 = vunpack.c.l.b16 %v228
      %v611 = vunpack.c.l.b16 %v229
      %v612 = vunpack.c.h.b16 %v229
      %v613 = vunpack.c.l.b16 %v230
      %v614 = vunpack.c.h.b16 %v230
      %v615 = vunpack.c.l.b16 %v231
      %v616 = vunpack.c.h.b16 %v231
      %v617 = vunpack.c.l.b16 %v232
      %v618 = vunpack.c.l.b16 %v233
      %v619 = vunpack.c.h.b16 %v233
      %v620 = vunpack.c.l.b16 %v234
      %v621 = vunpack.c.h.b16 %v234
      %v622 = vunpack.c.l.b16 %v235
      %v623 = vunpack.c.h.b16 %v235
      %v624 = vunpack.c.l.b16 %v236
      %v625 = vunpack.c.l.b16 %v237
      %v626 = vunpack.c.h.b16 %v237
      %v627 = vunpack.c.l.b16 %v238
      %v628 = vunpack.c.h.b16 %v238
      %v629 = vunpack.c.l.b16 %v239
      %v630 = vunpack.c.h.b16 %v239
      %v631 = vunpack.c.l.b16 %v240
      %v632 = vunpack.c.l.b16 %v241
      %v633 = vunpack.c.h.b16 %v241
      %v634 = vunpack.c.l.b16 %v242
      %v635 = vunpack.c.h.b16 %v242
      %v636 = vunpack.c.l.b16 %v243
      %v637 = vunpack.c.h.b16 %v243
      %v638 = vunpack.c.l.b16 %v244
      %v639 = vunpack.c.l.b16 %v245
      %v640 = vunpack.c.h.b16 %v245
      %v641 = vunpack.c.l.b16 %v246
      %v642 = vunpack.c.h.b16 %v246
      %v643 = vunpack.c.l.b16 %v247
      %v644 = vunpack.c.h.b16 %v247
      %v645 = vunpack.c.l.b16 %v248
      %v646 = vunpack.c.l.b16 %v249
      %v647 = vunpack.c.h.b16 %v249
      %v648 = vunpack.c.l.b16 %v250
      %v649 = vunpack.c.h.b16 %v250
      %v650 = vunpack.c.l.b16 %v251
      %v651 = vunpack.c.h.b16 %v251
      %v652 = vunpack.c.l.b16 %v252
      %v653 = vunpack.c.l.b16 %v253
      %v654 = vunpack.c.h.b16 %v253
      %v655 = vunpack.c.l.b16 %v254
      %v656 = vunpack.c.h.b16 %v254
      %v657 = vunpack.c.l.b16 %v255
      %v658 = vunpack.c.h.b16 %v255
      %v659 = vunpack.c.l.b16 %v256
      %v660 = vunpack.c.l.b16 %v257
      %v661 = vunpack.c.h.b16 %v257
      %v662 = vunpack.c.l.b16 %v258
      %v663 = vunpack.c.h.b16 %v258
      %v664 = vunpack.c.l.b16 %v259
      %v665 = vunpack.c.h.b16 %v259
      %v666 = vunpack.c.l.b16 %v260
      %v667 = vunpack.c.l.b16 %v261
      %v668 = vunpack.c.h.b16 %v261
      %v669 = vunpack.c.l.b16 %v262
      %v670 = vunpack.c.h.b16 %v262
      %v671 = vunpack.c.l.b16 %v263
      %v672 = vunpack.c.h.b16 %v263
      %v673 = vunpack.c.l.b16 %v264
      %v674 = vunpack.c.l.b16 %v265
      %v675 = vunpack.c.h.b16 %v265
      %v676 = vunpack.c.l.b16 %v266
      %v677 = vunpack.c.h.b16 %v266
      %v678 = vunpack.c.l.b16 %v267
      %v679 = vunpack.c.h.b16 %v267
      %v680 = vunpack.c.l.b16 %v268
      %v681 = vunpack.c.l.b16 %v269
      %v682 = vunpack.c.h.b16 %v269
      %v683 = vunpack.c.l.b16 %v270
      %v684 = vunpack.c.h.b16 %v270
      %v685 = vunpack.c.l.b16 %v271
      %v686 = vunpack.c.h.b16 %v271
      %v687 = vunpack.c.l.b16 %v272
      %v688 = vunpack.c.l.b16 %v273
      %v689 = vunpack.c.h.b16 %v273
      %v690 = vunpack.c.l.b16 %v274
      %v691 = vunpack.c.h.b16 %v274
      %v692 = vunpack.c.l.b16 %v275
      %v693 = vunpack.c.h.b16 %v275
      %v694 = vunpack.c.l.b16 %v276
      %v695 = vunpack.c.l.b16 %v277
      %v696 = vunpack.c.h.b16 %v277
      %v697 = vunpack.c.l.b16 %v278
      %v698 = vunpack.c.h.b16 %v278
      %v699 = vunpack.c.l.b16 %v279
      %v700 = vunpack.c.h.b16 %v279
      %v701 = vunpack.c.l.b16 %v280
      %v702 = vunpack.c.l.b16 %v281
      %v703 = vunpack.c.h.b16 %v281
      %v704 = vunpack.c.l.b16 %v282
      %v705 = vunpack.c.h.b16 %v282
      %v706 = vunpack.c.l.b16 %v283
      %v707 = vunpack.c.h.b16 %v283
      %v708 = vunpack.c.l.b16 %v284
      %v709 = vunpack.c.l.b16 %v285
      %v710 = vunpack.c.h.b16 %v285
      %v711 = vunpack.c.l.b16 %v286
      %v712 = vunpack.c.h.b16 %v286
      %v713 = vunpack.c.l.b16 %v287
      %v714 = vunpack.c.h.b16 %v287
      %v715 = vunpack.c.l.b16 %v288
      %v716 = vunpack.c.l.b16 %v289
      %v717 = vunpack.c.h.b16 %v289
      %v718 = vunpack.c.l.b16 %v290
      %v719 = vunpack.c.h.b16 %v290
      %v720 = vunpack.c.l.b16 %v291
      %v721 = vunpack.c.h.b16 %v291
      %v722 = vunpack.c.l.b16 %v292
      %v723 = vunpack.c.l.b16 %v293
      %v724 = vunpack.c.h.b16 %v293
      %v725 = vunpack.c.l.b16 %v294
      %v726 = vunpack.c.h.b16 %v294
      %v727 = vunpack.c.l.b16 %v295
      %v728 = vunpack.c.h.b16 %v295
      %v729 = vunpack.c.l.b16 %v296
      %v730 = vunpack.c.l.b16 %v297
      %v731 = vunpack.c.h.b16 %v297
      %v732 = vunpack.c.l.b16 %v298
      %v733 = vunpack.c.h.b16 %v298
      %v734 = vunpack.c.l.b16 %v299
      %v735 = vunpack.c.h.b16 %v299
      %v736 = vunpack.c.l.b16 %v300
      %v737 = vunpack.c.l.b16 %v301
      %v738 = vunpack.c.h.b16 %v301
      %v739 = vunpack.c.l.b16 %v302
      %v740 = vunpack.c.h.b16 %v302
      %v741 = vunpack.c.l.b16 %v303
      %v742 = vunpack.c.h.b16 %v303
      %v743 = vunpack.c.l.b16 %v304
      %v744 = vunpack.c.l.b16 %v305
      %v745 = vunpack.c.h.b16 %v305
      %v746 = vunpack.c.l.b16 %v306
      %v747 = vunpack.c.h.b16 %v306
      %v748 = vunpack.c.l.b16 %v307
      %v749 = vunpack.c.h.b16 %v307
      %v750 = vunpack.c.l.b16 %v308
      %v751 = vunpack.c.l.b16 %v309
      %v752 = vunpack.c.h.b16 %v309
      %v753 = vunpack.c.l.b16 %v310
      %v754 = vunpack.c.h.b16 %v310
      %v755 = vunpack.c.l.b16 %v311
      %v756 = vunpack.c.h.b16 %v311
      %v757 = vunpack.c.l.b16 %v312
      %v758 = vunpack.c.l.b16 %v313
      %v759 = vunpack.c.h.b16 %v313
      %v760 = vunpack.c.l.b16 %v314
      %v761 = vunpack.c.h.b16 %v314
      %v762 = vunpack.c.l.b16 %v315
      %v763 = vunpack.c.h.b16 %v315
      %v764 = vunpack.c.l.b16 %v316
      %v765 = vunpack.c.l.b16 %v317
      %v766 = vunpack.c.h.b16 %v317
      %v767 = vunpack.c.l.b16 %v318
      %v768 = vunpack.c.h.b16 %v318
      %v769 = vunpack.c.l.b16 %v319
      %v770 = vunpack.c.h.b16 %v319
      %v771 = vunpack.c.l.b16 %v320
      %v772 = vunpack.c.l.b16 %v321
      %v773 = vunpack.c.h.b16 %v321
      %v774 = vunpack.c.l.b16 %v322
      %v775 = vunpack.c.h.b16 %v322
      %v776 = vunpack.c.l.b16 %v323
      %v777 = vunpack.c.h.b16 %v323
      %v778 = vunpack.c.l.b16 %v324
      %v779 = vunpack.c.l.b16 %v325
      %v780 = vunpack.c.h.b16 %v325
      %v781 = vunpack.c.l.b16 %v326
      %v782 = vunpack.c.h.b16 %v326
      %v783 = vunpack.c.l.b16 %v327
      %v784 = vunpack.c.h.b16 %v327
      %v785 = vunpack.c.l.b16 %v328
      %v786 = vunpack.c.l.b16 %v329
      %v787 = vunpack.c.h.b16 %v329
      %v788 = vunpack.c.l.b16 %v330
      %v789 = vunpack.c.h.b16 %v330
      %v790 = vunpack.c.l.b16 %v331
      %v791 = vunpack.c.h.b16 %v331
      %v792 = vunpack.c.l.b16 %v332
      %v793 = vpack.c.b16 %v576, %v569
      %v794 = vpack.c.b16 %v577, %v570
      %v795 = vpack.c.b16 %v578, %v571
      %v796 = vpack.c.b16 %v579, %v572
      %v797 = vpack.c.b16 %v580, %v573
      %v798 = vpack.c.b16 %v581, %v574
      %v799 = vpack.c.b16 %v582, %v575
      %v800 = vpack.c.b16 %v590, %v583
      %v801 = vpack.c.b16 %v591, %v584
      %v802 = vpack.c.b16 %v592, %v585
      %v803 = vpack.c.b16 %v593, %v586
      %v804 = vpack.c.b16 %v594, %v587
      %v805 = vpack.c.b16 %v595, %v588
      %v806 = vpack.c.b16 %v596, %v589
      %v807 = vpack.c.b16 %v604, %v597
      %v808 = vpack.c.b16 %v605, %v598
      %v809 = vpack.c.b16 %v606, %v599
      %v810 = vpack.c.b16 %v607, %v600
      %v811 = vpack.c.b16 %v608, %v601
      %v812 = vpack.c.b16 %v609, %v602
      %v813 = vpack.c.b16 %v610, %v603
      %v814 = vpack.c.b16 %v618, %v611
      %v815 = vpack.c.b16 %v619, %v612
      %v816 = vpack.c.b16 %v620, %v613
      %v817 = vpack.c.b16 %v621, %v614
      %v818 = vpack.c.b16 %v622, %v615
      %v819 = vpack.c.b16 %v623, %v616
      %v820 = vpack.c.b16 %v624, %v617
      %v821 = vpack.c.b16 %v632, %v625
      %v822 = vpack.c.b16 %v633, %v626
      %v823 = vpack.c.b16 %v634, %v627
      %v824 = vpack.c.b16 %v635, %v628
      %v825 = vpack.c.b16 %v636, %v629
      %v826 = vpack.c.b16 %v637, %v630
      %v827 = vpack.c.b16 %v638, %v631
      %v828 = vpack.c.b16 %v646, %v639
      %v829 = vpack.c.b16 %v647, %v640
      %v830 = vpack.c.b16 %v648, %v641
      %v831 = vpack.c.b16 %v649, %v642
      %v832 = vpack.c.b16 %v650, %v643
      %v833 = vpack.c.b16 %v651, %v644
      %v834 = vpack.c.b16 %v652, %v645
      %v835 = vpack.c.b16 %v660, %v653
      %v836 = vpack.c.b16 %v661, %v654
      %v837 = vpack.c.b16 %v662, %v655
      %v838 = vpack.c.b16 %v663, %v656
      %v839 = vpack.c.b16 %v664, %v657
      %v840 = vpack.c.b16 %v665, %v658
      %v841 = vpack.c.b16 %v666, %v659
      %v842 = vpack.c.b16 %v674, %v667
      %v843 = vpack.c.b16 %v675, %v668
      %v844 = vpack.c.b16 %v676, %v669
      %v845 = vpack.c.b16 %v677, %v670
      %v846 = vpack.c.b16 %v678, %v671
      %v847 = vpack.c.b16 %v679, %v672
      %v848 = vpack.c.b16 %v680, %v673
      %v849 = vpack.c.b16 %v688, %v681
      %v850 = vpack.c.b16 %v689, %v682
      %v851 = vpack.c.b16 %v690, %v683
      %v852 = vpack.c.b16 %v691, %v684
      %v853 = vpack.c.b16 %v692, %v685
      %v854 = vpack.c.b16 %v693, %v686
      %v855 = vpack.c.b16 %v694, %v687
      %v856 = vpack.c.b16 %v702, %v695
      %v857 = vpack.c.b16 %v703, %v696
      %v858 = vpack.c.b16 %v704, %v697
      %v859 = vpack.c.b16 %v705, %v698
      %v860 = vpack.c.b16 %v706, %v699
      %v861 = vpack.c.b16 %v707, %v700
      %v862 = vpack.c.b16 %v708, %v701
      %v863 = vpack.c.b16 %v716, %v709
      %v864 = vpack.c.b16 %v717, %v710
      %v865 = vpack.c.b16 %v718, %v711
      %v866 = vpack.c.b16 %v719, %v712
      %v867 = vpack.c.b16 %v720, %v713
      %v868 = vpack.c.b16 %v721, %v714
      %v869 = vpack.c.b16 %v722, %v715
      %v870 = vpack.c.b16 %v730, %v723
      %v871 = vpack.c.b16 %v731, %v724
      %v872 = vpack.c.b16 %v732, %v725
      %v873 = vpack.c.b16 %v733, %v726
      %v874 = vpack.c.b16 %v734, %v727
      %v875 = vpack.c.b16 %v735, %v728
      %v876 = vpack.c.b16 %v736, %v729
      %v877 = vpack.c.b16 %v744, %v737
      %v878 = vpack.c.b16 %v745, %v738
      %v879 = vpack.c.b16 %v746, %v739
      %v880 = vpack.c.b16 %v747, %v740
      %v881 = vpack.c.b16 %v748, %v741
      %v882 = vpack.c.b16 %v749, %v742
      %v883 = vpack.c.b16 %v750, %v743
      %v884 = vpack.c.b16 %v758, %v751
      %v885 = vpack.c.b16 %v759, %v752
      %v886 = vpack.c.b16 %v760, %v753
      %v887 = vpack.c.b16 %v761, %v754
      %v888 = vpack.c.b16 %v762, %v755
      %v889 = vpack.c.b16 %v763, %v756
      %v890 = vpack.c.b16 %v764, %v757
      %v891 = vpack.c.b16 %v772, %v765
      %v892 = vpack.c.b16 %v773, %v766
      %v893 = vpack.c.b16 %v774, %v767
      %v894 = vpack.c.b16 %v775, %v768
      %v895 = vpack.c.b16 %v776, %v769
      %v896 = vpack.c.b16 %v777, %v770
      %v897 = vpack.c.b16 %v778, %v771
      %v898 = vpack.c.b16 %v786, %v779
      %v899 = vpack.c.b16 %v787, %v780
      %v900 = vpack.c.b16 %v788, %v781
      %v901 = vpack.c.b16 %v789, %v782
      %v902 = vpack.c.b16 %v790, %v783
      %v903 = vpack.c.b16 %v791, %v784
      %v904 = vpack.c.b16 %v792, %v785
      %v1109 = vunpack.c.l.b16 %v333
      %v1110 = vunpack.c.l.b16 %v334
      %v1111 = vunpack.c.l.b16 %v335
      %v1112 = vunpack.c.l.b16 %v336
      %v1113 = vunpack.c.l.b16 %v337
      %v1114 = vunpack.c.l.b16 %v338
      %v1115 = vunpack.c.l.b16 %v339
      %v1116 = vunpack.c.l.b16 %v340
      %v1117 = vunpack.c.l.b16 %v341
      %v1118 = vunpack.c.l.b16 %v342
      %v1119 = vunpack.c.l.b16 %v343
      %v1120 = vunpack.c.l.b16 %v344
      %v1121 = vunpack.c.l.b16 %v345
      %v1122 = vunpack.c.l.b16 %v346
      %v1123 = vunpack.c.l.b16 %v347
      %v1124 = vunpack.c.l.b16 %v348
      %v1125 = vunpack.c.l.b16 %v349
      %v1126 = vunpack.c.l.b16 %v350
      %v1127 = vunpack.c.l.b16 %v351
      %v1128 = vunpack.c.l.b16 %v352
      %v1129 = vunpack.c.l.b16 %v353
      %v1130 = vunpack.c.l.b16 %v354
      %v1131 = vunpack.c.l.b16 %v355
      %v1132 = vunpack.c.l.b16 %v356
      %v1133 = vunpack.c.l.b16 %v357
      %v1134 = vunpack.c.l.b16 %v358
      %v1135 = vunpack.c.l.b16 %v359
      %v1136 = vunpack.c.l.b16 %v360
      %v1137 = vunpack.c.l.b16 %v361
      %v1138 = vunpack.c.l.b16 %v362
      %v1139 = vunpack.c.l.b16 %v363
      %v1140 = vunpack.c.l.b16 %v364
      %v1141 = vunpack.c.l.b16 %v365
      %v1142 = vunpack.c.l.b16 %v366
      %v1143 = vunpack.c.l.b16 %v367
      %v1144 = vunpack.c.l.b16 %v368
      %v1145 = vunpack.c.l.b16 %v369
      %v1146 = vunpack.c.l.b16 %v370
      %v1147 = vunpack.c.l.b16 %v371
      %v1148 = vunpack.c.l.b16 %v372
      %v1149 = vunpack.c.l.b16 %v373
      %v1150 = vunpack.c.l.b16 %v374
      %v1151 = vunpack.c.l.b16 %v375
      %v1152 = vunpack.c.l.b16 %v376
      %v1153 = vunpack.c.l.b16 %v377
      %v1154 = vunpack.c.l.b16 %v378
      %v1155 = vunpack.c.l.b16 %v379
      %v1156 = vunpack.c.l.b16 %v380
      %v1157 = vunpack.c.l.b16 %v381
      %v1158 = vunpack.c.l.b16 %v382
      %v1159 = vunpack.c.l.b16 %v383
      %v1160 = vunpack.c.l.b16 %v384
      %v1161 = vunpack.c.l.b16 %v385
      %v1162 = vunpack.c.l.b16 %v386
      %v1163 = vunpack.c.l.b16 %v387
      %v1164 = vunpack.c.l.b16 %v388
      %v1165 = vunpack.c.l.b16 %v389
      %v1166 = vunpack.c.l.b16 %v390
      %v1167 = vunpack.c.l.b16 %v391
      %v1168 = vunpack.c.l.b16 %v392
      %v1169 = vunpack.c.l.b16 %v393
      %v1170 = vunpack.c.l.b16 %v394
      %v1171 = vunpack.c.l.b16 %v395
      %v1172 = vunpack.c.l.b16 %v396
      %v1173 = vunpack.c.l.b16 %v397
      %v1174 = vunpack.c.l.b16 %v398
      %v1175 = vunpack.c.l.b16 %v399
      %v1176 = vunpack.c.l.b16 %v400
      %v1177 = vunpack.c.l.b16 %v401
      %v1178 = vunpack.c.l.b16 %v402
      %v1179 = vunpack.c.l.b16 %v403
      %v1180 = vunpack.c.l.b16 %v404
      %v1181 = vunpack.c.l.b16 %v405
      %v1182 = vunpack.c.l.b16 %v406
      %v1183 = vunpack.c.l.b16 %v407
      %v1184 = vunpack.c.l.b16 %v408
      %v1185 = vunpack.c.l.b16 %v409
      %v1186 = vunpack.c.l.b16 %v410
      %v1187 = vunpack.c.l.b16 %v411
      %v1188 = vunpack.c.l.b16 %v412
      %v1189 = vunpack.c.l.b16 %v413
      %v1190 = vunpack.c.l.b16 %v414
      %v1191 = vunpack.c.l.b16 %v415
      %v1192 = vunpack.c.l.b16 %v416
      %v1193 = vunpack.c.l.b16 %v417
      %v1194 = vunpack.c.l.b16 %v418
      %v1195 = vunpack.c.l.b16 %v419
      %v1196 = vunpack.c.l.b16 %v420
      %v1197 = vunpack.c.l.b16 %v421
      %v1198 = vunpack.c.l.b16 %v422
      %v1199 = vunpack.c.l.b16 %v423
      %v1200 = vunpack.c.l.b16 %v424
      %v1201 = vunpack.c.l.b16 %v425
      %v1202 = vunpack.c.l.b16 %v426
      %v1203 = vunpack.c.l.b16 %v427
      %v1204 = vunpack.c.l.b16 %v428
      %v1205 = vunpack.c.l.b16 %v429
      %v1206 = vunpack.c.l.b16 %v430
      %v1207 = vunpack.c.l.b16 %v431
      %v1208 = vunpack.c.l.b16 %v432
      %v1209 = vunpack.c.l.b16 %v433
      %v1210 = vunpack.c.l.b16 %v434
      %v1211 = vunpack.c.l.b16 %v435
      %v1212 = vunpack.c.l.b16 %v436
      %v1213 = vunpack.c.l.b16 %v437
      %v1214 = vunpack.c.l.b16 %v438
      %v1215 = vunpack.c.l.b16 %v439
      %v1216 = vunpack.c.l.b16 %v440
      %v1217 = vpack.c.b16 %v1110, %v1109
      %v1218 = vpack.c.b16 %v1112, %v1111
      %v1219 = vpack.c.b16 %v1114, %v1113
      %v1220 = vpack.c.b16 %v1116, %v1115
      %v1221 = vpack.c.b16 %v1118, %v1117
      %v1222 = vpack.c.b16 %v1120, %v1119
      %v1223 = vpack.c.b16 %v1122, %v1121
      %v1224 = vpack.c.b16 %v1124, %v1123
      %v1225 = vpack.c.b16 %v1126, %v1125
      %v1226 = vpack.c.b16 %v1128, %v1127
      %v1227 = vpack.c.b16 %v1130, %v1129
      %v1228 = vpack.c.b16 %v1132, %v1131
      %v1229 = vpack.c.b16 %v1134, %v1133
      %v1230 = vpack.c.b16 %v1136, %v1135
      %v1231 = vpack.c.b16 %v1138, %v1137
      %v1232 = vpack.c.b16 %v1140, %v1139
      %v1233 = vpack.c.b16 %v1142, %v1141
      %v1234 = vpack.c.b16 %v1144, %v1143
      %v1235 = vpack.c.b16 %v1146, %v1145
      %v1236 = vpack.c.b16 %v1148, %v1147
      %v1237 = vpack.c.b16 %v1150, %v1149
      %v1238 = vpack.c.b16 %v1152, %v1151
      %v1239 = vpack.c.b16 %v1154, %v1153
      %v1240 = vpack.c.b16 %v1156, %v1155
      %v1241 = vpack.c.b16 %v1158, %v1157
      %v1242 = vpack.c.b16 %v1160, %v1159
      %v1243 = vpack.c.b16 %v1162, %v1161
      %v1244 = vpack.c.b16 %v1164, %v1163
      %v1245 = vpack.c.b16 %v1166, %v1165
      %v1246 = vpack.c.b16 %v1168, %v1167
      %v1247 = vpack.c.b16 %v1170, %v1169
      %v1248 = vpack.c.b16 %v1172, %v1171
      %v1249 = vpack.c.b16 %v1174, %v1173
      %v1250 = vpack.c.b16 %v1176, %v1175
      %v1251 = vpack.c.b16 %v1178, %v1177
      %v1252 = vpack.c.b16 %v1180, %v1179
      %v1253 = vpack.c.b16 %v1182, %v1181
      %v1254 = vpack.c.b16 %v1184, %v1183
      %v1255 = vpack.c.b16 %v1186, %v1185
      %v1256 = vpack.c.b16 %v1188, %v1187
      %v1257 = vpack.c.b16 %v1190, %v1189
      %v1258 = vpack.c.b16 %v1192, %v1191
      %v1259 = vpack.c.b16 %v1194, %v1193
      %v1260 = vpack.c.b16 %v1196, %v1195
      %v1261 = vpack.c.b16 %v1198, %v1197
      %v1262 = vpack.c.b16 %v1200, %v1199
      %v1263 = vpack.c.b16 %v1202, %v1201
      %v1264 = vpack.c.b16 %v1204, %v1203
      %v1265 = vpack.c.b16 %v1206, %v1205
      %v1266 = vpack.c.b16 %v1208, %v1207
      %v1267 = vpack.c.b16 %v1210, %v1209
      %v1268 = vpack.c.b16 %v1212, %v1211
      %v1269 = vpack.c.b16 %v1214, %v1213
      %v1270 = vpack.c.b16 %v1216, %v1215
      %vm1325 = vcmask 785408
      %v1327 = vsel %vm1325, %v799, 0
      %v1330 = vsel %vm1325, %v806, 0
      %v1333 = vsel %vm1325, %v813, 0
      %v1336 = vsel %vm1325, %v820, 0
      %v1339 = vsel %vm1325, %v827, 0
      %v1342 = vsel %vm1325, %v834, 0
      %v1345 = vsel %vm1325, %v841, 0
      %v1348 = vsel %vm1325, %v848, 0
      %v1351 = vsel %vm1325, %v855, 0
      %v1354 = vsel %vm1325, %v862, 0
      %v1357 = vsel %vm1325, %v869, 0
      %v1360 = vsel %vm1325, %v876, 0
      %v1363 = vsel %vm1325, %v883, 0
      %v1366 = vsel %vm1325, %v890, 0
      %v1369 = vsel %vm1325, %v897, 0
      %v1372 = vsel %vm1325, %v904, 0
      %1374 = vmatpush.bf16.msra.mxu0 %v1224
      %1375 = vmatpush.bf16.msra.mxu0 %v1223
      %1376 = vmatpush.bf16.msra.mxu0 %v1222
      %1377 = vmatpush.bf16.msra.mxu0 %v1221
      %1378 = vmatpush.bf16.msra.mxu0 %v1220
      %1379 = vmatpush.bf16.msra.mxu0 %v1219
      %1380 = vmatpush.bf16.msra.mxu0 %v1218
      %1381 = vmatpush.bf16.msra.mxu0 %v1217
      %1382 = vmatmul.bf16.gmra.mxu0 %v793
      %v1383 = vpop.f32.mrf.mxu0
      %v1384 = vadd.f32 0.0, %v1383
      %v1385 = vpop.f32.mrf.mxu0
      %v1386 = vadd.f32 0.0, %v1385
      %1387 = vmatmul.bf16.gmra.mxu0 %v800
      %v1388 = vpop.f32.mrf.mxu0
      %v1389 = vadd.f32 0.0, %v1388
      %v1390 = vpop.f32.mrf.mxu0
      %v1391 = vadd.f32 0.0, %v1390
      %1392 = vmatmul.bf16.gmra.mxu0 %v807
      %v1393 = vpop.f32.mrf.mxu0
      %v1394 = vadd.f32 0.0, %v1393
      %v1395 = vpop.f32.mrf.mxu0
      %v1396 = vadd.f32 0.0, %v1395
      %1397 = vmatmul.bf16.gmra.mxu0 %v814
      %v1398 = vpop.f32.mrf.mxu0
      %v1399 = vadd.f32 0.0, %v1398
      %v1400 = vpop.f32.mrf.mxu0
      %v1401 = vadd.f32 0.0, %v1400
      %1402 = vmatmul.bf16.gmra.mxu0 %v821
      %v1403 = vpop.f32.mrf.mxu0
      %v1404 = vadd.f32 0.0, %v1403
      %v1405 = vpop.f32.mrf.mxu0
      %v1406 = vadd.f32 0.0, %v1405
      %1407 = vmatmul.bf16.gmra.mxu0 %v828
      %v1408 = vpop.f32.mrf.mxu0
      %v1409 = vadd.f32 0.0, %v1408
      %v1410 = vpop.f32.mrf.mxu0
      %v1411 = vadd.f32 0.0, %v1410
      %1412 = vmatmul.bf16.gmra.mxu0 %v835
      %v1413 = vpop.f32.mrf.mxu0
      %v1414 = vadd.f32 0.0, %v1413
      %v1415 = vpop.f32.mrf.mxu0
      %v1416 = vadd.f32 0.0, %v1415
      %1417 = vmatmul.bf16.gmra.mxu0 %v842
      %v1418 = vpop.f32.mrf.mxu0
      %v1419 = vadd.f32 0.0, %v1418
      %v1420 = vpop.f32.mrf.mxu0
      %v1421 = vadd.f32 0.0, %v1420
      %1422 = vmatmul.bf16.gmra.mxu0 %v849
      %v1423 = vpop.f32.mrf.mxu0
      %v1424 = vadd.f32 0.0, %v1423
      %v1425 = vpop.f32.mrf.mxu0
      %v1426 = vadd.f32 0.0, %v1425
      %1427 = vmatmul.bf16.gmra.mxu0 %v856
      %v1428 = vpop.f32.mrf.mxu0
      %v1429 = vadd.f32 0.0, %v1428
      %v1430 = vpop.f32.mrf.mxu0
      %v1431 = vadd.f32 0.0, %v1430
      %1432 = vmatmul.bf16.gmra.mxu0 %v863
      %v1433 = vpop.f32.mrf.mxu0
      %v1434 = vadd.f32 0.0, %v1433
      %v1435 = vpop.f32.mrf.mxu0
      %v1436 = vadd.f32 0.0, %v1435
      %1437 = vmatmul.bf16.gmra.mxu0 %v870
      %v1438 = vpop.f32.mrf.mxu0
      %v1439 = vadd.f32 0.0, %v1438
      %v1440 = vpop.f32.mrf.mxu0
      %v1441 = vadd.f32 0.0, %v1440
      %1442 = vmatmul.bf16.gmra.mxu0 %v877
      %v1443 = vpop.f32.mrf.mxu0
      %v1444 = vadd.f32 0.0, %v1443
      %v1445 = vpop.f32.mrf.mxu0
      %v1446 = vadd.f32 0.0, %v1445
      %1447 = vmatmul.bf16.gmra.mxu0 %v884
      %v1448 = vpop.f32.mrf.mxu0
      %v1449 = vadd.f32 0.0, %v1448
      %v1450 = vpop.f32.mrf.mxu0
      %v1451 = vadd.f32 0.0, %v1450
      %1452 = vmatmul.bf16.gmra.mxu0 %v891
      %v1453 = vpop.f32.mrf.mxu0
      %v1454 = vadd.f32 0.0, %v1453
      %v1455 = vpop.f32.mrf.mxu0
      %v1456 = vadd.f32 0.0, %v1455
      %1457 = vmatmul.bf16.gmra.mxu0 %v898
      %v1458 = vpop.f32.mrf.mxu0
      %v1459 = vadd.f32 0.0, %v1458
      %v1460 = vpop.f32.mrf.mxu0
      %v1461 = vadd.f32 0.0, %v1460
      %1462 = vdwg.mxu0
      %1463 = vmatpush.bf16.msra.mxu0 %v1232
      %1464 = vmatpush.bf16.msra.mxu0 %v1231
      %1465 = vmatpush.bf16.msra.mxu0 %v1230
      %1466 = vmatpush.bf16.msra.mxu0 %v1229
      %1467 = vmatpush.bf16.msra.mxu0 %v1228
      %1468 = vmatpush.bf16.msra.mxu0 %v1227
      %1469 = vmatpush.bf16.msra.mxu0 %v1226
      %1470 = vmatpush.bf16.msra.mxu0 %v1225
      %1471 = vmatmul.bf16.gmra.mxu0 %v794
      %v1472 = vpop.f32.mrf.mxu0
      %v1473 = vadd.f32 %v1384, %v1472
      %v1474 = vpop.f32.mrf.mxu0
      %v1475 = vadd.f32 %v1386, %v1474
      %1476 = vmatmul.bf16.gmra.mxu0 %v801
      %v1477 = vpop.f32.mrf.mxu0
      %v1478 = vadd.f32 %v1389, %v1477
      %v1479 = vpop.f32.mrf.mxu0
      %v1480 = vadd.f32 %v1391, %v1479
      %1481 = vmatmul.bf16.gmra.mxu0 %v808
      %v1482 = vpop.f32.mrf.mxu0
      %v1483 = vadd.f32 %v1394, %v1482
      %v1484 = vpop.f32.mrf.mxu0
      %v1485 = vadd.f32 %v1396, %v1484
      %1486 = vmatmul.bf16.gmra.mxu0 %v815
      %v1487 = vpop.f32.mrf.mxu0
      %v1488 = vadd.f32 %v1399, %v1487
      %v1489 = vpop.f32.mrf.mxu0
      %v1490 = vadd.f32 %v1401, %v1489
      %1491 = vmatmul.bf16.gmra.mxu0 %v822
      %v1492 = vpop.f32.mrf.mxu0
      %v1493 = vadd.f32 %v1404, %v1492
      %v1494 = vpop.f32.mrf.mxu0
      %v1495 = vadd.f32 %v1406, %v1494
      %1496 = vmatmul.bf16.gmra.mxu0 %v829
      %v1497 = vpop.f32.mrf.mxu0
      %v1498 = vadd.f32 %v1409, %v1497
      %v1499 = vpop.f32.mrf.mxu0
      %v1500 = vadd.f32 %v1411, %v1499
      %1501 = vmatmul.bf16.gmra.mxu0 %v836
      %v1502 = vpop.f32.mrf.mxu0
      %v1503 = vadd.f32 %v1414, %v1502
      %v1504 = vpop.f32.mrf.mxu0
      %v1505 = vadd.f32 %v1416, %v1504
      %1506 = vmatmul.bf16.gmra.mxu0 %v843
      %v1507 = vpop.f32.mrf.mxu0
      %v1508 = vadd.f32 %v1419, %v1507
      %v1509 = vpop.f32.mrf.mxu0
      %v1510 = vadd.f32 %v1421, %v1509
      %1511 = vmatmul.bf16.gmra.mxu0 %v850
      %v1512 = vpop.f32.mrf.mxu0
      %v1513 = vadd.f32 %v1424, %v1512
      %v1514 = vpop.f32.mrf.mxu0
      %v1515 = vadd.f32 %v1426, %v1514
      %1516 = vmatmul.bf16.gmra.mxu0 %v857
      %v1517 = vpop.f32.mrf.mxu0
      %v1518 = vadd.f32 %v1429, %v1517
      %v1519 = vpop.f32.mrf.mxu0
      %v1520 = vadd.f32 %v1431, %v1519
      %1521 = vmatmul.bf16.gmra.mxu0 %v864
      %v1522 = vpop.f32.mrf.mxu0
      %v1523 = vadd.f32 %v1434, %v1522
      %v1524 = vpop.f32.mrf.mxu0
      %v1525 = vadd.f32 %v1436, %v1524
      %1526 = vmatmul.bf16.gmra.mxu0 %v871
      %v1527 = vpop.f32.mrf.mxu0
      %v1528 = vadd.f32 %v1439, %v1527
      %v1529 = vpop.f32.mrf.mxu0
      %v1530 = vadd.f32 %v1441, %v1529
      %1531 = vmatmul.bf16.gmra.mxu0 %v878
      %v1532 = vpop.f32.mrf.mxu0
      %v1533 = vadd.f32 %v1444, %v1532
      %v1534 = vpop.f32.mrf.mxu0
      %v1535 = vadd.f32 %v1446, %v1534
      %1536 = vmatmul.bf16.gmra.mxu0 %v885
      %v1537 = vpop.f32.mrf.mxu0
      %v1538 = vadd.f32 %v1449, %v1537
      %v1539 = vpop.f32.mrf.mxu0
      %v1540 = vadd.f32 %v1451, %v1539
      %1541 = vmatmul.bf16.gmra.mxu0 %v892
      %v1542 = vpop.f32.mrf.mxu0
      %v1543 = vadd.f32 %v1454, %v1542
      %v1544 = vpop.f32.mrf.mxu0
      %v1545 = vadd.f32 %v1456, %v1544
      %1546 = vmatmul.bf16.gmra.mxu0 %v899
      %v1547 = vpop.f32.mrf.mxu0
      %v1548 = vadd.f32 %v1459, %v1547
      %v1549 = vpop.f32.mrf.mxu0
      %v1550 = vadd.f32 %v1461, %v1549
      %1551 = vdwg.mxu0
      %1552 = vmatpush.bf16.msra.mxu0 %v1240
      %1553 = vmatpush.bf16.msra.mxu0 %v1239
      %1554 = vmatpush.bf16.msra.mxu0 %v1238
      %1555 = vmatpush.bf16.msra.mxu0 %v1237
      %1556 = vmatpush.bf16.msra.mxu0 %v1236
      %1557 = vmatpush.bf16.msra.mxu0 %v1235
      %1558 = vmatpush.bf16.msra.mxu0 %v1234
      %1559 = vmatpush.bf16.msra.mxu0 %v1233
      %1560 = vmatmul.bf16.gmra.mxu0 %v795
      %v1561 = vpop.f32.mrf.mxu0
      %v1562 = vadd.f32 %v1473, %v1561
      %v1563 = vpop.f32.mrf.mxu0
      %v1564 = vadd.f32 %v1475, %v1563
      %1565 = vmatmul.bf16.gmra.mxu0 %v802
      %v1566 = vpop.f32.mrf.mxu0
      %v1567 = vadd.f32 %v1478, %v1566
      %v1568 = vpop.f32.mrf.mxu0
      %v1569 = vadd.f32 %v1480, %v1568
      %1570 = vmatmul.bf16.gmra.mxu0 %v809
      %v1571 = vpop.f32.mrf.mxu0
      %v1572 = vadd.f32 %v1483, %v1571
      %v1573 = vpop.f32.mrf.mxu0
      %v1574 = vadd.f32 %v1485, %v1573
      %1575 = vmatmul.bf16.gmra.mxu0 %v816
      %v1576 = vpop.f32.mrf.mxu0
      %v1577 = vadd.f32 %v1488, %v1576
      %v1578 = vpop.f32.mrf.mxu0
      %v1579 = vadd.f32 %v1490, %v1578
      %1580 = vmatmul.bf16.gmra.mxu0 %v823
      %v1581 = vpop.f32.mrf.mxu0
      %v1582 = vadd.f32 %v1493, %v1581
      %v1583 = vpop.f32.mrf.mxu0
      %v1584 = vadd.f32 %v1495, %v1583
      %1585 = vmatmul.bf16.gmra.mxu0 %v830
      %v1586 = vpop.f32.mrf.mxu0
      %v1587 = vadd.f32 %v1498, %v1586
      %v1588 = vpop.f32.mrf.mxu0
      %v1589 = vadd.f32 %v1500, %v1588
      %1590 = vmatmul.bf16.gmra.mxu0 %v837
      %v1591 = vpop.f32.mrf.mxu0
      %v1592 = vadd.f32 %v1503, %v1591
      %v1593 = vpop.f32.mrf.mxu0
      %v1594 = vadd.f32 %v1505, %v1593
      %1595 = vmatmul.bf16.gmra.mxu0 %v844
      %v1596 = vpop.f32.mrf.mxu0
      %v1597 = vadd.f32 %v1508, %v1596
      %v1598 = vpop.f32.mrf.mxu0
      %v1599 = vadd.f32 %v1510, %v1598
      %1600 = vmatmul.bf16.gmra.mxu0 %v851
      %v1601 = vpop.f32.mrf.mxu0
      %v1602 = vadd.f32 %v1513, %v1601
      %v1603 = vpop.f32.mrf.mxu0
      %v1604 = vadd.f32 %v1515, %v1603
      %1605 = vmatmul.bf16.gmra.mxu0 %v858
      %v1606 = vpop.f32.mrf.mxu0
      %v1607 = vadd.f32 %v1518, %v1606
      %v1608 = vpop.f32.mrf.mxu0
      %v1609 = vadd.f32 %v1520, %v1608
      %1610 = vmatmul.bf16.gmra.mxu0 %v865
      %v1611 = vpop.f32.mrf.mxu0
      %v1612 = vadd.f32 %v1523, %v1611
      %v1613 = vpop.f32.mrf.mxu0
      %v1614 = vadd.f32 %v1525, %v1613
      %1615 = vmatmul.bf16.gmra.mxu0 %v872
      %v1616 = vpop.f32.mrf.mxu0
      %v1617 = vadd.f32 %v1528, %v1616
      %v1618 = vpop.f32.mrf.mxu0
      %v1619 = vadd.f32 %v1530, %v1618
      %1620 = vmatmul.bf16.gmra.mxu0 %v879
      %v1621 = vpop.f32.mrf.mxu0
      %v1622 = vadd.f32 %v1533, %v1621
      %v1623 = vpop.f32.mrf.mxu0
      %v1624 = vadd.f32 %v1535, %v1623
      %1625 = vmatmul.bf16.gmra.mxu0 %v886
      %v1626 = vpop.f32.mrf.mxu0
      %v1627 = vadd.f32 %v1538, %v1626
      %v1628 = vpop.f32.mrf.mxu0
      %v1629 = vadd.f32 %v1540, %v1628
      %1630 = vmatmul.bf16.gmra.mxu0 %v893
      %v1631 = vpop.f32.mrf.mxu0
      %v1632 = vadd.f32 %v1543, %v1631
      %v1633 = vpop.f32.mrf.mxu0
      %v1634 = vadd.f32 %v1545, %v1633
      %1635 = vmatmul.bf16.gmra.mxu0 %v900
      %v1636 = vpop.f32.mrf.mxu0
      %v1637 = vadd.f32 %v1548, %v1636
      %v1638 = vpop.f32.mrf.mxu0
      %v1639 = vadd.f32 %v1550, %v1638
      %1640 = vdwg.mxu0
      %1641 = vmatpush.bf16.msra.mxu0 %v1248
      %1642 = vmatpush.bf16.msra.mxu0 %v1247
      %1643 = vmatpush.bf16.msra.mxu0 %v1246
      %1644 = vmatpush.bf16.msra.mxu0 %v1245
      %1645 = vmatpush.bf16.msra.mxu0 %v1244
      %1646 = vmatpush.bf16.msra.mxu0 %v1243
      %1647 = vmatpush.bf16.msra.mxu0 %v1242
      %1648 = vmatpush.bf16.msra.mxu0 %v1241
      %1649 = vmatmul.bf16.gmra.mxu0 %v796
      %v1650 = vpop.f32.mrf.mxu0
      %v1651 = vadd.f32 %v1562, %v1650
      %v1652 = vpop.f32.mrf.mxu0
      %v1653 = vadd.f32 %v1564, %v1652
      %1654 = vmatmul.bf16.gmra.mxu0 %v803
      %v1655 = vpop.f32.mrf.mxu0
      %v1656 = vadd.f32 %v1567, %v1655
      %v1657 = vpop.f32.mrf.mxu0
      %v1658 = vadd.f32 %v1569, %v1657
      %1659 = vmatmul.bf16.gmra.mxu0 %v810
      %v1660 = vpop.f32.mrf.mxu0
      %v1661 = vadd.f32 %v1572, %v1660
      %v1662 = vpop.f32.mrf.mxu0
      %v1663 = vadd.f32 %v1574, %v1662
      %1664 = vmatmul.bf16.gmra.mxu0 %v817
      %v1665 = vpop.f32.mrf.mxu0
      %v1666 = vadd.f32 %v1577, %v1665
      %v1667 = vpop.f32.mrf.mxu0
      %v1668 = vadd.f32 %v1579, %v1667
      %1669 = vmatmul.bf16.gmra.mxu0 %v824
      %v1670 = vpop.f32.mrf.mxu0
      %v1671 = vadd.f32 %v1582, %v1670
      %v1672 = vpop.f32.mrf.mxu0
      %v1673 = vadd.f32 %v1584, %v1672
      %1674 = vmatmul.bf16.gmra.mxu0 %v831
      %v1675 = vpop.f32.mrf.mxu0
      %v1676 = vadd.f32 %v1587, %v1675
      %v1677 = vpop.f32.mrf.mxu0
      %v1678 = vadd.f32 %v1589, %v1677
      %1679 = vmatmul.bf16.gmra.mxu0 %v838
      %v1680 = vpop.f32.mrf.mxu0
      %v1681 = vadd.f32 %v1592, %v1680
      %v1682 = vpop.f32.mrf.mxu0
      %v1683 = vadd.f32 %v1594, %v1682
      %1684 = vmatmul.bf16.gmra.mxu0 %v845
      %v1685 = vpop.f32.mrf.mxu0
      %v1686 = vadd.f32 %v1597, %v1685
      %v1687 = vpop.f32.mrf.mxu0
      %v1688 = vadd.f32 %v1599, %v1687
      %1689 = vmatmul.bf16.gmra.mxu0 %v852
      %v1690 = vpop.f32.mrf.mxu0
      %v1691 = vadd.f32 %v1602, %v1690
      %v1692 = vpop.f32.mrf.mxu0
      %v1693 = vadd.f32 %v1604, %v1692
      %1694 = vmatmul.bf16.gmra.mxu0 %v859
      %v1695 = vpop.f32.mrf.mxu0
      %v1696 = vadd.f32 %v1607, %v1695
      %v1697 = vpop.f32.mrf.mxu0
      %v1698 = vadd.f32 %v1609, %v1697
      %1699 = vmatmul.bf16.gmra.mxu0 %v866
      %v1700 = vpop.f32.mrf.mxu0
      %v1701 = vadd.f32 %v1612, %v1700
      %v1702 = vpop.f32.mrf.mxu0
      %v1703 = vadd.f32 %v1614, %v1702
      %1704 = vmatmul.bf16.gmra.mxu0 %v873
      %v1705 = vpop.f32.mrf.mxu0
      %v1706 = vadd.f32 %v1617, %v1705
      %v1707 = vpop.f32.mrf.mxu0
      %v1708 = vadd.f32 %v1619, %v1707
      %1709 = vmatmul.bf16.gmra.mxu0 %v880
      %v1710 = vpop.f32.mrf.mxu0
      %v1711 = vadd.f32 %v1622, %v1710
      %v1712 = vpop.f32.mrf.mxu0
      %v1713 = vadd.f32 %v1624, %v1712
      %1714 = vmatmul.bf16.gmra.mxu0 %v887
      %v1715 = vpop.f32.mrf.mxu0
      %v1716 = vadd.f32 %v1627, %v1715
      %v1717 = vpop.f32.mrf.mxu0
      %v1718 = vadd.f32 %v1629, %v1717
      %1719 = vmatmul.bf16.gmra.mxu0 %v894
      %v1720 = vpop.f32.mrf.mxu0
      %v1721 = vadd.f32 %v1632, %v1720
      %v1722 = vpop.f32.mrf.mxu0
      %v1723 = vadd.f32 %v1634, %v1722
      %1724 = vmatmul.bf16.gmra.mxu0 %v901
      %v1725 = vpop.f32.mrf.mxu0
      %v1726 = vadd.f32 %v1637, %v1725
      %v1727 = vpop.f32.mrf.mxu0
      %v1728 = vadd.f32 %v1639, %v1727
      %1729 = vdwg.mxu0
      %1730 = vmatpush.bf16.msra.mxu0 %v1256
      %1731 = vmatpush.bf16.msra.mxu0 %v1255
      %1732 = vmatpush.bf16.msra.mxu0 %v1254
      %1733 = vmatpush.bf16.msra.mxu0 %v1253
      %1734 = vmatpush.bf16.msra.mxu0 %v1252
      %1735 = vmatpush.bf16.msra.mxu0 %v1251
      %1736 = vmatpush.bf16.msra.mxu0 %v1250
      %1737 = vmatpush.bf16.msra.mxu0 %v1249
      %1738 = vmatmul.bf16.gmra.mxu0 %v797
      %v1739 = vpop.f32.mrf.mxu0
      %v1740 = vadd.f32 %v1651, %v1739
      %v1741 = vpop.f32.mrf.mxu0
      %v1742 = vadd.f32 %v1653, %v1741
      %1743 = vmatmul.bf16.gmra.mxu0 %v804
      %v1744 = vpop.f32.mrf.mxu0
      %v1745 = vadd.f32 %v1656, %v1744
      %v1746 = vpop.f32.mrf.mxu0
      %v1747 = vadd.f32 %v1658, %v1746
      %1748 = vmatmul.bf16.gmra.mxu0 %v811
      %v1749 = vpop.f32.mrf.mxu0
      %v1750 = vadd.f32 %v1661, %v1749
      %v1751 = vpop.f32.mrf.mxu0
      %v1752 = vadd.f32 %v1663, %v1751
      %1753 = vmatmul.bf16.gmra.mxu0 %v818
      %v1754 = vpop.f32.mrf.mxu0
      %v1755 = vadd.f32 %v1666, %v1754
      %v1756 = vpop.f32.mrf.mxu0
      %v1757 = vadd.f32 %v1668, %v1756
      %1758 = vmatmul.bf16.gmra.mxu0 %v825
      %v1759 = vpop.f32.mrf.mxu0
      %v1760 = vadd.f32 %v1671, %v1759
      %v1761 = vpop.f32.mrf.mxu0
      %v1762 = vadd.f32 %v1673, %v1761
      %1763 = vmatmul.bf16.gmra.mxu0 %v832
      %v1764 = vpop.f32.mrf.mxu0
      %v1765 = vadd.f32 %v1676, %v1764
      %v1766 = vpop.f32.mrf.mxu0
      %v1767 = vadd.f32 %v1678, %v1766
      %1768 = vmatmul.bf16.gmra.mxu0 %v839
      %v1769 = vpop.f32.mrf.mxu0
      %v1770 = vadd.f32 %v1681, %v1769
      %v1771 = vpop.f32.mrf.mxu0
      %v1772 = vadd.f32 %v1683, %v1771
      %1773 = vmatmul.bf16.gmra.mxu0 %v846
      %v1774 = vpop.f32.mrf.mxu0
      %v1775 = vadd.f32 %v1686, %v1774
      %v1776 = vpop.f32.mrf.mxu0
      %v1777 = vadd.f32 %v1688, %v1776
      %1778 = vmatmul.bf16.gmra.mxu0 %v853
      %v1779 = vpop.f32.mrf.mxu0
      %v1780 = vadd.f32 %v1691, %v1779
      %v1781 = vpop.f32.mrf.mxu0
      %v1782 = vadd.f32 %v1693, %v1781
      %1783 = vmatmul.bf16.gmra.mxu0 %v860
      %v1784 = vpop.f32.mrf.mxu0
      %v1785 = vadd.f32 %v1696, %v1784
      %v1786 = vpop.f32.mrf.mxu0
      %v1787 = vadd.f32 %v1698, %v1786
      %1788 = vmatmul.bf16.gmra.mxu0 %v867
      %v1789 = vpop.f32.mrf.mxu0
      %v1790 = vadd.f32 %v1701, %v1789
      %v1791 = vpop.f32.mrf.mxu0
      %v1792 = vadd.f32 %v1703, %v1791
      %1793 = vmatmul.bf16.gmra.mxu0 %v874
      %v1794 = vpop.f32.mrf.mxu0
      %v1795 = vadd.f32 %v1706, %v1794
      %v1796 = vpop.f32.mrf.mxu0
      %v1797 = vadd.f32 %v1708, %v1796
      %1798 = vmatmul.bf16.gmra.mxu0 %v881
      %v1799 = vpop.f32.mrf.mxu0
      %v1800 = vadd.f32 %v1711, %v1799
      %v1801 = vpop.f32.mrf.mxu0
      %v1802 = vadd.f32 %v1713, %v1801
      %1803 = vmatmul.bf16.gmra.mxu0 %v888
      %v1804 = vpop.f32.mrf.mxu0
      %v1805 = vadd.f32 %v1716, %v1804
      %v1806 = vpop.f32.mrf.mxu0
      %v1807 = vadd.f32 %v1718, %v1806
      %1808 = vmatmul.bf16.gmra.mxu0 %v895
      %v1809 = vpop.f32.mrf.mxu0
      %v1810 = vadd.f32 %v1721, %v1809
      %v1811 = vpop.f32.mrf.mxu0
      %v1812 = vadd.f32 %v1723, %v1811
      %1813 = vmatmul.bf16.gmra.mxu0 %v902
      %v1814 = vpop.f32.mrf.mxu0
      %v1815 = vadd.f32 %v1726, %v1814
      %v1816 = vpop.f32.mrf.mxu0
      %v1817 = vadd.f32 %v1728, %v1816
      %1818 = vdwg.mxu0
      %1819 = vmatpush.bf16.msra.mxu0 %v1264
      %1820 = vmatpush.bf16.msra.mxu0 %v1263
      %1821 = vmatpush.bf16.msra.mxu0 %v1262
      %1822 = vmatpush.bf16.msra.mxu0 %v1261
      %1823 = vmatpush.bf16.msra.mxu0 %v1260
      %1824 = vmatpush.bf16.msra.mxu0 %v1259
      %1825 = vmatpush.bf16.msra.mxu0 %v1258
      %1826 = vmatpush.bf16.msra.mxu0 %v1257
      %1827 = vmatmul.bf16.gmra.mxu0 %v798
      %v1828 = vpop.f32.mrf.mxu0
      %v1829 = vadd.f32 %v1740, %v1828
      %v1830 = vpop.f32.mrf.mxu0
      %v1831 = vadd.f32 %v1742, %v1830
      %1832 = vmatmul.bf16.gmra.mxu0 %v805
      %v1833 = vpop.f32.mrf.mxu0
      %v1834 = vadd.f32 %v1745, %v1833
      %v1835 = vpop.f32.mrf.mxu0
      %v1836 = vadd.f32 %v1747, %v1835
      %1837 = vmatmul.bf16.gmra.mxu0 %v812
      %v1838 = vpop.f32.mrf.mxu0
      %v1839 = vadd.f32 %v1750, %v1838
      %v1840 = vpop.f32.mrf.mxu0
      %v1841 = vadd.f32 %v1752, %v1840
      %1842 = vmatmul.bf16.gmra.mxu0 %v819
      %v1843 = vpop.f32.mrf.mxu0
      %v1844 = vadd.f32 %v1755, %v1843
      %v1845 = vpop.f32.mrf.mxu0
      %v1846 = vadd.f32 %v1757, %v1845
      %1847 = vmatmul.bf16.gmra.mxu0 %v826
      %v1848 = vpop.f32.mrf.mxu0
      %v1849 = vadd.f32 %v1760, %v1848
      %v1850 = vpop.f32.mrf.mxu0
      %v1851 = vadd.f32 %v1762, %v1850
      %1852 = vmatmul.bf16.gmra.mxu0 %v833
      %v1853 = vpop.f32.mrf.mxu0
      %v1854 = vadd.f32 %v1765, %v1853
      %v1855 = vpop.f32.mrf.mxu0
      %v1856 = vadd.f32 %v1767, %v1855
      %1857 = vmatmul.bf16.gmra.mxu0 %v840
      %v1858 = vpop.f32.mrf.mxu0
      %v1859 = vadd.f32 %v1770, %v1858
      %v1860 = vpop.f32.mrf.mxu0
      %v1861 = vadd.f32 %v1772, %v1860
      %1862 = vmatmul.bf16.gmra.mxu0 %v847
      %v1863 = vpop.f32.mrf.mxu0
      %v1864 = vadd.f32 %v1775, %v1863
      %v1865 = vpop.f32.mrf.mxu0
      %v1866 = vadd.f32 %v1777, %v1865
      %1867 = vmatmul.bf16.gmra.mxu0 %v854
      %v1868 = vpop.f32.mrf.mxu0
      %v1869 = vadd.f32 %v1780, %v1868
      %v1870 = vpop.f32.mrf.mxu0
      %v1871 = vadd.f32 %v1782, %v1870
      %1872 = vmatmul.bf16.gmra.mxu0 %v861
      %v1873 = vpop.f32.mrf.mxu0
      %v1874 = vadd.f32 %v1785, %v1873
      %v1875 = vpop.f32.mrf.mxu0
      %v1876 = vadd.f32 %v1787, %v1875
      %1877 = vmatmul.bf16.gmra.mxu0 %v868
      %v1878 = vpop.f32.mrf.mxu0
      %v1879 = vadd.f32 %v1790, %v1878
      %v1880 = vpop.f32.mrf.mxu0
      %v1881 = vadd.f32 %v1792, %v1880
      %1882 = vmatmul.bf16.gmra.mxu0 %v875
      %v1883 = vpop.f32.mrf.mxu0
      %v1884 = vadd.f32 %v1795, %v1883
      %v1885 = vpop.f32.mrf.mxu0
      %v1886 = vadd.f32 %v1797, %v1885
      %1887 = vmatmul.bf16.gmra.mxu0 %v882
      %v1888 = vpop.f32.mrf.mxu0
      %v1889 = vadd.f32 %v1800, %v1888
      %v1890 = vpop.f32.mrf.mxu0
      %v1891 = vadd.f32 %v1802, %v1890
      %1892 = vmatmul.bf16.gmra.mxu0 %v889
      %v1893 = vpop.f32.mrf.mxu0
      %v1894 = vadd.f32 %v1805, %v1893
      %v1895 = vpop.f32.mrf.mxu0
      %v1896 = vadd.f32 %v1807, %v1895
      %1897 = vmatmul.bf16.gmra.mxu0 %v896
      %v1898 = vpop.f32.mrf.mxu0
      %v1899 = vadd.f32 %v1810, %v1898
      %v1900 = vpop.f32.mrf.mxu0
      %v1901 = vadd.f32 %v1812, %v1900
      %1902 = vmatmul.bf16.gmra.mxu0 %v903
      %v1903 = vpop.f32.mrf.mxu0
      %v1904 = vadd.f32 %v1815, %v1903
      %v1905 = vpop.f32.mrf.mxu0
      %v1906 = vadd.f32 %v1817, %v1905
      %1907 = vdwg.mxu0
      %1908 = vmatpush.bf16.msra.mxu0 0
      %1909 = vmatpush.bf16.msra.mxu0 0
      %1910 = vmatpush.bf16.msra.mxu0 %v1270
      %1911 = vmatpush.bf16.msra.mxu0 %v1269
      %1912 = vmatpush.bf16.msra.mxu0 %v1268
      %1913 = vmatpush.bf16.msra.mxu0 %v1267
      %1914 = vmatpush.bf16.msra.mxu0 %v1266
      %1915 = vmatpush.bf16.msra.mxu0 %v1265
      %1916 = vmatmul.bf16.gmra.mxu0 %v1327
      %v1917 = vpop.f32.mrf.mxu0
      %v1918 = vadd.f32 %v1829, %v1917
      %v1919 = vpop.f32.mrf.mxu0
      %v1920 = vadd.f32 %v1831, %v1919
      %1921 = vmatmul.bf16.gmra.mxu0 %v1330
      %v1922 = vpop.f32.mrf.mxu0
      %v1923 = vadd.f32 %v1834, %v1922
      %v1924 = vpop.f32.mrf.mxu0
      %v1925 = vadd.f32 %v1836, %v1924
      %1926 = vmatmul.bf16.gmra.mxu0 %v1333
      %v1927 = vpop.f32.mrf.mxu0
      %v1928 = vadd.f32 %v1839, %v1927
      %v1929 = vpop.f32.mrf.mxu0
      %v1930 = vadd.f32 %v1841, %v1929
      %1931 = vmatmul.bf16.gmra.mxu0 %v1336
      %v1932 = vpop.f32.mrf.mxu0
      %v1933 = vadd.f32 %v1844, %v1932
      %v1934 = vpop.f32.mrf.mxu0
      %v1935 = vadd.f32 %v1846, %v1934
      %1936 = vmatmul.bf16.gmra.mxu0 %v1339
      %v1937 = vpop.f32.mrf.mxu0
      %v1938 = vadd.f32 %v1849, %v1937
      %v1939 = vpop.f32.mrf.mxu0
      %v1940 = vadd.f32 %v1851, %v1939
      %1941 = vmatmul.bf16.gmra.mxu0 %v1342
      %v1942 = vpop.f32.mrf.mxu0
      %v1943 = vadd.f32 %v1854, %v1942
      %v1944 = vpop.f32.mrf.mxu0
      %v1945 = vadd.f32 %v1856, %v1944
      %1946 = vmatmul.bf16.gmra.mxu0 %v1345
      %v1947 = vpop.f32.mrf.mxu0
      %v1948 = vadd.f32 %v1859, %v1947
      %v1949 = vpop.f32.mrf.mxu0
      %v1950 = vadd.f32 %v1861, %v1949
      %1951 = vmatmul.bf16.gmra.mxu0 %v1348
      %v1952 = vpop.f32.mrf.mxu0
      %v1953 = vadd.f32 %v1864, %v1952
      %v1954 = vpop.f32.mrf.mxu0
      %v1955 = vadd.f32 %v1866, %v1954
      %1956 = vmatmul.bf16.gmra.mxu0 %v1351
      %v1957 = vpop.f32.mrf.mxu0
      %v1958 = vadd.f32 %v1869, %v1957
      %v1959 = vpop.f32.mrf.mxu0
      %v1960 = vadd.f32 %v1871, %v1959
      %1961 = vmatmul.bf16.gmra.mxu0 %v1354
      %v1962 = vpop.f32.mrf.mxu0
      %v1963 = vadd.f32 %v1874, %v1962
      %v1964 = vpop.f32.mrf.mxu0
      %v1965 = vadd.f32 %v1876, %v1964
      %1966 = vmatmul.bf16.gmra.mxu0 %v1357
      %v1967 = vpop.f32.mrf.mxu0
      %v1968 = vadd.f32 %v1879, %v1967
      %v1969 = vpop.f32.mrf.mxu0
      %v1970 = vadd.f32 %v1881, %v1969
      %1971 = vmatmul.bf16.gmra.mxu0 %v1360
      %v1972 = vpop.f32.mrf.mxu0
      %v1973 = vadd.f32 %v1884, %v1972
      %v1974 = vpop.f32.mrf.mxu0
      %v1975 = vadd.f32 %v1886, %v1974
      %1976 = vmatmul.bf16.gmra.mxu0 %v1363
      %v1977 = vpop.f32.mrf.mxu0
      %v1978 = vadd.f32 %v1889, %v1977
      %v1979 = vpop.f32.mrf.mxu0
      %v1980 = vadd.f32 %v1891, %v1979
      %1981 = vmatmul.bf16.gmra.mxu0 %v1366
      %v1982 = vpop.f32.mrf.mxu0
      %v1983 = vadd.f32 %v1894, %v1982
      %v1984 = vpop.f32.mrf.mxu0
      %v1985 = vadd.f32 %v1896, %v1984
      %1986 = vmatmul.bf16.gmra.mxu0 %v1369
      %v1987 = vpop.f32.mrf.mxu0
      %v1988 = vadd.f32 %v1899, %v1987
      %v1989 = vpop.f32.mrf.mxu0
      %v1990 = vadd.f32 %v1901, %v1989
      %1991 = vmatmul.bf16.gmra.mxu0 %v1372
      %v1992 = vpop.f32.mrf.mxu0
      %v1993 = vadd.f32 %v1904, %v1992
      %v1994 = vpop.f32.mrf.mxu0
      %v1995 = vadd.f32 %v1906, %v1994
      %1996 = vdwg.mxu0
      %v1997 = vld [vmem:[%s2] sm:$0x1]
      %v1999 = vperm.slane %v1997, 0
      %v2001 = vmul.f32 %v1918, %v1999
      %v2002 = vmul.f32 %v1920, %v1999
      %v2003 = vmul.f32 %v1923, %v1999
      %v2004 = vmul.f32 %v1925, %v1999
      %v2005 = vmul.f32 %v1928, %v1999
      %v2006 = vmul.f32 %v1930, %v1999
      %v2007 = vmul.f32 %v1933, %v1999
      %v2008 = vmul.f32 %v1935, %v1999
      %v2009 = vmul.f32 %v1938, %v1999
      %v2010 = vmul.f32 %v1940, %v1999
      %v2011 = vmul.f32 %v1943, %v1999
      %v2012 = vmul.f32 %v1945, %v1999
      %v2013 = vmul.f32 %v1948, %v1999
      %v2014 = vmul.f32 %v1950, %v1999
      %v2015 = vmul.f32 %v1953, %v1999
      %v2016 = vmul.f32 %v1955, %v1999
      %v2017 = vmul.f32 %v1958, %v1999
      %v2018 = vmul.f32 %v1960, %v1999
      %v2019 = vmul.f32 %v1963, %v1999
      %v2020 = vmul.f32 %v1965, %v1999
      %v2021 = vmul.f32 %v1968, %v1999
      %v2022 = vmul.f32 %v1970, %v1999
      %v2023 = vmul.f32 %v1973, %v1999
      %v2024 = vmul.f32 %v1975, %v1999
      %v2025 = vmul.f32 %v1978, %v1999
      %v2026 = vmul.f32 %v1980, %v1999
      %v2027 = vmul.f32 %v1983, %v1999
      %v2028 = vmul.f32 %v1985, %v1999
      %v2029 = vmul.f32 %v1988, %v1999
      %v2030 = vmul.f32 %v1990, %v1999
      %v2031 = vmul.f32 %v1993, %v1999
      %v2032 = vmul.f32 %v1995, %v1999
      %v2033 = vld [vmem:[%s3] sm:$0x1]
      %v2035 = vperm.slane %v2033, 0
      %v2037 = vadd.f32 %v2001, %v2035
      %v2038 = vadd.f32 %v2002, %v2035
      %v2039 = vadd.f32 %v2003, %v2035
      %v2040 = vadd.f32 %v2004, %v2035
      %v2041 = vadd.f32 %v2005, %v2035
      %v2042 = vadd.f32 %v2006, %v2035
      %v2043 = vadd.f32 %v2007, %v2035
      %v2044 = vadd.f32 %v2008, %v2035
      %v2045 = vadd.f32 %v2009, %v2035
      %v2046 = vadd.f32 %v2010, %v2035
      %v2047 = vadd.f32 %v2011, %v2035
      %v2048 = vadd.f32 %v2012, %v2035
      %v2049 = vadd.f32 %v2013, %v2035
      %v2050 = vadd.f32 %v2014, %v2035
      %v2051 = vadd.f32 %v2015, %v2035
      %v2052 = vadd.f32 %v2016, %v2035
      %v2053 = vadd.f32 %v2017, %v2035
      %v2054 = vadd.f32 %v2018, %v2035
      %v2055 = vadd.f32 %v2019, %v2035
      %v2056 = vadd.f32 %v2020, %v2035
      %v2057 = vadd.f32 %v2021, %v2035
      %v2058 = vadd.f32 %v2022, %v2035
      %v2059 = vadd.f32 %v2023, %v2035
      %v2060 = vadd.f32 %v2024, %v2035
      %v2061 = vadd.f32 %v2025, %v2035
      %v2062 = vadd.f32 %v2026, %v2035
      %v2063 = vadd.f32 %v2027, %v2035
      %v2064 = vadd.f32 %v2028, %v2035
      %v2065 = vadd.f32 %v2029, %v2035
      %v2066 = vadd.f32 %v2030, %v2035
      %v2067 = vadd.f32 %v2031, %v2035
      %v2068 = vadd.f32 %v2032, %v2035
      %v2069 = vmax.f32 %v2037, 0.0
      %v2070 = vmax.f32 %v2038, 0.0
      %v2071 = vmax.f32 %v2039, 0.0
      %v2072 = vmax.f32 %v2040, 0.0
      %v2073 = vmax.f32 %v2041, 0.0
      %v2074 = vmax.f32 %v2042, 0.0
      %v2075 = vmax.f32 %v2043, 0.0
      %v2076 = vmax.f32 %v2044, 0.0
      %v2077 = vmax.f32 %v2045, 0.0
      %v2078 = vmax.f32 %v2046, 0.0
      %v2079 = vmax.f32 %v2047, 0.0
      %v2080 = vmax.f32 %v2048, 0.0
      %v2081 = vmax.f32 %v2049, 0.0
      %v2082 = vmax.f32 %v2050, 0.0
      %v2083 = vmax.f32 %v2051, 0.0
      %v2084 = vmax.f32 %v2052, 0.0
      %v2085 = vmax.f32 %v2053, 0.0
      %v2086 = vmax.f32 %v2054, 0.0
      %v2087 = vmax.f32 %v2055, 0.0
      %v2088 = vmax.f32 %v2056, 0.0
      %v2089 = vmax.f32 %v2057, 0.0
      %v2090 = vmax.f32 %v2058, 0.0
      %v2091 = vmax.f32 %v2059, 0.0
      %v2092 = vmax.f32 %v2060, 0.0
      %v2093 = vmax.f32 %v2061, 0.0
      %v2094 = vmax.f32 %v2062, 0.0
      %v2095 = vmax.f32 %v2063, 0.0
      %v2096 = vmax.f32 %v2064, 0.0
      %v2097 = vmax.f32 %v2065, 0.0
      %v2098 = vmax.f32 %v2066, 0.0
      %v2099 = vmax.f32 %v2067, 0.0
      %v2100 = vmax.f32 %v2068, 0.0
      %vm2101 = vcmask 261120
      %2102 = vst.msk [vmem:[%s202] sm:$0xff] %vm2101, %v2069
      %2103 = vst.msk [vmem:[%s202 + $0x8] sm:$0xff] %vm2101, %v2070
      %2104 = vst.msk [vmem:[%s202 + $0x10] sm:$0xff] %vm2101, %v2071
      %2105 = vst.msk [vmem:[%s202 + $0x18] sm:$0xff] %vm2101, %v2072
      %2106 = vst.msk [vmem:[%s202 + $0x20] sm:$0xff] %vm2101, %v2073
      %2107 = vst.msk [vmem:[%s202 + $0x28] sm:$0xff] %vm2101, %v2074
      %2108 = vst.msk [vmem:[%s202 + $0x30] sm:$0xff] %vm2101, %v2075
      %2109 = vst.msk [vmem:[%s202 + $0x38] sm:$0xff] %vm2101, %v2076
      %2110 = vst.msk [vmem:[%s202 + $0x40] sm:$0xff] %vm2101, %v2077
      %2111 = vst.msk [vmem:[%s202 + $0x48] sm:$0xff] %vm2101, %v2078
      %2112 = vst.msk [vmem:[%s202 + $0x50] sm:$0xff] %vm2101, %v2079
      %2113 = vst.msk [vmem:[%s202 + $0x58] sm:$0xff] %vm2101, %v2080
      %2114 = vst.msk [vmem:[%s202 + $0x60] sm:$0xff] %vm2101, %v2081
      %2115 = vst.msk [vmem:[%s202 + $0x68] sm:$0xff] %vm2101, %v2082
      %2116 = vst.msk [vmem:[%s202 + $0x70] sm:$0xff] %vm2101, %v2083
      %2117 = vst.msk [vmem:[%s202 + $0x78] sm:$0xff] %vm2101, %v2084
      %2118 = vst.msk [vmem:[%s202 + $0x80] sm:$0xff] %vm2101, %v2085
      %2119 = vst.msk [vmem:[%s202 + $0x88] sm:$0xff] %vm2101, %v2086
      %2120 = vst.msk [vmem:[%s202 + $0x90] sm:$0xff] %vm2101, %v2087
      %2121 = vst.msk [vmem:[%s202 + $0x98] sm:$0xff] %vm2101, %v2088
      %2122 = vst.msk [vmem:[%s202 + $0xa0] sm:$0xff] %vm2101, %v2089
      %2123 = vst.msk [vmem:[%s202 + $0xa8] sm:$0xff] %vm2101, %v2090
      %2124 = vst.msk [vmem:[%s202 + $0xb0] sm:$0xff] %vm2101, %v2091
      %2125 = vst.msk [vmem:[%s202 + $0xb8] sm:$0xff] %vm2101, %v2092
      %2126 = vst.msk [vmem:[%s202 + $0xc0] sm:$0xff] %vm2101, %v2093
      %2127 = vst.msk [vmem:[%s202 + $0xc8] sm:$0xff] %vm2101, %v2094
      %2128 = vst.msk [vmem:[%s202 + $0xd0] sm:$0xff] %vm2101, %v2095
      %2129 = vst.msk [vmem:[%s202 + $0xd8] sm:$0xff] %vm2101, %v2096
      %2130 = vst.msk [vmem:[%s202 + $0xe0] sm:$0xff] %vm2101, %v2097
      %2131 = vst.msk [vmem:[%s202 + $0xe8] sm:$0xff] %vm2101, %v2098
      %2132 = vst.msk [vmem:[%s202 + $0xf0] sm:$0xff] %vm2101, %v2099
      %2133 = vst.msk [vmem:[%s202 + $0xf8] sm:$0xff] %vm2101, %v2100
      %s2134 = smul.u32 32, %s15
      %p2135 = scmp.lt.s32.totalorder %s2134, 63
      %s2136 = scalar_select %p2135, %s2134, 63
      %s2137 = smul.addr %s2136, 8
      %s2138 = scalar_lea.vmem %s4, %s2137
      // Predicated region
      $region37: #{_lambda_.7} parent=35 // pred_check
        %p2139 = pneg %p122
      $region38: #{_lambda_.7} parent=35 // pred_check_branch
        %2141 = sbr.rel (%p2139) target = $region40
      $region39: #{_lambda_.7} parent=35 // pred_region
        %s2142 = smul.u32 32, %s15
      $region40: #{_lambda_.7} parent=35 // pred_fallthru
        _
    $region36: #{_lambda_.7} parent=5 // pred_fallthru
      _
    %p2143 = scmp.le.s32.totalorder 2, %s10
    // Predicated region
    $region41: #{_lambda_.7} parent=5 // pred_check
      %p2144 = pneg %p2143
    $region42: #{_lambda_.7} parent=5 // pred_check_branch
      %2146 = sbr.rel (%p2144) target = $region44
    $region43: #{_lambda_.7} parent=5 // pred_region
      %s2147 = ssub.s32 %s10, 2
      // Predicated region
      $region45: #{_lambda_.7} parent=43 // pred_check
        %p2148 = pneg %p128
      $region46: #{_lambda_.7} parent=43 // pred_check_branch
        %2150 = sbr.rel (%p2148) target = $region48
      $region47: #{_lambda_.7} parent=43 // pred_region
        %s2151 = smul.u32 32, %s16
        %p2152 = scmp.lt.s32.totalorder %s2151, 63
        %s2153 = scalar_select %p2152, %s2151, 63
        %s2154 = smul.addr %s2153, 8
        %s2155 = scalar_lea.vmem %s4, %s2154
      $region48: #{_lambda_.7} parent=43 // pred_fallthru
        _
    $region44: #{_lambda_.7} parent=5 // pred_fallthru
      _
  $region6: #{_lambda_.7} parent=0 // loop_footer
    %s14 = sadd.s32 1, %s10
  $region7: #{_lambda_.7} parent=0 // loop_footer_branch
    %9 = sbr.rel target = $region3
  $region8: #{_lambda_.7} parent=0 // loop_exit
    _

// kernel: _lambda_.8
$region0: #{_lambda_.8}
  #allocation0 [shape = 'u32[]', space=smem, size = 0x4, offset = 0x4, fixed_abs, tag = 'smem constant byte address 0x4 - core index']
  #allocation1 [shape = 'u32[72,128]{1,0:T(1,128)}', space=vmem, size = 0x9000, scoped, tag = 'internal scratch']
  %s0 = inlined_call_operand.vmem [shape: bf16[64,864], index: 0, kind: input, shape index: {}]
  %s1 = inlined_call_operand.vmem [shape: bf16[864,32], index: 1, kind: input, shape index: {}]
  %s2 = inlined_call_operand.vmem [shape: f32[1,32], index: 2, kind: input, shape index: {}]
  %s3 = inlined_call_operand.vmem [shape: f32[1,32], index: 3, kind: input, shape index: {}]
  %s4 = inlined_call_operand.vmem [shape: f32[64,32], index: 4, kind: output, shape index: {}]
  %s5 = sld [smem:[#allocation0]]
  $region49: #{_lambda_.8} parent=0
    _
  %s7 = ssub.s32 1, %s5
  %s8 = scalar_select 0, %s7, %s5
  loop: start=0, step=1, limit=4
  $region2: #{_lambda_.8} parent=0 // loop_pre_header
    _
  $region3: #{_lambda_.8} parent=0 // loop_header
    %s10 = sphi 0, %s14
    %p11 = scmp.ge.s32.totalorder %s10, 4
    %s20 = sphi 0, %s22
    %s23 = sphi 0, %s20
    %s24 = sphi 0, %s23
    %s40 = sphi 0, %s24
    %s44 = sphi 0, %s44
    %s46 = sphi 0, %s44
    %s47 = sphi 0, %s46
    %s61 = sphi 0, %s47
    %s65 = sphi 0, %s65
    %s67 = sphi 0, %s65
    %s68 = sphi 0, %s67
    %s82 = sphi 0, %s68
    %s86 = sphi 0, %s86
    %s88 = sphi 0, %s86
    %s89 = sphi 0, %s88
    %s103 = sphi 0, %s89
    %s109 = sphi 0, %s111
    %s112 = sphi 0, %s109
    %s113 = sphi 0, %s112
    %s129 = sphi 0, %s113
  $region4: #{_lambda_.8} parent=0 // loop_header_branch
    %13 = sbr.rel (%p11) target = $region8
  $region5: #{_lambda_.8} parent=0 // loop_body
    %s15 = ssub.s32 %s10, 1
    %s16 = ssub.s32 %s10, 2
    %s17 = sadd.s32 %s10, 1
    %s18 = ssub.s32 %s10, %s17
    %p19 = scmp.eq.s32.totalorder %s18, 0
    %s21 = sadd.s32 %s20, 1
    %s22 = scalar_select %p19, %s20, %s21
    %p25 = pneg %p19
    %p26 = scmp.eq.s32.totalorder %s10, 1
    %p27 = por %p25, %p26
    %p28 = scmp.ne.s32.totalorder %s20, %s23
    %p29 = scmp.eq.s32.totalorder %s10, 0
    %p30 = por %p28, %p29
    %p31 = scmp.ne.s32.totalorder %s20, %s23
    %p32 = scmp.eq.s32.totalorder %s15, 1
    %p33 = por %p31, %p32
    %p34 = scmp.ne.s32.totalorder %s23, %s24
    %p35 = scmp.eq.s32.totalorder %s15, 0
    %p36 = por %p34, %p35
    %p37 = scmp.ne.s32.totalorder %s23, %s24
    %p38 = scmp.eq.s32.totalorder %s16, 1
    %p39 = por %p37, %p38
    %p41 = scmp.ne.s32.totalorder %s24, %s40
    %p42 = scmp.eq.s32.totalorder %s16, 0
    %p43 = por %p41, %p42
    %s45 = sadd.s32 %s44, 1
    %p48 = scmp.eq.s32.totalorder %s10, 1
    %p49 = scmp.ne.s32.totalorder %s44, %s46
    %p50 = scmp.eq.s32.totalorder %s10, 0
    %p51 = por %p49, %p50
    %p52 = scmp.ne.s32.totalorder %s44, %s46
    %p53 = scmp.eq.s32.totalorder %s15, 1
    %p54 = por %p52, %p53
    %p55 = scmp.ne.s32.totalorder %s46, %s47
    %p56 = scmp.eq.s32.totalorder %s15, 0
    %p57 = por %p55, %p56
    %p58 = scmp.ne.s32.totalorder %s46, %s47
    %p59 = scmp.eq.s32.totalorder %s16, 1
    %p60 = por %p58, %p59
    %p62 = scmp.ne.s32.totalorder %s47, %s61
    %p63 = scmp.eq.s32.totalorder %s16, 0
    %p64 = por %p62, %p63
    %s66 = sadd.s32 %s65, 1
    %p69 = scmp.eq.s32.totalorder %s10, 1
    %p70 = scmp.ne.s32.totalorder %s65, %s67
    %p71 = scmp.eq.s32.totalorder %s10, 0
    %p72 = por %p70, %p71
    %p73 = scmp.ne.s32.totalorder %s65, %s67
    %p74 = scmp.eq.s32.totalorder %s15, 1
    %p75 = por %p73, %p74
    %p76 = scmp.ne.s32.totalorder %s67, %s68
    %p77 = scmp.eq.s32.totalorder %s15, 0
    %p78 = por %p76, %p77
    %p79 = scmp.ne.s32.totalorder %s67, %s68
    %p80 = scmp.eq.s32.totalorder %s16, 1
    %p81 = por %p79, %p80
    %p83 = scmp.ne.s32.totalorder %s68, %s82
    %p84 = scmp.eq.s32.totalorder %s16, 0
    %p85 = por %p83, %p84
    %s87 = sadd.s32 %s86, 1
    %p90 = scmp.eq.s32.totalorder %s10, 1
    %p91 = scmp.ne.s32.totalorder %s86, %s88
    %p92 = scmp.eq.s32.totalorder %s10, 0
    %p93 = por %p91, %p92
    %p94 = scmp.ne.s32.totalorder %s86, %s88
    %p95 = scmp.eq.s32.totalorder %s15, 1
    %p96 = por %p94, %p95
    %p97 = scmp.ne.s32.totalorder %s88, %s89
    %p98 = scmp.eq.s32.totalorder %s15, 0
    %p99 = por %p97, %p98
    %p100 = scmp.ne.s32.totalorder %s88, %s89
    %p101 = scmp.eq.s32.totalorder %s16, 1
    %p102 = por %p100, %p101
    %p104 = scmp.ne.s32.totalorder %s89, %s103
    %p105 = scmp.eq.s32.totalorder %s16, 0
    %p106 = por %p104, %p105
    %s107 = ssub.s32 %s10, %s17
    %p108 = scmp.eq.s32.totalorder %s107, 0
    %s110 = sadd.s32 %s109, 1
    %s111 = scalar_select %p108, %s109, %s110
    %p114 = pneg %p108
    %p115 = scmp.eq.s32.totalorder %s10, 1
    %p116 = por %p114, %p115
    %p117 = scmp.ne.s32.totalorder %s109, %s112
    %p118 = scmp.eq.s32.totalorder %s10, 0
    %p119 = por %p117, %p118
    %p120 = scmp.ne.s32.totalorder %s109, %s112
    %p121 = scmp.eq.s32.totalorder %s15, 1
    %p122 = por %p120, %p121
    %p123 = scmp.ne.s32.totalorder %s112, %s113
    %p124 = scmp.eq.s32.totalorder %s15, 0
    %p125 = por %p123, %p124
    %p126 = scmp.ne.s32.totalorder %s112, %s113
    %p127 = scmp.eq.s32.totalorder %s16, 1
    %p128 = por %p126, %p127
    %p130 = scmp.ne.s32.totalorder %s113, %s129
    %p131 = scmp.eq.s32.totalorder %s16, 0
    %p132 = por %p130, %p131
    %p133 = scmp.le.s32.totalorder 1, %s10
    %p134 = scmp.lt.s32.totalorder %s10, 3
    %p135 = pnand %p133, %p134
    %p136 = pneg %p135
    // Predicated region
    $region9: #{_lambda_.8} parent=5 // pred_check
      _
    $region10: #{_lambda_.8} parent=5 // pred_check_branch
      %138 = sbr.rel (%p135) target = $region12
    $region11: #{_lambda_.8} parent=5 // pred_region
      %s139 = ssub.s32 %s10, 1
      // Predicated region
      $region13: #{_lambda_.8} parent=11 // pred_check
        %p140 = pneg %p57
      $region14: #{_lambda_.8} parent=11 // pred_check_branch
        %142 = sbr.rel (%p140) target = $region16
      $region15: #{_lambda_.8} parent=11 // pred_region
        _
      $region16: #{_lambda_.8} parent=11 // pred_fallthru
        _
      // Predicated region
      $region17: #{_lambda_.8} parent=11 // pred_check
        %p143 = pneg %p78
      $region18: #{_lambda_.8} parent=11 // pred_check_branch
        %145 = sbr.rel (%p143) target = $region20
      $region19: #{_lambda_.8} parent=11 // pred_region
        _
      $region20: #{_lambda_.8} parent=11 // pred_fallthru
        _
      // Predicated region
      $region21: #{_lambda_.8} parent=11 // pred_check
        %p146 = pneg %p99
      $region22: #{_lambda_.8} parent=11 // pred_check_branch
        %148 = sbr.rel (%p146) target = $region24
      $region23: #{_lambda_.8} parent=11 // pred_region
        _
      $region24: #{_lambda_.8} parent=11 // pred_fallthru
        _
    $region12: #{_lambda_.8} parent=5 // pred_fallthru
      _
    %p149 = scmp.lt.s32.totalorder %s10, 2
    // Predicated region
    $region25: #{_lambda_.8} parent=5 // pred_check
      %p150 = pneg %p149
    $region26: #{_lambda_.8} parent=5 // pred_check_branch
      %152 = sbr.rel (%p150) target = $region28
    $region27: #{_lambda_.8} parent=5 // pred_region
      // Predicated region
      $region29: #{_lambda_.8} parent=27 // pred_check
        %p153 = pneg %p30
      $region30: #{_lambda_.8} parent=27 // pred_check_branch
        %155 = sbr.rel (%p153) target = $region32
      $region31: #{_lambda_.8} parent=27 // pred_region
        %s156 = smul.u32 4, %s10
        %p157 = scmp.lt.s32.totalorder %s156, 7
        %s158 = scalar_select %p157, %s156, 7
        %s159 = smul.addr %s158, 7
        %s160 = smul.addr %s159, 4
        %s161 = scalar_lea.vmem %s0, %s160
        %s162 = smul.u32 4, %s10
      $region32: #{_lambda_.8} parent=27 // pred_fallthru
        _
    $region28: #{_lambda_.8} parent=5 // pred_fallthru
      _
    %p163 = scmp.le.s32.totalorder 1, %s10
    %p164 = scmp.lt.s32.totalorder %s10, 3
    %p165 = pnand %p163, %p164
    %p166 = pneg %p165
    // Predicated region
    $region33: #{_lambda_.8} parent=5 // pred_check
      _
    $region34: #{_lambda_.8} parent=5 // pred_check_branch
      %168 = sbr.rel (%p165) target = $region36
    $region35: #{_lambda_.8} parent=5 // pred_region
      %s169 = ssub.s32 %s10, 1
      %s170 = smul.u32 4, %s15
      %p171 = scmp.lt.s32.totalorder %s170, 7
      %s172 = scalar_select %p171, %s170, 7
      %s173 = smul.addr %s172, 7
      %s174 = smul.addr %s173, 4
      %s175 = scalar_lea.vmem %s0, %s174
      %p176 = pneg %p36
      %p177 = pneg %p33
      %p178 = pneg %p57
      %p179 = pneg %p54
      %p180 = pneg %p78
      %p181 = pneg %p75
      %p182 = pneg %p99
      %p183 = pneg %p96
      %p184 = pneg %p125
      %p185 = pneg %p122
      %s186 = smul.u32 4, %s15
      %p187 = scmp.lt.s32.totalorder %s186, 7
      %s188 = scalar_select %p187, %s186, 7
      %s189 = smul.addr %s188, 8
      %s190 = scalar_lea.vmem %s4, %s189
      %s191 = smul.u32 4, %s15
      %p192 = scmp.lt.s32.totalorder %s191, 7
      %s193 = scalar_select %p192, %s191, 7
      %s194 = smul.addr %s193, 7
      %s195 = smul.addr %s194, 4
      %s196 = scalar_lea.vmem %s0, %s195
      %s197 = smul.u32 4, %s15
      %s198 = smul.u32 4, %s15
      %p199 = scmp.lt.s32.totalorder %s198, 7
      %s200 = scalar_select %p199, %s198, 7
      %s201 = smul.addr %s200, 8
      %s202 = scalar_lea.vmem %s4, %s201
      %s203 = smul.u32 4, %s15
      %v205 = vld [vmem:[%s196] sm:$0xff]
      %v206 = vld [vmem:[%s196 + $0x8] sm:$0xff]
      %v207 = vld [vmem:[%s196 + $0x10] sm:$0xff]
      %v208 = vld [vmem:[%s196 + $0x18] sm:$0xf]
      %v209 = vld [vmem:[%s196 + $0x1c] sm:$0xff]
      %v210 = vld [vmem:[%s196 + $0x24] sm:$0xff]
      %v211 = vld [vmem:[%s196 + $0x2c] sm:$0xff]
      %v212 = vld [vmem:[%s196 + $0x34] sm:$0xf]
      %v213 = vld [vmem:[%s196 + $0x38] sm:$0xff]
      %v214 = vld [vmem:[%s196 + $0x40] sm:$0xff]
      %v215 = vld [vmem:[%s196 + $0x48] sm:$0xff]
      %v216 = vld [vmem:[%s196 + $0x50] sm:$0xf]
      %v217 = vld [vmem:[%s196 + $0x54] sm:$0xff]
      %v218 = vld [vmem:[%s196 + $0x5c] sm:$0xff]
      %v219 = vld [vmem:[%s196 + $0x64] sm:$0xff]
      %v220 = vld [vmem:[%s196 + $0x6c] sm:$0xf]
      %v221 = vld [vmem:[%s1] sm:$0xf]
      %v222 = vld [vmem:[%s1 + $0x4] sm:$0xf]
      %v223 = vld [vmem:[%s1 + $0x8] sm:$0xf]
      %v224 = vld [vmem:[%s1 + $0xc] sm:$0xf]
      %v225 = vld [vmem:[%s1 + $0x10] sm:$0xf]
      %v226 = vld [vmem:[%s1 + $0x14] sm:$0xf]
      %v227 = vld [vmem:[%s1 + $0x18] sm:$0xf]
      %v228 = vld [vmem:[%s1 + $0x1c] sm:$0xf]
      %v229 = vld [vmem:[%s1 + $0x20] sm:$0xf]
      %v230 = vld [vmem:[%s1 + $0x24] sm:$0xf]
      %v231 = vld [vmem:[%s1 + $0x28] sm:$0xf]
      %v232 = vld [vmem:[%s1 + $0x2c] sm:$0xf]
      %v233 = vld [vmem:[%s1 + $0x30] sm:$0xf]
      %v234 = vld [vmem:[%s1 + $0x34] sm:$0xf]
      %v235 = vld [vmem:[%s1 + $0x38] sm:$0xf]
      %v236 = vld [vmem:[%s1 + $0x3c] sm:$0xf]
      %v237 = vld [vmem:[%s1 + $0x40] sm:$0xf]
      %v238 = vld [vmem:[%s1 + $0x44] sm:$0xf]
      %v239 = vld [vmem:[%s1 + $0x48] sm:$0xf]
      %v240 = vld [vmem:[%s1 + $0x4c] sm:$0xf]
      %v241 = vld [vmem:[%s1 + $0x50] sm:$0xf]
      %v242 = vld [vmem:[%s1 + $0x54] sm:$0xf]
      %v243 = vld [vmem:[%s1 + $0x58] sm:$0xf]
      %v244 = vld [vmem:[%s1 + $0x5c] sm:$0xf]
      %v245 = vld [vmem:[%s1 + $0x60] sm:$0xf]
      %v246 = vld [vmem:[%s1 + $0x64] sm:$0xf]
      %v247 = vld [vmem:[%s1 + $0x68] sm:$0xf]
      %v248 = vld [vmem:[%s1 + $0x6c] sm:$0xf]
      %v249 = vld [vmem:[%s1 + $0x70] sm:$0xf]
      %v250 = vld [vmem:[%s1 + $0x74] sm:$0xf]
      %v251 = vld [vmem:[%s1 + $0x78] sm:$0xf]
      %v252 = vld [vmem:[%s1 + $0x7c] sm:$0xf]
      %v253 = vld [vmem:[%s1 + $0x80] sm:$0xf]
      %v254 = vld [vmem:[%s1 + $0x84] sm:$0xf]
      %v255 = vld [vmem:[%s1 + $0x88] sm:$0xf]
      %v256 = vld [vmem:[%s1 + $0x8c] sm:$0xf]
      %v257 = vld [vmem:[%s1 + $0x90] sm:$0xf]
      %v258 = vld [vmem:[%s1 + $0x94] sm:$0xf]
      %v259 = vld [vmem:[%s1 + $0x98] sm:$0xf]
      %v260 = vld [vmem:[%s1 + $0x9c] sm:$0xf]
      %v261 = vld [vmem:[%s1 + $0xa0] sm:$0xf]
      %v262 = vld [vmem:[%s1 + $0xa4] sm:$0xf]
      %v263 = vld [vmem:[%s1 + $0xa8] sm:$0xf]
      %v264 = vld [vmem:[%s1 + $0xac] sm:$0xf]
      %v265 = vld [vmem:[%s1 + $0xb0] sm:$0xf]
      %v266 = vld [vmem:[%s1 + $0xb4] sm:$0xf]
      %v267 = vld [vmem:[%s1 + $0xb8] sm:$0xf]
      %v268 = vld [vmem:[%s1 + $0xbc] sm:$0xf]
      %v269 = vld [vmem:[%s1 + $0xc0] sm:$0xf]
      %v270 = vld [vmem:[%s1 + $0xc4] sm:$0xf]
      %v271 = vld [vmem:[%s1 + $0xc8] sm:$0xf]
      %v272 = vld [vmem:[%s1 + $0xcc] sm:$0xf]
      %v273 = vld [vmem:[%s1 + $0xd0] sm:$0xf]
      %v274 = vld [vmem:[%s1 + $0xd4] sm:$0xf]
      %v275 = vld [vmem:[%s1 + $0xd8] sm:$0xf]
      %v276 = vld [vmem:[%s1 + $0xdc] sm:$0xf]
      %v277 = vld [vmem:[%s1 + $0xe0] sm:$0xf]
      %v278 = vld [vmem:[%s1 + $0xe4] sm:$0xf]
      %v279 = vld [vmem:[%s1 + $0xe8] sm:$0xf]
      %v280 = vld [vmem:[%s1 + $0xec] sm:$0xf]
      %v281 = vld [vmem:[%s1 + $0xf0] sm:$0xf]
      %v282 = vld [vmem:[%s1 + $0xf4] sm:$0xf]
      %v283 = vld [vmem:[%s1 + $0xf8] sm:$0xf]
      %v284 = vld [vmem:[%s1 + $0xfc] sm:$0xf]
      %v285 = vld [vmem:[%s1 + $0x100] sm:$0xf]
      %v286 = vld [vmem:[%s1 + $0x104] sm:$0xf]
      %v287 = vld [vmem:[%s1 + $0x108] sm:$0xf]
      %v288 = vld [vmem:[%s1 + $0x10c] sm:$0xf]
      %v289 = vld [vmem:[%s1 + $0x110] sm:$0xf]
      %v290 = vld [vmem:[%s1 + $0x114] sm:$0xf]
      %v291 = vld [vmem:[%s1 + $0x118] sm:$0xf]
      %v292 = vld [vmem:[%s1 + $0x11c] sm:$0xf]
      %v293 = vld [vmem:[%s1 + $0x120] sm:$0xf]
      %v294 = vld [vmem:[%s1 + $0x124] sm:$0xf]
      %v295 = vld [vmem:[%s1 + $0x128] sm:$0xf]
      %v296 = vld [vmem:[%s1 + $0x12c] sm:$0xf]
      %v297 = vld [vmem:[%s1 + $0x130] sm:$0xf]
      %v298 = vld [vmem:[%s1 + $0x134] sm:$0xf]
      %v299 = vld [vmem:[%s1 + $0x138] sm:$0xf]
      %v300 = vld [vmem:[%s1 + $0x13c] sm:$0xf]
      %v301 = vld [vmem:[%s1 + $0x140] sm:$0xf]
      %v302 = vld [vmem:[%s1 + $0x144] sm:$0xf]
      %v303 = vld [vmem:[%s1 + $0x148] sm:$0xf]
      %v304 = vld [vmem:[%s1 + $0x14c] sm:$0xf]
      %v305 = vld [vmem:[%s1 + $0x150] sm:$0xf]
      %v306 = vld [vmem:[%s1 + $0x154] sm:$0xf]
      %v307 = vld [vmem:[%s1 + $0x158] sm:$0xf]
      %v308 = vld [vmem:[%s1 + $0x15c] sm:$0xf]
      %v309 = vld [vmem:[%s1 + $0x160] sm:$0xf]
      %v310 = vld [vmem:[%s1 + $0x164] sm:$0xf]
      %v311 = vld [vmem:[%s1 + $0x168] sm:$0xf]
      %v312 = vld [vmem:[%s1 + $0x16c] sm:$0xf]
      %v313 = vld [vmem:[%s1 + $0x170] sm:$0xf]
      %v314 = vld [vmem:[%s1 + $0x174] sm:$0xf]
      %v315 = vld [vmem:[%s1 + $0x178] sm:$0xf]
      %v316 = vld [vmem:[%s1 + $0x17c] sm:$0xf]
      %v317 = vld [vmem:[%s1 + $0x180] sm:$0xf]
      %v318 = vld [vmem:[%s1 + $0x184] sm:$0xf]
      %v319 = vld [vmem:[%s1 + $0x188] sm:$0xf]
      %v320 = vld [vmem:[%s1 + $0x18c] sm:$0xf]
      %v321 = vld [vmem:[%s1 + $0x190] sm:$0xf]
      %v322 = vld [vmem:[%s1 + $0x194] sm:$0xf]
      %v323 = vld [vmem:[%s1 + $0x198] sm:$0xf]
      %v324 = vld [vmem:[%s1 + $0x19c] sm:$0xf]
      %v325 = vld [vmem:[%s1 + $0x1a0] sm:$0xf]
      %v326 = vld [vmem:[%s1 + $0x1a4] sm:$0xf]
      %v327 = vld [vmem:[%s1 + $0x1a8] sm:$0xf]
      %v328 = vld [vmem:[%s1 + $0x1ac] sm:$0xf]
      %v345 = vunpack.c.l.b16 %v205
      %v346 = vunpack.c.h.b16 %v205
      %v347 = vunpack.c.l.b16 %v206
      %v348 = vunpack.c.h.b16 %v206
      %v349 = vunpack.c.l.b16 %v207
      %v350 = vunpack.c.h.b16 %v207
      %v351 = vunpack.c.l.b16 %v208
      %v352 = vunpack.c.l.b16 %v209
      %v353 = vunpack.c.h.b16 %v209
      %v354 = vunpack.c.l.b16 %v210
      %v355 = vunpack.c.h.b16 %v210
      %v356 = vunpack.c.l.b16 %v211
      %v357 = vunpack.c.h.b16 %v211
      %v358 = vunpack.c.l.b16 %v212
      %v359 = vunpack.c.l.b16 %v213
      %v360 = vunpack.c.h.b16 %v213
      %v361 = vunpack.c.l.b16 %v214
      %v362 = vunpack.c.h.b16 %v214
      %v363 = vunpack.c.l.b16 %v215
      %v364 = vunpack.c.h.b16 %v215
      %v365 = vunpack.c.l.b16 %v216
      %v366 = vunpack.c.l.b16 %v217
      %v367 = vunpack.c.h.b16 %v217
      %v368 = vunpack.c.l.b16 %v218
      %v369 = vunpack.c.h.b16 %v218
      %v370 = vunpack.c.l.b16 %v219
      %v371 = vunpack.c.h.b16 %v219
      %v372 = vunpack.c.l.b16 %v220
      %v373 = vpack.c.b16 %v352, %v345
      %v374 = vpack.c.b16 %v353, %v346
      %v375 = vpack.c.b16 %v354, %v347
      %v376 = vpack.c.b16 %v355, %v348
      %v377 = vpack.c.b16 %v356, %v349
      %v378 = vpack.c.b16 %v357, %v350
      %v379 = vpack.c.b16 %v358, %v351
      %v380 = vpack.c.b16 %v366, %v359
      %v381 = vpack.c.b16 %v367, %v360
      %v382 = vpack.c.b16 %v368, %v361
      %v383 = vpack.c.b16 %v369, %v362
      %v384 = vpack.c.b16 %v370, %v363
      %v385 = vpack.c.b16 %v371, %v364
      %v386 = vpack.c.b16 %v372, %v365
      %v507 = vunpack.c.l.b16 %v221
      %v508 = vunpack.c.l.b16 %v222
      %v509 = vunpack.c.l.b16 %v223
      %v510 = vunpack.c.l.b16 %v224
      %v511 = vunpack.c.l.b16 %v225
      %v512 = vunpack.c.l.b16 %v226
      %v513 = vunpack.c.l.b16 %v227
      %v514 = vunpack.c.l.b16 %v228
      %v515 = vunpack.c.l.b16 %v229
      %v516 = vunpack.c.l.b16 %v230
      %v517 = vunpack.c.l.b16 %v231
      %v518 = vunpack.c.l.b16 %v232
      %v519 = vunpack.c.l.b16 %v233
      %v520 = vunpack.c.l.b16 %v234
      %v521 = vunpack.c.l.b16 %v235
      %v522 = vunpack.c.l.b16 %v236
      %v523 = vunpack.c.l.b16 %v237
      %v524 = vunpack.c.l.b16 %v238
      %v525 = vunpack.c.l.b16 %v239
      %v526 = vunpack.c.l.b16 %v240
      %v527 = vunpack.c.l.b16 %v241
      %v528 = vunpack.c.l.b16 %v242
      %v529 = vunpack.c.l.b16 %v243
      %v530 = vunpack.c.l.b16 %v244
      %v531 = vunpack.c.l.b16 %v245
      %v532 = vunpack.c.l.b16 %v246
      %v533 = vunpack.c.l.b16 %v247
      %v534 = vunpack.c.l.b16 %v248
      %v535 = vunpack.c.l.b16 %v249
      %v536 = vunpack.c.l.b16 %v250
      %v537 = vunpack.c.l.b16 %v251
      %v538 = vunpack.c.l.b16 %v252
      %v539 = vunpack.c.l.b16 %v253
      %v540 = vunpack.c.l.b16 %v254
      %v541 = vunpack.c.l.b16 %v255
      %v542 = vunpack.c.l.b16 %v256
      %v543 = vunpack.c.l.b16 %v257
      %v544 = vunpack.c.l.b16 %v258
      %v545 = vunpack.c.l.b16 %v259
      %v546 = vunpack.c.l.b16 %v260
      %v547 = vunpack.c.l.b16 %v261
      %v548 = vunpack.c.l.b16 %v262
      %v549 = vunpack.c.l.b16 %v263
      %v550 = vunpack.c.l.b16 %v264
      %v551 = vunpack.c.l.b16 %v265
      %v552 = vunpack.c.l.b16 %v266
      %v553 = vunpack.c.l.b16 %v267
      %v554 = vunpack.c.l.b16 %v268
      %v555 = vunpack.c.l.b16 %v269
      %v556 = vunpack.c.l.b16 %v270
      %v557 = vunpack.c.l.b16 %v271
      %v558 = vunpack.c.l.b16 %v272
      %v559 = vunpack.c.l.b16 %v273
      %v560 = vunpack.c.l.b16 %v274
      %v561 = vunpack.c.l.b16 %v275
      %v562 = vunpack.c.l.b16 %v276
      %v563 = vunpack.c.l.b16 %v277
      %v564 = vunpack.c.l.b16 %v278
      %v565 = vunpack.c.l.b16 %v279
      %v566 = vunpack.c.l.b16 %v280
      %v567 = vunpack.c.l.b16 %v281
      %v568 = vunpack.c.l.b16 %v282
      %v569 = vunpack.c.l.b16 %v283
      %v570 = vunpack.c.l.b16 %v284
      %v571 = vunpack.c.l.b16 %v285
      %v572 = vunpack.c.l.b16 %v286
      %v573 = vunpack.c.l.b16 %v287
      %v574 = vunpack.c.l.b16 %v288
      %v575 = vunpack.c.l.b16 %v289
      %v576 = vunpack.c.l.b16 %v290
      %v577 = vunpack.c.l.b16 %v291
      %v578 = vunpack.c.l.b16 %v292
      %v579 = vunpack.c.l.b16 %v293
      %v580 = vunpack.c.l.b16 %v294
      %v581 = vunpack.c.l.b16 %v295
      %v582 = vunpack.c.l.b16 %v296
      %v583 = vunpack.c.l.b16 %v297
      %v584 = vunpack.c.l.b16 %v298
      %v585 = vunpack.c.l.b16 %v299
      %v586 = vunpack.c.l.b16 %v300
      %v587 = vunpack.c.l.b16 %v301
      %v588 = vunpack.c.l.b16 %v302
      %v589 = vunpack.c.l.b16 %v303
      %v590 = vunpack.c.l.b16 %v304
      %v591 = vunpack.c.l.b16 %v305
      %v592 = vunpack.c.l.b16 %v306
      %v593 = vunpack.c.l.b16 %v307
      %v594 = vunpack.c.l.b16 %v308
      %v595 = vunpack.c.l.b16 %v309
      %v596 = vunpack.c.l.b16 %v310
      %v597 = vunpack.c.l.b16 %v311
      %v598 = vunpack.c.l.b16 %v312
      %v599 = vunpack.c.l.b16 %v313
      %v600 = vunpack.c.l.b16 %v314
      %v601 = vunpack.c.l.b16 %v315
      %v602 = vunpack.c.l.b16 %v316
      %v603 = vunpack.c.l.b16 %v317
      %v604 = vunpack.c.l.b16 %v318
      %v605 = vunpack.c.l.b16 %v319
      %v606 = vunpack.c.l.b16 %v320
      %v607 = vunpack.c.l.b16 %v321
      %v608 = vunpack.c.l.b16 %v322
      %v609 = vunpack.c.l.b16 %v323
      %v610 = vunpack.c.l.b16 %v324
      %v611 = vunpack.c.l.b16 %v325
      %v612 = vunpack.c.l.b16 %v326
      %v613 = vunpack.c.l.b16 %v327
      %v614 = vunpack.c.l.b16 %v328
      %v615 = vpack.c.b16 %v508, %v507
      %v616 = vpack.c.b16 %v510, %v509
      %v617 = vpack.c.b16 %v512, %v511
      %v618 = vpack.c.b16 %v514, %v513
      %v619 = vpack.c.b16 %v516, %v515
      %v620 = vpack.c.b16 %v518, %v517
      %v621 = vpack.c.b16 %v520, %v519
      %v622 = vpack.c.b16 %v522, %v521
      %v623 = vpack.c.b16 %v524, %v523
      %v624 = vpack.c.b16 %v526, %v525
      %v625 = vpack.c.b16 %v528, %v527
      %v626 = vpack.c.b16 %v530, %v529
      %v627 = vpack.c.b16 %v532, %v531
      %v628 = vpack.c.b16 %v534, %v533
      %v629 = vpack.c.b16 %v536, %v535
      %v630 = vpack.c.b16 %v538, %v537
      %v631 = vpack.c.b16 %v540, %v539
      %v632 = vpack.c.b16 %v542, %v541
      %v633 = vpack.c.b16 %v544, %v543
      %v634 = vpack.c.b16 %v546, %v545
      %v635 = vpack.c.b16 %v548, %v547
      %v636 = vpack.c.b16 %v550, %v549
      %v637 = vpack.c.b16 %v552, %v551
      %v638 = vpack.c.b16 %v554, %v553
      %v639 = vpack.c.b16 %v556, %v555
      %v640 = vpack.c.b16 %v558, %v557
      %v641 = vpack.c.b16 %v560, %v559
      %v642 = vpack.c.b16 %v562, %v561
      %v643 = vpack.c.b16 %v564, %v563
      %v644 = vpack.c.b16 %v566, %v565
      %v645 = vpack.c.b16 %v568, %v567
      %v646 = vpack.c.b16 %v570, %v569
      %v647 = vpack.c.b16 %v572, %v571
      %v648 = vpack.c.b16 %v574, %v573
      %v649 = vpack.c.b16 %v576, %v575
      %v650 = vpack.c.b16 %v578, %v577
      %v651 = vpack.c.b16 %v580, %v579
      %v652 = vpack.c.b16 %v582, %v581
      %v653 = vpack.c.b16 %v584, %v583
      %v654 = vpack.c.b16 %v586, %v585
      %v655 = vpack.c.b16 %v588, %v587
      %v656 = vpack.c.b16 %v590, %v589
      %v657 = vpack.c.b16 %v592, %v591
      %v658 = vpack.c.b16 %v594, %v593
      %v659 = vpack.c.b16 %v596, %v595
      %v660 = vpack.c.b16 %v598, %v597
      %v661 = vpack.c.b16 %v600, %v599
      %v662 = vpack.c.b16 %v602, %v601
      %v663 = vpack.c.b16 %v604, %v603
      %v664 = vpack.c.b16 %v606, %v605
      %v665 = vpack.c.b16 %v608, %v607
      %v666 = vpack.c.b16 %v610, %v609
      %v667 = vpack.c.b16 %v612, %v611
      %v668 = vpack.c.b16 %v614, %v613
      %vm723 = vcmask 785408
      %v725 = vsel %vm723, %v379, 0
      %v728 = vsel %vm723, %v386, 0
      %730 = vmatpush.bf16.msra.mxu0 %v622
      %731 = vmatpush.bf16.msra.mxu0 %v621
      %732 = vmatpush.bf16.msra.mxu0 %v620
      %733 = vmatpush.bf16.msra.mxu0 %v619
      %734 = vmatpush.bf16.msra.mxu0 %v618
      %735 = vmatpush.bf16.msra.mxu0 %v617
      %736 = vmatpush.bf16.msra.mxu0 %v616
      %737 = vmatpush.bf16.msra.mxu0 %v615
      %738 = vmatmul.bf16.gmra.mxu0 %v373
      %v739 = vpop.f32.mrf.mxu0
      %v740 = vadd.f32 0.0, %v739
      %v741 = vpop.f32.mrf.mxu0
      %v742 = vadd.f32 0.0, %v741
      %743 = vmatmul.bf16.gmra.mxu0 %v380
      %v744 = vpop.f32.mrf.mxu0
      %v745 = vadd.f32 0.0, %v744
      %v746 = vpop.f32.mrf.mxu0
      %v747 = vadd.f32 0.0, %v746
      %748 = vdwg.mxu0
      %749 = vmatpush.bf16.msra.mxu0 %v630
      %750 = vmatpush.bf16.msra.mxu0 %v629
      %751 = vmatpush.bf16.msra.mxu0 %v628
      %752 = vmatpush.bf16.msra.mxu0 %v627
      %753 = vmatpush.bf16.msra.mxu0 %v626
      %754 = vmatpush.bf16.msra.mxu0 %v625
      %755 = vmatpush.bf16.msra.mxu0 %v624
      %756 = vmatpush.bf16.msra.mxu0 %v623
      %757 = vmatmul.bf16.gmra.mxu0 %v374
      %v758 = vpop.f32.mrf.mxu0
      %v759 = vadd.f32 %v740, %v758
      %v760 = vpop.f32.mrf.mxu0
      %v761 = vadd.f32 %v742, %v760
      %762 = vmatmul.bf16.gmra.mxu0 %v381
      %v763 = vpop.f32.mrf.mxu0
      %v764 = vadd.f32 %v745, %v763
      %v765 = vpop.f32.mrf.mxu0
      %v766 = vadd.f32 %v747, %v765
      %767 = vdwg.mxu0
      %768 = vmatpush.bf16.msra.mxu0 %v638
      %769 = vmatpush.bf16.msra.mxu0 %v637
      %770 = vmatpush.bf16.msra.mxu0 %v636
      %771 = vmatpush.bf16.msra.mxu0 %v635
      %772 = vmatpush.bf16.msra.mxu0 %v634
      %773 = vmatpush.bf16.msra.mxu0 %v633
      %774 = vmatpush.bf16.msra.mxu0 %v632
      %775 = vmatpush.bf16.msra.mxu0 %v631
      %776 = vmatmul.bf16.gmra.mxu0 %v375
      %v777 = vpop.f32.mrf.mxu0
      %v778 = vadd.f32 %v759, %v777
      %v779 = vpop.f32.mrf.mxu0
      %v780 = vadd.f32 %v761, %v779
      %781 = vmatmul.bf16.gmra.mxu0 %v382
      %v782 = vpop.f32.mrf.mxu0
      %v783 = vadd.f32 %v764, %v782
      %v784 = vpop.f32.mrf.mxu0
      %v785 = vadd.f32 %v766, %v784
      %786 = vdwg.mxu0
      %787 = vmatpush.bf16.msra.mxu0 %v646
      %788 = vmatpush.bf16.msra.mxu0 %v645
      %789 = vmatpush.bf16.msra.mxu0 %v644
      %790 = vmatpush.bf16.msra.mxu0 %v643
      %791 = vmatpush.bf16.msra.mxu0 %v642
      %792 = vmatpush.bf16.msra.mxu0 %v641
      %793 = vmatpush.bf16.msra.mxu0 %v640
      %794 = vmatpush.bf16.msra.mxu0 %v639
      %795 = vmatmul.bf16.gmra.mxu0 %v376
      %v796 = vpop.f32.mrf.mxu0
      %v797 = vadd.f32 %v778, %v796
      %v798 = vpop.f32.mrf.mxu0
      %v799 = vadd.f32 %v780, %v798
      %800 = vmatmul.bf16.gmra.mxu0 %v383
      %v801 = vpop.f32.mrf.mxu0
      %v802 = vadd.f32 %v783, %v801
      %v803 = vpop.f32.mrf.mxu0
      %v804 = vadd.f32 %v785, %v803
      %805 = vdwg.mxu0
      %806 = vmatpush.bf16.msra.mxu0 %v654
      %807 = vmatpush.bf16.msra.mxu0 %v653
      %808 = vmatpush.bf16.msra.mxu0 %v652
      %809 = vmatpush.bf16.msra.mxu0 %v651
      %810 = vmatpush.bf16.msra.mxu0 %v650
      %811 = vmatpush.bf16.msra.mxu0 %v649
      %812 = vmatpush.bf16.msra.mxu0 %v648
      %813 = vmatpush.bf16.msra.mxu0 %v647
      %814 = vmatmul.bf16.gmra.mxu0 %v377
      %v815 = vpop.f32.mrf.mxu0
      %v816 = vadd.f32 %v797, %v815
      %v817 = vpop.f32.mrf.mxu0
      %v818 = vadd.f32 %v799, %v817
      %819 = vmatmul.bf16.gmra.mxu0 %v384
      %v820 = vpop.f32.mrf.mxu0
      %v821 = vadd.f32 %v802, %v820
      %v822 = vpop.f32.mrf.mxu0
      %v823 = vadd.f32 %v804, %v822
      %824 = vdwg.mxu0
      %825 = vmatpush.bf16.msra.mxu0 %v662
      %826 = vmatpush.bf16.msra.mxu0 %v661
      %827 = vmatpush.bf16.msra.mxu0 %v660
      %828 = vmatpush.bf16.msra.mxu0 %v659
      %829 = vmatpush.bf16.msra.mxu0 %v658
      %830 = vmatpush.bf16.msra.mxu0 %v657
      %831 = vmatpush.bf16.msra.mxu0 %v656
      %832 = vmatpush.bf16.msra.mxu0 %v655
      %833 = vmatmul.bf16.gmra.mxu0 %v378
      %v834 = vpop.f32.mrf.mxu0
      %v835 = vadd.f32 %v816, %v834
      %v836 = vpop.f32.mrf.mxu0
      %v837 = vadd.f32 %v818, %v836
      %838 = vmatmul.bf16.gmra.mxu0 %v385
      %v839 = vpop.f32.mrf.mxu0
      %v840 = vadd.f32 %v821, %v839
      %v841 = vpop.f32.mrf.mxu0
      %v842 = vadd.f32 %v823, %v841
      %843 = vdwg.mxu0
      %844 = vmatpush.bf16.msra.mxu0 0
      %845 = vmatpush.bf16.msra.mxu0 0
      %846 = vmatpush.bf16.msra.mxu0 %v668
      %847 = vmatpush.bf16.msra.mxu0 %v667
      %848 = vmatpush.bf16.msra.mxu0 %v666
      %849 = vmatpush.bf16.msra.mxu0 %v665
      %850 = vmatpush.bf16.msra.mxu0 %v664
      %851 = vmatpush.bf16.msra.mxu0 %v663
      %852 = vmatmul.bf16.gmra.mxu0 %v725
      %v853 = vpop.f32.mrf.mxu0
      %v854 = vadd.f32 %v835, %v853
      %v855 = vpop.f32.mrf.mxu0
      %v856 = vadd.f32 %v837, %v855
      %857 = vmatmul.bf16.gmra.mxu0 %v728
      %v858 = vpop.f32.mrf.mxu0
      %v859 = vadd.f32 %v840, %v858
      %v860 = vpop.f32.mrf.mxu0
      %v861 = vadd.f32 %v842, %v860
      %862 = vdwg.mxu0
      %v863 = vld [vmem:[%s2] sm:$0x1]
      %v865 = vperm.slane %v863, 0
      %v867 = vmul.f32 %v854, %v865
      %v868 = vmul.f32 %v856, %v865
      %v869 = vmul.f32 %v859, %v865
      %v870 = vmul.f32 %v861, %v865
      %v871 = vld [vmem:[%s3] sm:$0x1]
      %v873 = vperm.slane %v871, 0
      %v875 = vadd.f32 %v867, %v873
      %v876 = vadd.f32 %v868, %v873
      %v877 = vadd.f32 %v869, %v873
      %v878 = vadd.f32 %v870, %v873
      %v879 = vmax.f32 %v875, 0.0
      %v880 = vmax.f32 %v876, 0.0
      %v881 = vmax.f32 %v877, 0.0
      %v882 = vmax.f32 %v878, 0.0
      %vm883 = vcmask 261120
      %884 = vst.msk [vmem:[%s202] sm:$0xff] %vm883, %v879
      %885 = vst.msk [vmem:[%s202 + $0x8] sm:$0xff] %vm883, %v880
      %886 = vst.msk [vmem:[%s202 + $0x10] sm:$0xff] %vm883, %v881
      %887 = vst.msk [vmem:[%s202 + $0x18] sm:$0xff] %vm883, %v882
      %s888 = smul.u32 4, %s15
      %p889 = scmp.lt.s32.totalorder %s888, 7
      %s890 = scalar_select %p889, %s888, 7
      %s891 = smul.addr %s890, 8
      %s892 = scalar_lea.vmem %s4, %s891
      // Predicated region
      $region37: #{_lambda_.8} parent=35 // pred_check
        %p893 = pneg %p122
      $region38: #{_lambda_.8} parent=35 // pred_check_branch
        %895 = sbr.rel (%p893) target = $region40
      $region39: #{_lambda_.8} parent=35 // pred_region
        %s896 = smul.u32 4, %s15
      $region40: #{_lambda_.8} parent=35 // pred_fallthru
        _
    $region36: #{_lambda_.8} parent=5 // pred_fallthru
      _
    %p897 = scmp.le.s32.totalorder 2, %s10
    // Predicated region
    $region41: #{_lambda_.8} parent=5 // pred_check
      %p898 = pneg %p897
    $region42: #{_lambda_.8} parent=5 // pred_check_branch
      %900 = sbr.rel (%p898) target = $region44
    $region43: #{_lambda_.8} parent=5 // pred_region
      %s901 = ssub.s32 %s10, 2
      // Predicated region
      $region45: #{_lambda_.8} parent=43 // pred_check
        %p902 = pneg %p128
      $region46: #{_lambda_.8} parent=43 // pred_check_branch
        %904 = sbr.rel (%p902) target = $region48
      $region47: #{_lambda_.8} parent=43 // pred_region
        %s905 = smul.u32 4, %s16
        %p906 = scmp.lt.s32.totalorder %s905, 7
        %s907 = scalar_select %p906, %s905, 7
        %s908 = smul.addr %s907, 8
        %s909 = scalar_lea.vmem %s4, %s908
      $region48: #{_lambda_.8} parent=43 // pred_fallthru
        _
    $region44: #{_lambda_.8} parent=5 // pred_fallthru
      _
  $region6: #{_lambda_.8} parent=0 // loop_footer
    %s14 = sadd.s32 1, %s10
  $region7: #{_lambda_.8} parent=0 // loop_footer_branch
    %9 = sbr.rel target = $region3
  $region8: #{_lambda_.8} parent=0 // loop_exit
    _

// kernel: _lambda_.10
$region0: #{_lambda_.10}
  #allocation0 [shape = 'u32[]', space=smem, size = 0x4, offset = 0x4, fixed_abs, tag = 'smem constant byte address 0x4 - core index']
  #allocation1 [shape = 'u32[72,128]{1,0:T(1,128)}', space=vmem, size = 0x9000, scoped, tag = 'internal scratch']
  %s0 = inlined_call_operand.vmem [shape: bf16[512,864], index: 0, kind: input, shape index: {}]
  %s1 = inlined_call_operand.vmem [shape: bf16[864,32], index: 1, kind: input, shape index: {}]
  %s2 = inlined_call_operand.vmem [shape: f32[1,32], index: 2, kind: input, shape index: {}]
  %s3 = inlined_call_operand.vmem [shape: f32[1,32], index: 3, kind: input, shape index: {}]
  %s4 = inlined_call_operand.vmem [shape: f32[512,32], index: 4, kind: input, shape index: {}]
  %s5 = inlined_call_operand.vmem [shape: f32[512,32], index: 5, kind: output, shape index: {}]
  %s6 = sld [smem:[#allocation0]]
  $region53: #{_lambda_.10} parent=0
    _
  %s8 = ssub.s32 1, %s6
  %s9 = scalar_select 0, %s8, %s6
  loop: start=0, step=1, limit=4
  $region2: #{_lambda_.10} parent=0 // loop_pre_header
    _
  $region3: #{_lambda_.10} parent=0 // loop_header
    %s11 = sphi 0, %s15
    %p12 = scmp.ge.s32.totalorder %s11, 4
    %s21 = sphi 0, %s23
    %s24 = sphi 0, %s21
    %s25 = sphi 0, %s24
    %s41 = sphi 0, %s25
    %s45 = sphi 0, %s45
    %s47 = sphi 0, %s45
    %s48 = sphi 0, %s47
    %s62 = sphi 0, %s48
    %s66 = sphi 0, %s66
    %s68 = sphi 0, %s66
    %s69 = sphi 0, %s68
    %s83 = sphi 0, %s69
    %s87 = sphi 0, %s87
    %s89 = sphi 0, %s87
    %s90 = sphi 0, %s89
    %s104 = sphi 0, %s90
    %s110 = sphi 0, %s112
    %s113 = sphi 0, %s110
    %s114 = sphi 0, %s113
    %s130 = sphi 0, %s114
    %s136 = sphi 0, %s138
    %s139 = sphi 0, %s136
    %s140 = sphi 0, %s139
    %s156 = sphi 0, %s140
  $region4: #{_lambda_.10} parent=0 // loop_header_branch
    %14 = sbr.rel (%p12) target = $region8
  $region5: #{_lambda_.10} parent=0 // loop_body
    %s16 = ssub.s32 %s11, 1
    %s17 = ssub.s32 %s11, 2
    %s18 = sadd.s32 %s11, 1
    %s19 = ssub.s32 %s11, %s18
    %p20 = scmp.eq.s32.totalorder %s19, 0
    %s22 = sadd.s32 %s21, 1
    %s23 = scalar_select %p20, %s21, %s22
    %p26 = pneg %p20
    %p27 = scmp.eq.s32.totalorder %s11, 1
    %p28 = por %p26, %p27
    %p29 = scmp.ne.s32.totalorder %s21, %s24
    %p30 = scmp.eq.s32.totalorder %s11, 0
    %p31 = por %p29, %p30
    %p32 = scmp.ne.s32.totalorder %s21, %s24
    %p33 = scmp.eq.s32.totalorder %s16, 1
    %p34 = por %p32, %p33
    %p35 = scmp.ne.s32.totalorder %s24, %s25
    %p36 = scmp.eq.s32.totalorder %s16, 0
    %p37 = por %p35, %p36
    %p38 = scmp.ne.s32.totalorder %s24, %s25
    %p39 = scmp.eq.s32.totalorder %s17, 1
    %p40 = por %p38, %p39
    %p42 = scmp.ne.s32.totalorder %s25, %s41
    %p43 = scmp.eq.s32.totalorder %s17, 0
    %p44 = por %p42, %p43
    %s46 = sadd.s32 %s45, 1
    %p49 = scmp.eq.s32.totalorder %s11, 1
    %p50 = scmp.ne.s32.totalorder %s45, %s47
    %p51 = scmp.eq.s32.totalorder %s11, 0
    %p52 = por %p50, %p51
    %p53 = scmp.ne.s32.totalorder %s45, %s47
    %p54 = scmp.eq.s32.totalorder %s16, 1
    %p55 = por %p53, %p54
    %p56 = scmp.ne.s32.totalorder %s47, %s48
    %p57 = scmp.eq.s32.totalorder %s16, 0
    %p58 = por %p56, %p57
    %p59 = scmp.ne.s32.totalorder %s47, %s48
    %p60 = scmp.eq.s32.totalorder %s17, 1
    %p61 = por %p59, %p60
    %p63 = scmp.ne.s32.totalorder %s48, %s62
    %p64 = scmp.eq.s32.totalorder %s17, 0
    %p65 = por %p63, %p64
    %s67 = sadd.s32 %s66, 1
    %p70 = scmp.eq.s32.totalorder %s11, 1
    %p71 = scmp.ne.s32.totalorder %s66, %s68
    %p72 = scmp.eq.s32.totalorder %s11, 0
    %p73 = por %p71, %p72
    %p74 = scmp.ne.s32.totalorder %s66, %s68
    %p75 = scmp.eq.s32.totalorder %s16, 1
    %p76 = por %p74, %p75
    %p77 = scmp.ne.s32.totalorder %s68, %s69
    %p78 = scmp.eq.s32.totalorder %s16, 0
    %p79 = por %p77, %p78
    %p80 = scmp.ne.s32.totalorder %s68, %s69
    %p81 = scmp.eq.s32.totalorder %s17, 1
    %p82 = por %p80, %p81
    %p84 = scmp.ne.s32.totalorder %s69, %s83
    %p85 = scmp.eq.s32.totalorder %s17, 0
    %p86 = por %p84, %p85
    %s88 = sadd.s32 %s87, 1
    %p91 = scmp.eq.s32.totalorder %s11, 1
    %p92 = scmp.ne.s32.totalorder %s87, %s89
    %p93 = scmp.eq.s32.totalorder %s11, 0
    %p94 = por %p92, %p93
    %p95 = scmp.ne.s32.totalorder %s87, %s89
    %p96 = scmp.eq.s32.totalorder %s16, 1
    %p97 = por %p95, %p96
    %p98 = scmp.ne.s32.totalorder %s89, %s90
    %p99 = scmp.eq.s32.totalorder %s16, 0
    %p100 = por %p98, %p99
    %p101 = scmp.ne.s32.totalorder %s89, %s90
    %p102 = scmp.eq.s32.totalorder %s17, 1
    %p103 = por %p101, %p102
    %p105 = scmp.ne.s32.totalorder %s90, %s104
    %p106 = scmp.eq.s32.totalorder %s17, 0
    %p107 = por %p105, %p106
    %s108 = ssub.s32 %s11, %s18
    %p109 = scmp.eq.s32.totalorder %s108, 0
    %s111 = sadd.s32 %s110, 1
    %s112 = scalar_select %p109, %s110, %s111
    %p115 = pneg %p109
    %p116 = scmp.eq.s32.totalorder %s11, 1
    %p117 = por %p115, %p116
    %p118 = scmp.ne.s32.totalorder %s110, %s113
    %p119 = scmp.eq.s32.totalorder %s11, 0
    %p120 = por %p118, %p119
    %p121 = scmp.ne.s32.totalorder %s110, %s113
    %p122 = scmp.eq.s32.totalorder %s16, 1
    %p123 = por %p121, %p122
    %p124 = scmp.ne.s32.totalorder %s113, %s114
    %p125 = scmp.eq.s32.totalorder %s16, 0
    %p126 = por %p124, %p125
    %p127 = scmp.ne.s32.totalorder %s113, %s114
    %p128 = scmp.eq.s32.totalorder %s17, 1
    %p129 = por %p127, %p128
    %p131 = scmp.ne.s32.totalorder %s114, %s130
    %p132 = scmp.eq.s32.totalorder %s17, 0
    %p133 = por %p131, %p132
    %s134 = ssub.s32 %s11, %s18
    %p135 = scmp.eq.s32.totalorder %s134, 0
    %s137 = sadd.s32 %s136, 1
    %s138 = scalar_select %p135, %s136, %s137
    %p141 = pneg %p135
    %p142 = scmp.eq.s32.totalorder %s11, 1
    %p143 = por %p141, %p142
    %p144 = scmp.ne.s32.totalorder %s136, %s139
    %p145 = scmp.eq.s32.totalorder %s11, 0
    %p146 = por %p144, %p145
    %p147 = scmp.ne.s32.totalorder %s136, %s139
    %p148 = scmp.eq.s32.totalorder %s16, 1
    %p149 = por %p147, %p148
    %p150 = scmp.ne.s32.totalorder %s139, %s140
    %p151 = scmp.eq.s32.totalorder %s16, 0
    %p152 = por %p150, %p151
    %p153 = scmp.ne.s32.totalorder %s139, %s140
    %p154 = scmp.eq.s32.totalorder %s17, 1
    %p155 = por %p153, %p154
    %p157 = scmp.ne.s32.totalorder %s140, %s156
    %p158 = scmp.eq.s32.totalorder %s17, 0
    %p159 = por %p157, %p158
    %p160 = scmp.le.s32.totalorder 1, %s11
    %p161 = scmp.lt.s32.totalorder %s11, 3
    %p162 = pnand %p160, %p161
    %p163 = pneg %p162
    // Predicated region
    $region9: #{_lambda_.10} parent=5 // pred_check
      _
    $region10: #{_lambda_.10} parent=5 // pred_check_branch
      %165 = sbr.rel (%p162) target = $region12
    $region11: #{_lambda_.10} parent=5 // pred_region
      %s166 = ssub.s32 %s11, 1
      // Predicated region
      $region13: #{_lambda_.10} parent=11 // pred_check
        %p167 = pneg %p58
      $region14: #{_lambda_.10} parent=11 // pred_check_branch
        %169 = sbr.rel (%p167) target = $region16
      $region15: #{_lambda_.10} parent=11 // pred_region
        _
      $region16: #{_lambda_.10} parent=11 // pred_fallthru
        _
      // Predicated region
      $region17: #{_lambda_.10} parent=11 // pred_check
        %p170 = pneg %p79
      $region18: #{_lambda_.10} parent=11 // pred_check_branch
        %172 = sbr.rel (%p170) target = $region20
      $region19: #{_lambda_.10} parent=11 // pred_region
        _
      $region20: #{_lambda_.10} parent=11 // pred_fallthru
        _
      // Predicated region
      $region21: #{_lambda_.10} parent=11 // pred_check
        %p173 = pneg %p100
      $region22: #{_lambda_.10} parent=11 // pred_check_branch
        %175 = sbr.rel (%p173) target = $region24
      $region23: #{_lambda_.10} parent=11 // pred_region
        _
      $region24: #{_lambda_.10} parent=11 // pred_fallthru
        _
    $region12: #{_lambda_.10} parent=5 // pred_fallthru
      _
    %p176 = scmp.lt.s32.totalorder %s11, 2
    // Predicated region
    $region25: #{_lambda_.10} parent=5 // pred_check
      %p177 = pneg %p176
    $region26: #{_lambda_.10} parent=5 // pred_check_branch
      %179 = sbr.rel (%p177) target = $region28
    $region27: #{_lambda_.10} parent=5 // pred_region
      // Predicated region
      $region29: #{_lambda_.10} parent=27 // pred_check
        %p180 = pneg %p31
      $region30: #{_lambda_.10} parent=27 // pred_check_branch
        %182 = sbr.rel (%p180) target = $region32
      $region31: #{_lambda_.10} parent=27 // pred_region
        %s183 = smul.u32 32, %s11
        %p184 = scmp.lt.s32.totalorder %s183, 63
        %s185 = scalar_select %p184, %s183, 63
        %s186 = smul.addr %s185, 7
        %s187 = smul.addr %s186, 4
        %s188 = scalar_lea.vmem %s0, %s187
        %s189 = smul.u32 32, %s11
      $region32: #{_lambda_.10} parent=27 // pred_fallthru
        _
      // Predicated region
      $region33: #{_lambda_.10} parent=27 // pred_check
        %p190 = pneg %p120
      $region34: #{_lambda_.10} parent=27 // pred_check_branch
        %192 = sbr.rel (%p190) target = $region36
      $region35: #{_lambda_.10} parent=27 // pred_region
        %s193 = smul.u32 32, %s11
        %p194 = scmp.lt.s32.totalorder %s193, 63
        %s195 = scalar_select %p194, %s193, 63
        %s196 = smul.addr %s195, 8
        %s197 = scalar_lea.vmem %s4, %s196
        %s198 = smul.u32 32, %s11
      $region36: #{_lambda_.10} parent=27 // pred_fallthru
        _
    $region28: #{_lambda_.10} parent=5 // pred_fallthru
      _
    %p199 = scmp.le.s32.totalorder 1, %s11
    %p200 = scmp.lt.s32.totalorder %s11, 3
    %p201 = pnand %p199, %p200
    %p202 = pneg %p201
    // Predicated region
    $region37: #{_lambda_.10} parent=5 // pred_check
      _
    $region38: #{_lambda_.10} parent=5 // pred_check_branch
      %204 = sbr.rel (%p201) target = $region40
    $region39: #{_lambda_.10} parent=5 // pred_region
      %s205 = ssub.s32 %s11, 1
      %s206 = smul.u32 32, %s16
      %p207 = scmp.lt.s32.totalorder %s206, 63
      %s208 = scalar_select %p207, %s206, 63
      %s209 = smul.addr %s208, 7
      %s210 = smul.addr %s209, 4
      %s211 = scalar_lea.vmem %s0, %s210
      %p212 = pneg %p37
      %p213 = pneg %p34
      %p214 = pneg %p58
      %p215 = pneg %p55
      %p216 = pneg %p79
      %p217 = pneg %p76
      %p218 = pneg %p100
      %p219 = pneg %p97
      %s220 = smul.u32 32, %s16
      %p221 = scmp.lt.s32.totalorder %s220, 63
      %s222 = scalar_select %p221, %s220, 63
      %s223 = smul.addr %s222, 8
      %s224 = scalar_lea.vmem %s4, %s223
      %p225 = pneg %p126
      %p226 = pneg %p123
      %p227 = pneg %p152
      %p228 = pneg %p149
      %s229 = smul.u32 32, %s16
      %p230 = scmp.lt.s32.totalorder %s229, 63
      %s231 = scalar_select %p230, %s229, 63
      %s232 = smul.addr %s231, 8
      %s233 = scalar_lea.vmem %s5, %s232
      %s234 = smul.u32 32, %s16
      %p235 = scmp.lt.s32.totalorder %s234, 63
      %s236 = scalar_select %p235, %s234, 63
      %s237 = smul.addr %s236, 7
      %s238 = smul.addr %s237, 4
      %s239 = scalar_lea.vmem %s0, %s238
      %s240 = smul.u32 32, %s16
      %s241 = smul.u32 32, %s16
      %p242 = scmp.lt.s32.totalorder %s241, 63
      %s243 = scalar_select %p242, %s241, 63
      %s244 = smul.addr %s243, 8
      %s245 = scalar_lea.vmem %s4, %s244
      %s246 = smul.u32 32, %s16
      %s247 = smul.u32 32, %s16
      %p248 = scmp.lt.s32.totalorder %s247, 63
      %s249 = scalar_select %p248, %s247, 63
      %s250 = smul.addr %s249, 8
      %s251 = scalar_lea.vmem %s5, %s250
      %s252 = smul.u32 32, %s16
      %v254 = vld [vmem:[%s239] sm:$0xff]
      %v255 = vld [vmem:[%s239 + $0x8] sm:$0xff]
      %v256 = vld [vmem:[%s239 + $0x10] sm:$0xff]
      %v257 = vld [vmem:[%s239 + $0x18] sm:$0xf]
      %v258 = vld [vmem:[%s239 + $0x1c] sm:$0xff]
      %v259 = vld [vmem:[%s239 + $0x24] sm:$0xff]
      %v260 = vld [vmem:[%s239 + $0x2c] sm:$0xff]
      %v261 = vld [vmem:[%s239 + $0x34] sm:$0xf]
      %v262 = vld [vmem:[%s239 + $0x38] sm:$0xff]
      %v263 = vld [vmem:[%s239 + $0x40] sm:$0xff]
      %v264 = vld [vmem:[%s239 + $0x48] sm:$0xff]
      %v265 = vld [vmem:[%s239 + $0x50] sm:$0xf]
      %v266 = vld [vmem:[%s239 + $0x54] sm:$0xff]
      %v267 = vld [vmem:[%s239 + $0x5c] sm:$0xff]
      %v268 = vld [vmem:[%s239 + $0x64] sm:$0xff]
      %v269 = vld [vmem:[%s239 + $0x6c] sm:$0xf]
      %v270 = vld [vmem:[%s239 + $0x70] sm:$0xff]
      %v271 = vld [vmem:[%s239 + $0x78] sm:$0xff]
      %v272 = vld [vmem:[%s239 + $0x80] sm:$0xff]
      %v273 = vld [vmem:[%s239 + $0x88] sm:$0xf]
      %v274 = vld [vmem:[%s239 + $0x8c] sm:$0xff]
      %v275 = vld [vmem:[%s239 + $0x94] sm:$0xff]
      %v276 = vld [vmem:[%s239 + $0x9c] sm:$0xff]
      %v277 = vld [vmem:[%s239 + $0xa4] sm:$0xf]
      %v278 = vld [vmem:[%s239 + $0xa8] sm:$0xff]
      %v279 = vld [vmem:[%s239 + $0xb0] sm:$0xff]
      %v280 = vld [vmem:[%s239 + $0xb8] sm:$0xff]
      %v281 = vld [vmem:[%s239 + $0xc0] sm:$0xf]
      %v282 = vld [vmem:[%s239 + $0xc4] sm:$0xff]
      %v283 = vld [vmem:[%s239 + $0xcc] sm:$0xff]
      %v284 = vld [vmem:[%s239 + $0xd4] sm:$0xff]
      %v285 = vld [vmem:[%s239 + $0xdc] sm:$0xf]
      %v286 = vld [vmem:[%s239 + $0xe0] sm:$0xff]
      %v287 = vld [vmem:[%s239 + $0xe8] sm:$0xff]
      %v288 = vld [vmem:[%s239 + $0xf0] sm:$0xff]
      %v289 = vld [vmem:[%s239 + $0xf8] sm:$0xf]
      %v290 = vld [vmem:[%s239 + $0xfc] sm:$0xff]
      %v291 = vld [vmem:[%s239 + $0x104] sm:$0xff]
      %v292 = vld [vmem:[%s239 + $0x10c] sm:$0xff]
      %v293 = vld [vmem:[%s239 + $0x114] sm:$0xf]
      %v294 = vld [vmem:[%s239 + $0x118] sm:$0xff]
      %v295 = vld [vmem:[%s239 + $0x120] sm:$0xff]
      %v296 = vld [vmem:[%s239 + $0x128] sm:$0xff]
      %v297 = vld [vmem:[%s239 + $0x130] sm:$0xf]
      %v298 = vld [vmem:[%s239 + $0x134] sm:$0xff]
      %v299 = vld [vmem:[%s239 + $0x13c] sm:$0xff]
      %v300 = vld [vmem:[%s239 + $0x144] sm:$0xff]
      %v301 = vld [vmem:[%s239 + $0x14c] sm:$0xf]
      %v302 = vld [vmem:[%s239 + $0x150] sm:$0xff]
      %v303 = vld [vmem:[%s239 + $0x158] sm:$0xff]
      %v304 = vld [vmem:[%s239 + $0x160] sm:$0xff]
      %v305 = vld [vmem:[%s239 + $0x168] sm:$0xf]
      %v306 = vld [vmem:[%s239 + $0x16c] sm:$0xff]
      %v307 = vld [vmem:[%s239 + $0x174] sm:$0xff]
      %v308 = vld [vmem:[%s239 + $0x17c] sm:$0xff]
      %v309 = vld [vmem:[%s239 + $0x184] sm:$0xf]
      %v310 = vld [vmem:[%s239 + $0x188] sm:$0xff]
      %v311 = vld [vmem:[%s239 + $0x190] sm:$0xff]
      %v312 = vld [vmem:[%s239 + $0x198] sm:$0xff]
      %v313 = vld [vmem:[%s239 + $0x1a0] sm:$0xf]
      %v314 = vld [vmem:[%s239 + $0x1a4] sm:$0xff]
      %v315 = vld [vmem:[%s239 + $0x1ac] sm:$0xff]
      %v316 = vld [vmem:[%s239 + $0x1b4] sm:$0xff]
      %v317 = vld [vmem:[%s239 + $0x1bc] sm:$0xf]
      %v318 = vld [vmem:[%s239 + $0x1c0] sm:$0xff]
      %v319 = vld [vmem:[%s239 + $0x1c8] sm:$0xff]
      %v320 = vld [vmem:[%s239 + $0x1d0] sm:$0xff]
      %v321 = vld [vmem:[%s239 + $0x1d8] sm:$0xf]
      %v322 = vld [vmem:[%s239 + $0x1dc] sm:$0xff]
      %v323 = vld [vmem:[%s239 + $0x1e4] sm:$0xff]
      %v324 = vld [vmem:[%s239 + $0x1ec] sm:$0xff]
      %v325 = vld [vmem:[%s239 + $0x1f4] sm:$0xf]
      %v326 = vld [vmem:[%s239 + $0x1f8] sm:$0xff]
      %v327 = vld [vmem:[%s239 + $0x200] sm:$0xff]
      %v328 = vld [vmem:[%s239 + $0x208] sm:$0xff]
      %v329 = vld [vmem:[%s239 + $0x210] sm:$0xf]
      %v330 = vld [vmem:[%s239 + $0x214] sm:$0xff]
      %v331 = vld [vmem:[%s239 + $0x21c] sm:$0xff]
      %v332 = vld [vmem:[%s239 + $0x224] sm:$0xff]
      %v333 = vld [vmem:[%s239 + $0x22c] sm:$0xf]
      %v334 = vld [vmem:[%s239 + $0x230] sm:$0xff]
      %v335 = vld [vmem:[%s239 + $0x238] sm:$0xff]
      %v336 = vld [vmem:[%s239 + $0x240] sm:$0xff]
      %v337 = vld [vmem:[%s239 + $0x248] sm:$0xf]
      %v338 = vld [vmem:[%s239 + $0x24c] sm:$0xff]
      %v339 = vld [vmem:[%s239 + $0x254] sm:$0xff]
      %v340 = vld [vmem:[%s239 + $0x25c] sm:$0xff]
      %v341 = vld [vmem:[%s239 + $0x264] sm:$0xf]
      %v342 = vld [vmem:[%s239 + $0x268] sm:$0xff]
      %v343 = vld [vmem:[%s239 + $0x270] sm:$0xff]
      %v344 = vld [vmem:[%s239 + $0x278] sm:$0xff]
      %v345 = vld [vmem:[%s239 + $0x280] sm:$0xf]
      %v346 = vld [vmem:[%s239 + $0x284] sm:$0xff]
      %v347 = vld [vmem:[%s239 + $0x28c] sm:$0xff]
      %v348 = vld [vmem:[%s239 + $0x294] sm:$0xff]
      %v349 = vld [vmem:[%s239 + $0x29c] sm:$0xf]
      %v350 = vld [vmem:[%s239 + $0x2a0] sm:$0xff]
      %v351 = vld [vmem:[%s239 + $0x2a8] sm:$0xff]
      %v352 = vld [vmem:[%s239 + $0x2b0] sm:$0xff]
      %v353 = vld [vmem:[%s239 + $0x2b8] sm:$0xf]
      %v354 = vld [vmem:[%s239 + $0x2bc] sm:$0xff]
      %v355 = vld [vmem:[%s239 + $0x2c4] sm:$0xff]
      %v356 = vld [vmem:[%s239 + $0x2cc] sm:$0xff]
      %v357 = vld [vmem:[%s239 + $0x2d4] sm:$0xf]
      %v358 = vld [vmem:[%s239 + $0x2d8] sm:$0xff]
      %v359 = vld [vmem:[%s239 + $0x2e0] sm:$0xff]
      %v360 = vld [vmem:[%s239 + $0x2e8] sm:$0xff]
      %v361 = vld [vmem:[%s239 + $0x2f0] sm:$0xf]
      %v362 = vld [vmem:[%s239 + $0x2f4] sm:$0xff]
      %v363 = vld [vmem:[%s239 + $0x2fc] sm:$0xff]
      %v364 = vld [vmem:[%s239 + $0x304] sm:$0xff]
      %v365 = vld [vmem:[%s239 + $0x30c] sm:$0xf]
      %v366 = vld [vmem:[%s239 + $0x310] sm:$0xff]
      %v367 = vld [vmem:[%s239 + $0x318] sm:$0xff]
      %v368 = vld [vmem:[%s239 + $0x320] sm:$0xff]
      %v369 = vld [vmem:[%s239 + $0x328] sm:$0xf]
      %v370 = vld [vmem:[%s239 + $0x32c] sm:$0xff]
      %v371 = vld [vmem:[%s239 + $0x334] sm:$0xff]
      %v372 = vld [vmem:[%s239 + $0x33c] sm:$0xff]
      %v373 = vld [vmem:[%s239 + $0x344] sm:$0xf]
      %v374 = vld [vmem:[%s239 + $0x348] sm:$0xff]
      %v375 = vld [vmem:[%s239 + $0x350] sm:$0xff]
      %v376 = vld [vmem:[%s239 + $0x358] sm:$0xff]
      %v377 = vld [vmem:[%s239 + $0x360] sm:$0xf]
      %v378 = vld [vmem:[%s239 + $0x364] sm:$0xff]
      %v379 = vld [vmem:[%s239 + $0x36c] sm:$0xff]
      %v380 = vld [vmem:[%s239 + $0x374] sm:$0xff]
      %v381 = vld [vmem:[%s239 + $0x37c] sm:$0xf]
      %v382 = vld [vmem:[%s1] sm:$0xf]
      %v383 = vld [vmem:[%s1 + $0x4] sm:$0xf]
      %v384 = vld [vmem:[%s1 + $0x8] sm:$0xf]
      %v385 = vld [vmem:[%s1 + $0xc] sm:$0xf]
      %v386 = vld [vmem:[%s1 + $0x10] sm:$0xf]
      %v387 = vld [vmem:[%s1 + $0x14] sm:$0xf]
      %v388 = vld [vmem:[%s1 + $0x18] sm:$0xf]
      %v389 = vld [vmem:[%s1 + $0x1c] sm:$0xf]
      %v390 = vld [vmem:[%s1 + $0x20] sm:$0xf]
      %v391 = vld [vmem:[%s1 + $0x24] sm:$0xf]
      %v392 = vld [vmem:[%s1 + $0x28] sm:$0xf]
      %v393 = vld [vmem:[%s1 + $0x2c] sm:$0xf]
      %v394 = vld [vmem:[%s1 + $0x30] sm:$0xf]
      %v395 = vld [vmem:[%s1 + $0x34] sm:$0xf]
      %v396 = vld [vmem:[%s1 + $0x38] sm:$0xf]
      %v397 = vld [vmem:[%s1 + $0x3c] sm:$0xf]
      %v398 = vld [vmem:[%s1 + $0x40] sm:$0xf]
      %v399 = vld [vmem:[%s1 + $0x44] sm:$0xf]
      %v400 = vld [vmem:[%s1 + $0x48] sm:$0xf]
      %v401 = vld [vmem:[%s1 + $0x4c] sm:$0xf]
      %v402 = vld [vmem:[%s1 + $0x50] sm:$0xf]
      %v403 = vld [vmem:[%s1 + $0x54] sm:$0xf]
      %v404 = vld [vmem:[%s1 + $0x58] sm:$0xf]
      %v405 = vld [vmem:[%s1 + $0x5c] sm:$0xf]
      %v406 = vld [vmem:[%s1 + $0x60] sm:$0xf]
      %v407 = vld [vmem:[%s1 + $0x64] sm:$0xf]
      %v408 = vld [vmem:[%s1 + $0x68] sm:$0xf]
      %v409 = vld [vmem:[%s1 + $0x6c] sm:$0xf]
      %v410 = vld [vmem:[%s1 + $0x70] sm:$0xf]
      %v411 = vld [vmem:[%s1 + $0x74] sm:$0xf]
      %v412 = vld [vmem:[%s1 + $0x78] sm:$0xf]
      %v413 = vld [vmem:[%s1 + $0x7c] sm:$0xf]
      %v414 = vld [vmem:[%s1 + $0x80] sm:$0xf]
      %v415 = vld [vmem:[%s1 + $0x84] sm:$0xf]
      %v416 = vld [vmem:[%s1 + $0x88] sm:$0xf]
      %v417 = vld [vmem:[%s1 + $0x8c] sm:$0xf]
      %v418 = vld [vmem:[%s1 + $0x90] sm:$0xf]
      %v419 = vld [vmem:[%s1 + $0x94] sm:$0xf]
      %v420 = vld [vmem:[%s1 + $0x98] sm:$0xf]
      %v421 = vld [vmem:[%s1 + $0x9c] sm:$0xf]
      %v422 = vld [vmem:[%s1 + $0xa0] sm:$0xf]
      %v423 = vld [vmem:[%s1 + $0xa4] sm:$0xf]
      %v424 = vld [vmem:[%s1 + $0xa8] sm:$0xf]
      %v425 = vld [vmem:[%s1 + $0xac] sm:$0xf]
      %v426 = vld [vmem:[%s1 + $0xb0] sm:$0xf]
      %v427 = vld [vmem:[%s1 + $0xb4] sm:$0xf]
      %v428 = vld [vmem:[%s1 + $0xb8] sm:$0xf]
      %v429 = vld [vmem:[%s1 + $0xbc] sm:$0xf]
      %v430 = vld [vmem:[%s1 + $0xc0] sm:$0xf]
      %v431 = vld [vmem:[%s1 + $0xc4] sm:$0xf]
      %v432 = vld [vmem:[%s1 + $0xc8] sm:$0xf]
      %v433 = vld [vmem:[%s1 + $0xcc] sm:$0xf]
      %v434 = vld [vmem:[%s1 + $0xd0] sm:$0xf]
      %v435 = vld [vmem:[%s1 + $0xd4] sm:$0xf]
      %v436 = vld [vmem:[%s1 + $0xd8] sm:$0xf]
      %v437 = vld [vmem:[%s1 + $0xdc] sm:$0xf]
      %v438 = vld [vmem:[%s1 + $0xe0] sm:$0xf]
      %v439 = vld [vmem:[%s1 + $0xe4] sm:$0xf]
      %v440 = vld [vmem:[%s1 + $0xe8] sm:$0xf]
      %v441 = vld [vmem:[%s1 + $0xec] sm:$0xf]
      %v442 = vld [vmem:[%s1 + $0xf0] sm:$0xf]
      %v443 = vld [vmem:[%s1 + $0xf4] sm:$0xf]
      %v444 = vld [vmem:[%s1 + $0xf8] sm:$0xf]
      %v445 = vld [vmem:[%s1 + $0xfc] sm:$0xf]
      %v446 = vld [vmem:[%s1 + $0x100] sm:$0xf]
      %v447 = vld [vmem:[%s1 + $0x104] sm:$0xf]
      %v448 = vld [vmem:[%s1 + $0x108] sm:$0xf]
      %v449 = vld [vmem:[%s1 + $0x10c] sm:$0xf]
      %v450 = vld [vmem:[%s1 + $0x110] sm:$0xf]
      %v451 = vld [vmem:[%s1 + $0x114] sm:$0xf]
      %v452 = vld [vmem:[%s1 + $0x118] sm:$0xf]
      %v453 = vld [vmem:[%s1 + $0x11c] sm:$0xf]
      %v454 = vld [vmem:[%s1 + $0x120] sm:$0xf]
      %v455 = vld [vmem:[%s1 + $0x124] sm:$0xf]
      %v456 = vld [vmem:[%s1 + $0x128] sm:$0xf]
      %v457 = vld [vmem:[%s1 + $0x12c] sm:$0xf]
      %v458 = vld [vmem:[%s1 + $0x130] sm:$0xf]
      %v459 = vld [vmem:[%s1 + $0x134] sm:$0xf]
      %v460 = vld [vmem:[%s1 + $0x138] sm:$0xf]
      %v461 = vld [vmem:[%s1 + $0x13c] sm:$0xf]
      %v462 = vld [vmem:[%s1 + $0x140] sm:$0xf]
      %v463 = vld [vmem:[%s1 + $0x144] sm:$0xf]
      %v464 = vld [vmem:[%s1 + $0x148] sm:$0xf]
      %v465 = vld [vmem:[%s1 + $0x14c] sm:$0xf]
      %v466 = vld [vmem:[%s1 + $0x150] sm:$0xf]
      %v467 = vld [vmem:[%s1 + $0x154] sm:$0xf]
      %v468 = vld [vmem:[%s1 + $0x158] sm:$0xf]
      %v469 = vld [vmem:[%s1 + $0x15c] sm:$0xf]
      %v470 = vld [vmem:[%s1 + $0x160] sm:$0xf]
      %v471 = vld [vmem:[%s1 + $0x164] sm:$0xf]
      %v472 = vld [vmem:[%s1 + $0x168] sm:$0xf]
      %v473 = vld [vmem:[%s1 + $0x16c] sm:$0xf]
      %v474 = vld [vmem:[%s1 + $0x170] sm:$0xf]
      %v475 = vld [vmem:[%s1 + $0x174] sm:$0xf]
      %v476 = vld [vmem:[%s1 + $0x178] sm:$0xf]
      %v477 = vld [vmem:[%s1 + $0x17c] sm:$0xf]
      %v478 = vld [vmem:[%s1 + $0x180] sm:$0xf]
      %v479 = vld [vmem:[%s1 + $0x184] sm:$0xf]
      %v480 = vld [vmem:[%s1 + $0x188] sm:$0xf]
      %v481 = vld [vmem:[%s1 + $0x18c] sm:$0xf]
      %v482 = vld [vmem:[%s1 + $0x190] sm:$0xf]
      %v483 = vld [vmem:[%s1 + $0x194] sm:$0xf]
      %v484 = vld [vmem:[%s1 + $0x198] sm:$0xf]
      %v485 = vld [vmem:[%s1 + $0x19c] sm:$0xf]
      %v486 = vld [vmem:[%s1 + $0x1a0] sm:$0xf]
      %v487 = vld [vmem:[%s1 + $0x1a4] sm:$0xf]
      %v488 = vld [vmem:[%s1 + $0x1a8] sm:$0xf]
      %v489 = vld [vmem:[%s1 + $0x1ac] sm:$0xf]
      %v618 = vunpack.c.l.b16 %v254
      %v619 = vunpack.c.h.b16 %v254
      %v620 = vunpack.c.l.b16 %v255
      %v621 = vunpack.c.h.b16 %v255
      %v622 = vunpack.c.l.b16 %v256
      %v623 = vunpack.c.h.b16 %v256
      %v624 = vunpack.c.l.b16 %v257
      %v625 = vunpack.c.l.b16 %v258
      %v626 = vunpack.c.h.b16 %v258
      %v627 = vunpack.c.l.b16 %v259
      %v628 = vunpack.c.h.b16 %v259
      %v629 = vunpack.c.l.b16 %v260
      %v630 = vunpack.c.h.b16 %v260
      %v631 = vunpack.c.l.b16 %v261
      %v632 = vunpack.c.l.b16 %v262
      %v633 = vunpack.c.h.b16 %v262
      %v634 = vunpack.c.l.b16 %v263
      %v635 = vunpack.c.h.b16 %v263
      %v636 = vunpack.c.l.b16 %v264
      %v637 = vunpack.c.h.b16 %v264
      %v638 = vunpack.c.l.b16 %v265
      %v639 = vunpack.c.l.b16 %v266
      %v640 = vunpack.c.h.b16 %v266
      %v641 = vunpack.c.l.b16 %v267
      %v642 = vunpack.c.h.b16 %v267
      %v643 = vunpack.c.l.b16 %v268
      %v644 = vunpack.c.h.b16 %v268
      %v645 = vunpack.c.l.b16 %v269
      %v646 = vunpack.c.l.b16 %v270
      %v647 = vunpack.c.h.b16 %v270
      %v648 = vunpack.c.l.b16 %v271
      %v649 = vunpack.c.h.b16 %v271
      %v650 = vunpack.c.l.b16 %v272
      %v651 = vunpack.c.h.b16 %v272
      %v652 = vunpack.c.l.b16 %v273
      %v653 = vunpack.c.l.b16 %v274
      %v654 = vunpack.c.h.b16 %v274
      %v655 = vunpack.c.l.b16 %v275
      %v656 = vunpack.c.h.b16 %v275
      %v657 = vunpack.c.l.b16 %v276
      %v658 = vunpack.c.h.b16 %v276
      %v659 = vunpack.c.l.b16 %v277
      %v660 = vunpack.c.l.b16 %v278
      %v661 = vunpack.c.h.b16 %v278
      %v662 = vunpack.c.l.b16 %v279
      %v663 = vunpack.c.h.b16 %v279
      %v664 = vunpack.c.l.b16 %v280
      %v665 = vunpack.c.h.b16 %v280
      %v666 = vunpack.c.l.b16 %v281
      %v667 = vunpack.c.l.b16 %v282
      %v668 = vunpack.c.h.b16 %v282
      %v669 = vunpack.c.l.b16 %v283
      %v670 = vunpack.c.h.b16 %v283
      %v671 = vunpack.c.l.b16 %v284
      %v672 = vunpack.c.h.b16 %v284
      %v673 = vunpack.c.l.b16 %v285
      %v674 = vunpack.c.l.b16 %v286
      %v675 = vunpack.c.h.b16 %v286
      %v676 = vunpack.c.l.b16 %v287
      %v677 = vunpack.c.h.b16 %v287
      %v678 = vunpack.c.l.b16 %v288
      %v679 = vunpack.c.h.b16 %v288
      %v680 = vunpack.c.l.b16 %v289
      %v681 = vunpack.c.l.b16 %v290
      %v682 = vunpack.c.h.b16 %v290
      %v683 = vunpack.c.l.b16 %v291
      %v684 = vunpack.c.h.b16 %v291
      %v685 = vunpack.c.l.b16 %v292
      %v686 = vunpack.c.h.b16 %v292
      %v687 = vunpack.c.l.b16 %v293
      %v688 = vunpack.c.l.b16 %v294
      %v689 = vunpack.c.h.b16 %v294
      %v690 = vunpack.c.l.b16 %v295
      %v691 = vunpack.c.h.b16 %v295
      %v692 = vunpack.c.l.b16 %v296
      %v693 = vunpack.c.h.b16 %v296
      %v694 = vunpack.c.l.b16 %v297
      %v695 = vunpack.c.l.b16 %v298
      %v696 = vunpack.c.h.b16 %v298
      %v697 = vunpack.c.l.b16 %v299
      %v698 = vunpack.c.h.b16 %v299
      %v699 = vunpack.c.l.b16 %v300
      %v700 = vunpack.c.h.b16 %v300
      %v701 = vunpack.c.l.b16 %v301
      %v702 = vunpack.c.l.b16 %v302
      %v703 = vunpack.c.h.b16 %v302
      %v704 = vunpack.c.l.b16 %v303
      %v705 = vunpack.c.h.b16 %v303
      %v706 = vunpack.c.l.b16 %v304
      %v707 = vunpack.c.h.b16 %v304
      %v708 = vunpack.c.l.b16 %v305
      %v709 = vunpack.c.l.b16 %v306
      %v710 = vunpack.c.h.b16 %v306
      %v711 = vunpack.c.l.b16 %v307
      %v712 = vunpack.c.h.b16 %v307
      %v713 = vunpack.c.l.b16 %v308
      %v714 = vunpack.c.h.b16 %v308
      %v715 = vunpack.c.l.b16 %v309
      %v716 = vunpack.c.l.b16 %v310
      %v717 = vunpack.c.h.b16 %v310
      %v718 = vunpack.c.l.b16 %v311
      %v719 = vunpack.c.h.b16 %v311
      %v720 = vunpack.c.l.b16 %v312
      %v721 = vunpack.c.h.b16 %v312
      %v722 = vunpack.c.l.b16 %v313
      %v723 = vunpack.c.l.b16 %v314
      %v724 = vunpack.c.h.b16 %v314
      %v725 = vunpack.c.l.b16 %v315
      %v726 = vunpack.c.h.b16 %v315
      %v727 = vunpack.c.l.b16 %v316
      %v728 = vunpack.c.h.b16 %v316
      %v729 = vunpack.c.l.b16 %v317
      %v730 = vunpack.c.l.b16 %v318
      %v731 = vunpack.c.h.b16 %v318
      %v732 = vunpack.c.l.b16 %v319
      %v733 = vunpack.c.h.b16 %v319
      %v734 = vunpack.c.l.b16 %v320
      %v735 = vunpack.c.h.b16 %v320
      %v736 = vunpack.c.l.b16 %v321
      %v737 = vunpack.c.l.b16 %v322
      %v738 = vunpack.c.h.b16 %v322
      %v739 = vunpack.c.l.b16 %v323
      %v740 = vunpack.c.h.b16 %v323
      %v741 = vunpack.c.l.b16 %v324
      %v742 = vunpack.c.h.b16 %v324
      %v743 = vunpack.c.l.b16 %v325
      %v744 = vunpack.c.l.b16 %v326
      %v745 = vunpack.c.h.b16 %v326
      %v746 = vunpack.c.l.b16 %v327
      %v747 = vunpack.c.h.b16 %v327
      %v748 = vunpack.c.l.b16 %v328
      %v749 = vunpack.c.h.b16 %v328
      %v750 = vunpack.c.l.b16 %v329
      %v751 = vunpack.c.l.b16 %v330
      %v752 = vunpack.c.h.b16 %v330
      %v753 = vunpack.c.l.b16 %v331
      %v754 = vunpack.c.h.b16 %v331
      %v755 = vunpack.c.l.b16 %v332
      %v756 = vunpack.c.h.b16 %v332
      %v757 = vunpack.c.l.b16 %v333
      %v758 = vunpack.c.l.b16 %v334
      %v759 = vunpack.c.h.b16 %v334
      %v760 = vunpack.c.l.b16 %v335
      %v761 = vunpack.c.h.b16 %v335
      %v762 = vunpack.c.l.b16 %v336
      %v763 = vunpack.c.h.b16 %v336
      %v764 = vunpack.c.l.b16 %v337
      %v765 = vunpack.c.l.b16 %v338
      %v766 = vunpack.c.h.b16 %v338
      %v767 = vunpack.c.l.b16 %v339
      %v768 = vunpack.c.h.b16 %v339
      %v769 = vunpack.c.l.b16 %v340
      %v770 = vunpack.c.h.b16 %v340
      %v771 = vunpack.c.l.b16 %v341
      %v772 = vunpack.c.l.b16 %v342
      %v773 = vunpack.c.h.b16 %v342
      %v774 = vunpack.c.l.b16 %v343
      %v775 = vunpack.c.h.b16 %v343
      %v776 = vunpack.c.l.b16 %v344
      %v777 = vunpack.c.h.b16 %v344
      %v778 = vunpack.c.l.b16 %v345
      %v779 = vunpack.c.l.b16 %v346
      %v780 = vunpack.c.h.b16 %v346
      %v781 = vunpack.c.l.b16 %v347
      %v782 = vunpack.c.h.b16 %v347
      %v783 = vunpack.c.l.b16 %v348
      %v784 = vunpack.c.h.b16 %v348
      %v785 = vunpack.c.l.b16 %v349
      %v786 = vunpack.c.l.b16 %v350
      %v787 = vunpack.c.h.b16 %v350
      %v788 = vunpack.c.l.b16 %v351
      %v789 = vunpack.c.h.b16 %v351
      %v790 = vunpack.c.l.b16 %v352
      %v791 = vunpack.c.h.b16 %v352
      %v792 = vunpack.c.l.b16 %v353
      %v793 = vunpack.c.l.b16 %v354
      %v794 = vunpack.c.h.b16 %v354
      %v795 = vunpack.c.l.b16 %v355
      %v796 = vunpack.c.h.b16 %v355
      %v797 = vunpack.c.l.b16 %v356
      %v798 = vunpack.c.h.b16 %v356
      %v799 = vunpack.c.l.b16 %v357
      %v800 = vunpack.c.l.b16 %v358
      %v801 = vunpack.c.h.b16 %v358
      %v802 = vunpack.c.l.b16 %v359
      %v803 = vunpack.c.h.b16 %v359
      %v804 = vunpack.c.l.b16 %v360
      %v805 = vunpack.c.h.b16 %v360
      %v806 = vunpack.c.l.b16 %v361
      %v807 = vunpack.c.l.b16 %v362
      %v808 = vunpack.c.h.b16 %v362
      %v809 = vunpack.c.l.b16 %v363
      %v810 = vunpack.c.h.b16 %v363
      %v811 = vunpack.c.l.b16 %v364
      %v812 = vunpack.c.h.b16 %v364
      %v813 = vunpack.c.l.b16 %v365
      %v814 = vunpack.c.l.b16 %v366
      %v815 = vunpack.c.h.b16 %v366
      %v816 = vunpack.c.l.b16 %v367
      %v817 = vunpack.c.h.b16 %v367
      %v818 = vunpack.c.l.b16 %v368
      %v819 = vunpack.c.h.b16 %v368
      %v820 = vunpack.c.l.b16 %v369
      %v821 = vunpack.c.l.b16 %v370
      %v822 = vunpack.c.h.b16 %v370
      %v823 = vunpack.c.l.b16 %v371
      %v824 = vunpack.c.h.b16 %v371
      %v825 = vunpack.c.l.b16 %v372
      %v826 = vunpack.c.h.b16 %v372
      %v827 = vunpack.c.l.b16 %v373
      %v828 = vunpack.c.l.b16 %v374
      %v829 = vunpack.c.h.b16 %v374
      %v830 = vunpack.c.l.b16 %v375
      %v831 = vunpack.c.h.b16 %v375
      %v832 = vunpack.c.l.b16 %v376
      %v833 = vunpack.c.h.b16 %v376
      %v834 = vunpack.c.l.b16 %v377
      %v835 = vunpack.c.l.b16 %v378
      %v836 = vunpack.c.h.b16 %v378
      %v837 = vunpack.c.l.b16 %v379
      %v838 = vunpack.c.h.b16 %v379
      %v839 = vunpack.c.l.b16 %v380
      %v840 = vunpack.c.h.b16 %v380
      %v841 = vunpack.c.l.b16 %v381
      %v842 = vpack.c.b16 %v625, %v618
      %v843 = vpack.c.b16 %v626, %v619
      %v844 = vpack.c.b16 %v627, %v620
      %v845 = vpack.c.b16 %v628, %v621
      %v846 = vpack.c.b16 %v629, %v622
      %v847 = vpack.c.b16 %v630, %v623
      %v848 = vpack.c.b16 %v631, %v624
      %v849 = vpack.c.b16 %v639, %v632
      %v850 = vpack.c.b16 %v640, %v633
      %v851 = vpack.c.b16 %v641, %v634
      %v852 = vpack.c.b16 %v642, %v635
      %v853 = vpack.c.b16 %v643, %v636
      %v854 = vpack.c.b16 %v644, %v637
      %v855 = vpack.c.b16 %v645, %v638
      %v856 = vpack.c.b16 %v653, %v646
      %v857 = vpack.c.b16 %v654, %v647
      %v858 = vpack.c.b16 %v655, %v648
      %v859 = vpack.c.b16 %v656, %v649
      %v860 = vpack.c.b16 %v657, %v650
      %v861 = vpack.c.b16 %v658, %v651
      %v862 = vpack.c.b16 %v659, %v652
      %v863 = vpack.c.b16 %v667, %v660
      %v864 = vpack.c.b16 %v668, %v661
      %v865 = vpack.c.b16 %v669, %v662
      %v866 = vpack.c.b16 %v670, %v663
      %v867 = vpack.c.b16 %v671, %v664
      %v868 = vpack.c.b16 %v672, %v665
      %v869 = vpack.c.b16 %v673, %v666
      %v870 = vpack.c.b16 %v681, %v674
      %v871 = vpack.c.b16 %v682, %v675
      %v872 = vpack.c.b16 %v683, %v676
      %v873 = vpack.c.b16 %v684, %v677
      %v874 = vpack.c.b16 %v685, %v678
      %v875 = vpack.c.b16 %v686, %v679
      %v876 = vpack.c.b16 %v687, %v680
      %v877 = vpack.c.b16 %v695, %v688
      %v878 = vpack.c.b16 %v696, %v689
      %v879 = vpack.c.b16 %v697, %v690
      %v880 = vpack.c.b16 %v698, %v691
      %v881 = vpack.c.b16 %v699, %v692
      %v882 = vpack.c.b16 %v700, %v693
      %v883 = vpack.c.b16 %v701, %v694
      %v884 = vpack.c.b16 %v709, %v702
      %v885 = vpack.c.b16 %v710, %v703
      %v886 = vpack.c.b16 %v711, %v704
      %v887 = vpack.c.b16 %v712, %v705
      %v888 = vpack.c.b16 %v713, %v706
      %v889 = vpack.c.b16 %v714, %v707
      %v890 = vpack.c.b16 %v715, %v708
      %v891 = vpack.c.b16 %v723, %v716
      %v892 = vpack.c.b16 %v724, %v717
      %v893 = vpack.c.b16 %v725, %v718
      %v894 = vpack.c.b16 %v726, %v719
      %v895 = vpack.c.b16 %v727, %v720
      %v896 = vpack.c.b16 %v728, %v721
      %v897 = vpack.c.b16 %v729, %v722
      %v898 = vpack.c.b16 %v737, %v730
      %v899 = vpack.c.b16 %v738, %v731
      %v900 = vpack.c.b16 %v739, %v732
      %v901 = vpack.c.b16 %v740, %v733
      %v902 = vpack.c.b16 %v741, %v734
      %v903 = vpack.c.b16 %v742, %v735
      %v904 = vpack.c.b16 %v743, %v736
      %v905 = vpack.c.b16 %v751, %v744
      %v906 = vpack.c.b16 %v752, %v745
      %v907 = vpack.c.b16 %v753, %v746
      %v908 = vpack.c.b16 %v754, %v747
      %v909 = vpack.c.b16 %v755, %v748
      %v910 = vpack.c.b16 %v756, %v749
      %v911 = vpack.c.b16 %v757, %v750
      %v912 = vpack.c.b16 %v765, %v758
      %v913 = vpack.c.b16 %v766, %v759
      %v914 = vpack.c.b16 %v767, %v760
      %v915 = vpack.c.b16 %v768, %v761
      %v916 = vpack.c.b16 %v769, %v762
      %v917 = vpack.c.b16 %v770, %v763
      %v918 = vpack.c.b16 %v771, %v764
      %v919 = vpack.c.b16 %v779, %v772
      %v920 = vpack.c.b16 %v780, %v773
      %v921 = vpack.c.b16 %v781, %v774
      %v922 = vpack.c.b16 %v782, %v775
      %v923 = vpack.c.b16 %v783, %v776
      %v924 = vpack.c.b16 %v784, %v777
      %v925 = vpack.c.b16 %v785, %v778
      %v926 = vpack.c.b16 %v793, %v786
      %v927 = vpack.c.b16 %v794, %v787
      %v928 = vpack.c.b16 %v795, %v788
      %v929 = vpack.c.b16 %v796, %v789
      %v930 = vpack.c.b16 %v797, %v790
      %v931 = vpack.c.b16 %v798, %v791
      %v932 = vpack.c.b16 %v799, %v792
      %v933 = vpack.c.b16 %v807, %v800
      %v934 = vpack.c.b16 %v808, %v801
      %v935 = vpack.c.b16 %v809, %v802
      %v936 = vpack.c.b16 %v810, %v803
      %v937 = vpack.c.b16 %v811, %v804
      %v938 = vpack.c.b16 %v812, %v805
      %v939 = vpack.c.b16 %v813, %v806
      %v940 = vpack.c.b16 %v821, %v814
      %v941 = vpack.c.b16 %v822, %v815
      %v942 = vpack.c.b16 %v823, %v816
      %v943 = vpack.c.b16 %v824, %v817
      %v944 = vpack.c.b16 %v825, %v818
      %v945 = vpack.c.b16 %v826, %v819
      %v946 = vpack.c.b16 %v827, %v820
      %v947 = vpack.c.b16 %v835, %v828
      %v948 = vpack.c.b16 %v836, %v829
      %v949 = vpack.c.b16 %v837, %v830
      %v950 = vpack.c.b16 %v838, %v831
      %v951 = vpack.c.b16 %v839, %v832
      %v952 = vpack.c.b16 %v840, %v833
      %v953 = vpack.c.b16 %v841, %v834
      %v1158 = vunpack.c.l.b16 %v382
      %v1159 = vunpack.c.l.b16 %v383
      %v1160 = vunpack.c.l.b16 %v384
      %v1161 = vunpack.c.l.b16 %v385
      %v1162 = vunpack.c.l.b16 %v386
      %v1163 = vunpack.c.l.b16 %v387
      %v1164 = vunpack.c.l.b16 %v388
      %v1165 = vunpack.c.l.b16 %v389
      %v1166 = vunpack.c.l.b16 %v390
      %v1167 = vunpack.c.l.b16 %v391
      %v1168 = vunpack.c.l.b16 %v392
      %v1169 = vunpack.c.l.b16 %v393
      %v1170 = vunpack.c.l.b16 %v394
      %v1171 = vunpack.c.l.b16 %v395
      %v1172 = vunpack.c.l.b16 %v396
      %v1173 = vunpack.c.l.b16 %v397
      %v1174 = vunpack.c.l.b16 %v398
      %v1175 = vunpack.c.l.b16 %v399
      %v1176 = vunpack.c.l.b16 %v400
      %v1177 = vunpack.c.l.b16 %v401
      %v1178 = vunpack.c.l.b16 %v402
      %v1179 = vunpack.c.l.b16 %v403
      %v1180 = vunpack.c.l.b16 %v404
      %v1181 = vunpack.c.l.b16 %v405
      %v1182 = vunpack.c.l.b16 %v406
      %v1183 = vunpack.c.l.b16 %v407
      %v1184 = vunpack.c.l.b16 %v408
      %v1185 = vunpack.c.l.b16 %v409
      %v1186 = vunpack.c.l.b16 %v410
      %v1187 = vunpack.c.l.b16 %v411
      %v1188 = vunpack.c.l.b16 %v412
      %v1189 = vunpack.c.l.b16 %v413
      %v1190 = vunpack.c.l.b16 %v414
      %v1191 = vunpack.c.l.b16 %v415
      %v1192 = vunpack.c.l.b16 %v416
      %v1193 = vunpack.c.l.b16 %v417
      %v1194 = vunpack.c.l.b16 %v418
      %v1195 = vunpack.c.l.b16 %v419
      %v1196 = vunpack.c.l.b16 %v420
      %v1197 = vunpack.c.l.b16 %v421
      %v1198 = vunpack.c.l.b16 %v422
      %v1199 = vunpack.c.l.b16 %v423
      %v1200 = vunpack.c.l.b16 %v424
      %v1201 = vunpack.c.l.b16 %v425
      %v1202 = vunpack.c.l.b16 %v426
      %v1203 = vunpack.c.l.b16 %v427
      %v1204 = vunpack.c.l.b16 %v428
      %v1205 = vunpack.c.l.b16 %v429
      %v1206 = vunpack.c.l.b16 %v430
      %v1207 = vunpack.c.l.b16 %v431
      %v1208 = vunpack.c.l.b16 %v432
      %v1209 = vunpack.c.l.b16 %v433
      %v1210 = vunpack.c.l.b16 %v434
      %v1211 = vunpack.c.l.b16 %v435
      %v1212 = vunpack.c.l.b16 %v436
      %v1213 = vunpack.c.l.b16 %v437
      %v1214 = vunpack.c.l.b16 %v438
      %v1215 = vunpack.c.l.b16 %v439
      %v1216 = vunpack.c.l.b16 %v440
      %v1217 = vunpack.c.l.b16 %v441
      %v1218 = vunpack.c.l.b16 %v442
      %v1219 = vunpack.c.l.b16 %v443
      %v1220 = vunpack.c.l.b16 %v444
      %v1221 = vunpack.c.l.b16 %v445
      %v1222 = vunpack.c.l.b16 %v446
      %v1223 = vunpack.c.l.b16 %v447
      %v1224 = vunpack.c.l.b16 %v448
      %v1225 = vunpack.c.l.b16 %v449
      %v1226 = vunpack.c.l.b16 %v450
      %v1227 = vunpack.c.l.b16 %v451
      %v1228 = vunpack.c.l.b16 %v452
      %v1229 = vunpack.c.l.b16 %v453
      %v1230 = vunpack.c.l.b16 %v454
      %v1231 = vunpack.c.l.b16 %v455
      %v1232 = vunpack.c.l.b16 %v456
      %v1233 = vunpack.c.l.b16 %v457
      %v1234 = vunpack.c.l.b16 %v458
      %v1235 = vunpack.c.l.b16 %v459
      %v1236 = vunpack.c.l.b16 %v460
      %v1237 = vunpack.c.l.b16 %v461
      %v1238 = vunpack.c.l.b16 %v462
      %v1239 = vunpack.c.l.b16 %v463
      %v1240 = vunpack.c.l.b16 %v464
      %v1241 = vunpack.c.l.b16 %v465
      %v1242 = vunpack.c.l.b16 %v466
      %v1243 = vunpack.c.l.b16 %v467
      %v1244 = vunpack.c.l.b16 %v468
      %v1245 = vunpack.c.l.b16 %v469
      %v1246 = vunpack.c.l.b16 %v470
      %v1247 = vunpack.c.l.b16 %v471
      %v1248 = vunpack.c.l.b16 %v472
      %v1249 = vunpack.c.l.b16 %v473
      %v1250 = vunpack.c.l.b16 %v474
      %v1251 = vunpack.c.l.b16 %v475
      %v1252 = vunpack.c.l.b16 %v476
      %v1253 = vunpack.c.l.b16 %v477
      %v1254 = vunpack.c.l.b16 %v478
      %v1255 = vunpack.c.l.b16 %v479
      %v1256 = vunpack.c.l.b16 %v480
      %v1257 = vunpack.c.l.b16 %v481
      %v1258 = vunpack.c.l.b16 %v482
      %v1259 = vunpack.c.l.b16 %v483
      %v1260 = vunpack.c.l.b16 %v484
      %v1261 = vunpack.c.l.b16 %v485
      %v1262 = vunpack.c.l.b16 %v486
      %v1263 = vunpack.c.l.b16 %v487
      %v1264 = vunpack.c.l.b16 %v488
      %v1265 = vunpack.c.l.b16 %v489
      %v1266 = vpack.c.b16 %v1159, %v1158
      %v1267 = vpack.c.b16 %v1161, %v1160
      %v1268 = vpack.c.b16 %v1163, %v1162
      %v1269 = vpack.c.b16 %v1165, %v1164
      %v1270 = vpack.c.b16 %v1167, %v1166
      %v1271 = vpack.c.b16 %v1169, %v1168
      %v1272 = vpack.c.b16 %v1171, %v1170
      %v1273 = vpack.c.b16 %v1173, %v1172
      %v1274 = vpack.c.b16 %v1175, %v1174
      %v1275 = vpack.c.b16 %v1177, %v1176
      %v1276 = vpack.c.b16 %v1179, %v1178
      %v1277 = vpack.c.b16 %v1181, %v1180
      %v1278 = vpack.c.b16 %v1183, %v1182
      %v1279 = vpack.c.b16 %v1185, %v1184
      %v1280 = vpack.c.b16 %v1187, %v1186
      %v1281 = vpack.c.b16 %v1189, %v1188
      %v1282 = vpack.c.b16 %v1191, %v1190
      %v1283 = vpack.c.b16 %v1193, %v1192
      %v1284 = vpack.c.b16 %v1195, %v1194
      %v1285 = vpack.c.b16 %v1197, %v1196
      %v1286 = vpack.c.b16 %v1199, %v1198
      %v1287 = vpack.c.b16 %v1201, %v1200
      %v1288 = vpack.c.b16 %v1203, %v1202
      %v1289 = vpack.c.b16 %v1205, %v1204
      %v1290 = vpack.c.b16 %v1207, %v1206
      %v1291 = vpack.c.b16 %v1209, %v1208
      %v1292 = vpack.c.b16 %v1211, %v1210
      %v1293 = vpack.c.b16 %v1213, %v1212
      %v1294 = vpack.c.b16 %v1215, %v1214
      %v1295 = vpack.c.b16 %v1217, %v1216
      %v1296 = vpack.c.b16 %v1219, %v1218
      %v1297 = vpack.c.b16 %v1221, %v1220
      %v1298 = vpack.c.b16 %v1223, %v1222
      %v1299 = vpack.c.b16 %v1225, %v1224
      %v1300 = vpack.c.b16 %v1227, %v1226
      %v1301 = vpack.c.b16 %v1229, %v1228
      %v1302 = vpack.c.b16 %v1231, %v1230
      %v1303 = vpack.c.b16 %v1233, %v1232
      %v1304 = vpack.c.b16 %v1235, %v1234
      %v1305 = vpack.c.b16 %v1237, %v1236
      %v1306 = vpack.c.b16 %v1239, %v1238
      %v1307 = vpack.c.b16 %v1241, %v1240
      %v1308 = vpack.c.b16 %v1243, %v1242
      %v1309 = vpack.c.b16 %v1245, %v1244
      %v1310 = vpack.c.b16 %v1247, %v1246
      %v1311 = vpack.c.b16 %v1249, %v1248
      %v1312 = vpack.c.b16 %v1251, %v1250
      %v1313 = vpack.c.b16 %v1253, %v1252
      %v1314 = vpack.c.b16 %v1255, %v1254
      %v1315 = vpack.c.b16 %v1257, %v1256
      %v1316 = vpack.c.b16 %v1259, %v1258
      %v1317 = vpack.c.b16 %v1261, %v1260
      %v1318 = vpack.c.b16 %v1263, %v1262
      %v1319 = vpack.c.b16 %v1265, %v1264
      %vm1374 = vcmask 785408
      %v1376 = vsel %vm1374, %v848, 0
      %v1379 = vsel %vm1374, %v855, 0
      %v1382 = vsel %vm1374, %v862, 0
      %v1385 = vsel %vm1374, %v869, 0
      %v1388 = vsel %vm1374, %v876, 0
      %v1391 = vsel %vm1374, %v883, 0
      %v1394 = vsel %vm1374, %v890, 0
      %v1397 = vsel %vm1374, %v897, 0
      %v1400 = vsel %vm1374, %v904, 0
      %v1403 = vsel %vm1374, %v911, 0
      %v1406 = vsel %vm1374, %v918, 0
      %v1409 = vsel %vm1374, %v925, 0
      %v1412 = vsel %vm1374, %v932, 0
      %v1415 = vsel %vm1374, %v939, 0
      %v1418 = vsel %vm1374, %v946, 0
      %v1421 = vsel %vm1374, %v953, 0
      %1423 = vmatpush.bf16.msra.mxu0 %v1273
      %1424 = vmatpush.bf16.msra.mxu0 %v1272
      %1425 = vmatpush.bf16.msra.mxu0 %v1271
      %1426 = vmatpush.bf16.msra.mxu0 %v1270
      %1427 = vmatpush.bf16.msra.mxu0 %v1269
      %1428 = vmatpush.bf16.msra.mxu0 %v1268
      %1429 = vmatpush.bf16.msra.mxu0 %v1267
      %1430 = vmatpush.bf16.msra.mxu0 %v1266
      %1431 = vmatmul.bf16.gmra.mxu0 %v842
      %v1432 = vpop.f32.mrf.mxu0
      %v1433 = vadd.f32 0.0, %v1432
      %v1434 = vpop.f32.mrf.mxu0
      %v1435 = vadd.f32 0.0, %v1434
      %1436 = vmatmul.bf16.gmra.mxu0 %v849
      %v1437 = vpop.f32.mrf.mxu0
      %v1438 = vadd.f32 0.0, %v1437
      %v1439 = vpop.f32.mrf.mxu0
      %v1440 = vadd.f32 0.0, %v1439
      %1441 = vmatmul.bf16.gmra.mxu0 %v856
      %v1442 = vpop.f32.mrf.mxu0
      %v1443 = vadd.f32 0.0, %v1442
      %v1444 = vpop.f32.mrf.mxu0
      %v1445 = vadd.f32 0.0, %v1444
      %1446 = vmatmul.bf16.gmra.mxu0 %v863
      %v1447 = vpop.f32.mrf.mxu0
      %v1448 = vadd.f32 0.0, %v1447
      %v1449 = vpop.f32.mrf.mxu0
      %v1450 = vadd.f32 0.0, %v1449
      %1451 = vmatmul.bf16.gmra.mxu0 %v870
      %v1452 = vpop.f32.mrf.mxu0
      %v1453 = vadd.f32 0.0, %v1452
      %v1454 = vpop.f32.mrf.mxu0
      %v1455 = vadd.f32 0.0, %v1454
      %1456 = vmatmul.bf16.gmra.mxu0 %v877
      %v1457 = vpop.f32.mrf.mxu0
      %v1458 = vadd.f32 0.0, %v1457
      %v1459 = vpop.f32.mrf.mxu0
      %v1460 = vadd.f32 0.0, %v1459
      %1461 = vmatmul.bf16.gmra.mxu0 %v884
      %v1462 = vpop.f32.mrf.mxu0
      %v1463 = vadd.f32 0.0, %v1462
      %v1464 = vpop.f32.mrf.mxu0
      %v1465 = vadd.f32 0.0, %v1464
      %1466 = vmatmul.bf16.gmra.mxu0 %v891
      %v1467 = vpop.f32.mrf.mxu0
      %v1468 = vadd.f32 0.0, %v1467
      %v1469 = vpop.f32.mrf.mxu0
      %v1470 = vadd.f32 0.0, %v1469
      %1471 = vmatmul.bf16.gmra.mxu0 %v898
      %v1472 = vpop.f32.mrf.mxu0
      %v1473 = vadd.f32 0.0, %v1472
      %v1474 = vpop.f32.mrf.mxu0
      %v1475 = vadd.f32 0.0, %v1474
      %1476 = vmatmul.bf16.gmra.mxu0 %v905
      %v1477 = vpop.f32.mrf.mxu0
      %v1478 = vadd.f32 0.0, %v1477
      %v1479 = vpop.f32.mrf.mxu0
      %v1480 = vadd.f32 0.0, %v1479
      %1481 = vmatmul.bf16.gmra.mxu0 %v912
      %v1482 = vpop.f32.mrf.mxu0
      %v1483 = vadd.f32 0.0, %v1482
      %v1484 = vpop.f32.mrf.mxu0
      %v1485 = vadd.f32 0.0, %v1484
      %1486 = vmatmul.bf16.gmra.mxu0 %v919
      %v1487 = vpop.f32.mrf.mxu0
      %v1488 = vadd.f32 0.0, %v1487
      %v1489 = vpop.f32.mrf.mxu0
      %v1490 = vadd.f32 0.0, %v1489
      %1491 = vmatmul.bf16.gmra.mxu0 %v926
      %v1492 = vpop.f32.mrf.mxu0
      %v1493 = vadd.f32 0.0, %v1492
      %v1494 = vpop.f32.mrf.mxu0
      %v1495 = vadd.f32 0.0, %v1494
      %1496 = vmatmul.bf16.gmra.mxu0 %v933
      %v1497 = vpop.f32.mrf.mxu0
      %v1498 = vadd.f32 0.0, %v1497
      %v1499 = vpop.f32.mrf.mxu0
      %v1500 = vadd.f32 0.0, %v1499
      %1501 = vmatmul.bf16.gmra.mxu0 %v940
      %v1502 = vpop.f32.mrf.mxu0
      %v1503 = vadd.f32 0.0, %v1502
      %v1504 = vpop.f32.mrf.mxu0
      %v1505 = vadd.f32 0.0, %v1504
      %1506 = vmatmul.bf16.gmra.mxu0 %v947
      %v1507 = vpop.f32.mrf.mxu0
      %v1508 = vadd.f32 0.0, %v1507
      %v1509 = vpop.f32.mrf.mxu0
      %v1510 = vadd.f32 0.0, %v1509
      %1511 = vdwg.mxu0
      %1512 = vmatpush.bf16.msra.mxu0 %v1281
      %1513 = vmatpush.bf16.msra.mxu0 %v1280
      %1514 = vmatpush.bf16.msra.mxu0 %v1279
      %1515 = vmatpush.bf16.msra.mxu0 %v1278
      %1516 = vmatpush.bf16.msra.mxu0 %v1277
      %1517 = vmatpush.bf16.msra.mxu0 %v1276
      %1518 = vmatpush.bf16.msra.mxu0 %v1275
      %1519 = vmatpush.bf16.msra.mxu0 %v1274
      %1520 = vmatmul.bf16.gmra.mxu0 %v843
      %v1521 = vpop.f32.mrf.mxu0
      %v1522 = vadd.f32 %v1433, %v1521
      %v1523 = vpop.f32.mrf.mxu0
      %v1524 = vadd.f32 %v1435, %v1523
      %1525 = vmatmul.bf16.gmra.mxu0 %v850
      %v1526 = vpop.f32.mrf.mxu0
      %v1527 = vadd.f32 %v1438, %v1526
      %v1528 = vpop.f32.mrf.mxu0
      %v1529 = vadd.f32 %v1440, %v1528
      %1530 = vmatmul.bf16.gmra.mxu0 %v857
      %v1531 = vpop.f32.mrf.mxu0
      %v1532 = vadd.f32 %v1443, %v1531
      %v1533 = vpop.f32.mrf.mxu0
      %v1534 = vadd.f32 %v1445, %v1533
      %1535 = vmatmul.bf16.gmra.mxu0 %v864
      %v1536 = vpop.f32.mrf.mxu0
      %v1537 = vadd.f32 %v1448, %v1536
      %v1538 = vpop.f32.mrf.mxu0
      %v1539 = vadd.f32 %v1450, %v1538
      %1540 = vmatmul.bf16.gmra.mxu0 %v871
      %v1541 = vpop.f32.mrf.mxu0
      %v1542 = vadd.f32 %v1453, %v1541
      %v1543 = vpop.f32.mrf.mxu0
      %v1544 = vadd.f32 %v1455, %v1543
      %1545 = vmatmul.bf16.gmra.mxu0 %v878
      %v1546 = vpop.f32.mrf.mxu0
      %v1547 = vadd.f32 %v1458, %v1546
      %v1548 = vpop.f32.mrf.mxu0
      %v1549 = vadd.f32 %v1460, %v1548
      %1550 = vmatmul.bf16.gmra.mxu0 %v885
      %v1551 = vpop.f32.mrf.mxu0
      %v1552 = vadd.f32 %v1463, %v1551
      %v1553 = vpop.f32.mrf.mxu0
      %v1554 = vadd.f32 %v1465, %v1553
      %1555 = vmatmul.bf16.gmra.mxu0 %v892
      %v1556 = vpop.f32.mrf.mxu0
      %v1557 = vadd.f32 %v1468, %v1556
      %v1558 = vpop.f32.mrf.mxu0
      %v1559 = vadd.f32 %v1470, %v1558
      %1560 = vmatmul.bf16.gmra.mxu0 %v899
      %v1561 = vpop.f32.mrf.mxu0
      %v1562 = vadd.f32 %v1473, %v1561
      %v1563 = vpop.f32.mrf.mxu0
      %v1564 = vadd.f32 %v1475, %v1563
      %1565 = vmatmul.bf16.gmra.mxu0 %v906
      %v1566 = vpop.f32.mrf.mxu0
      %v1567 = vadd.f32 %v1478, %v1566
      %v1568 = vpop.f32.mrf.mxu0
      %v1569 = vadd.f32 %v1480, %v1568
      %1570 = vmatmul.bf16.gmra.mxu0 %v913
      %v1571 = vpop.f32.mrf.mxu0
      %v1572 = vadd.f32 %v1483, %v1571
      %v1573 = vpop.f32.mrf.mxu0
      %v1574 = vadd.f32 %v1485, %v1573
      %1575 = vmatmul.bf16.gmra.mxu0 %v920
      %v1576 = vpop.f32.mrf.mxu0
      %v1577 = vadd.f32 %v1488, %v1576
      %v1578 = vpop.f32.mrf.mxu0
      %v1579 = vadd.f32 %v1490, %v1578
      %1580 = vmatmul.bf16.gmra.mxu0 %v927
      %v1581 = vpop.f32.mrf.mxu0
      %v1582 = vadd.f32 %v1493, %v1581
      %v1583 = vpop.f32.mrf.mxu0
      %v1584 = vadd.f32 %v1495, %v1583
      %1585 = vmatmul.bf16.gmra.mxu0 %v934
      %v1586 = vpop.f32.mrf.mxu0
      %v1587 = vadd.f32 %v1498, %v1586
      %v1588 = vpop.f32.mrf.mxu0
      %v1589 = vadd.f32 %v1500, %v1588
      %1590 = vmatmul.bf16.gmra.mxu0 %v941
      %v1591 = vpop.f32.mrf.mxu0
      %v1592 = vadd.f32 %v1503, %v1591
      %v1593 = vpop.f32.mrf.mxu0
      %v1594 = vadd.f32 %v1505, %v1593
      %1595 = vmatmul.bf16.gmra.mxu0 %v948
      %v1596 = vpop.f32.mrf.mxu0
      %v1597 = vadd.f32 %v1508, %v1596
      %v1598 = vpop.f32.mrf.mxu0
      %v1599 = vadd.f32 %v1510, %v1598
      %1600 = vdwg.mxu0
      %1601 = vmatpush.bf16.msra.mxu0 %v1289
      %1602 = vmatpush.bf16.msra.mxu0 %v1288
      %1603 = vmatpush.bf16.msra.mxu0 %v1287
      %1604 = vmatpush.bf16.msra.mxu0 %v1286
      %1605 = vmatpush.bf16.msra.mxu0 %v1285
      %1606 = vmatpush.bf16.msra.mxu0 %v1284
      %1607 = vmatpush.bf16.msra.mxu0 %v1283
      %1608 = vmatpush.bf16.msra.mxu0 %v1282
      %1609 = vmatmul.bf16.gmra.mxu0 %v844
      %v1610 = vpop.f32.mrf.mxu0
      %v1611 = vadd.f32 %v1522, %v1610
      %v1612 = vpop.f32.mrf.mxu0
      %v1613 = vadd.f32 %v1524, %v1612
      %1614 = vmatmul.bf16.gmra.mxu0 %v851
      %v1615 = vpop.f32.mrf.mxu0
      %v1616 = vadd.f32 %v1527, %v1615
      %v1617 = vpop.f32.mrf.mxu0
      %v1618 = vadd.f32 %v1529, %v1617
      %1619 = vmatmul.bf16.gmra.mxu0 %v858
      %v1620 = vpop.f32.mrf.mxu0
      %v1621 = vadd.f32 %v1532, %v1620
      %v1622 = vpop.f32.mrf.mxu0
      %v1623 = vadd.f32 %v1534, %v1622
      %1624 = vmatmul.bf16.gmra.mxu0 %v865
      %v1625 = vpop.f32.mrf.mxu0
      %v1626 = vadd.f32 %v1537, %v1625
      %v1627 = vpop.f32.mrf.mxu0
      %v1628 = vadd.f32 %v1539, %v1627
      %1629 = vmatmul.bf16.gmra.mxu0 %v872
      %v1630 = vpop.f32.mrf.mxu0
      %v1631 = vadd.f32 %v1542, %v1630
      %v1632 = vpop.f32.mrf.mxu0
      %v1633 = vadd.f32 %v1544, %v1632
      %1634 = vmatmul.bf16.gmra.mxu0 %v879
      %v1635 = vpop.f32.mrf.mxu0
      %v1636 = vadd.f32 %v1547, %v1635
      %v1637 = vpop.f32.mrf.mxu0
      %v1638 = vadd.f32 %v1549, %v1637
      %1639 = vmatmul.bf16.gmra.mxu0 %v886
      %v1640 = vpop.f32.mrf.mxu0
      %v1641 = vadd.f32 %v1552, %v1640
      %v1642 = vpop.f32.mrf.mxu0
      %v1643 = vadd.f32 %v1554, %v1642
      %1644 = vmatmul.bf16.gmra.mxu0 %v893
      %v1645 = vpop.f32.mrf.mxu0
      %v1646 = vadd.f32 %v1557, %v1645
      %v1647 = vpop.f32.mrf.mxu0
      %v1648 = vadd.f32 %v1559, %v1647
      %1649 = vmatmul.bf16.gmra.mxu0 %v900
      %v1650 = vpop.f32.mrf.mxu0
      %v1651 = vadd.f32 %v1562, %v1650
      %v1652 = vpop.f32.mrf.mxu0
      %v1653 = vadd.f32 %v1564, %v1652
      %1654 = vmatmul.bf16.gmra.mxu0 %v907
      %v1655 = vpop.f32.mrf.mxu0
      %v1656 = vadd.f32 %v1567, %v1655
      %v1657 = vpop.f32.mrf.mxu0
      %v1658 = vadd.f32 %v1569, %v1657
      %1659 = vmatmul.bf16.gmra.mxu0 %v914
      %v1660 = vpop.f32.mrf.mxu0
      %v1661 = vadd.f32 %v1572, %v1660
      %v1662 = vpop.f32.mrf.mxu0
      %v1663 = vadd.f32 %v1574, %v1662
      %1664 = vmatmul.bf16.gmra.mxu0 %v921
      %v1665 = vpop.f32.mrf.mxu0
      %v1666 = vadd.f32 %v1577, %v1665
      %v1667 = vpop.f32.mrf.mxu0
      %v1668 = vadd.f32 %v1579, %v1667
      %1669 = vmatmul.bf16.gmra.mxu0 %v928
      %v1670 = vpop.f32.mrf.mxu0
      %v1671 = vadd.f32 %v1582, %v1670
      %v1672 = vpop.f32.mrf.mxu0
      %v1673 = vadd.f32 %v1584, %v1672
      %1674 = vmatmul.bf16.gmra.mxu0 %v935
      %v1675 = vpop.f32.mrf.mxu0
      %v1676 = vadd.f32 %v1587, %v1675
      %v1677 = vpop.f32.mrf.mxu0
      %v1678 = vadd.f32 %v1589, %v1677
      %1679 = vmatmul.bf16.gmra.mxu0 %v942
      %v1680 = vpop.f32.mrf.mxu0
      %v1681 = vadd.f32 %v1592, %v1680
      %v1682 = vpop.f32.mrf.mxu0
      %v1683 = vadd.f32 %v1594, %v1682
      %1684 = vmatmul.bf16.gmra.mxu0 %v949
      %v1685 = vpop.f32.mrf.mxu0
      %v1686 = vadd.f32 %v1597, %v1685
      %v1687 = vpop.f32.mrf.mxu0
      %v1688 = vadd.f32 %v1599, %v1687
      %1689 = vdwg.mxu0
      %1690 = vmatpush.bf16.msra.mxu0 %v1297
      %1691 = vmatpush.bf16.msra.mxu0 %v1296
      %1692 = vmatpush.bf16.msra.mxu0 %v1295
      %1693 = vmatpush.bf16.msra.mxu0 %v1294
      %1694 = vmatpush.bf16.msra.mxu0 %v1293
      %1695 = vmatpush.bf16.msra.mxu0 %v1292
      %1696 = vmatpush.bf16.msra.mxu0 %v1291
      %1697 = vmatpush.bf16.msra.mxu0 %v1290
      %1698 = vmatmul.bf16.gmra.mxu0 %v845
      %v1699 = vpop.f32.mrf.mxu0
      %v1700 = vadd.f32 %v1611, %v1699
      %v1701 = vpop.f32.mrf.mxu0
      %v1702 = vadd.f32 %v1613, %v1701
      %1703 = vmatmul.bf16.gmra.mxu0 %v852
      %v1704 = vpop.f32.mrf.mxu0
      %v1705 = vadd.f32 %v1616, %v1704
      %v1706 = vpop.f32.mrf.mxu0
      %v1707 = vadd.f32 %v1618, %v1706
      %1708 = vmatmul.bf16.gmra.mxu0 %v859
      %v1709 = vpop.f32.mrf.mxu0
      %v1710 = vadd.f32 %v1621, %v1709
      %v1711 = vpop.f32.mrf.mxu0
      %v1712 = vadd.f32 %v1623, %v1711
      %1713 = vmatmul.bf16.gmra.mxu0 %v866
      %v1714 = vpop.f32.mrf.mxu0
      %v1715 = vadd.f32 %v1626, %v1714
      %v1716 = vpop.f32.mrf.mxu0
      %v1717 = vadd.f32 %v1628, %v1716
      %1718 = vmatmul.bf16.gmra.mxu0 %v873
      %v1719 = vpop.f32.mrf.mxu0
      %v1720 = vadd.f32 %v1631, %v1719
      %v1721 = vpop.f32.mrf.mxu0
      %v1722 = vadd.f32 %v1633, %v1721
      %1723 = vmatmul.bf16.gmra.mxu0 %v880
      %v1724 = vpop.f32.mrf.mxu0
      %v1725 = vadd.f32 %v1636, %v1724
      %v1726 = vpop.f32.mrf.mxu0
      %v1727 = vadd.f32 %v1638, %v1726
      %1728 = vmatmul.bf16.gmra.mxu0 %v887
      %v1729 = vpop.f32.mrf.mxu0
      %v1730 = vadd.f32 %v1641, %v1729
      %v1731 = vpop.f32.mrf.mxu0
      %v1732 = vadd.f32 %v1643, %v1731
      %1733 = vmatmul.bf16.gmra.mxu0 %v894
      %v1734 = vpop.f32.mrf.mxu0
      %v1735 = vadd.f32 %v1646, %v1734
      %v1736 = vpop.f32.mrf.mxu0
      %v1737 = vadd.f32 %v1648, %v1736
      %1738 = vmatmul.bf16.gmra.mxu0 %v901
      %v1739 = vpop.f32.mrf.mxu0
      %v1740 = vadd.f32 %v1651, %v1739
      %v1741 = vpop.f32.mrf.mxu0
      %v1742 = vadd.f32 %v1653, %v1741
      %1743 = vmatmul.bf16.gmra.mxu0 %v908
      %v1744 = vpop.f32.mrf.mxu0
      %v1745 = vadd.f32 %v1656, %v1744
      %v1746 = vpop.f32.mrf.mxu0
      %v1747 = vadd.f32 %v1658, %v1746
      %1748 = vmatmul.bf16.gmra.mxu0 %v915
      %v1749 = vpop.f32.mrf.mxu0
      %v1750 = vadd.f32 %v1661, %v1749
      %v1751 = vpop.f32.mrf.mxu0
      %v1752 = vadd.f32 %v1663, %v1751
      %1753 = vmatmul.bf16.gmra.mxu0 %v922
      %v1754 = vpop.f32.mrf.mxu0
      %v1755 = vadd.f32 %v1666, %v1754
      %v1756 = vpop.f32.mrf.mxu0
      %v1757 = vadd.f32 %v1668, %v1756
      %1758 = vmatmul.bf16.gmra.mxu0 %v929
      %v1759 = vpop.f32.mrf.mxu0
      %v1760 = vadd.f32 %v1671, %v1759
      %v1761 = vpop.f32.mrf.mxu0
      %v1762 = vadd.f32 %v1673, %v1761
      %1763 = vmatmul.bf16.gmra.mxu0 %v936
      %v1764 = vpop.f32.mrf.mxu0
      %v1765 = vadd.f32 %v1676, %v1764
      %v1766 = vpop.f32.mrf.mxu0
      %v1767 = vadd.f32 %v1678, %v1766
      %1768 = vmatmul.bf16.gmra.mxu0 %v943
      %v1769 = vpop.f32.mrf.mxu0
      %v1770 = vadd.f32 %v1681, %v1769
      %v1771 = vpop.f32.mrf.mxu0
      %v1772 = vadd.f32 %v1683, %v1771
      %1773 = vmatmul.bf16.gmra.mxu0 %v950
      %v1774 = vpop.f32.mrf.mxu0
      %v1775 = vadd.f32 %v1686, %v1774
      %v1776 = vpop.f32.mrf.mxu0
      %v1777 = vadd.f32 %v1688, %v1776
      %1778 = vdwg.mxu0
      %1779 = vmatpush.bf16.msra.mxu0 %v1305
      %1780 = vmatpush.bf16.msra.mxu0 %v1304
      %1781 = vmatpush.bf16.msra.mxu0 %v1303
      %1782 = vmatpush.bf16.msra.mxu0 %v1302
      %1783 = vmatpush.bf16.msra.mxu0 %v1301
      %1784 = vmatpush.bf16.msra.mxu0 %v1300
      %1785 = vmatpush.bf16.msra.mxu0 %v1299
      %1786 = vmatpush.bf16.msra.mxu0 %v1298
      %1787 = vmatmul.bf16.gmra.mxu0 %v846
      %v1788 = vpop.f32.mrf.mxu0
      %v1789 = vadd.f32 %v1700, %v1788
      %v1790 = vpop.f32.mrf.mxu0
      %v1791 = vadd.f32 %v1702, %v1790
      %1792 = vmatmul.bf16.gmra.mxu0 %v853
      %v1793 = vpop.f32.mrf.mxu0
      %v1794 = vadd.f32 %v1705, %v1793
      %v1795 = vpop.f32.mrf.mxu0
      %v1796 = vadd.f32 %v1707, %v1795
      %1797 = vmatmul.bf16.gmra.mxu0 %v860
      %v1798 = vpop.f32.mrf.mxu0
      %v1799 = vadd.f32 %v1710, %v1798
      %v1800 = vpop.f32.mrf.mxu0
      %v1801 = vadd.f32 %v1712, %v1800
      %1802 = vmatmul.bf16.gmra.mxu0 %v867
      %v1803 = vpop.f32.mrf.mxu0
      %v1804 = vadd.f32 %v1715, %v1803
      %v1805 = vpop.f32.mrf.mxu0
      %v1806 = vadd.f32 %v1717, %v1805
      %1807 = vmatmul.bf16.gmra.mxu0 %v874
      %v1808 = vpop.f32.mrf.mxu0
      %v1809 = vadd.f32 %v1720, %v1808
      %v1810 = vpop.f32.mrf.mxu0
      %v1811 = vadd.f32 %v1722, %v1810
      %1812 = vmatmul.bf16.gmra.mxu0 %v881
      %v1813 = vpop.f32.mrf.mxu0
      %v1814 = vadd.f32 %v1725, %v1813
      %v1815 = vpop.f32.mrf.mxu0
      %v1816 = vadd.f32 %v1727, %v1815
      %1817 = vmatmul.bf16.gmra.mxu0 %v888
      %v1818 = vpop.f32.mrf.mxu0
      %v1819 = vadd.f32 %v1730, %v1818
      %v1820 = vpop.f32.mrf.mxu0
      %v1821 = vadd.f32 %v1732, %v1820
      %1822 = vmatmul.bf16.gmra.mxu0 %v895
      %v1823 = vpop.f32.mrf.mxu0
      %v1824 = vadd.f32 %v1735, %v1823
      %v1825 = vpop.f32.mrf.mxu0
      %v1826 = vadd.f32 %v1737, %v1825
      %1827 = vmatmul.bf16.gmra.mxu0 %v902
      %v1828 = vpop.f32.mrf.mxu0
      %v1829 = vadd.f32 %v1740, %v1828
      %v1830 = vpop.f32.mrf.mxu0
      %v1831 = vadd.f32 %v1742, %v1830
      %1832 = vmatmul.bf16.gmra.mxu0 %v909
      %v1833 = vpop.f32.mrf.mxu0
      %v1834 = vadd.f32 %v1745, %v1833
      %v1835 = vpop.f32.mrf.mxu0
      %v1836 = vadd.f32 %v1747, %v1835
      %1837 = vmatmul.bf16.gmra.mxu0 %v916
      %v1838 = vpop.f32.mrf.mxu0
      %v1839 = vadd.f32 %v1750, %v1838
      %v1840 = vpop.f32.mrf.mxu0
      %v1841 = vadd.f32 %v1752, %v1840
      %1842 = vmatmul.bf16.gmra.mxu0 %v923
      %v1843 = vpop.f32.mrf.mxu0
      %v1844 = vadd.f32 %v1755, %v1843
      %v1845 = vpop.f32.mrf.mxu0
      %v1846 = vadd.f32 %v1757, %v1845
      %1847 = vmatmul.bf16.gmra.mxu0 %v930
      %v1848 = vpop.f32.mrf.mxu0
      %v1849 = vadd.f32 %v1760, %v1848
      %v1850 = vpop.f32.mrf.mxu0
      %v1851 = vadd.f32 %v1762, %v1850
      %1852 = vmatmul.bf16.gmra.mxu0 %v937
      %v1853 = vpop.f32.mrf.mxu0
      %v1854 = vadd.f32 %v1765, %v1853
      %v1855 = vpop.f32.mrf.mxu0
      %v1856 = vadd.f32 %v1767, %v1855
      %1857 = vmatmul.bf16.gmra.mxu0 %v944
      %v1858 = vpop.f32.mrf.mxu0
      %v1859 = vadd.f32 %v1770, %v1858
      %v1860 = vpop.f32.mrf.mxu0
      %v1861 = vadd.f32 %v1772, %v1860
      %1862 = vmatmul.bf16.gmra.mxu0 %v951
      %v1863 = vpop.f32.mrf.mxu0
      %v1864 = vadd.f32 %v1775, %v1863
      %v1865 = vpop.f32.mrf.mxu0
      %v1866 = vadd.f32 %v1777, %v1865
      %1867 = vdwg.mxu0
      %1868 = vmatpush.bf16.msra.mxu0 %v1313
      %1869 = vmatpush.bf16.msra.mxu0 %v1312
      %1870 = vmatpush.bf16.msra.mxu0 %v1311
      %1871 = vmatpush.bf16.msra.mxu0 %v1310
      %1872 = vmatpush.bf16.msra.mxu0 %v1309
      %1873 = vmatpush.bf16.msra.mxu0 %v1308
      %1874 = vmatpush.bf16.msra.mxu0 %v1307
      %1875 = vmatpush.bf16.msra.mxu0 %v1306
      %1876 = vmatmul.bf16.gmra.mxu0 %v847
      %v1877 = vpop.f32.mrf.mxu0
      %v1878 = vadd.f32 %v1789, %v1877
      %v1879 = vpop.f32.mrf.mxu0
      %v1880 = vadd.f32 %v1791, %v1879
      %1881 = vmatmul.bf16.gmra.mxu0 %v854
      %v1882 = vpop.f32.mrf.mxu0
      %v1883 = vadd.f32 %v1794, %v1882
      %v1884 = vpop.f32.mrf.mxu0
      %v1885 = vadd.f32 %v1796, %v1884
      %1886 = vmatmul.bf16.gmra.mxu0 %v861
      %v1887 = vpop.f32.mrf.mxu0
      %v1888 = vadd.f32 %v1799, %v1887
      %v1889 = vpop.f32.mrf.mxu0
      %v1890 = vadd.f32 %v1801, %v1889
      %1891 = vmatmul.bf16.gmra.mxu0 %v868
      %v1892 = vpop.f32.mrf.mxu0
      %v1893 = vadd.f32 %v1804, %v1892
      %v1894 = vpop.f32.mrf.mxu0
      %v1895 = vadd.f32 %v1806, %v1894
      %1896 = vmatmul.bf16.gmra.mxu0 %v875
      %v1897 = vpop.f32.mrf.mxu0
      %v1898 = vadd.f32 %v1809, %v1897
      %v1899 = vpop.f32.mrf.mxu0
      %v1900 = vadd.f32 %v1811, %v1899
      %1901 = vmatmul.bf16.gmra.mxu0 %v882
      %v1902 = vpop.f32.mrf.mxu0
      %v1903 = vadd.f32 %v1814, %v1902
      %v1904 = vpop.f32.mrf.mxu0
      %v1905 = vadd.f32 %v1816, %v1904
      %1906 = vmatmul.bf16.gmra.mxu0 %v889
      %v1907 = vpop.f32.mrf.mxu0
      %v1908 = vadd.f32 %v1819, %v1907
      %v1909 = vpop.f32.mrf.mxu0
      %v1910 = vadd.f32 %v1821, %v1909
      %1911 = vmatmul.bf16.gmra.mxu0 %v896
      %v1912 = vpop.f32.mrf.mxu0
      %v1913 = vadd.f32 %v1824, %v1912
      %v1914 = vpop.f32.mrf.mxu0
      %v1915 = vadd.f32 %v1826, %v1914
      %1916 = vmatmul.bf16.gmra.mxu0 %v903
      %v1917 = vpop.f32.mrf.mxu0
      %v1918 = vadd.f32 %v1829, %v1917
      %v1919 = vpop.f32.mrf.mxu0
      %v1920 = vadd.f32 %v1831, %v1919
      %1921 = vmatmul.bf16.gmra.mxu0 %v910
      %v1922 = vpop.f32.mrf.mxu0
      %v1923 = vadd.f32 %v1834, %v1922
      %v1924 = vpop.f32.mrf.mxu0
      %v1925 = vadd.f32 %v1836, %v1924
      %1926 = vmatmul.bf16.gmra.mxu0 %v917
      %v1927 = vpop.f32.mrf.mxu0
      %v1928 = vadd.f32 %v1839, %v1927
      %v1929 = vpop.f32.mrf.mxu0
      %v1930 = vadd.f32 %v1841, %v1929
      %1931 = vmatmul.bf16.gmra.mxu0 %v924
      %v1932 = vpop.f32.mrf.mxu0
      %v1933 = vadd.f32 %v1844, %v1932
      %v1934 = vpop.f32.mrf.mxu0
      %v1935 = vadd.f32 %v1846, %v1934
      %1936 = vmatmul.bf16.gmra.mxu0 %v931
      %v1937 = vpop.f32.mrf.mxu0
      %v1938 = vadd.f32 %v1849, %v1937
      %v1939 = vpop.f32.mrf.mxu0
      %v1940 = vadd.f32 %v1851, %v1939
      %1941 = vmatmul.bf16.gmra.mxu0 %v938
      %v1942 = vpop.f32.mrf.mxu0
      %v1943 = vadd.f32 %v1854, %v1942
      %v1944 = vpop.f32.mrf.mxu0
      %v1945 = vadd.f32 %v1856, %v1944
      %1946 = vmatmul.bf16.gmra.mxu0 %v945
      %v1947 = vpop.f32.mrf.mxu0
      %v1948 = vadd.f32 %v1859, %v1947
      %v1949 = vpop.f32.mrf.mxu0
      %v1950 = vadd.f32 %v1861, %v1949
      %1951 = vmatmul.bf16.gmra.mxu0 %v952
      %v1952 = vpop.f32.mrf.mxu0
      %v1953 = vadd.f32 %v1864, %v1952
      %v1954 = vpop.f32.mrf.mxu0
      %v1955 = vadd.f32 %v1866, %v1954
      %1956 = vdwg.mxu0
      %1957 = vmatpush.bf16.msra.mxu0 0
      %1958 = vmatpush.bf16.msra.mxu0 0
      %1959 = vmatpush.bf16.msra.mxu0 %v1319
      %1960 = vmatpush.bf16.msra.mxu0 %v1318
      %1961 = vmatpush.bf16.msra.mxu0 %v1317
      %1962 = vmatpush.bf16.msra.mxu0 %v1316
      %1963 = vmatpush.bf16.msra.mxu0 %v1315
      %1964 = vmatpush.bf16.msra.mxu0 %v1314
      %1965 = vmatmul.bf16.gmra.mxu0 %v1376
      %v1966 = vpop.f32.mrf.mxu0
      %v1967 = vadd.f32 %v1878, %v1966
      %v1968 = vpop.f32.mrf.mxu0
      %v1969 = vadd.f32 %v1880, %v1968
      %1970 = vmatmul.bf16.gmra.mxu0 %v1379
      %v1971 = vpop.f32.mrf.mxu0
      %v1972 = vadd.f32 %v1883, %v1971
      %v1973 = vpop.f32.mrf.mxu0
      %v1974 = vadd.f32 %v1885, %v1973
      %1975 = vmatmul.bf16.gmra.mxu0 %v1382
      %v1976 = vpop.f32.mrf.mxu0
      %v1977 = vadd.f32 %v1888, %v1976
      %v1978 = vpop.f32.mrf.mxu0
      %v1979 = vadd.f32 %v1890, %v1978
      %1980 = vmatmul.bf16.gmra.mxu0 %v1385
      %v1981 = vpop.f32.mrf.mxu0
      %v1982 = vadd.f32 %v1893, %v1981
      %v1983 = vpop.f32.mrf.mxu0
      %v1984 = vadd.f32 %v1895, %v1983
      %1985 = vmatmul.bf16.gmra.mxu0 %v1388
      %v1986 = vpop.f32.mrf.mxu0
      %v1987 = vadd.f32 %v1898, %v1986
      %v1988 = vpop.f32.mrf.mxu0
      %v1989 = vadd.f32 %v1900, %v1988
      %1990 = vmatmul.bf16.gmra.mxu0 %v1391
      %v1991 = vpop.f32.mrf.mxu0
      %v1992 = vadd.f32 %v1903, %v1991
      %v1993 = vpop.f32.mrf.mxu0
      %v1994 = vadd.f32 %v1905, %v1993
      %1995 = vmatmul.bf16.gmra.mxu0 %v1394
      %v1996 = vpop.f32.mrf.mxu0
      %v1997 = vadd.f32 %v1908, %v1996
      %v1998 = vpop.f32.mrf.mxu0
      %v1999 = vadd.f32 %v1910, %v1998
      %2000 = vmatmul.bf16.gmra.mxu0 %v1397
      %v2001 = vpop.f32.mrf.mxu0
      %v2002 = vadd.f32 %v1913, %v2001
      %v2003 = vpop.f32.mrf.mxu0
      %v2004 = vadd.f32 %v1915, %v2003
      %2005 = vmatmul.bf16.gmra.mxu0 %v1400
      %v2006 = vpop.f32.mrf.mxu0
      %v2007 = vadd.f32 %v1918, %v2006
      %v2008 = vpop.f32.mrf.mxu0
      %v2009 = vadd.f32 %v1920, %v2008
      %2010 = vmatmul.bf16.gmra.mxu0 %v1403
      %v2011 = vpop.f32.mrf.mxu0
      %v2012 = vadd.f32 %v1923, %v2011
      %v2013 = vpop.f32.mrf.mxu0
      %v2014 = vadd.f32 %v1925, %v2013
      %2015 = vmatmul.bf16.gmra.mxu0 %v1406
      %v2016 = vpop.f32.mrf.mxu0
      %v2017 = vadd.f32 %v1928, %v2016
      %v2018 = vpop.f32.mrf.mxu0
      %v2019 = vadd.f32 %v1930, %v2018
      %2020 = vmatmul.bf16.gmra.mxu0 %v1409
      %v2021 = vpop.f32.mrf.mxu0
      %v2022 = vadd.f32 %v1933, %v2021
      %v2023 = vpop.f32.mrf.mxu0
      %v2024 = vadd.f32 %v1935, %v2023
      %2025 = vmatmul.bf16.gmra.mxu0 %v1412
      %v2026 = vpop.f32.mrf.mxu0
      %v2027 = vadd.f32 %v1938, %v2026
      %v2028 = vpop.f32.mrf.mxu0
      %v2029 = vadd.f32 %v1940, %v2028
      %2030 = vmatmul.bf16.gmra.mxu0 %v1415
      %v2031 = vpop.f32.mrf.mxu0
      %v2032 = vadd.f32 %v1943, %v2031
      %v2033 = vpop.f32.mrf.mxu0
      %v2034 = vadd.f32 %v1945, %v2033
      %2035 = vmatmul.bf16.gmra.mxu0 %v1418
      %v2036 = vpop.f32.mrf.mxu0
      %v2037 = vadd.f32 %v1948, %v2036
      %v2038 = vpop.f32.mrf.mxu0
      %v2039 = vadd.f32 %v1950, %v2038
      %2040 = vmatmul.bf16.gmra.mxu0 %v1421
      %v2041 = vpop.f32.mrf.mxu0
      %v2042 = vadd.f32 %v1953, %v2041
      %v2043 = vpop.f32.mrf.mxu0
      %v2044 = vadd.f32 %v1955, %v2043
      %2045 = vdwg.mxu0
      %v2046 = vld [vmem:[%s2] sm:$0x1]
      %v2048 = vperm.slane %v2046, 0
      %v2050 = vmul.f32 %v1967, %v2048
      %v2051 = vmul.f32 %v1969, %v2048
      %v2052 = vmul.f32 %v1972, %v2048
      %v2053 = vmul.f32 %v1974, %v2048
      %v2054 = vmul.f32 %v1977, %v2048
      %v2055 = vmul.f32 %v1979, %v2048
      %v2056 = vmul.f32 %v1982, %v2048
      %v2057 = vmul.f32 %v1984, %v2048
      %v2058 = vmul.f32 %v1987, %v2048
      %v2059 = vmul.f32 %v1989, %v2048
      %v2060 = vmul.f32 %v1992, %v2048
      %v2061 = vmul.f32 %v1994, %v2048
      %v2062 = vmul.f32 %v1997, %v2048
      %v2063 = vmul.f32 %v1999, %v2048
      %v2064 = vmul.f32 %v2002, %v2048
      %v2065 = vmul.f32 %v2004, %v2048
      %v2066 = vmul.f32 %v2007, %v2048
      %v2067 = vmul.f32 %v2009, %v2048
      %v2068 = vmul.f32 %v2012, %v2048
      %v2069 = vmul.f32 %v2014, %v2048
      %v2070 = vmul.f32 %v2017, %v2048
      %v2071 = vmul.f32 %v2019, %v2048
      %v2072 = vmul.f32 %v2022, %v2048
      %v2073 = vmul.f32 %v2024, %v2048
      %v2074 = vmul.f32 %v2027, %v2048
      %v2075 = vmul.f32 %v2029, %v2048
      %v2076 = vmul.f32 %v2032, %v2048
      %v2077 = vmul.f32 %v2034, %v2048
      %v2078 = vmul.f32 %v2037, %v2048
      %v2079 = vmul.f32 %v2039, %v2048
      %v2080 = vmul.f32 %v2042, %v2048
      %v2081 = vmul.f32 %v2044, %v2048
      %v2082 = vld [vmem:[%s3] sm:$0x1]
      %v2084 = vperm.slane %v2082, 0
      %v2086 = vadd.f32 %v2050, %v2084
      %v2087 = vadd.f32 %v2051, %v2084
      %v2088 = vadd.f32 %v2052, %v2084
      %v2089 = vadd.f32 %v2053, %v2084
      %v2090 = vadd.f32 %v2054, %v2084
      %v2091 = vadd.f32 %v2055, %v2084
      %v2092 = vadd.f32 %v2056, %v2084
      %v2093 = vadd.f32 %v2057, %v2084
      %v2094 = vadd.f32 %v2058, %v2084
      %v2095 = vadd.f32 %v2059, %v2084
      %v2096 = vadd.f32 %v2060, %v2084
      %v2097 = vadd.f32 %v2061, %v2084
      %v2098 = vadd.f32 %v2062, %v2084
      %v2099 = vadd.f32 %v2063, %v2084
      %v2100 = vadd.f32 %v2064, %v2084
      %v2101 = vadd.f32 %v2065, %v2084
      %v2102 = vadd.f32 %v2066, %v2084
      %v2103 = vadd.f32 %v2067, %v2084
      %v2104 = vadd.f32 %v2068, %v2084
      %v2105 = vadd.f32 %v2069, %v2084
      %v2106 = vadd.f32 %v2070, %v2084
      %v2107 = vadd.f32 %v2071, %v2084
      %v2108 = vadd.f32 %v2072, %v2084
      %v2109 = vadd.f32 %v2073, %v2084
      %v2110 = vadd.f32 %v2074, %v2084
      %v2111 = vadd.f32 %v2075, %v2084
      %v2112 = vadd.f32 %v2076, %v2084
      %v2113 = vadd.f32 %v2077, %v2084
      %v2114 = vadd.f32 %v2078, %v2084
      %v2115 = vadd.f32 %v2079, %v2084
      %v2116 = vadd.f32 %v2080, %v2084
      %v2117 = vadd.f32 %v2081, %v2084
      %v2118 = vld [vmem:[%s245] sm:$0xff]
      %v2119 = vld [vmem:[%s245 + $0x8] sm:$0xff]
      %v2120 = vld [vmem:[%s245 + $0x10] sm:$0xff]
      %v2121 = vld [vmem:[%s245 + $0x18] sm:$0xff]
      %v2122 = vld [vmem:[%s245 + $0x20] sm:$0xff]
      %v2123 = vld [vmem:[%s245 + $0x28] sm:$0xff]
      %v2124 = vld [vmem:[%s245 + $0x30] sm:$0xff]
      %v2125 = vld [vmem:[%s245 + $0x38] sm:$0xff]
      %v2126 = vld [vmem:[%s245 + $0x40] sm:$0xff]
      %v2127 = vld [vmem:[%s245 + $0x48] sm:$0xff]
      %v2128 = vld [vmem:[%s245 + $0x50] sm:$0xff]
      %v2129 = vld [vmem:[%s245 + $0x58] sm:$0xff]
      %v2130 = vld [vmem:[%s245 + $0x60] sm:$0xff]
      %v2131 = vld [vmem:[%s245 + $0x68] sm:$0xff]
      %v2132 = vld [vmem:[%s245 + $0x70] sm:$0xff]
      %v2133 = vld [vmem:[%s245 + $0x78] sm:$0xff]
      %v2134 = vld [vmem:[%s245 + $0x80] sm:$0xff]
      %v2135 = vld [vmem:[%s245 + $0x88] sm:$0xff]
      %v2136 = vld [vmem:[%s245 + $0x90] sm:$0xff]
      %v2137 = vld [vmem:[%s245 + $0x98] sm:$0xff]
      %v2138 = vld [vmem:[%s245 + $0xa0] sm:$0xff]
      %v2139 = vld [vmem:[%s245 + $0xa8] sm:$0xff]
      %v2140 = vld [vmem:[%s245 + $0xb0] sm:$0xff]
      %v2141 = vld [vmem:[%s245 + $0xb8] sm:$0xff]
      %v2142 = vld [vmem:[%s245 + $0xc0] sm:$0xff]
      %v2143 = vld [vmem:[%s245 + $0xc8] sm:$0xff]
      %v2144 = vld [vmem:[%s245 + $0xd0] sm:$0xff]
      %v2145 = vld [vmem:[%s245 + $0xd8] sm:$0xff]
      %v2146 = vld [vmem:[%s245 + $0xe0] sm:$0xff]
      %v2147 = vld [vmem:[%s245 + $0xe8] sm:$0xff]
      %v2148 = vld [vmem:[%s245 + $0xf0] sm:$0xff]
      %v2149 = vld [vmem:[%s245 + $0xf8] sm:$0xff]
      %v2150 = vadd.f32 %v2086, %v2118
      %v2151 = vadd.f32 %v2087, %v2119
      %v2152 = vadd.f32 %v2088, %v2120
      %v2153 = vadd.f32 %v2089, %v2121
      %v2154 = vadd.f32 %v2090, %v2122
      %v2155 = vadd.f32 %v2091, %v2123
      %v2156 = vadd.f32 %v2092, %v2124
      %v2157 = vadd.f32 %v2093, %v2125
      %v2158 = vadd.f32 %v2094, %v2126
      %v2159 = vadd.f32 %v2095, %v2127
      %v2160 = vadd.f32 %v2096, %v2128
      %v2161 = vadd.f32 %v2097, %v2129
      %v2162 = vadd.f32 %v2098, %v2130
      %v2163 = vadd.f32 %v2099, %v2131
      %v2164 = vadd.f32 %v2100, %v2132
      %v2165 = vadd.f32 %v2101, %v2133
      %v2166 = vadd.f32 %v2102, %v2134
      %v2167 = vadd.f32 %v2103, %v2135
      %v2168 = vadd.f32 %v2104, %v2136
      %v2169 = vadd.f32 %v2105, %v2137
      %v2170 = vadd.f32 %v2106, %v2138
      %v2171 = vadd.f32 %v2107, %v2139
      %v2172 = vadd.f32 %v2108, %v2140
      %v2173 = vadd.f32 %v2109, %v2141
      %v2174 = vadd.f32 %v2110, %v2142
      %v2175 = vadd.f32 %v2111, %v2143
      %v2176 = vadd.f32 %v2112, %v2144
      %v2177 = vadd.f32 %v2113, %v2145
      %v2178 = vadd.f32 %v2114, %v2146
      %v2179 = vadd.f32 %v2115, %v2147
      %v2180 = vadd.f32 %v2116, %v2148
      %v2181 = vadd.f32 %v2117, %v2149
      %v2182 = vmax.f32 %v2150, 0.0
      %v2183 = vmax.f32 %v2151, 0.0
      %v2184 = vmax.f32 %v2152, 0.0
      %v2185 = vmax.f32 %v2153, 0.0
      %v2186 = vmax.f32 %v2154, 0.0
      %v2187 = vmax.f32 %v2155, 0.0
      %v2188 = vmax.f32 %v2156, 0.0
      %v2189 = vmax.f32 %v2157, 0.0
      %v2190 = vmax.f32 %v2158, 0.0
      %v2191 = vmax.f32 %v2159, 0.0
      %v2192 = vmax.f32 %v2160, 0.0
      %v2193 = vmax.f32 %v2161, 0.0
      %v2194 = vmax.f32 %v2162, 0.0
      %v2195 = vmax.f32 %v2163, 0.0
      %v2196 = vmax.f32 %v2164, 0.0
      %v2197 = vmax.f32 %v2165, 0.0
      %v2198 = vmax.f32 %v2166, 0.0
      %v2199 = vmax.f32 %v2167, 0.0
      %v2200 = vmax.f32 %v2168, 0.0
      %v2201 = vmax.f32 %v2169, 0.0
      %v2202 = vmax.f32 %v2170, 0.0
      %v2203 = vmax.f32 %v2171, 0.0
      %v2204 = vmax.f32 %v2172, 0.0
      %v2205 = vmax.f32 %v2173, 0.0
      %v2206 = vmax.f32 %v2174, 0.0
      %v2207 = vmax.f32 %v2175, 0.0
      %v2208 = vmax.f32 %v2176, 0.0
      %v2209 = vmax.f32 %v2177, 0.0
      %v2210 = vmax.f32 %v2178, 0.0
      %v2211 = vmax.f32 %v2179, 0.0
      %v2212 = vmax.f32 %v2180, 0.0
      %v2213 = vmax.f32 %v2181, 0.0
      %vm2214 = vcmask 261120
      %2215 = vst.msk [vmem:[%s251] sm:$0xff] %vm2214, %v2182
      %2216 = vst.msk [vmem:[%s251 + $0x8] sm:$0xff] %vm2214, %v2183
      %2217 = vst.msk [vmem:[%s251 + $0x10] sm:$0xff] %vm2214, %v2184
      %2218 = vst.msk [vmem:[%s251 + $0x18] sm:$0xff] %vm2214, %v2185
      %2219 = vst.msk [vmem:[%s251 + $0x20] sm:$0xff] %vm2214, %v2186
      %2220 = vst.msk [vmem:[%s251 + $0x28] sm:$0xff] %vm2214, %v2187
      %2221 = vst.msk [vmem:[%s251 + $0x30] sm:$0xff] %vm2214, %v2188
      %2222 = vst.msk [vmem:[%s251 + $0x38] sm:$0xff] %vm2214, %v2189
      %2223 = vst.msk [vmem:[%s251 + $0x40] sm:$0xff] %vm2214, %v2190
      %2224 = vst.msk [vmem:[%s251 + $0x48] sm:$0xff] %vm2214, %v2191
      %2225 = vst.msk [vmem:[%s251 + $0x50] sm:$0xff] %vm2214, %v2192
      %2226 = vst.msk [vmem:[%s251 + $0x58] sm:$0xff] %vm2214, %v2193
      %2227 = vst.msk [vmem:[%s251 + $0x60] sm:$0xff] %vm2214, %v2194
      %2228 = vst.msk [vmem:[%s251 + $0x68] sm:$0xff] %vm2214, %v2195
      %2229 = vst.msk [vmem:[%s251 + $0x70] sm:$0xff] %vm2214, %v2196
      %2230 = vst.msk [vmem:[%s251 + $0x78] sm:$0xff] %vm2214, %v2197
      %2231 = vst.msk [vmem:[%s251 + $0x80] sm:$0xff] %vm2214, %v2198
      %2232 = vst.msk [vmem:[%s251 + $0x88] sm:$0xff] %vm2214, %v2199
      %2233 = vst.msk [vmem:[%s251 + $0x90] sm:$0xff] %vm2214, %v2200
      %2234 = vst.msk [vmem:[%s251 + $0x98] sm:$0xff] %vm2214, %v2201
      %2235 = vst.msk [vmem:[%s251 + $0xa0] sm:$0xff] %vm2214, %v2202
      %2236 = vst.msk [vmem:[%s251 + $0xa8] sm:$0xff] %vm2214, %v2203
      %2237 = vst.msk [vmem:[%s251 + $0xb0] sm:$0xff] %vm2214, %v2204
      %2238 = vst.msk [vmem:[%s251 + $0xb8] sm:$0xff] %vm2214, %v2205
      %2239 = vst.msk [vmem:[%s251 + $0xc0] sm:$0xff] %vm2214, %v2206
      %2240 = vst.msk [vmem:[%s251 + $0xc8] sm:$0xff] %vm2214, %v2207
      %2241 = vst.msk [vmem:[%s251 + $0xd0] sm:$0xff] %vm2214, %v2208
      %2242 = vst.msk [vmem:[%s251 + $0xd8] sm:$0xff] %vm2214, %v2209
      %2243 = vst.msk [vmem:[%s251 + $0xe0] sm:$0xff] %vm2214, %v2210
      %2244 = vst.msk [vmem:[%s251 + $0xe8] sm:$0xff] %vm2214, %v2211
      %2245 = vst.msk [vmem:[%s251 + $0xf0] sm:$0xff] %vm2214, %v2212
      %2246 = vst.msk [vmem:[%s251 + $0xf8] sm:$0xff] %vm2214, %v2213
      %s2247 = smul.u32 32, %s16
      %p2248 = scmp.lt.s32.totalorder %s2247, 63
      %s2249 = scalar_select %p2248, %s2247, 63
      %s2250 = smul.addr %s2249, 8
      %s2251 = scalar_lea.vmem %s5, %s2250
      // Predicated region
      $region41: #{_lambda_.10} parent=39 // pred_check
        %p2252 = pneg %p149
      $region42: #{_lambda_.10} parent=39 // pred_check_branch
        %2254 = sbr.rel (%p2252) target = $region44
      $region43: #{_lambda_.10} parent=39 // pred_region
        %s2255 = smul.u32 32, %s16
      $region44: #{_lambda_.10} parent=39 // pred_fallthru
        _
    $region40: #{_lambda_.10} parent=5 // pred_fallthru
      _
    %p2256 = scmp.le.s32.totalorder 2, %s11
    // Predicated region
    $region45: #{_lambda_.10} parent=5 // pred_check
      %p2257 = pneg %p2256
    $region46: #{_lambda_.10} parent=5 // pred_check_branch
      %2259 = sbr.rel (%p2257) target = $region48
    $region47: #{_lambda_.10} parent=5 // pred_region
      %s2260 = ssub.s32 %s11, 2
      // Predicated region
      $region49: #{_lambda_.10} parent=47 // pred_check
        %p2261 = pneg %p155
      $region50: #{_lambda_.10} parent=47 // pred_check_branch
        %2263 = sbr.rel (%p2261) target = $region52
      $region51: #{_lambda_.10} parent=47 // pred_region
        %s2264 = smul.u32 32, %s17
        %p2265 = scmp.lt.s32.totalorder %s2264, 63
        %s2266 = scalar_select %p2265, %s2264, 63
        %s2267 = smul.addr %s2266, 8
        %s2268 = scalar_lea.vmem %s5, %s2267
      $region52: #{_lambda_.10} parent=47 // pred_fallthru
        _
    $region48: #{_lambda_.10} parent=5 // pred_fallthru
      _
  $region6: #{_lambda_.10} parent=0 // loop_footer
    %s15 = sadd.s32 1, %s11
  $region7: #{_lambda_.10} parent=0 // loop_footer_branch
    %10 = sbr.rel target = $region3
  $region8: #{_lambda_.10} parent=0 // loop_exit
    _

// kernel: _lambda_.11
$region0: #{_lambda_.11}
  #allocation0 [shape = 'u32[]', space=smem, size = 0x4, offset = 0x4, fixed_abs, tag = 'smem constant byte address 0x4 - core index']
  #allocation1 [shape = 'u32[72,128]{1,0:T(1,128)}', space=vmem, size = 0x9000, scoped, tag = 'internal scratch']
  %s0 = inlined_call_operand.vmem [shape: bf16[4096,864], index: 0, kind: input, shape index: {}]
  %s1 = inlined_call_operand.vmem [shape: bf16[864,16], index: 1, kind: input, shape index: {}]
  %s2 = inlined_call_operand.vmem [shape: f32[1,16], index: 2, kind: input, shape index: {}]
  %s3 = inlined_call_operand.vmem [shape: f32[1,16], index: 3, kind: input, shape index: {}]
  %s4 = inlined_call_operand.vmem [shape: f32[4096,16], index: 4, kind: output, shape index: {}]
  %s5 = sld [smem:[#allocation0]]
  $region49: #{_lambda_.11} parent=0
    _
  %s7 = ssub.s32 1, %s5
  %s8 = scalar_select 0, %s7, %s5
  loop: start=0, step=1, limit=10
  $region2: #{_lambda_.11} parent=0 // loop_pre_header
    _
  $region3: #{_lambda_.11} parent=0 // loop_header
    %s10 = sphi 0, %s14
    %p11 = scmp.ge.s32.totalorder %s10, 10
    %s20 = sphi 0, %s22
    %s23 = sphi 0, %s20
    %s24 = sphi 0, %s23
    %s40 = sphi 0, %s24
    %s44 = sphi 0, %s44
    %s46 = sphi 0, %s44
    %s47 = sphi 0, %s46
    %s61 = sphi 0, %s47
    %s65 = sphi 0, %s65
    %s67 = sphi 0, %s65
    %s68 = sphi 0, %s67
    %s82 = sphi 0, %s68
    %s86 = sphi 0, %s86
    %s88 = sphi 0, %s86
    %s89 = sphi 0, %s88
    %s103 = sphi 0, %s89
    %s109 = sphi 0, %s111
    %s112 = sphi 0, %s109
    %s113 = sphi 0, %s112
    %s129 = sphi 0, %s113
  $region4: #{_lambda_.11} parent=0 // loop_header_branch
    %13 = sbr.rel (%p11) target = $region8
  $region5: #{_lambda_.11} parent=0 // loop_body
    %s15 = ssub.s32 %s10, 1
    %s16 = ssub.s32 %s10, 2
    %s17 = sadd.s32 %s10, 1
    %s18 = ssub.s32 %s10, %s17
    %p19 = scmp.eq.s32.totalorder %s18, 0
    %s21 = sadd.s32 %s20, 1
    %s22 = scalar_select %p19, %s20, %s21
    %p25 = pneg %p19
    %p26 = scmp.eq.s32.totalorder %s10, 7
    %p27 = por %p25, %p26
    %p28 = scmp.ne.s32.totalorder %s20, %s23
    %p29 = scmp.eq.s32.totalorder %s10, 0
    %p30 = por %p28, %p29
    %p31 = scmp.ne.s32.totalorder %s20, %s23
    %p32 = scmp.eq.s32.totalorder %s15, 7
    %p33 = por %p31, %p32
    %p34 = scmp.ne.s32.totalorder %s23, %s24
    %p35 = scmp.eq.s32.totalorder %s15, 0
    %p36 = por %p34, %p35
    %p37 = scmp.ne.s32.totalorder %s23, %s24
    %p38 = scmp.eq.s32.totalorder %s16, 7
    %p39 = por %p37, %p38
    %p41 = scmp.ne.s32.totalorder %s24, %s40
    %p42 = scmp.eq.s32.totalorder %s16, 0
    %p43 = por %p41, %p42
    %s45 = sadd.s32 %s44, 1
    %p48 = scmp.eq.s32.totalorder %s10, 7
    %p49 = scmp.ne.s32.totalorder %s44, %s46
    %p50 = scmp.eq.s32.totalorder %s10, 0
    %p51 = por %p49, %p50
    %p52 = scmp.ne.s32.totalorder %s44, %s46
    %p53 = scmp.eq.s32.totalorder %s15, 7
    %p54 = por %p52, %p53
    %p55 = scmp.ne.s32.totalorder %s46, %s47
    %p56 = scmp.eq.s32.totalorder %s15, 0
    %p57 = por %p55, %p56
    %p58 = scmp.ne.s32.totalorder %s46, %s47
    %p59 = scmp.eq.s32.totalorder %s16, 7
    %p60 = por %p58, %p59
    %p62 = scmp.ne.s32.totalorder %s47, %s61
    %p63 = scmp.eq.s32.totalorder %s16, 0
    %p64 = por %p62, %p63
    %s66 = sadd.s32 %s65, 1
    %p69 = scmp.eq.s32.totalorder %s10, 7
    %p70 = scmp.ne.s32.totalorder %s65, %s67
    %p71 = scmp.eq.s32.totalorder %s10, 0
    %p72 = por %p70, %p71
    %p73 = scmp.ne.s32.totalorder %s65, %s67
    %p74 = scmp.eq.s32.totalorder %s15, 7
    %p75 = por %p73, %p74
    %p76 = scmp.ne.s32.totalorder %s67, %s68
    %p77 = scmp.eq.s32.totalorder %s15, 0
    %p78 = por %p76, %p77
    %p79 = scmp.ne.s32.totalorder %s67, %s68
    %p80 = scmp.eq.s32.totalorder %s16, 7
    %p81 = por %p79, %p80
    %p83 = scmp.ne.s32.totalorder %s68, %s82
    %p84 = scmp.eq.s32.totalorder %s16, 0
    %p85 = por %p83, %p84
    %s87 = sadd.s32 %s86, 1
    %p90 = scmp.eq.s32.totalorder %s10, 7
    %p91 = scmp.ne.s32.totalorder %s86, %s88
    %p92 = scmp.eq.s32.totalorder %s10, 0
    %p93 = por %p91, %p92
    %p94 = scmp.ne.s32.totalorder %s86, %s88
    %p95 = scmp.eq.s32.totalorder %s15, 7
    %p96 = por %p94, %p95
    %p97 = scmp.ne.s32.totalorder %s88, %s89
    %p98 = scmp.eq.s32.totalorder %s15, 0
    %p99 = por %p97, %p98
    %p100 = scmp.ne.s32.totalorder %s88, %s89
    %p101 = scmp.eq.s32.totalorder %s16, 7
    %p102 = por %p100, %p101
    %p104 = scmp.ne.s32.totalorder %s89, %s103
    %p105 = scmp.eq.s32.totalorder %s16, 0
    %p106 = por %p104, %p105
    %s107 = ssub.s32 %s10, %s17
    %p108 = scmp.eq.s32.totalorder %s107, 0
    %s110 = sadd.s32 %s109, 1
    %s111 = scalar_select %p108, %s109, %s110
    %p114 = pneg %p108
    %p115 = scmp.eq.s32.totalorder %s10, 7
    %p116 = por %p114, %p115
    %p117 = scmp.ne.s32.totalorder %s109, %s112
    %p118 = scmp.eq.s32.totalorder %s10, 0
    %p119 = por %p117, %p118
    %p120 = scmp.ne.s32.totalorder %s109, %s112
    %p121 = scmp.eq.s32.totalorder %s15, 7
    %p122 = por %p120, %p121
    %p123 = scmp.ne.s32.totalorder %s112, %s113
    %p124 = scmp.eq.s32.totalorder %s15, 0
    %p125 = por %p123, %p124
    %p126 = scmp.ne.s32.totalorder %s112, %s113
    %p127 = scmp.eq.s32.totalorder %s16, 7
    %p128 = por %p126, %p127
    %p130 = scmp.ne.s32.totalorder %s113, %s129
    %p131 = scmp.eq.s32.totalorder %s16, 0
    %p132 = por %p130, %p131
    %p133 = scmp.le.s32.totalorder 1, %s10
    %p134 = scmp.lt.s32.totalorder %s10, 9
    %p135 = pnand %p133, %p134
    %p136 = pneg %p135
    // Predicated region
    $region9: #{_lambda_.11} parent=5 // pred_check
      _
    $region10: #{_lambda_.11} parent=5 // pred_check_branch
      %138 = sbr.rel (%p135) target = $region12
    $region11: #{_lambda_.11} parent=5 // pred_region
      %s139 = ssub.s32 %s10, 1
      // Predicated region
      $region13: #{_lambda_.11} parent=11 // pred_check
        %p140 = pneg %p57
      $region14: #{_lambda_.11} parent=11 // pred_check_branch
        %142 = sbr.rel (%p140) target = $region16
      $region15: #{_lambda_.11} parent=11 // pred_region
        _
      $region16: #{_lambda_.11} parent=11 // pred_fallthru
        _
      // Predicated region
      $region17: #{_lambda_.11} parent=11 // pred_check
        %p143 = pneg %p78
      $region18: #{_lambda_.11} parent=11 // pred_check_branch
        %145 = sbr.rel (%p143) target = $region20
      $region19: #{_lambda_.11} parent=11 // pred_region
        _
      $region20: #{_lambda_.11} parent=11 // pred_fallthru
        _
      // Predicated region
      $region21: #{_lambda_.11} parent=11 // pred_check
        %p146 = pneg %p99
      $region22: #{_lambda_.11} parent=11 // pred_check_branch
        %148 = sbr.rel (%p146) target = $region24
      $region23: #{_lambda_.11} parent=11 // pred_region
        _
      $region24: #{_lambda_.11} parent=11 // pred_fallthru
        _
    $region12: #{_lambda_.11} parent=5 // pred_fallthru
      _
    %p149 = scmp.lt.s32.totalorder %s10, 8
    // Predicated region
    $region25: #{_lambda_.11} parent=5 // pred_check
      %p150 = pneg %p149
    $region26: #{_lambda_.11} parent=5 // pred_check_branch
      %152 = sbr.rel (%p150) target = $region28
    $region27: #{_lambda_.11} parent=5 // pred_region
      // Predicated region
      $region29: #{_lambda_.11} parent=27 // pred_check
        %p153 = pneg %p30
      $region30: #{_lambda_.11} parent=27 // pred_check_branch
        %155 = sbr.rel (%p153) target = $region32
      $region31: #{_lambda_.11} parent=27 // pred_region
        %s156 = smul.u32 64, %s10
        %p157 = scmp.lt.s32.totalorder %s156, 511
        %s158 = scalar_select %p157, %s156, 511
        %s159 = smul.addr %s158, 7
        %s160 = smul.addr %s159, 4
        %s161 = scalar_lea.vmem %s0, %s160
        %s162 = smul.u32 64, %s10
      $region32: #{_lambda_.11} parent=27 // pred_fallthru
        _
    $region28: #{_lambda_.11} parent=5 // pred_fallthru
      _
    %p163 = scmp.le.s32.totalorder 1, %s10
    %p164 = scmp.lt.s32.totalorder %s10, 9
    %p165 = pnand %p163, %p164
    %p166 = pneg %p165
    // Predicated region
    $region33: #{_lambda_.11} parent=5 // pred_check
      _
    $region34: #{_lambda_.11} parent=5 // pred_check_branch
      %168 = sbr.rel (%p165) target = $region36
    $region35: #{_lambda_.11} parent=5 // pred_region
      %s169 = ssub.s32 %s10, 1
      %s170 = smul.u32 64, %s15
      %p171 = scmp.lt.s32.totalorder %s170, 511
      %s172 = scalar_select %p171, %s170, 511
      %s173 = smul.addr %s172, 7
      %s174 = smul.addr %s173, 4
      %s175 = scalar_lea.vmem %s0, %s174
      %p176 = pneg %p36
      %p177 = pneg %p33
      %p178 = pneg %p57
      %p179 = pneg %p54
      %p180 = pneg %p78
      %p181 = pneg %p75
      %p182 = pneg %p99
      %p183 = pneg %p96
      %p184 = pneg %p125
      %p185 = pneg %p122
      %s186 = smul.u32 64, %s15
      %p187 = scmp.lt.s32.totalorder %s186, 511
      %s188 = scalar_select %p187, %s186, 511
      %s189 = smul.addr %s188, 8
      %s190 = scalar_lea.vmem %s4, %s189
      %s191 = smul.u32 64, %s15
      %p192 = scmp.lt.s32.totalorder %s191, 511
      %s193 = scalar_select %p192, %s191, 511
      %s194 = smul.addr %s193, 7
      %s195 = smul.addr %s194, 4
      %s196 = scalar_lea.vmem %s0, %s195
      %s197 = smul.u32 64, %s15
      %s198 = smul.u32 64, %s15
      %p199 = scmp.lt.s32.totalorder %s198, 511
      %s200 = scalar_select %p199, %s198, 511
      %s201 = smul.addr %s200, 8
      %s202 = scalar_lea.vmem %s4, %s201
      %s203 = smul.u32 64, %s15
      %v205 = vld [vmem:[%s196] sm:$0xff]
      %v206 = vld [vmem:[%s196 + $0x8] sm:$0xff]
      %v207 = vld [vmem:[%s196 + $0x10] sm:$0xff]
      %v208 = vld [vmem:[%s196 + $0x18] sm:$0xf]
      %v209 = vld [vmem:[%s196 + $0x1c] sm:$0xff]
      %v210 = vld [vmem:[%s196 + $0x24] sm:$0xff]
      %v211 = vld [vmem:[%s196 + $0x2c] sm:$0xff]
      %v212 = vld [vmem:[%s196 + $0x34] sm:$0xf]
      %v213 = vld [vmem:[%s196 + $0x38] sm:$0xff]
      %v214 = vld [vmem:[%s196 + $0x40] sm:$0xff]
      %v215 = vld [vmem:[%s196 + $0x48] sm:$0xff]
      %v216 = vld [vmem:[%s196 + $0x50] sm:$0xf]
      %v217 = vld [vmem:[%s196 + $0x54] sm:$0xff]
      %v218 = vld [vmem:[%s196 + $0x5c] sm:$0xff]
      %v219 = vld [vmem:[%s196 + $0x64] sm:$0xff]
      %v220 = vld [vmem:[%s196 + $0x6c] sm:$0xf]
      %v221 = vld [vmem:[%s196 + $0x70] sm:$0xff]
      %v222 = vld [vmem:[%s196 + $0x78] sm:$0xff]
      %v223 = vld [vmem:[%s196 + $0x80] sm:$0xff]
      %v224 = vld [vmem:[%s196 + $0x88] sm:$0xf]
      %v225 = vld [vmem:[%s196 + $0x8c] sm:$0xff]
      %v226 = vld [vmem:[%s196 + $0x94] sm:$0xff]
      %v227 = vld [vmem:[%s196 + $0x9c] sm:$0xff]
      %v228 = vld [vmem:[%s196 + $0xa4] sm:$0xf]
      %v229 = vld [vmem:[%s196 + $0xa8] sm:$0xff]
      %v230 = vld [vmem:[%s196 + $0xb0] sm:$0xff]
      %v231 = vld [vmem:[%s196 + $0xb8] sm:$0xff]
      %v232 = vld [vmem:[%s196 + $0xc0] sm:$0xf]
      %v233 = vld [vmem:[%s196 + $0xc4] sm:$0xff]
      %v234 = vld [vmem:[%s196 + $0xcc] sm:$0xff]
      %v235 = vld [vmem:[%s196 + $0xd4] sm:$0xff]
      %v236 = vld [vmem:[%s196 + $0xdc] sm:$0xf]
      %v237 = vld [vmem:[%s196 + $0xe0] sm:$0xff]
      %v238 = vld [vmem:[%s196 + $0xe8] sm:$0xff]
      %v239 = vld [vmem:[%s196 + $0xf0] sm:$0xff]
      %v240 = vld [vmem:[%s196 + $0xf8] sm:$0xf]
      %v241 = vld [vmem:[%s196 + $0xfc] sm:$0xff]
      %v242 = vld [vmem:[%s196 + $0x104] sm:$0xff]
      %v243 = vld [vmem:[%s196 + $0x10c] sm:$0xff]
      %v244 = vld [vmem:[%s196 + $0x114] sm:$0xf]
      %v245 = vld [vmem:[%s196 + $0x118] sm:$0xff]
      %v246 = vld [vmem:[%s196 + $0x120] sm:$0xff]
      %v247 = vld [vmem:[%s196 + $0x128] sm:$0xff]
      %v248 = vld [vmem:[%s196 + $0x130] sm:$0xf]
      %v249 = vld [vmem:[%s196 + $0x134] sm:$0xff]
      %v250 = vld [vmem:[%s196 + $0x13c] sm:$0xff]
      %v251 = vld [vmem:[%s196 + $0x144] sm:$0xff]
      %v252 = vld [vmem:[%s196 + $0x14c] sm:$0xf]
      %v253 = vld [vmem:[%s196 + $0x150] sm:$0xff]
      %v254 = vld [vmem:[%s196 + $0x158] sm:$0xff]
      %v255 = vld [vmem:[%s196 + $0x160] sm:$0xff]
      %v256 = vld [vmem:[%s196 + $0x168] sm:$0xf]
      %v257 = vld [vmem:[%s196 + $0x16c] sm:$0xff]
      %v258 = vld [vmem:[%s196 + $0x174] sm:$0xff]
      %v259 = vld [vmem:[%s196 + $0x17c] sm:$0xff]
      %v260 = vld [vmem:[%s196 + $0x184] sm:$0xf]
      %v261 = vld [vmem:[%s196 + $0x188] sm:$0xff]
      %v262 = vld [vmem:[%s196 + $0x190] sm:$0xff]
      %v263 = vld [vmem:[%s196 + $0x198] sm:$0xff]
      %v264 = vld [vmem:[%s196 + $0x1a0] sm:$0xf]
      %v265 = vld [vmem:[%s196 + $0x1a4] sm:$0xff]
      %v266 = vld [vmem:[%s196 + $0x1ac] sm:$0xff]
      %v267 = vld [vmem:[%s196 + $0x1b4] sm:$0xff]
      %v268 = vld [vmem:[%s196 + $0x1bc] sm:$0xf]
      %v269 = vld [vmem:[%s196 + $0x1c0] sm:$0xff]
      %v270 = vld [vmem:[%s196 + $0x1c8] sm:$0xff]
      %v271 = vld [vmem:[%s196 + $0x1d0] sm:$0xff]
      %v272 = vld [vmem:[%s196 + $0x1d8] sm:$0xf]
      %v273 = vld [vmem:[%s196 + $0x1dc] sm:$0xff]
      %v274 = vld [vmem:[%s196 + $0x1e4] sm:$0xff]
      %v275 = vld [vmem:[%s196 + $0x1ec] sm:$0xff]
      %v276 = vld [vmem:[%s196 + $0x1f4] sm:$0xf]
      %v277 = vld [vmem:[%s196 + $0x1f8] sm:$0xff]
      %v278 = vld [vmem:[%s196 + $0x200] sm:$0xff]
      %v279 = vld [vmem:[%s196 + $0x208] sm:$0xff]
      %v280 = vld [vmem:[%s196 + $0x210] sm:$0xf]
      %v281 = vld [vmem:[%s196 + $0x214] sm:$0xff]
      %v282 = vld [vmem:[%s196 + $0x21c] sm:$0xff]
      %v283 = vld [vmem:[%s196 + $0x224] sm:$0xff]
      %v284 = vld [vmem:[%s196 + $0x22c] sm:$0xf]
      %v285 = vld [vmem:[%s196 + $0x230] sm:$0xff]
      %v286 = vld [vmem:[%s196 + $0x238] sm:$0xff]
      %v287 = vld [vmem:[%s196 + $0x240] sm:$0xff]
      %v288 = vld [vmem:[%s196 + $0x248] sm:$0xf]
      %v289 = vld [vmem:[%s196 + $0x24c] sm:$0xff]
      %v290 = vld [vmem:[%s196 + $0x254] sm:$0xff]
      %v291 = vld [vmem:[%s196 + $0x25c] sm:$0xff]
      %v292 = vld [vmem:[%s196 + $0x264] sm:$0xf]
      %v293 = vld [vmem:[%s196 + $0x268] sm:$0xff]
      %v294 = vld [vmem:[%s196 + $0x270] sm:$0xff]
      %v295 = vld [vmem:[%s196 + $0x278] sm:$0xff]
      %v296 = vld [vmem:[%s196 + $0x280] sm:$0xf]
      %v297 = vld [vmem:[%s196 + $0x284] sm:$0xff]
      %v298 = vld [vmem:[%s196 + $0x28c] sm:$0xff]
      %v299 = vld [vmem:[%s196 + $0x294] sm:$0xff]
      %v300 = vld [vmem:[%s196 + $0x29c] sm:$0xf]
      %v301 = vld [vmem:[%s196 + $0x2a0] sm:$0xff]
      %v302 = vld [vmem:[%s196 + $0x2a8] sm:$0xff]
      %v303 = vld [vmem:[%s196 + $0x2b0] sm:$0xff]
      %v304 = vld [vmem:[%s196 + $0x2b8] sm:$0xf]
      %v305 = vld [vmem:[%s196 + $0x2bc] sm:$0xff]
      %v306 = vld [vmem:[%s196 + $0x2c4] sm:$0xff]
      %v307 = vld [vmem:[%s196 + $0x2cc] sm:$0xff]
      %v308 = vld [vmem:[%s196 + $0x2d4] sm:$0xf]
      %v309 = vld [vmem:[%s196 + $0x2d8] sm:$0xff]
      %v310 = vld [vmem:[%s196 + $0x2e0] sm:$0xff]
      %v311 = vld [vmem:[%s196 + $0x2e8] sm:$0xff]
      %v312 = vld [vmem:[%s196 + $0x2f0] sm:$0xf]
      %v313 = vld [vmem:[%s196 + $0x2f4] sm:$0xff]
      %v314 = vld [vmem:[%s196 + $0x2fc] sm:$0xff]
      %v315 = vld [vmem:[%s196 + $0x304] sm:$0xff]
      %v316 = vld [vmem:[%s196 + $0x30c] sm:$0xf]
      %v317 = vld [vmem:[%s196 + $0x310] sm:$0xff]
      %v318 = vld [vmem:[%s196 + $0x318] sm:$0xff]
      %v319 = vld [vmem:[%s196 + $0x320] sm:$0xff]
      %v320 = vld [vmem:[%s196 + $0x328] sm:$0xf]
      %v321 = vld [vmem:[%s196 + $0x32c] sm:$0xff]
      %v322 = vld [vmem:[%s196 + $0x334] sm:$0xff]
      %v323 = vld [vmem:[%s196 + $0x33c] sm:$0xff]
      %v324 = vld [vmem:[%s196 + $0x344] sm:$0xf]
      %v325 = vld [vmem:[%s196 + $0x348] sm:$0xff]
      %v326 = vld [vmem:[%s196 + $0x350] sm:$0xff]
      %v327 = vld [vmem:[%s196 + $0x358] sm:$0xff]
      %v328 = vld [vmem:[%s196 + $0x360] sm:$0xf]
      %v329 = vld [vmem:[%s196 + $0x364] sm:$0xff]
      %v330 = vld [vmem:[%s196 + $0x36c] sm:$0xff]
      %v331 = vld [vmem:[%s196 + $0x374] sm:$0xff]
      %v332 = vld [vmem:[%s196 + $0x37c] sm:$0xf]
      %v333 = vld [vmem:[%s196 + $0x380] sm:$0xff]
      %v334 = vld [vmem:[%s196 + $0x388] sm:$0xff]
      %v335 = vld [vmem:[%s196 + $0x390] sm:$0xff]
      %v336 = vld [vmem:[%s196 + $0x398] sm:$0xf]
      %v337 = vld [vmem:[%s196 + $0x39c] sm:$0xff]
      %v338 = vld [vmem:[%s196 + $0x3a4] sm:$0xff]
      %v339 = vld [vmem:[%s196 + $0x3ac] sm:$0xff]
      %v340 = vld [vmem:[%s196 + $0x3b4] sm:$0xf]
      %v341 = vld [vmem:[%s196 + $0x3b8] sm:$0xff]
      %v342 = vld [vmem:[%s196 + $0x3c0] sm:$0xff]
      %v343 = vld [vmem:[%s196 + $0x3c8] sm:$0xff]
      %v344 = vld [vmem:[%s196 + $0x3d0] sm:$0xf]
      %v345 = vld [vmem:[%s196 + $0x3d4] sm:$0xff]
      %v346 = vld [vmem:[%s196 + $0x3dc] sm:$0xff]
      %v347 = vld [vmem:[%s196 + $0x3e4] sm:$0xff]
      %v348 = vld [vmem:[%s196 + $0x3ec] sm:$0xf]
      %v349 = vld [vmem:[%s196 + $0x3f0] sm:$0xff]
      %v350 = vld [vmem:[%s196 + $0x3f8] sm:$0xff]
      %v351 = vld [vmem:[%s196 + $0x400] sm:$0xff]
      %v352 = vld [vmem:[%s196 + $0x408] sm:$0xf]
      %v353 = vld [vmem:[%s196 + $0x40c] sm:$0xff]
      %v354 = vld [vmem:[%s196 + $0x414] sm:$0xff]
      %v355 = vld [vmem:[%s196 + $0x41c] sm:$0xff]
      %v356 = vld [vmem:[%s196 + $0x424] sm:$0xf]
      %v357 = vld [vmem:[%s196 + $0x428] sm:$0xff]
      %v358 = vld [vmem:[%s196 + $0x430] sm:$0xff]
      %v359 = vld [vmem:[%s196 + $0x438] sm:$0xff]
      %v360 = vld [vmem:[%s196 + $0x440] sm:$0xf]
      %v361 = vld [vmem:[%s196 + $0x444] sm:$0xff]
      %v362 = vld [vmem:[%s196 + $0x44c] sm:$0xff]
      %v363 = vld [vmem:[%s196 + $0x454] sm:$0xff]
      %v364 = vld [vmem:[%s196 + $0x45c] sm:$0xf]
      %v365 = vld [vmem:[%s196 + $0x460] sm:$0xff]
      %v366 = vld [vmem:[%s196 + $0x468] sm:$0xff]
      %v367 = vld [vmem:[%s196 + $0x470] sm:$0xff]
      %v368 = vld [vmem:[%s196 + $0x478] sm:$0xf]
      %v369 = vld [vmem:[%s196 + $0x47c] sm:$0xff]
      %v370 = vld [vmem:[%s196 + $0x484] sm:$0xff]
      %v371 = vld [vmem:[%s196 + $0x48c] sm:$0xff]
      %v372 = vld [vmem:[%s196 + $0x494] sm:$0xf]
      %v373 = vld [vmem:[%s196 + $0x498] sm:$0xff]
      %v374 = vld [vmem:[%s196 + $0x4a0] sm:$0xff]
      %v375 = vld [vmem:[%s196 + $0x4a8] sm:$0xff]
      %v376 = vld [vmem:[%s196 + $0x4b0] sm:$0xf]
      %v377 = vld [vmem:[%s196 + $0x4b4] sm:$0xff]
      %v378 = vld [vmem:[%s196 + $0x4bc] sm:$0xff]
      %v379 = vld [vmem:[%s196 + $0x4c4] sm:$0xff]
      %v380 = vld [vmem:[%s196 + $0x4cc] sm:$0xf]
      %v381 = vld [vmem:[%s196 + $0x4d0] sm:$0xff]
      %v382 = vld [vmem:[%s196 + $0x4d8] sm:$0xff]
      %v383 = vld [vmem:[%s196 + $0x4e0] sm:$0xff]
      %v384 = vld [vmem:[%s196 + $0x4e8] sm:$0xf]
      %v385 = vld [vmem:[%s196 + $0x4ec] sm:$0xff]
      %v386 = vld [vmem:[%s196 + $0x4f4] sm:$0xff]
      %v387 = vld [vmem:[%s196 + $0x4fc] sm:$0xff]
      %v388 = vld [vmem:[%s196 + $0x504] sm:$0xf]
      %v389 = vld [vmem:[%s196 + $0x508] sm:$0xff]
      %v390 = vld [vmem:[%s196 + $0x510] sm:$0xff]
      %v391 = vld [vmem:[%s196 + $0x518] sm:$0xff]
      %v392 = vld [vmem:[%s196 + $0x520] sm:$0xf]
      %v393 = vld [vmem:[%s196 + $0x524] sm:$0xff]
      %v394 = vld [vmem:[%s196 + $0x52c] sm:$0xff]
      %v395 = vld [vmem:[%s196 + $0x534] sm:$0xff]
      %v396 = vld [vmem:[%s196 + $0x53c] sm:$0xf]
      %v397 = vld [vmem:[%s196 + $0x540] sm:$0xff]
      %v398 = vld [vmem:[%s196 + $0x548] sm:$0xff]
      %v399 = vld [vmem:[%s196 + $0x550] sm:$0xff]
      %v400 = vld [vmem:[%s196 + $0x558] sm:$0xf]
      %v401 = vld [vmem:[%s196 + $0x55c] sm:$0xff]
      %v402 = vld [vmem:[%s196 + $0x564] sm:$0xff]
      %v403 = vld [vmem:[%s196 + $0x56c] sm:$0xff]
      %v404 = vld [vmem:[%s196 + $0x574] sm:$0xf]
      %v405 = vld [vmem:[%s196 + $0x578] sm:$0xff]
      %v406 = vld [vmem:[%s196 + $0x580] sm:$0xff]
      %v407 = vld [vmem:[%s196 + $0x588] sm:$0xff]
      %v408 = vld [vmem:[%s196 + $0x590] sm:$0xf]
      %v409 = vld [vmem:[%s196 + $0x594] sm:$0xff]
      %v410 = vld [vmem:[%s196 + $0x59c] sm:$0xff]
      %v411 = vld [vmem:[%s196 + $0x5a4] sm:$0xff]
      %v412 = vld [vmem:[%s196 + $0x5ac] sm:$0xf]
      %v413 = vld [vmem:[%s196 + $0x5b0] sm:$0xff]
      %v414 = vld [vmem:[%s196 + $0x5b8] sm:$0xff]
      %v415 = vld [vmem:[%s196 + $0x5c0] sm:$0xff]
      %v416 = vld [vmem:[%s196 + $0x5c8] sm:$0xf]
      %v417 = vld [vmem:[%s196 + $0x5cc] sm:$0xff]
      %v418 = vld [vmem:[%s196 + $0x5d4] sm:$0xff]
      %v419 = vld [vmem:[%s196 + $0x5dc] sm:$0xff]
      %v420 = vld [vmem:[%s196 + $0x5e4] sm:$0xf]
      %v421 = vld [vmem:[%s196 + $0x5e8] sm:$0xff]
      %v422 = vld [vmem:[%s196 + $0x5f0] sm:$0xff]
      %v423 = vld [vmem:[%s196 + $0x5f8] sm:$0xff]
      %v424 = vld [vmem:[%s196 + $0x600] sm:$0xf]
      %v425 = vld [vmem:[%s196 + $0x604] sm:$0xff]
      %v426 = vld [vmem:[%s196 + $0x60c] sm:$0xff]
      %v427 = vld [vmem:[%s196 + $0x614] sm:$0xff]
      %v428 = vld [vmem:[%s196 + $0x61c] sm:$0xf]
      %v429 = vld [vmem:[%s196 + $0x620] sm:$0xff]
      %v430 = vld [vmem:[%s196 + $0x628] sm:$0xff]
      %v431 = vld [vmem:[%s196 + $0x630] sm:$0xff]
      %v432 = vld [vmem:[%s196 + $0x638] sm:$0xf]
      %v433 = vld [vmem:[%s196 + $0x63c] sm:$0xff]
      %v434 = vld [vmem:[%s196 + $0x644] sm:$0xff]
      %v435 = vld [vmem:[%s196 + $0x64c] sm:$0xff]
      %v436 = vld [vmem:[%s196 + $0x654] sm:$0xf]
      %v437 = vld [vmem:[%s196 + $0x658] sm:$0xff]
      %v438 = vld [vmem:[%s196 + $0x660] sm:$0xff]
      %v439 = vld [vmem:[%s196 + $0x668] sm:$0xff]
      %v440 = vld [vmem:[%s196 + $0x670] sm:$0xf]
      %v441 = vld [vmem:[%s196 + $0x674] sm:$0xff]
      %v442 = vld [vmem:[%s196 + $0x67c] sm:$0xff]
      %v443 = vld [vmem:[%s196 + $0x684] sm:$0xff]
      %v444 = vld [vmem:[%s196 + $0x68c] sm:$0xf]
      %v445 = vld [vmem:[%s196 + $0x690] sm:$0xff]
      %v446 = vld [vmem:[%s196 + $0x698] sm:$0xff]
      %v447 = vld [vmem:[%s196 + $0x6a0] sm:$0xff]
      %v448 = vld [vmem:[%s196 + $0x6a8] sm:$0xf]
      %v449 = vld [vmem:[%s196 + $0x6ac] sm:$0xff]
      %v450 = vld [vmem:[%s196 + $0x6b4] sm:$0xff]
      %v451 = vld [vmem:[%s196 + $0x6bc] sm:$0xff]
      %v452 = vld [vmem:[%s196 + $0x6c4] sm:$0xf]
      %v453 = vld [vmem:[%s196 + $0x6c8] sm:$0xff]
      %v454 = vld [vmem:[%s196 + $0x6d0] sm:$0xff]
      %v455 = vld [vmem:[%s196 + $0x6d8] sm:$0xff]
      %v456 = vld [vmem:[%s196 + $0x6e0] sm:$0xf]
      %v457 = vld [vmem:[%s196 + $0x6e4] sm:$0xff]
      %v458 = vld [vmem:[%s196 + $0x6ec] sm:$0xff]
      %v459 = vld [vmem:[%s196 + $0x6f4] sm:$0xff]
      %v460 = vld [vmem:[%s196 + $0x6fc] sm:$0xf]
      %v461 = vld [vmem:[%s1] sm:$0xf]
      %v462 = vld [vmem:[%s1 + $0x4] sm:$0xf]
      %v463 = vld [vmem:[%s1 + $0x8] sm:$0xf]
      %v464 = vld [vmem:[%s1 + $0xc] sm:$0xf]
      %v465 = vld [vmem:[%s1 + $0x10] sm:$0xf]
      %v466 = vld [vmem:[%s1 + $0x14] sm:$0xf]
      %v467 = vld [vmem:[%s1 + $0x18] sm:$0xf]
      %v468 = vld [vmem:[%s1 + $0x1c] sm:$0xf]
      %v469 = vld [vmem:[%s1 + $0x20] sm:$0xf]
      %v470 = vld [vmem:[%s1 + $0x24] sm:$0xf]
      %v471 = vld [vmem:[%s1 + $0x28] sm:$0xf]
      %v472 = vld [vmem:[%s1 + $0x2c] sm:$0xf]
      %v473 = vld [vmem:[%s1 + $0x30] sm:$0xf]
      %v474 = vld [vmem:[%s1 + $0x34] sm:$0xf]
      %v475 = vld [vmem:[%s1 + $0x38] sm:$0xf]
      %v476 = vld [vmem:[%s1 + $0x3c] sm:$0xf]
      %v477 = vld [vmem:[%s1 + $0x40] sm:$0xf]
      %v478 = vld [vmem:[%s1 + $0x44] sm:$0xf]
      %v479 = vld [vmem:[%s1 + $0x48] sm:$0xf]
      %v480 = vld [vmem:[%s1 + $0x4c] sm:$0xf]
      %v481 = vld [vmem:[%s1 + $0x50] sm:$0xf]
      %v482 = vld [vmem:[%s1 + $0x54] sm:$0xf]
      %v483 = vld [vmem:[%s1 + $0x58] sm:$0xf]
      %v484 = vld [vmem:[%s1 + $0x5c] sm:$0xf]
      %v485 = vld [vmem:[%s1 + $0x60] sm:$0xf]
      %v486 = vld [vmem:[%s1 + $0x64] sm:$0xf]
      %v487 = vld [vmem:[%s1 + $0x68] sm:$0xf]
      %v488 = vld [vmem:[%s1 + $0x6c] sm:$0xf]
      %v489 = vld [vmem:[%s1 + $0x70] sm:$0xf]
      %v490 = vld [vmem:[%s1 + $0x74] sm:$0xf]
      %v491 = vld [vmem:[%s1 + $0x78] sm:$0xf]
      %v492 = vld [vmem:[%s1 + $0x7c] sm:$0xf]
      %v493 = vld [vmem:[%s1 + $0x80] sm:$0xf]
      %v494 = vld [vmem:[%s1 + $0x84] sm:$0xf]
      %v495 = vld [vmem:[%s1 + $0x88] sm:$0xf]
      %v496 = vld [vmem:[%s1 + $0x8c] sm:$0xf]
      %v497 = vld [vmem:[%s1 + $0x90] sm:$0xf]
      %v498 = vld [vmem:[%s1 + $0x94] sm:$0xf]
      %v499 = vld [vmem:[%s1 + $0x98] sm:$0xf]
      %v500 = vld [vmem:[%s1 + $0x9c] sm:$0xf]
      %v501 = vld [vmem:[%s1 + $0xa0] sm:$0xf]
      %v502 = vld [vmem:[%s1 + $0xa4] sm:$0xf]
      %v503 = vld [vmem:[%s1 + $0xa8] sm:$0xf]
      %v504 = vld [vmem:[%s1 + $0xac] sm:$0xf]
      %v505 = vld [vmem:[%s1 + $0xb0] sm:$0xf]
      %v506 = vld [vmem:[%s1 + $0xb4] sm:$0xf]
      %v507 = vld [vmem:[%s1 + $0xb8] sm:$0xf]
      %v508 = vld [vmem:[%s1 + $0xbc] sm:$0xf]
      %v509 = vld [vmem:[%s1 + $0xc0] sm:$0xf]
      %v510 = vld [vmem:[%s1 + $0xc4] sm:$0xf]
      %v511 = vld [vmem:[%s1 + $0xc8] sm:$0xf]
      %v512 = vld [vmem:[%s1 + $0xcc] sm:$0xf]
      %v513 = vld [vmem:[%s1 + $0xd0] sm:$0xf]
      %v514 = vld [vmem:[%s1 + $0xd4] sm:$0xf]
      %v515 = vld [vmem:[%s1 + $0xd8] sm:$0xf]
      %v516 = vld [vmem:[%s1 + $0xdc] sm:$0xf]
      %v517 = vld [vmem:[%s1 + $0xe0] sm:$0xf]
      %v518 = vld [vmem:[%s1 + $0xe4] sm:$0xf]
      %v519 = vld [vmem:[%s1 + $0xe8] sm:$0xf]
      %v520 = vld [vmem:[%s1 + $0xec] sm:$0xf]
      %v521 = vld [vmem:[%s1 + $0xf0] sm:$0xf]
      %v522 = vld [vmem:[%s1 + $0xf4] sm:$0xf]
      %v523 = vld [vmem:[%s1 + $0xf8] sm:$0xf]
      %v524 = vld [vmem:[%s1 + $0xfc] sm:$0xf]
      %v525 = vld [vmem:[%s1 + $0x100] sm:$0xf]
      %v526 = vld [vmem:[%s1 + $0x104] sm:$0xf]
      %v527 = vld [vmem:[%s1 + $0x108] sm:$0xf]
      %v528 = vld [vmem:[%s1 + $0x10c] sm:$0xf]
      %v529 = vld [vmem:[%s1 + $0x110] sm:$0xf]
      %v530 = vld [vmem:[%s1 + $0x114] sm:$0xf]
      %v531 = vld [vmem:[%s1 + $0x118] sm:$0xf]
      %v532 = vld [vmem:[%s1 + $0x11c] sm:$0xf]
      %v533 = vld [vmem:[%s1 + $0x120] sm:$0xf]
      %v534 = vld [vmem:[%s1 + $0x124] sm:$0xf]
      %v535 = vld [vmem:[%s1 + $0x128] sm:$0xf]
      %v536 = vld [vmem:[%s1 + $0x12c] sm:$0xf]
      %v537 = vld [vmem:[%s1 + $0x130] sm:$0xf]
      %v538 = vld [vmem:[%s1 + $0x134] sm:$0xf]
      %v539 = vld [vmem:[%s1 + $0x138] sm:$0xf]
      %v540 = vld [vmem:[%s1 + $0x13c] sm:$0xf]
      %v541 = vld [vmem:[%s1 + $0x140] sm:$0xf]
      %v542 = vld [vmem:[%s1 + $0x144] sm:$0xf]
      %v543 = vld [vmem:[%s1 + $0x148] sm:$0xf]
      %v544 = vld [vmem:[%s1 + $0x14c] sm:$0xf]
      %v545 = vld [vmem:[%s1 + $0x150] sm:$0xf]
      %v546 = vld [vmem:[%s1 + $0x154] sm:$0xf]
      %v547 = vld [vmem:[%s1 + $0x158] sm:$0xf]
      %v548 = vld [vmem:[%s1 + $0x15c] sm:$0xf]
      %v549 = vld [vmem:[%s1 + $0x160] sm:$0xf]
      %v550 = vld [vmem:[%s1 + $0x164] sm:$0xf]
      %v551 = vld [vmem:[%s1 + $0x168] sm:$0xf]
      %v552 = vld [vmem:[%s1 + $0x16c] sm:$0xf]
      %v553 = vld [vmem:[%s1 + $0x170] sm:$0xf]
      %v554 = vld [vmem:[%s1 + $0x174] sm:$0xf]
      %v555 = vld [vmem:[%s1 + $0x178] sm:$0xf]
      %v556 = vld [vmem:[%s1 + $0x17c] sm:$0xf]
      %v557 = vld [vmem:[%s1 + $0x180] sm:$0xf]
      %v558 = vld [vmem:[%s1 + $0x184] sm:$0xf]
      %v559 = vld [vmem:[%s1 + $0x188] sm:$0xf]
      %v560 = vld [vmem:[%s1 + $0x18c] sm:$0xf]
      %v561 = vld [vmem:[%s1 + $0x190] sm:$0xf]
      %v562 = vld [vmem:[%s1 + $0x194] sm:$0xf]
      %v563 = vld [vmem:[%s1 + $0x198] sm:$0xf]
      %v564 = vld [vmem:[%s1 + $0x19c] sm:$0xf]
      %v565 = vld [vmem:[%s1 + $0x1a0] sm:$0xf]
      %v566 = vld [vmem:[%s1 + $0x1a4] sm:$0xf]
      %v567 = vld [vmem:[%s1 + $0x1a8] sm:$0xf]
      %v568 = vld [vmem:[%s1 + $0x1ac] sm:$0xf]
      %v825 = vunpack.c.l.b16 %v205
      %v826 = vunpack.c.h.b16 %v205
      %v827 = vunpack.c.l.b16 %v206
      %v828 = vunpack.c.h.b16 %v206
      %v829 = vunpack.c.l.b16 %v207
      %v830 = vunpack.c.h.b16 %v207
      %v831 = vunpack.c.l.b16 %v208
      %v832 = vunpack.c.l.b16 %v209
      %v833 = vunpack.c.h.b16 %v209
      %v834 = vunpack.c.l.b16 %v210
      %v835 = vunpack.c.h.b16 %v210
      %v836 = vunpack.c.l.b16 %v211
      %v837 = vunpack.c.h.b16 %v211
      %v838 = vunpack.c.l.b16 %v212
      %v839 = vunpack.c.l.b16 %v213
      %v840 = vunpack.c.h.b16 %v213
      %v841 = vunpack.c.l.b16 %v214
      %v842 = vunpack.c.h.b16 %v214
      %v843 = vunpack.c.l.b16 %v215
      %v844 = vunpack.c.h.b16 %v215
      %v845 = vunpack.c.l.b16 %v216
      %v846 = vunpack.c.l.b16 %v217
      %v847 = vunpack.c.h.b16 %v217
      %v848 = vunpack.c.l.b16 %v218
      %v849 = vunpack.c.h.b16 %v218
      %v850 = vunpack.c.l.b16 %v219
      %v851 = vunpack.c.h.b16 %v219
      %v852 = vunpack.c.l.b16 %v220
      %v853 = vunpack.c.l.b16 %v221
      %v854 = vunpack.c.h.b16 %v221
      %v855 = vunpack.c.l.b16 %v222
      %v856 = vunpack.c.h.b16 %v222
      %v857 = vunpack.c.l.b16 %v223
      %v858 = vunpack.c.h.b16 %v223
      %v859 = vunpack.c.l.b16 %v224
      %v860 = vunpack.c.l.b16 %v225
      %v861 = vunpack.c.h.b16 %v225
      %v862 = vunpack.c.l.b16 %v226
      %v863 = vunpack.c.h.b16 %v226
      %v864 = vunpack.c.l.b16 %v227
      %v865 = vunpack.c.h.b16 %v227
      %v866 = vunpack.c.l.b16 %v228
      %v867 = vunpack.c.l.b16 %v229
      %v868 = vunpack.c.h.b16 %v229
      %v869 = vunpack.c.l.b16 %v230
      %v870 = vunpack.c.h.b16 %v230
      %v871 = vunpack.c.l.b16 %v231
      %v872 = vunpack.c.h.b16 %v231
      %v873 = vunpack.c.l.b16 %v232
      %v874 = vunpack.c.l.b16 %v233
      %v875 = vunpack.c.h.b16 %v233
      %v876 = vunpack.c.l.b16 %v234
      %v877 = vunpack.c.h.b16 %v234
      %v878 = vunpack.c.l.b16 %v235
      %v879 = vunpack.c.h.b16 %v235
      %v880 = vunpack.c.l.b16 %v236
      %v881 = vunpack.c.l.b16 %v237
      %v882 = vunpack.c.h.b16 %v237
      %v883 = vunpack.c.l.b16 %v238
      %v884 = vunpack.c.h.b16 %v238
      %v885 = vunpack.c.l.b16 %v239
      %v886 = vunpack.c.h.b16 %v239
      %v887 = vunpack.c.l.b16 %v240
      %v888 = vunpack.c.l.b16 %v241
      %v889 = vunpack.c.h.b16 %v241
      %v890 = vunpack.c.l.b16 %v242
      %v891 = vunpack.c.h.b16 %v242
      %v892 = vunpack.c.l.b16 %v243
      %v893 = vunpack.c.h.b16 %v243
      %v894 = vunpack.c.l.b16 %v244
      %v895 = vunpack.c.l.b16 %v245
      %v896 = vunpack.c.h.b16 %v245
      %v897 = vunpack.c.l.b16 %v246
      %v898 = vunpack.c.h.b16 %v246
      %v899 = vunpack.c.l.b16 %v247
      %v900 = vunpack.c.h.b16 %v247
      %v901 = vunpack.c.l.b16 %v248
      %v902 = vunpack.c.l.b16 %v249
      %v903 = vunpack.c.h.b16 %v249
      %v904 = vunpack.c.l.b16 %v250
      %v905 = vunpack.c.h.b16 %v250
      %v906 = vunpack.c.l.b16 %v251
      %v907 = vunpack.c.h.b16 %v251
      %v908 = vunpack.c.l.b16 %v252
      %v909 = vunpack.c.l.b16 %v253
      %v910 = vunpack.c.h.b16 %v253
      %v911 = vunpack.c.l.b16 %v254
      %v912 = vunpack.c.h.b16 %v254
      %v913 = vunpack.c.l.b16 %v255
      %v914 = vunpack.c.h.b16 %v255
      %v915 = vunpack.c.l.b16 %v256
      %v916 = vunpack.c.l.b16 %v257
      %v917 = vunpack.c.h.b16 %v257
      %v918 = vunpack.c.l.b16 %v258
      %v919 = vunpack.c.h.b16 %v258
      %v920 = vunpack.c.l.b16 %v259
      %v921 = vunpack.c.h.b16 %v259
      %v922 = vunpack.c.l.b16 %v260
      %v923 = vunpack.c.l.b16 %v261
      %v924 = vunpack.c.h.b16 %v261
      %v925 = vunpack.c.l.b16 %v262
      %v926 = vunpack.c.h.b16 %v262
      %v927 = vunpack.c.l.b16 %v263
      %v928 = vunpack.c.h.b16 %v263
      %v929 = vunpack.c.l.b16 %v264
      %v930 = vunpack.c.l.b16 %v265
      %v931 = vunpack.c.h.b16 %v265
      %v932 = vunpack.c.l.b16 %v266
      %v933 = vunpack.c.h.b16 %v266
      %v934 = vunpack.c.l.b16 %v267
      %v935 = vunpack.c.h.b16 %v267
      %v936 = vunpack.c.l.b16 %v268
      %v937 = vunpack.c.l.b16 %v269
      %v938 = vunpack.c.h.b16 %v269
      %v939 = vunpack.c.l.b16 %v270
      %v940 = vunpack.c.h.b16 %v270
      %v941 = vunpack.c.l.b16 %v271
      %v942 = vunpack.c.h.b16 %v271
      %v943 = vunpack.c.l.b16 %v272
      %v944 = vunpack.c.l.b16 %v273
      %v945 = vunpack.c.h.b16 %v273
      %v946 = vunpack.c.l.b16 %v274
      %v947 = vunpack.c.h.b16 %v274
      %v948 = vunpack.c.l.b16 %v275
      %v949 = vunpack.c.h.b16 %v275
      %v950 = vunpack.c.l.b16 %v276
      %v951 = vunpack.c.l.b16 %v277
      %v952 = vunpack.c.h.b16 %v277
      %v953 = vunpack.c.l.b16 %v278
      %v954 = vunpack.c.h.b16 %v278
      %v955 = vunpack.c.l.b16 %v279
      %v956 = vunpack.c.h.b16 %v279
      %v957 = vunpack.c.l.b16 %v280
      %v958 = vunpack.c.l.b16 %v281
      %v959 = vunpack.c.h.b16 %v281
      %v960 = vunpack.c.l.b16 %v282
      %v961 = vunpack.c.h.b16 %v282
      %v962 = vunpack.c.l.b16 %v283
      %v963 = vunpack.c.h.b16 %v283
      %v964 = vunpack.c.l.b16 %v284
      %v965 = vunpack.c.l.b16 %v285
      %v966 = vunpack.c.h.b16 %v285
      %v967 = vunpack.c.l.b16 %v286
      %v968 = vunpack.c.h.b16 %v286
      %v969 = vunpack.c.l.b16 %v287
      %v970 = vunpack.c.h.b16 %v287
      %v971 = vunpack.c.l.b16 %v288
      %v972 = vunpack.c.l.b16 %v289
      %v973 = vunpack.c.h.b16 %v289
      %v974 = vunpack.c.l.b16 %v290
      %v975 = vunpack.c.h.b16 %v290
      %v976 = vunpack.c.l.b16 %v291
      %v977 = vunpack.c.h.b16 %v291
      %v978 = vunpack.c.l.b16 %v292
      %v979 = vunpack.c.l.b16 %v293
      %v980 = vunpack.c.h.b16 %v293
      %v981 = vunpack.c.l.b16 %v294
      %v982 = vunpack.c.h.b16 %v294
      %v983 = vunpack.c.l.b16 %v295
      %v984 = vunpack.c.h.b16 %v295
      %v985 = vunpack.c.l.b16 %v296
      %v986 = vunpack.c.l.b16 %v297
      %v987 = vunpack.c.h.b16 %v297
      %v988 = vunpack.c.l.b16 %v298
      %v989 = vunpack.c.h.b16 %v298
      %v990 = vunpack.c.l.b16 %v299
      %v991 = vunpack.c.h.b16 %v299
      %v992 = vunpack.c.l.b16 %v300
      %v993 = vunpack.c.l.b16 %v301
      %v994 = vunpack.c.h.b16 %v301
      %v995 = vunpack.c.l.b16 %v302
      %v996 = vunpack.c.h.b16 %v302
      %v997 = vunpack.c.l.b16 %v303
      %v998 = vunpack.c.h.b16 %v303
      %v999 = vunpack.c.l.b16 %v304
      %v1000 = vunpack.c.l.b16 %v305
      %v1001 = vunpack.c.h.b16 %v305
      %v1002 = vunpack.c.l.b16 %v306
      %v1003 = vunpack.c.h.b16 %v306
      %v1004 = vunpack.c.l.b16 %v307
      %v1005 = vunpack.c.h.b16 %v307
      %v1006 = vunpack.c.l.b16 %v308
      %v1007 = vunpack.c.l.b16 %v309
      %v1008 = vunpack.c.h.b16 %v309
      %v1009 = vunpack.c.l.b16 %v310
      %v1010 = vunpack.c.h.b16 %v310
      %v1011 = vunpack.c.l.b16 %v311
      %v1012 = vunpack.c.h.b16 %v311
      %v1013 = vunpack.c.l.b16 %v312
      %v1014 = vunpack.c.l.b16 %v313
      %v1015 = vunpack.c.h.b16 %v313
      %v1016 = vunpack.c.l.b16 %v314
      %v1017 = vunpack.c.h.b16 %v314
      %v1018 = vunpack.c.l.b16 %v315
      %v1019 = vunpack.c.h.b16 %v315
      %v1020 = vunpack.c.l.b16 %v316
      %v1021 = vunpack.c.l.b16 %v317
      %v1022 = vunpack.c.h.b16 %v317
      %v1023 = vunpack.c.l.b16 %v318
      %v1024 = vunpack.c.h.b16 %v318
      %v1025 = vunpack.c.l.b16 %v319
      %v1026 = vunpack.c.h.b16 %v319
      %v1027 = vunpack.c.l.b16 %v320
      %v1028 = vunpack.c.l.b16 %v321
      %v1029 = vunpack.c.h.b16 %v321
      %v1030 = vunpack.c.l.b16 %v322
      %v1031 = vunpack.c.h.b16 %v322
      %v1032 = vunpack.c.l.b16 %v323
      %v1033 = vunpack.c.h.b16 %v323
      %v1034 = vunpack.c.l.b16 %v324
      %v1035 = vunpack.c.l.b16 %v325
      %v1036 = vunpack.c.h.b16 %v325
      %v1037 = vunpack.c.l.b16 %v326
      %v1038 = vunpack.c.h.b16 %v326
      %v1039 = vunpack.c.l.b16 %v327
      %v1040 = vunpack.c.h.b16 %v327
      %v1041 = vunpack.c.l.b16 %v328
      %v1042 = vunpack.c.l.b16 %v329
      %v1043 = vunpack.c.h.b16 %v329
      %v1044 = vunpack.c.l.b16 %v330
      %v1045 = vunpack.c.h.b16 %v330
      %v1046 = vunpack.c.l.b16 %v331
      %v1047 = vunpack.c.h.b16 %v331
      %v1048 = vunpack.c.l.b16 %v332
      %v1049 = vunpack.c.l.b16 %v333
      %v1050 = vunpack.c.h.b16 %v333
      %v1051 = vunpack.c.l.b16 %v334
      %v1052 = vunpack.c.h.b16 %v334
      %v1053 = vunpack.c.l.b16 %v335
      %v1054 = vunpack.c.h.b16 %v335
      %v1055 = vunpack.c.l.b16 %v336
      %v1056 = vunpack.c.l.b16 %v337
      %v1057 = vunpack.c.h.b16 %v337
      %v1058 = vunpack.c.l.b16 %v338
      %v1059 = vunpack.c.h.b16 %v338
      %v1060 = vunpack.c.l.b16 %v339
      %v1061 = vunpack.c.h.b16 %v339
      %v1062 = vunpack.c.l.b16 %v340
      %v1063 = vunpack.c.l.b16 %v341
      %v1064 = vunpack.c.h.b16 %v341
      %v1065 = vunpack.c.l.b16 %v342
      %v1066 = vunpack.c.h.b16 %v342
      %v1067 = vunpack.c.l.b16 %v343
      %v1068 = vunpack.c.h.b16 %v343
      %v1069 = vunpack.c.l.b16 %v344
      %v1070 = vunpack.c.l.b16 %v345
      %v1071 = vunpack.c.h.b16 %v345
      %v1072 = vunpack.c.l.b16 %v346
      %v1073 = vunpack.c.h.b16 %v346
      %v1074 = vunpack.c.l.b16 %v347
      %v1075 = vunpack.c.h.b16 %v347
      %v1076 = vunpack.c.l.b16 %v348
      %v1077 = vunpack.c.l.b16 %v349
      %v1078 = vunpack.c.h.b16 %v349
      %v1079 = vunpack.c.l.b16 %v350
      %v1080 = vunpack.c.h.b16 %v350
      %v1081 = vunpack.c.l.b16 %v351
      %v1082 = vunpack.c.h.b16 %v351
      %v1083 = vunpack.c.l.b16 %v352
      %v1084 = vunpack.c.l.b16 %v353
      %v1085 = vunpack.c.h.b16 %v353
      %v1086 = vunpack.c.l.b16 %v354
      %v1087 = vunpack.c.h.b16 %v354
      %v1088 = vunpack.c.l.b16 %v355
      %v1089 = vunpack.c.h.b16 %v355
      %v1090 = vunpack.c.l.b16 %v356
      %v1091 = vunpack.c.l.b16 %v357
      %v1092 = vunpack.c.h.b16 %v357
      %v1093 = vunpack.c.l.b16 %v358
      %v1094 = vunpack.c.h.b16 %v358
      %v1095 = vunpack.c.l.b16 %v359
      %v1096 = vunpack.c.h.b16 %v359
      %v1097 = vunpack.c.l.b16 %v360
      %v1098 = vunpack.c.l.b16 %v361
      %v1099 = vunpack.c.h.b16 %v361
      %v1100 = vunpack.c.l.b16 %v362
      %v1101 = vunpack.c.h.b16 %v362
      %v1102 = vunpack.c.l.b16 %v363
      %v1103 = vunpack.c.h.b16 %v363
      %v1104 = vunpack.c.l.b16 %v364
      %v1105 = vunpack.c.l.b16 %v365
      %v1106 = vunpack.c.h.b16 %v365
      %v1107 = vunpack.c.l.b16 %v366
      %v1108 = vunpack.c.h.b16 %v366
      %v1109 = vunpack.c.l.b16 %v367
      %v1110 = vunpack.c.h.b16 %v367
      %v1111 = vunpack.c.l.b16 %v368
      %v1112 = vunpack.c.l.b16 %v369
      %v1113 = vunpack.c.h.b16 %v369
      %v1114 = vunpack.c.l.b16 %v370
      %v1115 = vunpack.c.h.b16 %v370
      %v1116 = vunpack.c.l.b16 %v371
      %v1117 = vunpack.c.h.b16 %v371
      %v1118 = vunpack.c.l.b16 %v372
      %v1119 = vunpack.c.l.b16 %v373
      %v1120 = vunpack.c.h.b16 %v373
      %v1121 = vunpack.c.l.b16 %v374
      %v1122 = vunpack.c.h.b16 %v374
      %v1123 = vunpack.c.l.b16 %v375
      %v1124 = vunpack.c.h.b16 %v375
      %v1125 = vunpack.c.l.b16 %v376
      %v1126 = vunpack.c.l.b16 %v377
      %v1127 = vunpack.c.h.b16 %v377
      %v1128 = vunpack.c.l.b16 %v378
      %v1129 = vunpack.c.h.b16 %v378
      %v1130 = vunpack.c.l.b16 %v379
      %v1131 = vunpack.c.h.b16 %v379
      %v1132 = vunpack.c.l.b16 %v380
      %v1133 = vunpack.c.l.b16 %v381
      %v1134 = vunpack.c.h.b16 %v381
      %v1135 = vunpack.c.l.b16 %v382
      %v1136 = vunpack.c.h.b16 %v382
      %v1137 = vunpack.c.l.b16 %v383
      %v1138 = vunpack.c.h.b16 %v383
      %v1139 = vunpack.c.l.b16 %v384
      %v1140 = vunpack.c.l.b16 %v385
      %v1141 = vunpack.c.h.b16 %v385
      %v1142 = vunpack.c.l.b16 %v386
      %v1143 = vunpack.c.h.b16 %v386
      %v1144 = vunpack.c.l.b16 %v387
      %v1145 = vunpack.c.h.b16 %v387
      %v1146 = vunpack.c.l.b16 %v388
      %v1147 = vunpack.c.l.b16 %v389
      %v1148 = vunpack.c.h.b16 %v389
      %v1149 = vunpack.c.l.b16 %v390
      %v1150 = vunpack.c.h.b16 %v390
      %v1151 = vunpack.c.l.b16 %v391
      %v1152 = vunpack.c.h.b16 %v391
      %v1153 = vunpack.c.l.b16 %v392
      %v1154 = vunpack.c.l.b16 %v393
      %v1155 = vunpack.c.h.b16 %v393
      %v1156 = vunpack.c.l.b16 %v394
      %v1157 = vunpack.c.h.b16 %v394
      %v1158 = vunpack.c.l.b16 %v395
      %v1159 = vunpack.c.h.b16 %v395
      %v1160 = vunpack.c.l.b16 %v396
      %v1161 = vunpack.c.l.b16 %v397
      %v1162 = vunpack.c.h.b16 %v397
      %v1163 = vunpack.c.l.b16 %v398
      %v1164 = vunpack.c.h.b16 %v398
      %v1165 = vunpack.c.l.b16 %v399
      %v1166 = vunpack.c.h.b16 %v399
      %v1167 = vunpack.c.l.b16 %v400
      %v1168 = vunpack.c.l.b16 %v401
      %v1169 = vunpack.c.h.b16 %v401
      %v1170 = vunpack.c.l.b16 %v402
      %v1171 = vunpack.c.h.b16 %v402
      %v1172 = vunpack.c.l.b16 %v403
      %v1173 = vunpack.c.h.b16 %v403
      %v1174 = vunpack.c.l.b16 %v404
      %v1175 = vunpack.c.l.b16 %v405
      %v1176 = vunpack.c.h.b16 %v405
      %v1177 = vunpack.c.l.b16 %v406
      %v1178 = vunpack.c.h.b16 %v406
      %v1179 = vunpack.c.l.b16 %v407
      %v1180 = vunpack.c.h.b16 %v407
      %v1181 = vunpack.c.l.b16 %v408
      %v1182 = vunpack.c.l.b16 %v409
      %v1183 = vunpack.c.h.b16 %v409
      %v1184 = vunpack.c.l.b16 %v410
      %v1185 = vunpack.c.h.b16 %v410
      %v1186 = vunpack.c.l.b16 %v411
      %v1187 = vunpack.c.h.b16 %v411
      %v1188 = vunpack.c.l.b16 %v412
      %v1189 = vunpack.c.l.b16 %v413
      %v1190 = vunpack.c.h.b16 %v413
      %v1191 = vunpack.c.l.b16 %v414
      %v1192 = vunpack.c.h.b16 %v414
      %v1193 = vunpack.c.l.b16 %v415
      %v1194 = vunpack.c.h.b16 %v415
      %v1195 = vunpack.c.l.b16 %v416
      %v1196 = vunpack.c.l.b16 %v417
      %v1197 = vunpack.c.h.b16 %v417
      %v1198 = vunpack.c.l.b16 %v418
      %v1199 = vunpack.c.h.b16 %v418
      %v1200 = vunpack.c.l.b16 %v419
      %v1201 = vunpack.c.h.b16 %v419
      %v1202 = vunpack.c.l.b16 %v420
      %v1203 = vunpack.c.l.b16 %v421
      %v1204 = vunpack.c.h.b16 %v421
      %v1205 = vunpack.c.l.b16 %v422
      %v1206 = vunpack.c.h.b16 %v422
      %v1207 = vunpack.c.l.b16 %v423
      %v1208 = vunpack.c.h.b16 %v423
      %v1209 = vunpack.c.l.b16 %v424
      %v1210 = vunpack.c.l.b16 %v425
      %v1211 = vunpack.c.h.b16 %v425
      %v1212 = vunpack.c.l.b16 %v426
      %v1213 = vunpack.c.h.b16 %v426
      %v1214 = vunpack.c.l.b16 %v427
      %v1215 = vunpack.c.h.b16 %v427
      %v1216 = vunpack.c.l.b16 %v428
      %v1217 = vunpack.c.l.b16 %v429
      %v1218 = vunpack.c.h.b16 %v429
      %v1219 = vunpack.c.l.b16 %v430
      %v1220 = vunpack.c.h.b16 %v430
      %v1221 = vunpack.c.l.b16 %v431
      %v1222 = vunpack.c.h.b16 %v431
      %v1223 = vunpack.c.l.b16 %v432
      %v1224 = vunpack.c.l.b16 %v433
      %v1225 = vunpack.c.h.b16 %v433
      %v1226 = vunpack.c.l.b16 %v434
      %v1227 = vunpack.c.h.b16 %v434
      %v1228 = vunpack.c.l.b16 %v435
      %v1229 = vunpack.c.h.b16 %v435
      %v1230 = vunpack.c.l.b16 %v436
      %v1231 = vunpack.c.l.b16 %v437
      %v1232 = vunpack.c.h.b16 %v437
      %v1233 = vunpack.c.l.b16 %v438
      %v1234 = vunpack.c.h.b16 %v438
      %v1235 = vunpack.c.l.b16 %v439
      %v1236 = vunpack.c.h.b16 %v439
      %v1237 = vunpack.c.l.b16 %v440
      %v1238 = vunpack.c.l.b16 %v441
      %v1239 = vunpack.c.h.b16 %v441
      %v1240 = vunpack.c.l.b16 %v442
      %v1241 = vunpack.c.h.b16 %v442
      %v1242 = vunpack.c.l.b16 %v443
      %v1243 = vunpack.c.h.b16 %v443
      %v1244 = vunpack.c.l.b16 %v444
      %v1245 = vunpack.c.l.b16 %v445
      %v1246 = vunpack.c.h.b16 %v445
      %v1247 = vunpack.c.l.b16 %v446
      %v1248 = vunpack.c.h.b16 %v446
      %v1249 = vunpack.c.l.b16 %v447
      %v1250 = vunpack.c.h.b16 %v447
      %v1251 = vunpack.c.l.b16 %v448
      %v1252 = vunpack.c.l.b16 %v449
      %v1253 = vunpack.c.h.b16 %v449
      %v1254 = vunpack.c.l.b16 %v450
      %v1255 = vunpack.c.h.b16 %v450
      %v1256 = vunpack.c.l.b16 %v451
      %v1257 = vunpack.c.h.b16 %v451
      %v1258 = vunpack.c.l.b16 %v452
      %v1259 = vunpack.c.l.b16 %v453
      %v1260 = vunpack.c.h.b16 %v453
      %v1261 = vunpack.c.l.b16 %v454
      %v1262 = vunpack.c.h.b16 %v454
      %v1263 = vunpack.c.l.b16 %v455
      %v1264 = vunpack.c.h.b16 %v455
      %v1265 = vunpack.c.l.b16 %v456
      %v1266 = vunpack.c.l.b16 %v457
      %v1267 = vunpack.c.h.b16 %v457
      %v1268 = vunpack.c.l.b16 %v458
      %v1269 = vunpack.c.h.b16 %v458
      %v1270 = vunpack.c.l.b16 %v459
      %v1271 = vunpack.c.h.b16 %v459
      %v1272 = vunpack.c.l.b16 %v460
      %v1273 = vpack.c.b16 %v832, %v825
      %v1274 = vpack.c.b16 %v833, %v826
      %v1275 = vpack.c.b16 %v834, %v827
      %v1276 = vpack.c.b16 %v835, %v828
      %v1277 = vpack.c.b16 %v836, %v829
      %v1278 = vpack.c.b16 %v837, %v830
      %v1279 = vpack.c.b16 %v838, %v831
      %v1280 = vpack.c.b16 %v846, %v839
      %v1281 = vpack.c.b16 %v847, %v840
      %v1282 = vpack.c.b16 %v848, %v841
      %v1283 = vpack.c.b16 %v849, %v842
      %v1284 = vpack.c.b16 %v850, %v843
      %v1285 = vpack.c.b16 %v851, %v844
      %v1286 = vpack.c.b16 %v852, %v845
      %v1287 = vpack.c.b16 %v860, %v853
      %v1288 = vpack.c.b16 %v861, %v854
      %v1289 = vpack.c.b16 %v862, %v855
      %v1290 = vpack.c.b16 %v863, %v856
      %v1291 = vpack.c.b16 %v864, %v857
      %v1292 = vpack.c.b16 %v865, %v858
      %v1293 = vpack.c.b16 %v866, %v859
      %v1294 = vpack.c.b16 %v874, %v867
      %v1295 = vpack.c.b16 %v875, %v868
      %v1296 = vpack.c.b16 %v876, %v869
      %v1297 = vpack.c.b16 %v877, %v870
      %v1298 = vpack.c.b16 %v878, %v871
      %v1299 = vpack.c.b16 %v879, %v872
      %v1300 = vpack.c.b16 %v880, %v873
      %v1301 = vpack.c.b16 %v888, %v881
      %v1302 = vpack.c.b16 %v889, %v882
      %v1303 = vpack.c.b16 %v890, %v883
      %v1304 = vpack.c.b16 %v891, %v884
      %v1305 = vpack.c.b16 %v892, %v885
      %v1306 = vpack.c.b16 %v893, %v886
      %v1307 = vpack.c.b16 %v894, %v887
      %v1308 = vpack.c.b16 %v902, %v895
      %v1309 = vpack.c.b16 %v903, %v896
      %v1310 = vpack.c.b16 %v904, %v897
      %v1311 = vpack.c.b16 %v905, %v898
      %v1312 = vpack.c.b16 %v906, %v899
      %v1313 = vpack.c.b16 %v907, %v900
      %v1314 = vpack.c.b16 %v908, %v901
      %v1315 = vpack.c.b16 %v916, %v909
      %v1316 = vpack.c.b16 %v917, %v910
      %v1317 = vpack.c.b16 %v918, %v911
      %v1318 = vpack.c.b16 %v919, %v912
      %v1319 = vpack.c.b16 %v920, %v913
      %v1320 = vpack.c.b16 %v921, %v914
      %v1321 = vpack.c.b16 %v922, %v915
      %v1322 = vpack.c.b16 %v930, %v923
      %v1323 = vpack.c.b16 %v931, %v924
      %v1324 = vpack.c.b16 %v932, %v925
      %v1325 = vpack.c.b16 %v933, %v926
      %v1326 = vpack.c.b16 %v934, %v927
      %v1327 = vpack.c.b16 %v935, %v928
      %v1328 = vpack.c.b16 %v936, %v929
      %v1329 = vpack.c.b16 %v944, %v937
      %v1330 = vpack.c.b16 %v945, %v938
      %v1331 = vpack.c.b16 %v946, %v939
      %v1332 = vpack.c.b16 %v947, %v940
      %v1333 = vpack.c.b16 %v948, %v941
      %v1334 = vpack.c.b16 %v949, %v942
      %v1335 = vpack.c.b16 %v950, %v943
      %v1336 = vpack.c.b16 %v958, %v951
      %v1337 = vpack.c.b16 %v959, %v952
      %v1338 = vpack.c.b16 %v960, %v953
      %v1339 = vpack.c.b16 %v961, %v954
      %v1340 = vpack.c.b16 %v962, %v955
      %v1341 = vpack.c.b16 %v963, %v956
      %v1342 = vpack.c.b16 %v964, %v957
      %v1343 = vpack.c.b16 %v972, %v965
      %v1344 = vpack.c.b16 %v973, %v966
      %v1345 = vpack.c.b16 %v974, %v967
      %v1346 = vpack.c.b16 %v975, %v968
      %v1347 = vpack.c.b16 %v976, %v969
      %v1348 = vpack.c.b16 %v977, %v970
      %v1349 = vpack.c.b16 %v978, %v971
      %v1350 = vpack.c.b16 %v986, %v979
      %v1351 = vpack.c.b16 %v987, %v980
      %v1352 = vpack.c.b16 %v988, %v981
      %v1353 = vpack.c.b16 %v989, %v982
      %v1354 = vpack.c.b16 %v990, %v983
      %v1355 = vpack.c.b16 %v991, %v984
      %v1356 = vpack.c.b16 %v992, %v985
      %v1357 = vpack.c.b16 %v1000, %v993
      %v1358 = vpack.c.b16 %v1001, %v994
      %v1359 = vpack.c.b16 %v1002, %v995
      %v1360 = vpack.c.b16 %v1003, %v996
      %v1361 = vpack.c.b16 %v1004, %v997
      %v1362 = vpack.c.b16 %v1005, %v998
      %v1363 = vpack.c.b16 %v1006, %v999
      %v1364 = vpack.c.b16 %v1014, %v1007
      %v1365 = vpack.c.b16 %v1015, %v1008
      %v1366 = vpack.c.b16 %v1016, %v1009
      %v1367 = vpack.c.b16 %v1017, %v1010
      %v1368 = vpack.c.b16 %v1018, %v1011
      %v1369 = vpack.c.b16 %v1019, %v1012
      %v1370 = vpack.c.b16 %v1020, %v1013
      %v1371 = vpack.c.b16 %v1028, %v1021
      %v1372 = vpack.c.b16 %v1029, %v1022
      %v1373 = vpack.c.b16 %v1030, %v1023
      %v1374 = vpack.c.b16 %v1031, %v1024
      %v1375 = vpack.c.b16 %v1032, %v1025
      %v1376 = vpack.c.b16 %v1033, %v1026
      %v1377 = vpack.c.b16 %v1034, %v1027
      %v1378 = vpack.c.b16 %v1042, %v1035
      %v1379 = vpack.c.b16 %v1043, %v1036
      %v1380 = vpack.c.b16 %v1044, %v1037
      %v1381 = vpack.c.b16 %v1045, %v1038
      %v1382 = vpack.c.b16 %v1046, %v1039
      %v1383 = vpack.c.b16 %v1047, %v1040
      %v1384 = vpack.c.b16 %v1048, %v1041
      %v1385 = vpack.c.b16 %v1056, %v1049
      %v1386 = vpack.c.b16 %v1057, %v1050
      %v1387 = vpack.c.b16 %v1058, %v1051
      %v1388 = vpack.c.b16 %v1059, %v1052
      %v1389 = vpack.c.b16 %v1060, %v1053
      %v1390 = vpack.c.b16 %v1061, %v1054
      %v1391 = vpack.c.b16 %v1062, %v1055
      %v1392 = vpack.c.b16 %v1070, %v1063
      %v1393 = vpack.c.b16 %v1071, %v1064
      %v1394 = vpack.c.b16 %v1072, %v1065
      %v1395 = vpack.c.b16 %v1073, %v1066
      %v1396 = vpack.c.b16 %v1074, %v1067
      %v1397 = vpack.c.b16 %v1075, %v1068
      %v1398 = vpack.c.b16 %v1076, %v1069
      %v1399 = vpack.c.b16 %v1084, %v1077
      %v1400 = vpack.c.b16 %v1085, %v1078
      %v1401 = vpack.c.b16 %v1086, %v1079
      %v1402 = vpack.c.b16 %v1087, %v1080
      %v1403 = vpack.c.b16 %v1088, %v1081
      %v1404 = vpack.c.b16 %v1089, %v1082
      %v1405 = vpack.c.b16 %v1090, %v1083
      %v1406 = vpack.c.b16 %v1098, %v1091
      %v1407 = vpack.c.b16 %v1099, %v1092
      %v1408 = vpack.c.b16 %v1100, %v1093
      %v1409 = vpack.c.b16 %v1101, %v1094
      %v1410 = vpack.c.b16 %v1102, %v1095
      %v1411 = vpack.c.b16 %v1103, %v1096
      %v1412 = vpack.c.b16 %v1104, %v1097
      %v1413 = vpack.c.b16 %v1112, %v1105
      %v1414 = vpack.c.b16 %v1113, %v1106
      %v1415 = vpack.c.b16 %v1114, %v1107
      %v1416 = vpack.c.b16 %v1115, %v1108
      %v1417 = vpack.c.b16 %v1116, %v1109
      %v1418 = vpack.c.b16 %v1117, %v1110
      %v1419 = vpack.c.b16 %v1118, %v1111
      %v1420 = vpack.c.b16 %v1126, %v1119
      %v1421 = vpack.c.b16 %v1127, %v1120
      %v1422 = vpack.c.b16 %v1128, %v1121
      %v1423 = vpack.c.b16 %v1129, %v1122
      %v1424 = vpack.c.b16 %v1130, %v1123
      %v1425 = vpack.c.b16 %v1131, %v1124
      %v1426 = vpack.c.b16 %v1132, %v1125
      %v1427 = vpack.c.b16 %v1140, %v1133
      %v1428 = vpack.c.b16 %v1141, %v1134
      %v1429 = vpack.c.b16 %v1142, %v1135
      %v1430 = vpack.c.b16 %v1143, %v1136
      %v1431 = vpack.c.b16 %v1144, %v1137
      %v1432 = vpack.c.b16 %v1145, %v1138
      %v1433 = vpack.c.b16 %v1146, %v1139
      %v1434 = vpack.c.b16 %v1154, %v1147
      %v1435 = vpack.c.b16 %v1155, %v1148
      %v1436 = vpack.c.b16 %v1156, %v1149
      %v1437 = vpack.c.b16 %v1157, %v1150
      %v1438 = vpack.c.b16 %v1158, %v1151
      %v1439 = vpack.c.b16 %v1159, %v1152
      %v1440 = vpack.c.b16 %v1160, %v1153
      %v1441 = vpack.c.b16 %v1168, %v1161
      %v1442 = vpack.c.b16 %v1169, %v1162
      %v1443 = vpack.c.b16 %v1170, %v1163
      %v1444 = vpack.c.b16 %v1171, %v1164
      %v1445 = vpack.c.b16 %v1172, %v1165
      %v1446 = vpack.c.b16 %v1173, %v1166
      %v1447 = vpack.c.b16 %v1174, %v1167
      %v1448 = vpack.c.b16 %v1182, %v1175
      %v1449 = vpack.c.b16 %v1183, %v1176
      %v1450 = vpack.c.b16 %v1184, %v1177
      %v1451 = vpack.c.b16 %v1185, %v1178
      %v1452 = vpack.c.b16 %v1186, %v1179
      %v1453 = vpack.c.b16 %v1187, %v1180
      %v1454 = vpack.c.b16 %v1188, %v1181
      %v1455 = vpack.c.b16 %v1196, %v1189
      %v1456 = vpack.c.b16 %v1197, %v1190
      %v1457 = vpack.c.b16 %v1198, %v1191
      %v1458 = vpack.c.b16 %v1199, %v1192
      %v1459 = vpack.c.b16 %v1200, %v1193
      %v1460 = vpack.c.b16 %v1201, %v1194
      %v1461 = vpack.c.b16 %v1202, %v1195
      %v1462 = vpack.c.b16 %v1210, %v1203
      %v1463 = vpack.c.b16 %v1211, %v1204
      %v1464 = vpack.c.b16 %v1212, %v1205
      %v1465 = vpack.c.b16 %v1213, %v1206
      %v1466 = vpack.c.b16 %v1214, %v1207
      %v1467 = vpack.c.b16 %v1215, %v1208
      %v1468 = vpack.c.b16 %v1216, %v1209
      %v1469 = vpack.c.b16 %v1224, %v1217
      %v1470 = vpack.c.b16 %v1225, %v1218
      %v1471 = vpack.c.b16 %v1226, %v1219
      %v1472 = vpack.c.b16 %v1227, %v1220
      %v1473 = vpack.c.b16 %v1228, %v1221
      %v1474 = vpack.c.b16 %v1229, %v1222
      %v1475 = vpack.c.b16 %v1230, %v1223
      %v1476 = vpack.c.b16 %v1238, %v1231
      %v1477 = vpack.c.b16 %v1239, %v1232
      %v1478 = vpack.c.b16 %v1240, %v1233
      %v1479 = vpack.c.b16 %v1241, %v1234
      %v1480 = vpack.c.b16 %v1242, %v1235
      %v1481 = vpack.c.b16 %v1243, %v1236
      %v1482 = vpack.c.b16 %v1244, %v1237
      %v1483 = vpack.c.b16 %v1252, %v1245
      %v1484 = vpack.c.b16 %v1253, %v1246
      %v1485 = vpack.c.b16 %v1254, %v1247
      %v1486 = vpack.c.b16 %v1255, %v1248
      %v1487 = vpack.c.b16 %v1256, %v1249
      %v1488 = vpack.c.b16 %v1257, %v1250
      %v1489 = vpack.c.b16 %v1258, %v1251
      %v1490 = vpack.c.b16 %v1266, %v1259
      %v1491 = vpack.c.b16 %v1267, %v1260
      %v1492 = vpack.c.b16 %v1268, %v1261
      %v1493 = vpack.c.b16 %v1269, %v1262
      %v1494 = vpack.c.b16 %v1270, %v1263
      %v1495 = vpack.c.b16 %v1271, %v1264
      %v1496 = vpack.c.b16 %v1272, %v1265
      %v1797 = vunpack.c.l.b16 %v461
      %v1798 = vunpack.c.l.b16 %v462
      %v1799 = vunpack.c.l.b16 %v463
      %v1800 = vunpack.c.l.b16 %v464
      %v1801 = vunpack.c.l.b16 %v465
      %v1802 = vunpack.c.l.b16 %v466
      %v1803 = vunpack.c.l.b16 %v467
      %v1804 = vunpack.c.l.b16 %v468
      %v1805 = vunpack.c.l.b16 %v469
      %v1806 = vunpack.c.l.b16 %v470
      %v1807 = vunpack.c.l.b16 %v471
      %v1808 = vunpack.c.l.b16 %v472
      %v1809 = vunpack.c.l.b16 %v473
      %v1810 = vunpack.c.l.b16 %v474
      %v1811 = vunpack.c.l.b16 %v475
      %v1812 = vunpack.c.l.b16 %v476
      %v1813 = vunpack.c.l.b16 %v477
      %v1814 = vunpack.c.l.b16 %v478
      %v1815 = vunpack.c.l.b16 %v479
      %v1816 = vunpack.c.l.b16 %v480
      %v1817 = vunpack.c.l.b16 %v481
      %v1818 = vunpack.c.l.b16 %v482
      %v1819 = vunpack.c.l.b16 %v483
      %v1820 = vunpack.c.l.b16 %v484
      %v1821 = vunpack.c.l.b16 %v485
      %v1822 = vunpack.c.l.b16 %v486
      %v1823 = vunpack.c.l.b16 %v487
      %v1824 = vunpack.c.l.b16 %v488
      %v1825 = vunpack.c.l.b16 %v489
      %v1826 = vunpack.c.l.b16 %v490
      %v1827 = vunpack.c.l.b16 %v491
      %v1828 = vunpack.c.l.b16 %v492
      %v1829 = vunpack.c.l.b16 %v493
      %v1830 = vunpack.c.l.b16 %v494
      %v1831 = vunpack.c.l.b16 %v495
      %v1832 = vunpack.c.l.b16 %v496
      %v1833 = vunpack.c.l.b16 %v497
      %v1834 = vunpack.c.l.b16 %v498
      %v1835 = vunpack.c.l.b16 %v499
      %v1836 = vunpack.c.l.b16 %v500
      %v1837 = vunpack.c.l.b16 %v501
      %v1838 = vunpack.c.l.b16 %v502
      %v1839 = vunpack.c.l.b16 %v503
      %v1840 = vunpack.c.l.b16 %v504
      %v1841 = vunpack.c.l.b16 %v505
      %v1842 = vunpack.c.l.b16 %v506
      %v1843 = vunpack.c.l.b16 %v507
      %v1844 = vunpack.c.l.b16 %v508
      %v1845 = vunpack.c.l.b16 %v509
      %v1846 = vunpack.c.l.b16 %v510
      %v1847 = vunpack.c.l.b16 %v511
      %v1848 = vunpack.c.l.b16 %v512
      %v1849 = vunpack.c.l.b16 %v513
      %v1850 = vunpack.c.l.b16 %v514
      %v1851 = vunpack.c.l.b16 %v515
      %v1852 = vunpack.c.l.b16 %v516
      %v1853 = vunpack.c.l.b16 %v517
      %v1854 = vunpack.c.l.b16 %v518
      %v1855 = vunpack.c.l.b16 %v519
      %v1856 = vunpack.c.l.b16 %v520
      %v1857 = vunpack.c.l.b16 %v521
      %v1858 = vunpack.c.l.b16 %v522
      %v1859 = vunpack.c.l.b16 %v523
      %v1860 = vunpack.c.l.b16 %v524
      %v1861 = vunpack.c.l.b16 %v525
      %v1862 = vunpack.c.l.b16 %v526
      %v1863 = vunpack.c.l.b16 %v527
      %v1864 = vunpack.c.l.b16 %v528
      %v1865 = vunpack.c.l.b16 %v529
      %v1866 = vunpack.c.l.b16 %v530
      %v1867 = vunpack.c.l.b16 %v531
      %v1868 = vunpack.c.l.b16 %v532
      %v1869 = vunpack.c.l.b16 %v533
      %v1870 = vunpack.c.l.b16 %v534
      %v1871 = vunpack.c.l.b16 %v535
      %v1872 = vunpack.c.l.b16 %v536
      %v1873 = vunpack.c.l.b16 %v537
      %v1874 = vunpack.c.l.b16 %v538
      %v1875 = vunpack.c.l.b16 %v539
      %v1876 = vunpack.c.l.b16 %v540
      %v1877 = vunpack.c.l.b16 %v541
      %v1878 = vunpack.c.l.b16 %v542
      %v1879 = vunpack.c.l.b16 %v543
      %v1880 = vunpack.c.l.b16 %v544
      %v1881 = vunpack.c.l.b16 %v545
      %v1882 = vunpack.c.l.b16 %v546
      %v1883 = vunpack.c.l.b16 %v547
      %v1884 = vunpack.c.l.b16 %v548
      %v1885 = vunpack.c.l.b16 %v549
      %v1886 = vunpack.c.l.b16 %v550
      %v1887 = vunpack.c.l.b16 %v551
      %v1888 = vunpack.c.l.b16 %v552
      %v1889 = vunpack.c.l.b16 %v553
      %v1890 = vunpack.c.l.b16 %v554
      %v1891 = vunpack.c.l.b16 %v555
      %v1892 = vunpack.c.l.b16 %v556
      %v1893 = vunpack.c.l.b16 %v557
      %v1894 = vunpack.c.l.b16 %v558
      %v1895 = vunpack.c.l.b16 %v559
      %v1896 = vunpack.c.l.b16 %v560
      %v1897 = vunpack.c.l.b16 %v561
      %v1898 = vunpack.c.l.b16 %v562
      %v1899 = vunpack.c.l.b16 %v563
      %v1900 = vunpack.c.l.b16 %v564
      %v1901 = vunpack.c.l.b16 %v565
      %v1902 = vunpack.c.l.b16 %v566
      %v1903 = vunpack.c.l.b16 %v567
      %v1904 = vunpack.c.l.b16 %v568
      %v1905 = vpack.c.b16 %v1798, %v1797
      %v1906 = vpack.c.b16 %v1800, %v1799
      %v1907 = vpack.c.b16 %v1802, %v1801
      %v1908 = vpack.c.b16 %v1804, %v1803
      %v1909 = vpack.c.b16 %v1806, %v1805
      %v1910 = vpack.c.b16 %v1808, %v1807
      %v1911 = vpack.c.b16 %v1810, %v1809
      %v1912 = vpack.c.b16 %v1812, %v1811
      %v1913 = vpack.c.b16 %v1814, %v1813
      %v1914 = vpack.c.b16 %v1816, %v1815
      %v1915 = vpack.c.b16 %v1818, %v1817
      %v1916 = vpack.c.b16 %v1820, %v1819
      %v1917 = vpack.c.b16 %v1822, %v1821
      %v1918 = vpack.c.b16 %v1824, %v1823
      %v1919 = vpack.c.b16 %v1826, %v1825
      %v1920 = vpack.c.b16 %v1828, %v1827
      %v1921 = vpack.c.b16 %v1830, %v1829
      %v1922 = vpack.c.b16 %v1832, %v1831
      %v1923 = vpack.c.b16 %v1834, %v1833
      %v1924 = vpack.c.b16 %v1836, %v1835
      %v1925 = vpack.c.b16 %v1838, %v1837
      %v1926 = vpack.c.b16 %v1840, %v1839
      %v1927 = vpack.c.b16 %v1842, %v1841
      %v1928 = vpack.c.b16 %v1844, %v1843
      %v1929 = vpack.c.b16 %v1846, %v1845
      %v1930 = vpack.c.b16 %v1848, %v1847
      %v1931 = vpack.c.b16 %v1850, %v1849
      %v1932 = vpack.c.b16 %v1852, %v1851
      %v1933 = vpack.c.b16 %v1854, %v1853
      %v1934 = vpack.c.b16 %v1856, %v1855
      %v1935 = vpack.c.b16 %v1858, %v1857
      %v1936 = vpack.c.b16 %v1860, %v1859
      %v1937 = vpack.c.b16 %v1862, %v1861
      %v1938 = vpack.c.b16 %v1864, %v1863
      %v1939 = vpack.c.b16 %v1866, %v1865
      %v1940 = vpack.c.b16 %v1868, %v1867
      %v1941 = vpack.c.b16 %v1870, %v1869
      %v1942 = vpack.c.b16 %v1872, %v1871
      %v1943 = vpack.c.b16 %v1874, %v1873
      %v1944 = vpack.c.b16 %v1876, %v1875
      %v1945 = vpack.c.b16 %v1878, %v1877
      %v1946 = vpack.c.b16 %v1880, %v1879
      %v1947 = vpack.c.b16 %v1882, %v1881
      %v1948 = vpack.c.b16 %v1884, %v1883
      %v1949 = vpack.c.b16 %v1886, %v1885
      %v1950 = vpack.c.b16 %v1888, %v1887
      %v1951 = vpack.c.b16 %v1890, %v1889
      %v1952 = vpack.c.b16 %v1892, %v1891
      %v1953 = vpack.c.b16 %v1894, %v1893
      %v1954 = vpack.c.b16 %v1896, %v1895
      %v1955 = vpack.c.b16 %v1898, %v1897
      %v1956 = vpack.c.b16 %v1900, %v1899
      %v1957 = vpack.c.b16 %v1902, %v1901
      %v1958 = vpack.c.b16 %v1904, %v1903
      %vm2013 = vcmask 785408
      %v2015 = vsel %vm2013, %v1279, 0
      %v2018 = vsel %vm2013, %v1286, 0
      %v2021 = vsel %vm2013, %v1293, 0
      %v2024 = vsel %vm2013, %v1300, 0
      %v2027 = vsel %vm2013, %v1307, 0
      %v2030 = vsel %vm2013, %v1314, 0
      %v2033 = vsel %vm2013, %v1321, 0
      %v2036 = vsel %vm2013, %v1328, 0
      %v2039 = vsel %vm2013, %v1335, 0
      %v2042 = vsel %vm2013, %v1342, 0
      %v2045 = vsel %vm2013, %v1349, 0
      %v2048 = vsel %vm2013, %v1356, 0
      %v2051 = vsel %vm2013, %v1363, 0
      %v2054 = vsel %vm2013, %v1370, 0
      %v2057 = vsel %vm2013, %v1377, 0
      %v2060 = vsel %vm2013, %v1384, 0
      %v2063 = vsel %vm2013, %v1391, 0
      %v2066 = vsel %vm2013, %v1398, 0
      %v2069 = vsel %vm2013, %v1405, 0
      %v2072 = vsel %vm2013, %v1412, 0
      %v2075 = vsel %vm2013, %v1419, 0
      %v2078 = vsel %vm2013, %v1426, 0
      %v2081 = vsel %vm2013, %v1433, 0
      %v2084 = vsel %vm2013, %v1440, 0
      %v2087 = vsel %vm2013, %v1447, 0
      %v2090 = vsel %vm2013, %v1454, 0
      %v2093 = vsel %vm2013, %v1461, 0
      %v2096 = vsel %vm2013, %v1468, 0
      %v2099 = vsel %vm2013, %v1475, 0
      %v2102 = vsel %vm2013, %v1482, 0
      %v2105 = vsel %vm2013, %v1489, 0
      %v2108 = vsel %vm2013, %v1496, 0
      %2110 = vmatpush.bf16.msra.mxu0 %v1912
      %2111 = vmatpush.bf16.msra.mxu0 %v1911
      %2112 = vmatpush.bf16.msra.mxu0 %v1910
      %2113 = vmatpush.bf16.msra.mxu0 %v1909
      %2114 = vmatpush.bf16.msra.mxu0 %v1908
      %2115 = vmatpush.bf16.msra.mxu0 %v1907
      %2116 = vmatpush.bf16.msra.mxu0 %v1906
      %2117 = vmatpush.bf16.msra.mxu0 %v1905
      %2118 = vmatmul.bf16.gmra.mxu0 %v1273
      %v2119 = vpop.f32.mrf.mxu0
      %v2120 = vadd.f32 0.0, %v2119
      %v2121 = vpop.f32.mrf.mxu0
      %v2122 = vadd.f32 0.0, %v2121
      %2123 = vmatmul.bf16.gmra.mxu0 %v1280
      %v2124 = vpop.f32.mrf.mxu0
      %v2125 = vadd.f32 0.0, %v2124
      %v2126 = vpop.f32.mrf.mxu0
      %v2127 = vadd.f32 0.0, %v2126
      %2128 = vmatmul.bf16.gmra.mxu0 %v1287
      %v2129 = vpop.f32.mrf.mxu0
      %v2130 = vadd.f32 0.0, %v2129
      %v2131 = vpop.f32.mrf.mxu0
      %v2132 = vadd.f32 0.0, %v2131
      %2133 = vmatmul.bf16.gmra.mxu0 %v1294
      %v2134 = vpop.f32.mrf.mxu0
      %v2135 = vadd.f32 0.0, %v2134
      %v2136 = vpop.f32.mrf.mxu0
      %v2137 = vadd.f32 0.0, %v2136
      %2138 = vmatmul.bf16.gmra.mxu0 %v1301
      %v2139 = vpop.f32.mrf.mxu0
      %v2140 = vadd.f32 0.0, %v2139
      %v2141 = vpop.f32.mrf.mxu0
      %v2142 = vadd.f32 0.0, %v2141
      %2143 = vmatmul.bf16.gmra.mxu0 %v1308
      %v2144 = vpop.f32.mrf.mxu0
      %v2145 = vadd.f32 0.0, %v2144
      %v2146 = vpop.f32.mrf.mxu0
      %v2147 = vadd.f32 0.0, %v2146
      %2148 = vmatmul.bf16.gmra.mxu0 %v1315
      %v2149 = vpop.f32.mrf.mxu0
      %v2150 = vadd.f32 0.0, %v2149
      %v2151 = vpop.f32.mrf.mxu0
      %v2152 = vadd.f32 0.0, %v2151
      %2153 = vmatmul.bf16.gmra.mxu0 %v1322
      %v2154 = vpop.f32.mrf.mxu0
      %v2155 = vadd.f32 0.0, %v2154
      %v2156 = vpop.f32.mrf.mxu0
      %v2157 = vadd.f32 0.0, %v2156
      %2158 = vmatmul.bf16.gmra.mxu0 %v1329
      %v2159 = vpop.f32.mrf.mxu0
      %v2160 = vadd.f32 0.0, %v2159
      %v2161 = vpop.f32.mrf.mxu0
      %v2162 = vadd.f32 0.0, %v2161
      %2163 = vmatmul.bf16.gmra.mxu0 %v1336
      %v2164 = vpop.f32.mrf.mxu0
      %v2165 = vadd.f32 0.0, %v2164
      %v2166 = vpop.f32.mrf.mxu0
      %v2167 = vadd.f32 0.0, %v2166
      %2168 = vmatmul.bf16.gmra.mxu0 %v1343
      %v2169 = vpop.f32.mrf.mxu0
      %v2170 = vadd.f32 0.0, %v2169
      %v2171 = vpop.f32.mrf.mxu0
      %v2172 = vadd.f32 0.0, %v2171
      %2173 = vmatmul.bf16.gmra.mxu0 %v1350
      %v2174 = vpop.f32.mrf.mxu0
      %v2175 = vadd.f32 0.0, %v2174
      %v2176 = vpop.f32.mrf.mxu0
      %v2177 = vadd.f32 0.0, %v2176
      %2178 = vmatmul.bf16.gmra.mxu0 %v1357
      %v2179 = vpop.f32.mrf.mxu0
      %v2180 = vadd.f32 0.0, %v2179
      %v2181 = vpop.f32.mrf.mxu0
      %v2182 = vadd.f32 0.0, %v2181
      %2183 = vmatmul.bf16.gmra.mxu0 %v1364
      %v2184 = vpop.f32.mrf.mxu0
      %v2185 = vadd.f32 0.0, %v2184
      %v2186 = vpop.f32.mrf.mxu0
      %v2187 = vadd.f32 0.0, %v2186
      %2188 = vmatmul.bf16.gmra.mxu0 %v1371
      %v2189 = vpop.f32.mrf.mxu0
      %v2190 = vadd.f32 0.0, %v2189
      %v2191 = vpop.f32.mrf.mxu0
      %v2192 = vadd.f32 0.0, %v2191
      %2193 = vmatmul.bf16.gmra.mxu0 %v1378
      %v2194 = vpop.f32.mrf.mxu0
      %v2195 = vadd.f32 0.0, %v2194
      %v2196 = vpop.f32.mrf.mxu0
      %v2197 = vadd.f32 0.0, %v2196
      %2198 = vmatmul.bf16.gmra.mxu0 %v1385
      %v2199 = vpop.f32.mrf.mxu0
      %v2200 = vadd.f32 0.0, %v2199
      %v2201 = vpop.f32.mrf.mxu0
      %v2202 = vadd.f32 0.0, %v2201
      %2203 = vmatmul.bf16.gmra.mxu0 %v1392
      %v2204 = vpop.f32.mrf.mxu0
      %v2205 = vadd.f32 0.0, %v2204
      %v2206 = vpop.f32.mrf.mxu0
      %v2207 = vadd.f32 0.0, %v2206
      %2208 = vmatmul.bf16.gmra.mxu0 %v1399
      %v2209 = vpop.f32.mrf.mxu0
      %v2210 = vadd.f32 0.0, %v2209
      %v2211 = vpop.f32.mrf.mxu0
      %v2212 = vadd.f32 0.0, %v2211
      %2213 = vmatmul.bf16.gmra.mxu0 %v1406
      %v2214 = vpop.f32.mrf.mxu0
      %v2215 = vadd.f32 0.0, %v2214
      %v2216 = vpop.f32.mrf.mxu0
      %v2217 = vadd.f32 0.0, %v2216
      %2218 = vmatmul.bf16.gmra.mxu0 %v1413
      %v2219 = vpop.f32.mrf.mxu0
      %v2220 = vadd.f32 0.0, %v2219
      %v2221 = vpop.f32.mrf.mxu0
      %v2222 = vadd.f32 0.0, %v2221
      %2223 = vmatmul.bf16.gmra.mxu0 %v1420
      %v2224 = vpop.f32.mrf.mxu0
      %v2225 = vadd.f32 0.0, %v2224
      %v2226 = vpop.f32.mrf.mxu0
      %v2227 = vadd.f32 0.0, %v2226
      %2228 = vmatmul.bf16.gmra.mxu0 %v1427
      %v2229 = vpop.f32.mrf.mxu0
      %v2230 = vadd.f32 0.0, %v2229
      %v2231 = vpop.f32.mrf.mxu0
      %v2232 = vadd.f32 0.0, %v2231
      %2233 = vmatmul.bf16.gmra.mxu0 %v1434
      %v2234 = vpop.f32.mrf.mxu0
      %v2235 = vadd.f32 0.0, %v2234
      %v2236 = vpop.f32.mrf.mxu0
      %v2237 = vadd.f32 0.0, %v2236
      %2238 = vmatmul.bf16.gmra.mxu0 %v1441
      %v2239 = vpop.f32.mrf.mxu0
      %v2240 = vadd.f32 0.0, %v2239
      %v2241 = vpop.f32.mrf.mxu0
      %v2242 = vadd.f32 0.0, %v2241
      %2243 = vmatmul.bf16.gmra.mxu0 %v1448
      %v2244 = vpop.f32.mrf.mxu0
      %v2245 = vadd.f32 0.0, %v2244
      %v2246 = vpop.f32.mrf.mxu0
      %v2247 = vadd.f32 0.0, %v2246
      %2248 = vmatmul.bf16.gmra.mxu0 %v1455
      %v2249 = vpop.f32.mrf.mxu0
      %v2250 = vadd.f32 0.0, %v2249
      %v2251 = vpop.f32.mrf.mxu0
      %v2252 = vadd.f32 0.0, %v2251
      %2253 = vmatmul.bf16.gmra.mxu0 %v1462
      %v2254 = vpop.f32.mrf.mxu0
      %v2255 = vadd.f32 0.0, %v2254
      %v2256 = vpop.f32.mrf.mxu0
      %v2257 = vadd.f32 0.0, %v2256
      %2258 = vmatmul.bf16.gmra.mxu0 %v1469
      %v2259 = vpop.f32.mrf.mxu0
      %v2260 = vadd.f32 0.0, %v2259
      %v2261 = vpop.f32.mrf.mxu0
      %v2262 = vadd.f32 0.0, %v2261
      %2263 = vmatmul.bf16.gmra.mxu0 %v1476
      %v2264 = vpop.f32.mrf.mxu0
      %v2265 = vadd.f32 0.0, %v2264
      %v2266 = vpop.f32.mrf.mxu0
      %v2267 = vadd.f32 0.0, %v2266
      %2268 = vmatmul.bf16.gmra.mxu0 %v1483
      %v2269 = vpop.f32.mrf.mxu0
      %v2270 = vadd.f32 0.0, %v2269
      %v2271 = vpop.f32.mrf.mxu0
      %v2272 = vadd.f32 0.0, %v2271
      %2273 = vmatmul.bf16.gmra.mxu0 %v1490
      %v2274 = vpop.f32.mrf.mxu0
      %v2275 = vadd.f32 0.0, %v2274
      %v2276 = vpop.f32.mrf.mxu0
      %v2277 = vadd.f32 0.0, %v2276
      %2278 = vdwg.mxu0
      %2279 = vmatpush.bf16.msra.mxu0 %v1920
      %2280 = vmatpush.bf16.msra.mxu0 %v1919
      %2281 = vmatpush.bf16.msra.mxu0 %v1918
      %2282 = vmatpush.bf16.msra.mxu0 %v1917
      %2283 = vmatpush.bf16.msra.mxu0 %v1916
      %2284 = vmatpush.bf16.msra.mxu0 %v1915
      %2285 = vmatpush.bf16.msra.mxu0 %v1914
      %2286 = vmatpush.bf16.msra.mxu0 %v1913
      %2287 = vmatmul.bf16.gmra.mxu0 %v1274
      %v2288 = vpop.f32.mrf.mxu0
      %v2289 = vadd.f32 %v2120, %v2288
      %v2290 = vpop.f32.mrf.mxu0
      %v2291 = vadd.f32 %v2122, %v2290
      %2292 = vmatmul.bf16.gmra.mxu0 %v1281
      %v2293 = vpop.f32.mrf.mxu0
      %v2294 = vadd.f32 %v2125, %v2293
      %v2295 = vpop.f32.mrf.mxu0
      %v2296 = vadd.f32 %v2127, %v2295
      %2297 = vmatmul.bf16.gmra.mxu0 %v1288
      %v2298 = vpop.f32.mrf.mxu0
      %v2299 = vadd.f32 %v2130, %v2298
      %v2300 = vpop.f32.mrf.mxu0
      %v2301 = vadd.f32 %v2132, %v2300
      %2302 = vmatmul.bf16.gmra.mxu0 %v1295
      %v2303 = vpop.f32.mrf.mxu0
      %v2304 = vadd.f32 %v2135, %v2303
      %v2305 = vpop.f32.mrf.mxu0
      %v2306 = vadd.f32 %v2137, %v2305
      %2307 = vmatmul.bf16.gmra.mxu0 %v1302
      %v2308 = vpop.f32.mrf.mxu0
      %v2309 = vadd.f32 %v2140, %v2308
      %v2310 = vpop.f32.mrf.mxu0
      %v2311 = vadd.f32 %v2142, %v2310
      %2312 = vmatmul.bf16.gmra.mxu0 %v1309
      %v2313 = vpop.f32.mrf.mxu0
      %v2314 = vadd.f32 %v2145, %v2313
      %v2315 = vpop.f32.mrf.mxu0
      %v2316 = vadd.f32 %v2147, %v2315
      %2317 = vmatmul.bf16.gmra.mxu0 %v1316
      %v2318 = vpop.f32.mrf.mxu0
      %v2319 = vadd.f32 %v2150, %v2318
      %v2320 = vpop.f32.mrf.mxu0
      %v2321 = vadd.f32 %v2152, %v2320
      %2322 = vmatmul.bf16.gmra.mxu0 %v1323
      %v2323 = vpop.f32.mrf.mxu0
      %v2324 = vadd.f32 %v2155, %v2323
      %v2325 = vpop.f32.mrf.mxu0
      %v2326 = vadd.f32 %v2157, %v2325
      %2327 = vmatmul.bf16.gmra.mxu0 %v1330
      %v2328 = vpop.f32.mrf.mxu0
      %v2329 = vadd.f32 %v2160, %v2328
      %v2330 = vpop.f32.mrf.mxu0
      %v2331 = vadd.f32 %v2162, %v2330
      %2332 = vmatmul.bf16.gmra.mxu0 %v1337
      %v2333 = vpop.f32.mrf.mxu0
      %v2334 = vadd.f32 %v2165, %v2333
      %v2335 = vpop.f32.mrf.mxu0
      %v2336 = vadd.f32 %v2167, %v2335
      %2337 = vmatmul.bf16.gmra.mxu0 %v1344
      %v2338 = vpop.f32.mrf.mxu0
      %v2339 = vadd.f32 %v2170, %v2338
      %v2340 = vpop.f32.mrf.mxu0
      %v2341 = vadd.f32 %v2172, %v2340
      %2342 = vmatmul.bf16.gmra.mxu0 %v1351
      %v2343 = vpop.f32.mrf.mxu0
      %v2344 = vadd.f32 %v2175, %v2343
      %v2345 = vpop.f32.mrf.mxu0
      %v2346 = vadd.f32 %v2177, %v2345
      %2347 = vmatmul.bf16.gmra.mxu0 %v1358
      %v2348 = vpop.f32.mrf.mxu0
      %v2349 = vadd.f32 %v2180, %v2348
      %v2350 = vpop.f32.mrf.mxu0
      %v2351 = vadd.f32 %v2182, %v2350
      %2352 = vmatmul.bf16.gmra.mxu0 %v1365
      %v2353 = vpop.f32.mrf.mxu0
      %v2354 = vadd.f32 %v2185, %v2353
      %v2355 = vpop.f32.mrf.mxu0
      %v2356 = vadd.f32 %v2187, %v2355
      %2357 = vmatmul.bf16.gmra.mxu0 %v1372
      %v2358 = vpop.f32.mrf.mxu0
      %v2359 = vadd.f32 %v2190, %v2358
      %v2360 = vpop.f32.mrf.mxu0
      %v2361 = vadd.f32 %v2192, %v2360
      %2362 = vmatmul.bf16.gmra.mxu0 %v1379
      %v2363 = vpop.f32.mrf.mxu0
      %v2364 = vadd.f32 %v2195, %v2363
      %v2365 = vpop.f32.mrf.mxu0
      %v2366 = vadd.f32 %v2197, %v2365
      %2367 = vmatmul.bf16.gmra.mxu0 %v1386
      %v2368 = vpop.f32.mrf.mxu0
      %v2369 = vadd.f32 %v2200, %v2368
      %v2370 = vpop.f32.mrf.mxu0
      %v2371 = vadd.f32 %v2202, %v2370
      %2372 = vmatmul.bf16.gmra.mxu0 %v1393
      %v2373 = vpop.f32.mrf.mxu0
      %v2374 = vadd.f32 %v2205, %v2373
      %v2375 = vpop.f32.mrf.mxu0
      %v2376 = vadd.f32 %v2207, %v2375
      %2377 = vmatmul.bf16.gmra.mxu0 %v1400
      %v2378 = vpop.f32.mrf.mxu0
      %v2379 = vadd.f32 %v2210, %v2378
      %v2380 = vpop.f32.mrf.mxu0
      %v2381 = vadd.f32 %v2212, %v2380
      %2382 = vmatmul.bf16.gmra.mxu0 %v1407
      %v2383 = vpop.f32.mrf.mxu0
      %v2384 = vadd.f32 %v2215, %v2383
      %v2385 = vpop.f32.mrf.mxu0
      %v2386 = vadd.f32 %v2217, %v2385
      %2387 = vmatmul.bf16.gmra.mxu0 %v1414
      %v2388 = vpop.f32.mrf.mxu0
      %v2389 = vadd.f32 %v2220, %v2388
      %v2390 = vpop.f32.mrf.mxu0
      %v2391 = vadd.f32 %v2222, %v2390
      %2392 = vmatmul.bf16.gmra.mxu0 %v1421
      %v2393 = vpop.f32.mrf.mxu0
      %v2394 = vadd.f32 %v2225, %v2393
      %v2395 = vpop.f32.mrf.mxu0
      %v2396 = vadd.f32 %v2227, %v2395
      %2397 = vmatmul.bf16.gmra.mxu0 %v1428
      %v2398 = vpop.f32.mrf.mxu0
      %v2399 = vadd.f32 %v2230, %v2398
      %v2400 = vpop.f32.mrf.mxu0
      %v2401 = vadd.f32 %v2232, %v2400
      %2402 = vmatmul.bf16.gmra.mxu0 %v1435
      %v2403 = vpop.f32.mrf.mxu0
      %v2404 = vadd.f32 %v2235, %v2403
      %v2405 = vpop.f32.mrf.mxu0
      %v2406 = vadd.f32 %v2237, %v2405
      %2407 = vmatmul.bf16.gmra.mxu0 %v1442
      %v2408 = vpop.f32.mrf.mxu0
      %v2409 = vadd.f32 %v2240, %v2408
      %v2410 = vpop.f32.mrf.mxu0
      %v2411 = vadd.f32 %v2242, %v2410
      %2412 = vmatmul.bf16.gmra.mxu0 %v1449
      %v2413 = vpop.f32.mrf.mxu0
      %v2414 = vadd.f32 %v2245, %v2413
      %v2415 = vpop.f32.mrf.mxu0
      %v2416 = vadd.f32 %v2247, %v2415
      %2417 = vmatmul.bf16.gmra.mxu0 %v1456
      %v2418 = vpop.f32.mrf.mxu0
      %v2419 = vadd.f32 %v2250, %v2418
      %v2420 = vpop.f32.mrf.mxu0
      %v2421 = vadd.f32 %v2252, %v2420
      %2422 = vmatmul.bf16.gmra.mxu0 %v1463
      %v2423 = vpop.f32.mrf.mxu0
      %v2424 = vadd.f32 %v2255, %v2423
      %v2425 = vpop.f32.mrf.mxu0
      %v2426 = vadd.f32 %v2257, %v2425
      %2427 = vmatmul.bf16.gmra.mxu0 %v1470
      %v2428 = vpop.f32.mrf.mxu0
      %v2429 = vadd.f32 %v2260, %v2428
      %v2430 = vpop.f32.mrf.mxu0
      %v2431 = vadd.f32 %v2262, %v2430
      %2432 = vmatmul.bf16.gmra.mxu0 %v1477
      %v2433 = vpop.f32.mrf.mxu0
      %v2434 = vadd.f32 %v2265, %v2433
      %v2435 = vpop.f32.mrf.mxu0
      %v2436 = vadd.f32 %v2267, %v2435
      %2437 = vmatmul.bf16.gmra.mxu0 %v1484
      %v2438 = vpop.f32.mrf.mxu0
      %v2439 = vadd.f32 %v2270, %v2438
      %v2440 = vpop.f32.mrf.mxu0
      %v2441 = vadd.f32 %v2272, %v2440
      %2442 = vmatmul.bf16.gmra.mxu0 %v1491
      %v2443 = vpop.f32.mrf.mxu0
      %v2444 = vadd.f32 %v2275, %v2443
      %v2445 = vpop.f32.mrf.mxu0
      %v2446 = vadd.f32 %v2277, %v2445
      %2447 = vdwg.mxu0
      %2448 = vmatpush.bf16.msra.mxu0 %v1928
      %2449 = vmatpush.bf16.msra.mxu0 %v1927
      %2450 = vmatpush.bf16.msra.mxu0 %v1926
      %2451 = vmatpush.bf16.msra.mxu0 %v1925
      %2452 = vmatpush.bf16.msra.mxu0 %v1924
      %2453 = vmatpush.bf16.msra.mxu0 %v1923
      %2454 = vmatpush.bf16.msra.mxu0 %v1922
      %2455 = vmatpush.bf16.msra.mxu0 %v1921
      %2456 = vmatmul.bf16.gmra.mxu0 %v1275
      %v2457 = vpop.f32.mrf.mxu0
      %v2458 = vadd.f32 %v2289, %v2457
      %v2459 = vpop.f32.mrf.mxu0
      %v2460 = vadd.f32 %v2291, %v2459
      %2461 = vmatmul.bf16.gmra.mxu0 %v1282
      %v2462 = vpop.f32.mrf.mxu0
      %v2463 = vadd.f32 %v2294, %v2462
      %v2464 = vpop.f32.mrf.mxu0
      %v2465 = vadd.f32 %v2296, %v2464
      %2466 = vmatmul.bf16.gmra.mxu0 %v1289
      %v2467 = vpop.f32.mrf.mxu0
      %v2468 = vadd.f32 %v2299, %v2467
      %v2469 = vpop.f32.mrf.mxu0
      %v2470 = vadd.f32 %v2301, %v2469
      %2471 = vmatmul.bf16.gmra.mxu0 %v1296
      %v2472 = vpop.f32.mrf.mxu0
      %v2473 = vadd.f32 %v2304, %v2472
      %v2474 = vpop.f32.mrf.mxu0
      %v2475 = vadd.f32 %v2306, %v2474
      %2476 = vmatmul.bf16.gmra.mxu0 %v1303
      %v2477 = vpop.f32.mrf.mxu0
      %v2478 = vadd.f32 %v2309, %v2477
      %v2479 = vpop.f32.mrf.mxu0
      %v2480 = vadd.f32 %v2311, %v2479
      %2481 = vmatmul.bf16.gmra.mxu0 %v1310
      %v2482 = vpop.f32.mrf.mxu0
      %v2483 = vadd.f32 %v2314, %v2482
      %v2484 = vpop.f32.mrf.mxu0
      %v2485 = vadd.f32 %v2316, %v2484
      %2486 = vmatmul.bf16.gmra.mxu0 %v1317
      %v2487 = vpop.f32.mrf.mxu0
      %v2488 = vadd.f32 %v2319, %v2487
      %v2489 = vpop.f32.mrf.mxu0
      %v2490 = vadd.f32 %v2321, %v2489
      %2491 = vmatmul.bf16.gmra.mxu0 %v1324
      %v2492 = vpop.f32.mrf.mxu0
      %v2493 = vadd.f32 %v2324, %v2492
      %v2494 = vpop.f32.mrf.mxu0
      %v2495 = vadd.f32 %v2326, %v2494
      %2496 = vmatmul.bf16.gmra.mxu0 %v1331
      %v2497 = vpop.f32.mrf.mxu0
      %v2498 = vadd.f32 %v2329, %v2497
      %v2499 = vpop.f32.mrf.mxu0
      %v2500 = vadd.f32 %v2331, %v2499
      %2501 = vmatmul.bf16.gmra.mxu0 %v1338
      %v2502 = vpop.f32.mrf.mxu0
      %v2503 = vadd.f32 %v2334, %v2502
      %v2504 = vpop.f32.mrf.mxu0
      %v2505 = vadd.f32 %v2336, %v2504
      %2506 = vmatmul.bf16.gmra.mxu0 %v1345
      %v2507 = vpop.f32.mrf.mxu0
      %v2508 = vadd.f32 %v2339, %v2507
      %v2509 = vpop.f32.mrf.mxu0
      %v2510 = vadd.f32 %v2341, %v2509
      %2511 = vmatmul.bf16.gmra.mxu0 %v1352
      %v2512 = vpop.f32.mrf.mxu0
      %v2513 = vadd.f32 %v2344, %v2512
      %v2514 = vpop.f32.mrf.mxu0
      %v2515 = vadd.f32 %v2346, %v2514
      %2516 = vmatmul.bf16.gmra.mxu0 %v1359
      %v2517 = vpop.f32.mrf.mxu0
      %v2518 = vadd.f32 %v2349, %v2517
      %v2519 = vpop.f32.mrf.mxu0
      %v2520 = vadd.f32 %v2351, %v2519
      %2521 = vmatmul.bf16.gmra.mxu0 %v1366
      %v2522 = vpop.f32.mrf.mxu0
      %v2523 = vadd.f32 %v2354, %v2522
      %v2524 = vpop.f32.mrf.mxu0
      %v2525 = vadd.f32 %v2356, %v2524
      %2526 = vmatmul.bf16.gmra.mxu0 %v1373
      %v2527 = vpop.f32.mrf.mxu0
      %v2528 = vadd.f32 %v2359, %v2527
      %v2529 = vpop.f32.mrf.mxu0
      %v2530 = vadd.f32 %v2361, %v2529
      %2531 = vmatmul.bf16.gmra.mxu0 %v1380
      %v2532 = vpop.f32.mrf.mxu0
      %v2533 = vadd.f32 %v2364, %v2532
      %v2534 = vpop.f32.mrf.mxu0
      %v2535 = vadd.f32 %v2366, %v2534
      %2536 = vmatmul.bf16.gmra.mxu0 %v1387
      %v2537 = vpop.f32.mrf.mxu0
      %v2538 = vadd.f32 %v2369, %v2537
      %v2539 = vpop.f32.mrf.mxu0
      %v2540 = vadd.f32 %v2371, %v2539
      %2541 = vmatmul.bf16.gmra.mxu0 %v1394
      %v2542 = vpop.f32.mrf.mxu0
      %v2543 = vadd.f32 %v2374, %v2542
      %v2544 = vpop.f32.mrf.mxu0
      %v2545 = vadd.f32 %v2376, %v2544
      %2546 = vmatmul.bf16.gmra.mxu0 %v1401
      %v2547 = vpop.f32.mrf.mxu0
      %v2548 = vadd.f32 %v2379, %v2547
      %v2549 = vpop.f32.mrf.mxu0
      %v2550 = vadd.f32 %v2381, %v2549
      %2551 = vmatmul.bf16.gmra.mxu0 %v1408
      %v2552 = vpop.f32.mrf.mxu0
      %v2553 = vadd.f32 %v2384, %v2552
      %v2554 = vpop.f32.mrf.mxu0
      %v2555 = vadd.f32 %v2386, %v2554
      %2556 = vmatmul.bf16.gmra.mxu0 %v1415
      %v2557 = vpop.f32.mrf.mxu0
      %v2558 = vadd.f32 %v2389, %v2557
      %v2559 = vpop.f32.mrf.mxu0
      %v2560 = vadd.f32 %v2391, %v2559
      %2561 = vmatmul.bf16.gmra.mxu0 %v1422
      %v2562 = vpop.f32.mrf.mxu0
      %v2563 = vadd.f32 %v2394, %v2562
      %v2564 = vpop.f32.mrf.mxu0
      %v2565 = vadd.f32 %v2396, %v2564
      %2566 = vmatmul.bf16.gmra.mxu0 %v1429
      %v2567 = vpop.f32.mrf.mxu0
      %v2568 = vadd.f32 %v2399, %v2567
      %v2569 = vpop.f32.mrf.mxu0
      %v2570 = vadd.f32 %v2401, %v2569
      %2571 = vmatmul.bf16.gmra.mxu0 %v1436
      %v2572 = vpop.f32.mrf.mxu0
      %v2573 = vadd.f32 %v2404, %v2572
      %v2574 = vpop.f32.mrf.mxu0
      %v2575 = vadd.f32 %v2406, %v2574
      %2576 = vmatmul.bf16.gmra.mxu0 %v1443
      %v2577 = vpop.f32.mrf.mxu0
      %v2578 = vadd.f32 %v2409, %v2577
      %v2579 = vpop.f32.mrf.mxu0
      %v2580 = vadd.f32 %v2411, %v2579
      %2581 = vmatmul.bf16.gmra.mxu0 %v1450
      %v2582 = vpop.f32.mrf.mxu0
      %v2583 = vadd.f32 %v2414, %v2582
      %v2584 = vpop.f32.mrf.mxu0
      %v2585 = vadd.f32 %v2416, %v2584
      %2586 = vmatmul.bf16.gmra.mxu0 %v1457
      %v2587 = vpop.f32.mrf.mxu0
      %v2588 = vadd.f32 %v2419, %v2587
      %v2589 = vpop.f32.mrf.mxu0
      %v2590 = vadd.f32 %v2421, %v2589
      %2591 = vmatmul.bf16.gmra.mxu0 %v1464
      %v2592 = vpop.f32.mrf.mxu0
      %v2593 = vadd.f32 %v2424, %v2592
      %v2594 = vpop.f32.mrf.mxu0
      %v2595 = vadd.f32 %v2426, %v2594
      %2596 = vmatmul.bf16.gmra.mxu0 %v1471
      %v2597 = vpop.f32.mrf.mxu0
      %v2598 = vadd.f32 %v2429, %v2597
      %v2599 = vpop.f32.mrf.mxu0
      %v2600 = vadd.f32 %v2431, %v2599
      %2601 = vmatmul.bf16.gmra.mxu0 %v1478
      %v2602 = vpop.f32.mrf.mxu0
      %v2603 = vadd.f32 %v2434, %v2602
      %v2604 = vpop.f32.mrf.mxu0
      %v2605 = vadd.f32 %v2436, %v2604
      %2606 = vmatmul.bf16.gmra.mxu0 %v1485
      %v2607 = vpop.f32.mrf.mxu0
      %v2608 = vadd.f32 %v2439, %v2607
      %v2609 = vpop.f32.mrf.mxu0
      %v2610 = vadd.f32 %v2441, %v2609
      %2611 = vmatmul.bf16.gmra.mxu0 %v1492
      %v2612 = vpop.f32.mrf.mxu0
      %v2613 = vadd.f32 %v2444, %v2612
      %v2614 = vpop.f32.mrf.mxu0
      %v2615 = vadd.f32 %v2446, %v2614
      %2616 = vdwg.mxu0
      %2617 = vmatpush.bf16.msra.mxu0 %v1936
      %2618 = vmatpush.bf16.msra.mxu0 %v1935
      %2619 = vmatpush.bf16.msra.mxu0 %v1934
      %2620 = vmatpush.bf16.msra.mxu0 %v1933
      %2621 = vmatpush.bf16.msra.mxu0 %v1932
      %2622 = vmatpush.bf16.msra.mxu0 %v1931
      %2623 = vmatpush.bf16.msra.mxu0 %v1930
      %2624 = vmatpush.bf16.msra.mxu0 %v1929
      %2625 = vmatmul.bf16.gmra.mxu0 %v1276
      %v2626 = vpop.f32.mrf.mxu0
      %v2627 = vadd.f32 %v2458, %v2626
      %v2628 = vpop.f32.mrf.mxu0
      %v2629 = vadd.f32 %v2460, %v2628
      %2630 = vmatmul.bf16.gmra.mxu0 %v1283
      %v2631 = vpop.f32.mrf.mxu0
      %v2632 = vadd.f32 %v2463, %v2631
      %v2633 = vpop.f32.mrf.mxu0
      %v2634 = vadd.f32 %v2465, %v2633
      %2635 = vmatmul.bf16.gmra.mxu0 %v1290
      %v2636 = vpop.f32.mrf.mxu0
      %v2637 = vadd.f32 %v2468, %v2636
      %v2638 = vpop.f32.mrf.mxu0
      %v2639 = vadd.f32 %v2470, %v2638
      %2640 = vmatmul.bf16.gmra.mxu0 %v1297
      %v2641 = vpop.f32.mrf.mxu0
      %v2642 = vadd.f32 %v2473, %v2641
      %v2643 = vpop.f32.mrf.mxu0
      %v2644 = vadd.f32 %v2475, %v2643
      %2645 = vmatmul.bf16.gmra.mxu0 %v1304
      %v2646 = vpop.f32.mrf.mxu0
      %v2647 = vadd.f32 %v2478, %v2646
      %v2648 = vpop.f32.mrf.mxu0
      %v2649 = vadd.f32 %v2480, %v2648
      %2650 = vmatmul.bf16.gmra.mxu0 %v1311
      %v2651 = vpop.f32.mrf.mxu0
      %v2652 = vadd.f32 %v2483, %v2651
      %v2653 = vpop.f32.mrf.mxu0
      %v2654 = vadd.f32 %v2485, %v2653
      %2655 = vmatmul.bf16.gmra.mxu0 %v1318
      %v2656 = vpop.f32.mrf.mxu0
      %v2657 = vadd.f32 %v2488, %v2656
      %v2658 = vpop.f32.mrf.mxu0
      %v2659 = vadd.f32 %v2490, %v2658
      %2660 = vmatmul.bf16.gmra.mxu0 %v1325
      %v2661 = vpop.f32.mrf.mxu0
      %v2662 = vadd.f32 %v2493, %v2661
      %v2663 = vpop.f32.mrf.mxu0
      %v2664 = vadd.f32 %v2495, %v2663
      %2665 = vmatmul.bf16.gmra.mxu0 %v1332
      %v2666 = vpop.f32.mrf.mxu0
      %v2667 = vadd.f32 %v2498, %v2666
      %v2668 = vpop.f32.mrf.mxu0
      %v2669 = vadd.f32 %v2500, %v2668
      %2670 = vmatmul.bf16.gmra.mxu0 %v1339
      %v2671 = vpop.f32.mrf.mxu0
      %v2672 = vadd.f32 %v2503, %v2671
      %v2673 = vpop.f32.mrf.mxu0
      %v2674 = vadd.f32 %v2505, %v2673
      %2675 = vmatmul.bf16.gmra.mxu0 %v1346
      %v2676 = vpop.f32.mrf.mxu0
      %v2677 = vadd.f32 %v2508, %v2676
      %v2678 = vpop.f32.mrf.mxu0
      %v2679 = vadd.f32 %v2510, %v2678
      %2680 = vmatmul.bf16.gmra.mxu0 %v1353
      %v2681 = vpop.f32.mrf.mxu0
      %v2682 = vadd.f32 %v2513, %v2681
      %v2683 = vpop.f32.mrf.mxu0
      %v2684 = vadd.f32 %v2515, %v2683
      %2685 = vmatmul.bf16.gmra.mxu0 %v1360
      %v2686 = vpop.f32.mrf.mxu0
      %v2687 = vadd.f32 %v2518, %v2686
      %v2688 = vpop.f32.mrf.mxu0
      %v2689 = vadd.f32 %v2520, %v2688
      %2690 = vmatmul.bf16.gmra.mxu0 %v1367
      %v2691 = vpop.f32.mrf.mxu0
      %v2692 = vadd.f32 %v2523, %v2691
      %v2693 = vpop.f32.mrf.mxu0
      %v2694 = vadd.f32 %v2525, %v2693
      %2695 = vmatmul.bf16.gmra.mxu0 %v1374
      %v2696 = vpop.f32.mrf.mxu0
      %v2697 = vadd.f32 %v2528, %v2696
      %v2698 = vpop.f32.mrf.mxu0
      %v2699 = vadd.f32 %v2530, %v2698
      %2700 = vmatmul.bf16.gmra.mxu0 %v1381
      %v2701 = vpop.f32.mrf.mxu0
      %v2702 = vadd.f32 %v2533, %v2701
      %v2703 = vpop.f32.mrf.mxu0
      %v2704 = vadd.f32 %v2535, %v2703
      %2705 = vmatmul.bf16.gmra.mxu0 %v1388
      %v2706 = vpop.f32.mrf.mxu0
      %v2707 = vadd.f32 %v2538, %v2706
      %v2708 = vpop.f32.mrf.mxu0
      %v2709 = vadd.f32 %v2540, %v2708
      %2710 = vmatmul.bf16.gmra.mxu0 %v1395
      %v2711 = vpop.f32.mrf.mxu0
      %v2712 = vadd.f32 %v2543, %v2711
      %v2713 = vpop.f32.mrf.mxu0
      %v2714 = vadd.f32 %v2545, %v2713
      %2715 = vmatmul.bf16.gmra.mxu0 %v1402
      %v2716 = vpop.f32.mrf.mxu0
      %v2717 = vadd.f32 %v2548, %v2716
      %v2718 = vpop.f32.mrf.mxu0
      %v2719 = vadd.f32 %v2550, %v2718
      %2720 = vmatmul.bf16.gmra.mxu0 %v1409
      %v2721 = vpop.f32.mrf.mxu0
      %v2722 = vadd.f32 %v2553, %v2721
      %v2723 = vpop.f32.mrf.mxu0
      %v2724 = vadd.f32 %v2555, %v2723
      %2725 = vmatmul.bf16.gmra.mxu0 %v1416
      %v2726 = vpop.f32.mrf.mxu0
      %v2727 = vadd.f32 %v2558, %v2726
      %v2728 = vpop.f32.mrf.mxu0
      %v2729 = vadd.f32 %v2560, %v2728
      %2730 = vmatmul.bf16.gmra.mxu0 %v1423
      %v2731 = vpop.f32.mrf.mxu0
      %v2732 = vadd.f32 %v2563, %v2731
      %v2733 = vpop.f32.mrf.mxu0
      %v2734 = vadd.f32 %v2565, %v2733
      %2735 = vmatmul.bf16.gmra.mxu0 %v1430
      %v2736 = vpop.f32.mrf.mxu0
      %v2737 = vadd.f32 %v2568, %v2736
      %v2738 = vpop.f32.mrf.mxu0
      %v2739 = vadd.f32 %v2570, %v2738
      %2740 = vmatmul.bf16.gmra.mxu0 %v1437
      %v2741 = vpop.f32.mrf.mxu0
      %v2742 = vadd.f32 %v2573, %v2741
      %v2743 = vpop.f32.mrf.mxu0
      %v2744 = vadd.f32 %v2575, %v2743
      %2745 = vmatmul.bf16.gmra.mxu0 %v1444
      %v2746 = vpop.f32.mrf.mxu0
      %v2747 = vadd.f32 %v2578, %v2746
      %v2748 = vpop.f32.mrf.mxu0
      %v2749 = vadd.f32 %v2580, %v2748
      %2750 = vmatmul.bf16.gmra.mxu0 %v1451
      %v2751 = vpop.f32.mrf.mxu0
      %v2752 = vadd.f32 %v2583, %v2751
      %v2753 = vpop.f32.mrf.mxu0
      %v2754 = vadd.f32 %v2585, %v2753
      %2755 = vmatmul.bf16.gmra.mxu0 %v1458
      %v2756 = vpop.f32.mrf.mxu0
      %v2757 = vadd.f32 %v2588, %v2756
      %v2758 = vpop.f32.mrf.mxu0
      %v2759 = vadd.f32 %v2590, %v2758
      %2760 = vmatmul.bf16.gmra.mxu0 %v1465
      %v2761 = vpop.f32.mrf.mxu0
      %v2762 = vadd.f32 %v2593, %v2761
      %v2763 = vpop.f32.mrf.mxu0
      %v2764 = vadd.f32 %v2595, %v2763
      %2765 = vmatmul.bf16.gmra.mxu0 %v1472
      %v2766 = vpop.f32.mrf.mxu0
      %v2767 = vadd.f32 %v2598, %v2766
      %v2768 = vpop.f32.mrf.mxu0
      %v2769 = vadd.f32 %v2600, %v2768
      %2770 = vmatmul.bf16.gmra.mxu0 %v1479
      %v2771 = vpop.f32.mrf.mxu0
      %v2772 = vadd.f32 %v2603, %v2771
      %v2773 = vpop.f32.mrf.mxu0
      %v2774 = vadd.f32 %v2605, %v2773
      %2775 = vmatmul.bf16.gmra.mxu0 %v1486
      %v2776 = vpop.f32.mrf.mxu0
      %v2777 = vadd.f32 %v2608, %v2776
      %v2778 = vpop.f32.mrf.mxu0
      %v2779 = vadd.f32 %v2610, %v2778
      %2780 = vmatmul.bf16.gmra.mxu0 %v1493
      %v2781 = vpop.f32.mrf.mxu0
      %v2782 = vadd.f32 %v2613, %v2781
      %v2783 = vpop.f32.mrf.mxu0
      %v2784 = vadd.f32 %v2615, %v2783
      %2785 = vdwg.mxu0
      %2786 = vmatpush.bf16.msra.mxu0 %v1944
      %2787 = vmatpush.bf16.msra.mxu0 %v1943
      %2788 = vmatpush.bf16.msra.mxu0 %v1942
      %2789 = vmatpush.bf16.msra.mxu0 %v1941
      %2790 = vmatpush.bf16.msra.mxu0 %v1940
      %2791 = vmatpush.bf16.msra.mxu0 %v1939
      %2792 = vmatpush.bf16.msra.mxu0 %v1938
      %2793 = vmatpush.bf16.msra.mxu0 %v1937
      %2794 = vmatmul.bf16.gmra.mxu0 %v1277
      %v2795 = vpop.f32.mrf.mxu0
      %v2796 = vadd.f32 %v2627, %v2795
      %v2797 = vpop.f32.mrf.mxu0
      %v2798 = vadd.f32 %v2629, %v2797
      %2799 = vmatmul.bf16.gmra.mxu0 %v1284
      %v2800 = vpop.f32.mrf.mxu0
      %v2801 = vadd.f32 %v2632, %v2800
      %v2802 = vpop.f32.mrf.mxu0
      %v2803 = vadd.f32 %v2634, %v2802
      %2804 = vmatmul.bf16.gmra.mxu0 %v1291
      %v2805 = vpop.f32.mrf.mxu0
      %v2806 = vadd.f32 %v2637, %v2805
      %v2807 = vpop.f32.mrf.mxu0
      %v2808 = vadd.f32 %v2639, %v2807
      %2809 = vmatmul.bf16.gmra.mxu0 %v1298
      %v2810 = vpop.f32.mrf.mxu0
      %v2811 = vadd.f32 %v2642, %v2810
      %v2812 = vpop.f32.mrf.mxu0
      %v2813 = vadd.f32 %v2644, %v2812
      %2814 = vmatmul.bf16.gmra.mxu0 %v1305
      %v2815 = vpop.f32.mrf.mxu0
      %v2816 = vadd.f32 %v2647, %v2815
      %v2817 = vpop.f32.mrf.mxu0
      %v2818 = vadd.f32 %v2649, %v2817
      %2819 = vmatmul.bf16.gmra.mxu0 %v1312
      %v2820 = vpop.f32.mrf.mxu0
      %v2821 = vadd.f32 %v2652, %v2820
      %v2822 = vpop.f32.mrf.mxu0
      %v2823 = vadd.f32 %v2654, %v2822
      %2824 = vmatmul.bf16.gmra.mxu0 %v1319
      %v2825 = vpop.f32.mrf.mxu0
      %v2826 = vadd.f32 %v2657, %v2825
      %v2827 = vpop.f32.mrf.mxu0
      %v2828 = vadd.f32 %v2659, %v2827
      %2829 = vmatmul.bf16.gmra.mxu0 %v1326
      %v2830 = vpop.f32.mrf.mxu0
      %v2831 = vadd.f32 %v2662, %v2830
      %v2832 = vpop.f32.mrf.mxu0
      %v2833 = vadd.f32 %v2664, %v2832
      %2834 = vmatmul.bf16.gmra.mxu0 %v1333
      %v2835 = vpop.f32.mrf.mxu0
      %v2836 = vadd.f32 %v2667, %v2835
      %v2837 = vpop.f32.mrf.mxu0
      %v2838 = vadd.f32 %v2669, %v2837
      %2839 = vmatmul.bf16.gmra.mxu0 %v1340
      %v2840 = vpop.f32.mrf.mxu0
      %v2841 = vadd.f32 %v2672, %v2840
      %v2842 = vpop.f32.mrf.mxu0
      %v2843 = vadd.f32 %v2674, %v2842
      %2844 = vmatmul.bf16.gmra.mxu0 %v1347
      %v2845 = vpop.f32.mrf.mxu0
      %v2846 = vadd.f32 %v2677, %v2845
      %v2847 = vpop.f32.mrf.mxu0
      %v2848 = vadd.f32 %v2679, %v2847
      %2849 = vmatmul.bf16.gmra.mxu0 %v1354
      %v2850 = vpop.f32.mrf.mxu0
      %v2851 = vadd.f32 %v2682, %v2850
      %v2852 = vpop.f32.mrf.mxu0
      %v2853 = vadd.f32 %v2684, %v2852
      %2854 = vmatmul.bf16.gmra.mxu0 %v1361
      %v2855 = vpop.f32.mrf.mxu0
      %v2856 = vadd.f32 %v2687, %v2855
      %v2857 = vpop.f32.mrf.mxu0
      %v2858 = vadd.f32 %v2689, %v2857
      %2859 = vmatmul.bf16.gmra.mxu0 %v1368
      %v2860 = vpop.f32.mrf.mxu0
      %v2861 = vadd.f32 %v2692, %v2860
      %v2862 = vpop.f32.mrf.mxu0
      %v2863 = vadd.f32 %v2694, %v2862
      %2864 = vmatmul.bf16.gmra.mxu0 %v1375
      %v2865 = vpop.f32.mrf.mxu0
      %v2866 = vadd.f32 %v2697, %v2865
      %v2867 = vpop.f32.mrf.mxu0
      %v2868 = vadd.f32 %v2699, %v2867
      %2869 = vmatmul.bf16.gmra.mxu0 %v1382
      %v2870 = vpop.f32.mrf.mxu0
      %v2871 = vadd.f32 %v2702, %v2870
      %v2872 = vpop.f32.mrf.mxu0
      %v2873 = vadd.f32 %v2704, %v2872
      %2874 = vmatmul.bf16.gmra.mxu0 %v1389
      %v2875 = vpop.f32.mrf.mxu0
      %v2876 = vadd.f32 %v2707, %v2875
      %v2877 = vpop.f32.mrf.mxu0
      %v2878 = vadd.f32 %v2709, %v2877
      %2879 = vmatmul.bf16.gmra.mxu0 %v1396
      %v2880 = vpop.f32.mrf.mxu0
      %v2881 = vadd.f32 %v2712, %v2880
      %v2882 = vpop.f32.mrf.mxu0
      %v2883 = vadd.f32 %v2714, %v2882
      %2884 = vmatmul.bf16.gmra.mxu0 %v1403
      %v2885 = vpop.f32.mrf.mxu0
      %v2886 = vadd.f32 %v2717, %v2885
      %v2887 = vpop.f32.mrf.mxu0
      %v2888 = vadd.f32 %v2719, %v2887
      %2889 = vmatmul.bf16.gmra.mxu0 %v1410
      %v2890 = vpop.f32.mrf.mxu0
      %v2891 = vadd.f32 %v2722, %v2890
      %v2892 = vpop.f32.mrf.mxu0
      %v2893 = vadd.f32 %v2724, %v2892
      %2894 = vmatmul.bf16.gmra.mxu0 %v1417
      %v2895 = vpop.f32.mrf.mxu0
      %v2896 = vadd.f32 %v2727, %v2895
      %v2897 = vpop.f32.mrf.mxu0
      %v2898 = vadd.f32 %v2729, %v2897
      %2899 = vmatmul.bf16.gmra.mxu0 %v1424
      %v2900 = vpop.f32.mrf.mxu0
      %v2901 = vadd.f32 %v2732, %v2900
      %v2902 = vpop.f32.mrf.mxu0
      %v2903 = vadd.f32 %v2734, %v2902
      %2904 = vmatmul.bf16.gmra.mxu0 %v1431
      %v2905 = vpop.f32.mrf.mxu0
      %v2906 = vadd.f32 %v2737, %v2905
      %v2907 = vpop.f32.mrf.mxu0
      %v2908 = vadd.f32 %v2739, %v2907
      %2909 = vmatmul.bf16.gmra.mxu0 %v1438
      %v2910 = vpop.f32.mrf.mxu0
      %v2911 = vadd.f32 %v2742, %v2910
      %v2912 = vpop.f32.mrf.mxu0
      %v2913 = vadd.f32 %v2744, %v2912
      %2914 = vmatmul.bf16.gmra.mxu0 %v1445
      %v2915 = vpop.f32.mrf.mxu0
      %v2916 = vadd.f32 %v2747, %v2915
      %v2917 = vpop.f32.mrf.mxu0
      %v2918 = vadd.f32 %v2749, %v2917
      %2919 = vmatmul.bf16.gmra.mxu0 %v1452
      %v2920 = vpop.f32.mrf.mxu0
      %v2921 = vadd.f32 %v2752, %v2920
      %v2922 = vpop.f32.mrf.mxu0
      %v2923 = vadd.f32 %v2754, %v2922
      %2924 = vmatmul.bf16.gmra.mxu0 %v1459
      %v2925 = vpop.f32.mrf.mxu0
      %v2926 = vadd.f32 %v2757, %v2925
      %v2927 = vpop.f32.mrf.mxu0
      %v2928 = vadd.f32 %v2759, %v2927
      %2929 = vmatmul.bf16.gmra.mxu0 %v1466
      %v2930 = vpop.f32.mrf.mxu0
      %v2931 = vadd.f32 %v2762, %v2930
      %v2932 = vpop.f32.mrf.mxu0
      %v2933 = vadd.f32 %v2764, %v2932
      %2934 = vmatmul.bf16.gmra.mxu0 %v1473
      %v2935 = vpop.f32.mrf.mxu0
      %v2936 = vadd.f32 %v2767, %v2935
      %v2937 = vpop.f32.mrf.mxu0
      %v2938 = vadd.f32 %v2769, %v2937
      %2939 = vmatmul.bf16.gmra.mxu0 %v1480
      %v2940 = vpop.f32.mrf.mxu0
      %v2941 = vadd.f32 %v2772, %v2940
      %v2942 = vpop.f32.mrf.mxu0
      %v2943 = vadd.f32 %v2774, %v2942
      %2944 = vmatmul.bf16.gmra.mxu0 %v1487
      %v2945 = vpop.f32.mrf.mxu0
      %v2946 = vadd.f32 %v2777, %v2945
      %v2947 = vpop.f32.mrf.mxu0
      %v2948 = vadd.f32 %v2779, %v2947
      %2949 = vmatmul.bf16.gmra.mxu0 %v1494
      %v2950 = vpop.f32.mrf.mxu0
      %v2951 = vadd.f32 %v2782, %v2950
      %v2952 = vpop.f32.mrf.mxu0
      %v2953 = vadd.f32 %v2784, %v2952
      %2954 = vdwg.mxu0
      %2955 = vmatpush.bf16.msra.mxu0 %v1952
      %2956 = vmatpush.bf16.msra.mxu0 %v1951
      %2957 = vmatpush.bf16.msra.mxu0 %v1950
      %2958 = vmatpush.bf16.msra.mxu0 %v1949
      %2959 = vmatpush.bf16.msra.mxu0 %v1948
      %2960 = vmatpush.bf16.msra.mxu0 %v1947
      %2961 = vmatpush.bf16.msra.mxu0 %v1946
      %2962 = vmatpush.bf16.msra.mxu0 %v1945
      %2963 = vmatmul.bf16.gmra.mxu0 %v1278
      %v2964 = vpop.f32.mrf.mxu0
      %v2965 = vadd.f32 %v2796, %v2964
      %v2966 = vpop.f32.mrf.mxu0
      %v2967 = vadd.f32 %v2798, %v2966
      %2968 = vmatmul.bf16.gmra.mxu0 %v1285
      %v2969 = vpop.f32.mrf.mxu0
      %v2970 = vadd.f32 %v2801, %v2969
      %v2971 = vpop.f32.mrf.mxu0
      %v2972 = vadd.f32 %v2803, %v2971
      %2973 = vmatmul.bf16.gmra.mxu0 %v1292
      %v2974 = vpop.f32.mrf.mxu0
      %v2975 = vadd.f32 %v2806, %v2974
      %v2976 = vpop.f32.mrf.mxu0
      %v2977 = vadd.f32 %v2808, %v2976
      %2978 = vmatmul.bf16.gmra.mxu0 %v1299
      %v2979 = vpop.f32.mrf.mxu0
      %v2980 = vadd.f32 %v2811, %v2979
      %v2981 = vpop.f32.mrf.mxu0
      %v2982 = vadd.f32 %v2813, %v2981
      %2983 = vmatmul.bf16.gmra.mxu0 %v1306
      %v2984 = vpop.f32.mrf.mxu0
      %v2985 = vadd.f32 %v2816, %v2984
      %v2986 = vpop.f32.mrf.mxu0
      %v2987 = vadd.f32 %v2818, %v2986
      %2988 = vmatmul.bf16.gmra.mxu0 %v1313
      %v2989 = vpop.f32.mrf.mxu0
      %v2990 = vadd.f32 %v2821, %v2989
      %v2991 = vpop.f32.mrf.mxu0
      %v2992 = vadd.f32 %v2823, %v2991
      %2993 = vmatmul.bf16.gmra.mxu0 %v1320
      %v2994 = vpop.f32.mrf.mxu0
      %v2995 = vadd.f32 %v2826, %v2994
      %v2996 = vpop.f32.mrf.mxu0
      %v2997 = vadd.f32 %v2828, %v2996
      %2998 = vmatmul.bf16.gmra.mxu0 %v1327
      %v2999 = vpop.f32.mrf.mxu0
      %v3000 = vadd.f32 %v2831, %v2999
      %v3001 = vpop.f32.mrf.mxu0
      %v3002 = vadd.f32 %v2833, %v3001
      %3003 = vmatmul.bf16.gmra.mxu0 %v1334
      %v3004 = vpop.f32.mrf.mxu0
      %v3005 = vadd.f32 %v2836, %v3004
      %v3006 = vpop.f32.mrf.mxu0
      %v3007 = vadd.f32 %v2838, %v3006
      %3008 = vmatmul.bf16.gmra.mxu0 %v1341
      %v3009 = vpop.f32.mrf.mxu0
      %v3010 = vadd.f32 %v2841, %v3009
      %v3011 = vpop.f32.mrf.mxu0
      %v3012 = vadd.f32 %v2843, %v3011
      %3013 = vmatmul.bf16.gmra.mxu0 %v1348
      %v3014 = vpop.f32.mrf.mxu0
      %v3015 = vadd.f32 %v2846, %v3014
      %v3016 = vpop.f32.mrf.mxu0
      %v3017 = vadd.f32 %v2848, %v3016
      %3018 = vmatmul.bf16.gmra.mxu0 %v1355
      %v3019 = vpop.f32.mrf.mxu0
      %v3020 = vadd.f32 %v2851, %v3019
      %v3021 = vpop.f32.mrf.mxu0
      %v3022 = vadd.f32 %v2853, %v3021
      %3023 = vmatmul.bf16.gmra.mxu0 %v1362
      %v3024 = vpop.f32.mrf.mxu0
      %v3025 = vadd.f32 %v2856, %v3024
      %v3026 = vpop.f32.mrf.mxu0
      %v3027 = vadd.f32 %v2858, %v3026
      %3028 = vmatmul.bf16.gmra.mxu0 %v1369
      %v3029 = vpop.f32.mrf.mxu0
      %v3030 = vadd.f32 %v2861, %v3029
      %v3031 = vpop.f32.mrf.mxu0
      %v3032 = vadd.f32 %v2863, %v3031
      %3033 = vmatmul.bf16.gmra.mxu0 %v1376
      %v3034 = vpop.f32.mrf.mxu0
      %v3035 = vadd.f32 %v2866, %v3034
      %v3036 = vpop.f32.mrf.mxu0
      %v3037 = vadd.f32 %v2868, %v3036
      %3038 = vmatmul.bf16.gmra.mxu0 %v1383
      %v3039 = vpop.f32.mrf.mxu0
      %v3040 = vadd.f32 %v2871, %v3039
      %v3041 = vpop.f32.mrf.mxu0
      %v3042 = vadd.f32 %v2873, %v3041
      %3043 = vmatmul.bf16.gmra.mxu0 %v1390
      %v3044 = vpop.f32.mrf.mxu0
      %v3045 = vadd.f32 %v2876, %v3044
      %v3046 = vpop.f32.mrf.mxu0
      %v3047 = vadd.f32 %v2878, %v3046
      %3048 = vmatmul.bf16.gmra.mxu0 %v1397
      %v3049 = vpop.f32.mrf.mxu0
      %v3050 = vadd.f32 %v2881, %v3049
      %v3051 = vpop.f32.mrf.mxu0
      %v3052 = vadd.f32 %v2883, %v3051
      %3053 = vmatmul.bf16.gmra.mxu0 %v1404
      %v3054 = vpop.f32.mrf.mxu0
      %v3055 = vadd.f32 %v2886, %v3054
      %v3056 = vpop.f32.mrf.mxu0
      %v3057 = vadd.f32 %v2888, %v3056
      %3058 = vmatmul.bf16.gmra.mxu0 %v1411
      %v3059 = vpop.f32.mrf.mxu0
      %v3060 = vadd.f32 %v2891, %v3059
      %v3061 = vpop.f32.mrf.mxu0
      %v3062 = vadd.f32 %v2893, %v3061
      %3063 = vmatmul.bf16.gmra.mxu0 %v1418
      %v3064 = vpop.f32.mrf.mxu0
      %v3065 = vadd.f32 %v2896, %v3064
      %v3066 = vpop.f32.mrf.mxu0
      %v3067 = vadd.f32 %v2898, %v3066
      %3068 = vmatmul.bf16.gmra.mxu0 %v1425
      %v3069 = vpop.f32.mrf.mxu0
      %v3070 = vadd.f32 %v2901, %v3069
      %v3071 = vpop.f32.mrf.mxu0
      %v3072 = vadd.f32 %v2903, %v3071
      %3073 = vmatmul.bf16.gmra.mxu0 %v1432
      %v3074 = vpop.f32.mrf.mxu0
      %v3075 = vadd.f32 %v2906, %v3074
      %v3076 = vpop.f32.mrf.mxu0
      %v3077 = vadd.f32 %v2908, %v3076
      %3078 = vmatmul.bf16.gmra.mxu0 %v1439
      %v3079 = vpop.f32.mrf.mxu0
      %v3080 = vadd.f32 %v2911, %v3079
      %v3081 = vpop.f32.mrf.mxu0
      %v3082 = vadd.f32 %v2913, %v3081
      %3083 = vmatmul.bf16.gmra.mxu0 %v1446
      %v3084 = vpop.f32.mrf.mxu0
      %v3085 = vadd.f32 %v2916, %v3084
      %v3086 = vpop.f32.mrf.mxu0
      %v3087 = vadd.f32 %v2918, %v3086
      %3088 = vmatmul.bf16.gmra.mxu0 %v1453
      %v3089 = vpop.f32.mrf.mxu0
      %v3090 = vadd.f32 %v2921, %v3089
      %v3091 = vpop.f32.mrf.mxu0
      %v3092 = vadd.f32 %v2923, %v3091
      %3093 = vmatmul.bf16.gmra.mxu0 %v1460
      %v3094 = vpop.f32.mrf.mxu0
      %v3095 = vadd.f32 %v2926, %v3094
      %v3096 = vpop.f32.mrf.mxu0
      %v3097 = vadd.f32 %v2928, %v3096
      %3098 = vmatmul.bf16.gmra.mxu0 %v1467
      %v3099 = vpop.f32.mrf.mxu0
      %v3100 = vadd.f32 %v2931, %v3099
      %v3101 = vpop.f32.mrf.mxu0
      %v3102 = vadd.f32 %v2933, %v3101
      %3103 = vmatmul.bf16.gmra.mxu0 %v1474
      %v3104 = vpop.f32.mrf.mxu0
      %v3105 = vadd.f32 %v2936, %v3104
      %v3106 = vpop.f32.mrf.mxu0
      %v3107 = vadd.f32 %v2938, %v3106
      %3108 = vmatmul.bf16.gmra.mxu0 %v1481
      %v3109 = vpop.f32.mrf.mxu0
      %v3110 = vadd.f32 %v2941, %v3109
      %v3111 = vpop.f32.mrf.mxu0
      %v3112 = vadd.f32 %v2943, %v3111
      %3113 = vmatmul.bf16.gmra.mxu0 %v1488
      %v3114 = vpop.f32.mrf.mxu0
      %v3115 = vadd.f32 %v2946, %v3114
      %v3116 = vpop.f32.mrf.mxu0
      %v3117 = vadd.f32 %v2948, %v3116
      %3118 = vmatmul.bf16.gmra.mxu0 %v1495
      %v3119 = vpop.f32.mrf.mxu0
      %v3120 = vadd.f32 %v2951, %v3119
      %v3121 = vpop.f32.mrf.mxu0
      %v3122 = vadd.f32 %v2953, %v3121
      %3123 = vdwg.mxu0
      %3124 = vmatpush.bf16.msra.mxu0 0
      %3125 = vmatpush.bf16.msra.mxu0 0
      %3126 = vmatpush.bf16.msra.mxu0 %v1958
      %3127 = vmatpush.bf16.msra.mxu0 %v1957
      %3128 = vmatpush.bf16.msra.mxu0 %v1956
      %3129 = vmatpush.bf16.msra.mxu0 %v1955
      %3130 = vmatpush.bf16.msra.mxu0 %v1954
      %3131 = vmatpush.bf16.msra.mxu0 %v1953
      %3132 = vmatmul.bf16.gmra.mxu0 %v2015
      %v3133 = vpop.f32.mrf.mxu0
      %v3134 = vadd.f32 %v2965, %v3133
      %v3135 = vpop.f32.mrf.mxu0
      %v3136 = vadd.f32 %v2967, %v3135
      %3137 = vmatmul.bf16.gmra.mxu0 %v2018
      %v3138 = vpop.f32.mrf.mxu0
      %v3139 = vadd.f32 %v2970, %v3138
      %v3140 = vpop.f32.mrf.mxu0
      %v3141 = vadd.f32 %v2972, %v3140
      %3142 = vmatmul.bf16.gmra.mxu0 %v2021
      %v3143 = vpop.f32.mrf.mxu0
      %v3144 = vadd.f32 %v2975, %v3143
      %v3145 = vpop.f32.mrf.mxu0
      %v3146 = vadd.f32 %v2977, %v3145
      %3147 = vmatmul.bf16.gmra.mxu0 %v2024
      %v3148 = vpop.f32.mrf.mxu0
      %v3149 = vadd.f32 %v2980, %v3148
      %v3150 = vpop.f32.mrf.mxu0
      %v3151 = vadd.f32 %v2982, %v3150
      %3152 = vmatmul.bf16.gmra.mxu0 %v2027
      %v3153 = vpop.f32.mrf.mxu0
      %v3154 = vadd.f32 %v2985, %v3153
      %v3155 = vpop.f32.mrf.mxu0
      %v3156 = vadd.f32 %v2987, %v3155
      %3157 = vmatmul.bf16.gmra.mxu0 %v2030
      %v3158 = vpop.f32.mrf.mxu0
      %v3159 = vadd.f32 %v2990, %v3158
      %v3160 = vpop.f32.mrf.mxu0
      %v3161 = vadd.f32 %v2992, %v3160
      %3162 = vmatmul.bf16.gmra.mxu0 %v2033
      %v3163 = vpop.f32.mrf.mxu0
      %v3164 = vadd.f32 %v2995, %v3163
      %v3165 = vpop.f32.mrf.mxu0
      %v3166 = vadd.f32 %v2997, %v3165
      %3167 = vmatmul.bf16.gmra.mxu0 %v2036
      %v3168 = vpop.f32.mrf.mxu0
      %v3169 = vadd.f32 %v3000, %v3168
      %v3170 = vpop.f32.mrf.mxu0
      %v3171 = vadd.f32 %v3002, %v3170
      %3172 = vmatmul.bf16.gmra.mxu0 %v2039
      %v3173 = vpop.f32.mrf.mxu0
      %v3174 = vadd.f32 %v3005, %v3173
      %v3175 = vpop.f32.mrf.mxu0
      %v3176 = vadd.f32 %v3007, %v3175
      %3177 = vmatmul.bf16.gmra.mxu0 %v2042
      %v3178 = vpop.f32.mrf.mxu0
      %v3179 = vadd.f32 %v3010, %v3178
      %v3180 = vpop.f32.mrf.mxu0
      %v3181 = vadd.f32 %v3012, %v3180
      %3182 = vmatmul.bf16.gmra.mxu0 %v2045
      %v3183 = vpop.f32.mrf.mxu0
      %v3184 = vadd.f32 %v3015, %v3183
      %v3185 = vpop.f32.mrf.mxu0
      %v3186 = vadd.f32 %v3017, %v3185
      %3187 = vmatmul.bf16.gmra.mxu0 %v2048
      %v3188 = vpop.f32.mrf.mxu0
      %v3189 = vadd.f32 %v3020, %v3188
      %v3190 = vpop.f32.mrf.mxu0
      %v3191 = vadd.f32 %v3022, %v3190
      %3192 = vmatmul.bf16.gmra.mxu0 %v2051
      %v3193 = vpop.f32.mrf.mxu0
      %v3194 = vadd.f32 %v3025, %v3193
      %v3195 = vpop.f32.mrf.mxu0
      %v3196 = vadd.f32 %v3027, %v3195
      %3197 = vmatmul.bf16.gmra.mxu0 %v2054
      %v3198 = vpop.f32.mrf.mxu0
      %v3199 = vadd.f32 %v3030, %v3198
      %v3200 = vpop.f32.mrf.mxu0
      %v3201 = vadd.f32 %v3032, %v3200
      %3202 = vmatmul.bf16.gmra.mxu0 %v2057
      %v3203 = vpop.f32.mrf.mxu0
      %v3204 = vadd.f32 %v3035, %v3203
      %v3205 = vpop.f32.mrf.mxu0
      %v3206 = vadd.f32 %v3037, %v3205
      %3207 = vmatmul.bf16.gmra.mxu0 %v2060
      %v3208 = vpop.f32.mrf.mxu0
      %v3209 = vadd.f32 %v3040, %v3208
      %v3210 = vpop.f32.mrf.mxu0
      %v3211 = vadd.f32 %v3042, %v3210
      %3212 = vmatmul.bf16.gmra.mxu0 %v2063
      %v3213 = vpop.f32.mrf.mxu0
      %v3214 = vadd.f32 %v3045, %v3213
      %v3215 = vpop.f32.mrf.mxu0
      %v3216 = vadd.f32 %v3047, %v3215
      %3217 = vmatmul.bf16.gmra.mxu0 %v2066
      %v3218 = vpop.f32.mrf.mxu0
      %v3219 = vadd.f32 %v3050, %v3218
      %v3220 = vpop.f32.mrf.mxu0
      %v3221 = vadd.f32 %v3052, %v3220
      %3222 = vmatmul.bf16.gmra.mxu0 %v2069
      %v3223 = vpop.f32.mrf.mxu0
      %v3224 = vadd.f32 %v3055, %v3223
      %v3225 = vpop.f32.mrf.mxu0
      %v3226 = vadd.f32 %v3057, %v3225
      %3227 = vmatmul.bf16.gmra.mxu0 %v2072
      %v3228 = vpop.f32.mrf.mxu0
      %v3229 = vadd.f32 %v3060, %v3228
      %v3230 = vpop.f32.mrf.mxu0
      %v3231 = vadd.f32 %v3062, %v3230
      %3232 = vmatmul.bf16.gmra.mxu0 %v2075
      %v3233 = vpop.f32.mrf.mxu0
      %v3234 = vadd.f32 %v3065, %v3233
      %v3235 = vpop.f32.mrf.mxu0
      %v3236 = vadd.f32 %v3067, %v3235
      %3237 = vmatmul.bf16.gmra.mxu0 %v2078
      %v3238 = vpop.f32.mrf.mxu0
      %v3239 = vadd.f32 %v3070, %v3238
      %v3240 = vpop.f32.mrf.mxu0
      %v3241 = vadd.f32 %v3072, %v3240
      %3242 = vmatmul.bf16.gmra.mxu0 %v2081
      %v3243 = vpop.f32.mrf.mxu0
      %v3244 = vadd.f32 %v3075, %v3243
      %v3245 = vpop.f32.mrf.mxu0
      %v3246 = vadd.f32 %v3077, %v3245
      %3247 = vmatmul.bf16.gmra.mxu0 %v2084
      %v3248 = vpop.f32.mrf.mxu0
      %v3249 = vadd.f32 %v3080, %v3248
      %v3250 = vpop.f32.mrf.mxu0
      %v3251 = vadd.f32 %v3082, %v3250
      %3252 = vmatmul.bf16.gmra.mxu0 %v2087
      %v3253 = vpop.f32.mrf.mxu0
      %v3254 = vadd.f32 %v3085, %v3253
      %v3255 = vpop.f32.mrf.mxu0
      %v3256 = vadd.f32 %v3087, %v3255
      %3257 = vmatmul.bf16.gmra.mxu0 %v2090
      %v3258 = vpop.f32.mrf.mxu0
      %v3259 = vadd.f32 %v3090, %v3258
      %v3260 = vpop.f32.mrf.mxu0
      %v3261 = vadd.f32 %v3092, %v3260
      %3262 = vmatmul.bf16.gmra.mxu0 %v2093
      %v3263 = vpop.f32.mrf.mxu0
      %v3264 = vadd.f32 %v3095, %v3263
      %v3265 = vpop.f32.mrf.mxu0
      %v3266 = vadd.f32 %v3097, %v3265
      %3267 = vmatmul.bf16.gmra.mxu0 %v2096
      %v3268 = vpop.f32.mrf.mxu0
      %v3269 = vadd.f32 %v3100, %v3268
      %v3270 = vpop.f32.mrf.mxu0
      %v3271 = vadd.f32 %v3102, %v3270
      %3272 = vmatmul.bf16.gmra.mxu0 %v2099
      %v3273 = vpop.f32.mrf.mxu0
      %v3274 = vadd.f32 %v3105, %v3273
      %v3275 = vpop.f32.mrf.mxu0
      %v3276 = vadd.f32 %v3107, %v3275
      %3277 = vmatmul.bf16.gmra.mxu0 %v2102
      %v3278 = vpop.f32.mrf.mxu0
      %v3279 = vadd.f32 %v3110, %v3278
      %v3280 = vpop.f32.mrf.mxu0
      %v3281 = vadd.f32 %v3112, %v3280
      %3282 = vmatmul.bf16.gmra.mxu0 %v2105
      %v3283 = vpop.f32.mrf.mxu0
      %v3284 = vadd.f32 %v3115, %v3283
      %v3285 = vpop.f32.mrf.mxu0
      %v3286 = vadd.f32 %v3117, %v3285
      %3287 = vmatmul.bf16.gmra.mxu0 %v2108
      %v3288 = vpop.f32.mrf.mxu0
      %v3289 = vadd.f32 %v3120, %v3288
      %v3290 = vpop.f32.mrf.mxu0
      %v3291 = vadd.f32 %v3122, %v3290
      %3292 = vdwg.mxu0
      %v3293 = vld [vmem:[%s2] sm:$0x1]
      %v3295 = vperm.slane %v3293, 0
      %v3297 = vmul.f32 %v3134, %v3295
      %v3298 = vmul.f32 %v3136, %v3295
      %v3299 = vmul.f32 %v3139, %v3295
      %v3300 = vmul.f32 %v3141, %v3295
      %v3301 = vmul.f32 %v3144, %v3295
      %v3302 = vmul.f32 %v3146, %v3295
      %v3303 = vmul.f32 %v3149, %v3295
      %v3304 = vmul.f32 %v3151, %v3295
      %v3305 = vmul.f32 %v3154, %v3295
      %v3306 = vmul.f32 %v3156, %v3295
      %v3307 = vmul.f32 %v3159, %v3295
      %v3308 = vmul.f32 %v3161, %v3295
      %v3309 = vmul.f32 %v3164, %v3295
      %v3310 = vmul.f32 %v3166, %v3295
      %v3311 = vmul.f32 %v3169, %v3295
      %v3312 = vmul.f32 %v3171, %v3295
      %v3313 = vmul.f32 %v3174, %v3295
      %v3314 = vmul.f32 %v3176, %v3295
      %v3315 = vmul.f32 %v3179, %v3295
      %v3316 = vmul.f32 %v3181, %v3295
      %v3317 = vmul.f32 %v3184, %v3295
      %v3318 = vmul.f32 %v3186, %v3295
      %v3319 = vmul.f32 %v3189, %v3295
      %v3320 = vmul.f32 %v3191, %v3295
      %v3321 = vmul.f32 %v3194, %v3295
      %v3322 = vmul.f32 %v3196, %v3295
      %v3323 = vmul.f32 %v3199, %v3295
      %v3324 = vmul.f32 %v3201, %v3295
      %v3325 = vmul.f32 %v3204, %v3295
      %v3326 = vmul.f32 %v3206, %v3295
      %v3327 = vmul.f32 %v3209, %v3295
      %v3328 = vmul.f32 %v3211, %v3295
      %v3329 = vmul.f32 %v3214, %v3295
      %v3330 = vmul.f32 %v3216, %v3295
      %v3331 = vmul.f32 %v3219, %v3295
      %v3332 = vmul.f32 %v3221, %v3295
      %v3333 = vmul.f32 %v3224, %v3295
      %v3334 = vmul.f32 %v3226, %v3295
      %v3335 = vmul.f32 %v3229, %v3295
      %v3336 = vmul.f32 %v3231, %v3295
      %v3337 = vmul.f32 %v3234, %v3295
      %v3338 = vmul.f32 %v3236, %v3295
      %v3339 = vmul.f32 %v3239, %v3295
      %v3340 = vmul.f32 %v3241, %v3295
      %v3341 = vmul.f32 %v3244, %v3295
      %v3342 = vmul.f32 %v3246, %v3295
      %v3343 = vmul.f32 %v3249, %v3295
      %v3344 = vmul.f32 %v3251, %v3295
      %v3345 = vmul.f32 %v3254, %v3295
      %v3346 = vmul.f32 %v3256, %v3295
      %v3347 = vmul.f32 %v3259, %v3295
      %v3348 = vmul.f32 %v3261, %v3295
      %v3349 = vmul.f32 %v3264, %v3295
      %v3350 = vmul.f32 %v3266, %v3295
      %v3351 = vmul.f32 %v3269, %v3295
      %v3352 = vmul.f32 %v3271, %v3295
      %v3353 = vmul.f32 %v3274, %v3295
      %v3354 = vmul.f32 %v3276, %v3295
      %v3355 = vmul.f32 %v3279, %v3295
      %v3356 = vmul.f32 %v3281, %v3295
      %v3357 = vmul.f32 %v3284, %v3295
      %v3358 = vmul.f32 %v3286, %v3295
      %v3359 = vmul.f32 %v3289, %v3295
      %v3360 = vmul.f32 %v3291, %v3295
      %v3361 = vld [vmem:[%s3] sm:$0x1]
      %v3363 = vperm.slane %v3361, 0
      %v3365 = vadd.f32 %v3297, %v3363
      %v3366 = vadd.f32 %v3298, %v3363
      %v3367 = vadd.f32 %v3299, %v3363
      %v3368 = vadd.f32 %v3300, %v3363
      %v3369 = vadd.f32 %v3301, %v3363
      %v3370 = vadd.f32 %v3302, %v3363
      %v3371 = vadd.f32 %v3303, %v3363
      %v3372 = vadd.f32 %v3304, %v3363
      %v3373 = vadd.f32 %v3305, %v3363
      %v3374 = vadd.f32 %v3306, %v3363
      %v3375 = vadd.f32 %v3307, %v3363
      %v3376 = vadd.f32 %v3308, %v3363
      %v3377 = vadd.f32 %v3309, %v3363
      %v3378 = vadd.f32 %v3310, %v3363
      %v3379 = vadd.f32 %v3311, %v3363
      %v3380 = vadd.f32 %v3312, %v3363
      %v3381 = vadd.f32 %v3313, %v3363
      %v3382 = vadd.f32 %v3314, %v3363
      %v3383 = vadd.f32 %v3315, %v3363
      %v3384 = vadd.f32 %v3316, %v3363
      %v3385 = vadd.f32 %v3317, %v3363
      %v3386 = vadd.f32 %v3318, %v3363
      %v3387 = vadd.f32 %v3319, %v3363
      %v3388 = vadd.f32 %v3320, %v3363
      %v3389 = vadd.f32 %v3321, %v3363
      %v3390 = vadd.f32 %v3322, %v3363
      %v3391 = vadd.f32 %v3323, %v3363
      %v3392 = vadd.f32 %v3324, %v3363
      %v3393 = vadd.f32 %v3325, %v3363
      %v3394 = vadd.f32 %v3326, %v3363
      %v3395 = vadd.f32 %v3327, %v3363
      %v3396 = vadd.f32 %v3328, %v3363
      %v3397 = vadd.f32 %v3329, %v3363
      %v3398 = vadd.f32 %v3330, %v3363
      %v3399 = vadd.f32 %v3331, %v3363
      %v3400 = vadd.f32 %v3332, %v3363
      %v3401 = vadd.f32 %v3333, %v3363
      %v3402 = vadd.f32 %v3334, %v3363
      %v3403 = vadd.f32 %v3335, %v3363
      %v3404 = vadd.f32 %v3336, %v3363
      %v3405 = vadd.f32 %v3337, %v3363
      %v3406 = vadd.f32 %v3338, %v3363
      %v3407 = vadd.f32 %v3339, %v3363
      %v3408 = vadd.f32 %v3340, %v3363
      %v3409 = vadd.f32 %v3341, %v3363
      %v3410 = vadd.f32 %v3342, %v3363
      %v3411 = vadd.f32 %v3343, %v3363
      %v3412 = vadd.f32 %v3344, %v3363
      %v3413 = vadd.f32 %v3345, %v3363
      %v3414 = vadd.f32 %v3346, %v3363
      %v3415 = vadd.f32 %v3347, %v3363
      %v3416 = vadd.f32 %v3348, %v3363
      %v3417 = vadd.f32 %v3349, %v3363
      %v3418 = vadd.f32 %v3350, %v3363
      %v3419 = vadd.f32 %v3351, %v3363
      %v3420 = vadd.f32 %v3352, %v3363
      %v3421 = vadd.f32 %v3353, %v3363
      %v3422 = vadd.f32 %v3354, %v3363
      %v3423 = vadd.f32 %v3355, %v3363
      %v3424 = vadd.f32 %v3356, %v3363
      %v3425 = vadd.f32 %v3357, %v3363
      %v3426 = vadd.f32 %v3358, %v3363
      %v3427 = vadd.f32 %v3359, %v3363
      %v3428 = vadd.f32 %v3360, %v3363
      %vm3429 = vcmask 130048
      %3430 = vst.msk [vmem:[%s202] sm:$0xff] %vm3429, %v3365
      %3431 = vst.msk [vmem:[%s202 + $0x8] sm:$0xff] %vm3429, %v3366
      %3432 = vst.msk [vmem:[%s202 + $0x10] sm:$0xff] %vm3429, %v3367
      %3433 = vst.msk [vmem:[%s202 + $0x18] sm:$0xff] %vm3429, %v3368
      %3434 = vst.msk [vmem:[%s202 + $0x20] sm:$0xff] %vm3429, %v3369
      %3435 = vst.msk [vmem:[%s202 + $0x28] sm:$0xff] %vm3429, %v3370
      %3436 = vst.msk [vmem:[%s202 + $0x30] sm:$0xff] %vm3429, %v3371
      %3437 = vst.msk [vmem:[%s202 + $0x38] sm:$0xff] %vm3429, %v3372
      %3438 = vst.msk [vmem:[%s202 + $0x40] sm:$0xff] %vm3429, %v3373
      %3439 = vst.msk [vmem:[%s202 + $0x48] sm:$0xff] %vm3429, %v3374
      %3440 = vst.msk [vmem:[%s202 + $0x50] sm:$0xff] %vm3429, %v3375
      %3441 = vst.msk [vmem:[%s202 + $0x58] sm:$0xff] %vm3429, %v3376
      %3442 = vst.msk [vmem:[%s202 + $0x60] sm:$0xff] %vm3429, %v3377
      %3443 = vst.msk [vmem:[%s202 + $0x68] sm:$0xff] %vm3429, %v3378
      %3444 = vst.msk [vmem:[%s202 + $0x70] sm:$0xff] %vm3429, %v3379
      %3445 = vst.msk [vmem:[%s202 + $0x78] sm:$0xff] %vm3429, %v3380
      %3446 = vst.msk [vmem:[%s202 + $0x80] sm:$0xff] %vm3429, %v3381
      %3447 = vst.msk [vmem:[%s202 + $0x88] sm:$0xff] %vm3429, %v3382
      %3448 = vst.msk [vmem:[%s202 + $0x90] sm:$0xff] %vm3429, %v3383
      %3449 = vst.msk [vmem:[%s202 + $0x98] sm:$0xff] %vm3429, %v3384
      %3450 = vst.msk [vmem:[%s202 + $0xa0] sm:$0xff] %vm3429, %v3385
      %3451 = vst.msk [vmem:[%s202 + $0xa8] sm:$0xff] %vm3429, %v3386
      %3452 = vst.msk [vmem:[%s202 + $0xb0] sm:$0xff] %vm3429, %v3387
      %3453 = vst.msk [vmem:[%s202 + $0xb8] sm:$0xff] %vm3429, %v3388
      %3454 = vst.msk [vmem:[%s202 + $0xc0] sm:$0xff] %vm3429, %v3389
      %3455 = vst.msk [vmem:[%s202 + $0xc8] sm:$0xff] %vm3429, %v3390
      %3456 = vst.msk [vmem:[%s202 + $0xd0] sm:$0xff] %vm3429, %v3391
      %3457 = vst.msk [vmem:[%s202 + $0xd8] sm:$0xff] %vm3429, %v3392
      %3458 = vst.msk [vmem:[%s202 + $0xe0] sm:$0xff] %vm3429, %v3393
      %3459 = vst.msk [vmem:[%s202 + $0xe8] sm:$0xff] %vm3429, %v3394
      %3460 = vst.msk [vmem:[%s202 + $0xf0] sm:$0xff] %vm3429, %v3395
      %3461 = vst.msk [vmem:[%s202 + $0xf8] sm:$0xff] %vm3429, %v3396
      %3462 = vst.msk [vmem:[%s202 + $0x100] sm:$0xff] %vm3429, %v3397
      %3463 = vst.msk [vmem:[%s202 + $0x108] sm:$0xff] %vm3429, %v3398
      %3464 = vst.msk [vmem:[%s202 + $0x110] sm:$0xff] %vm3429, %v3399
      %3465 = vst.msk [vmem:[%s202 + $0x118] sm:$0xff] %vm3429, %v3400
      %3466 = vst.msk [vmem:[%s202 + $0x120] sm:$0xff] %vm3429, %v3401
      %3467 = vst.msk [vmem:[%s202 + $0x128] sm:$0xff] %vm3429, %v3402
      %3468 = vst.msk [vmem:[%s202 + $0x130] sm:$0xff] %vm3429, %v3403
      %3469 = vst.msk [vmem:[%s202 + $0x138] sm:$0xff] %vm3429, %v3404
      %3470 = vst.msk [vmem:[%s202 + $0x140] sm:$0xff] %vm3429, %v3405
      %3471 = vst.msk [vmem:[%s202 + $0x148] sm:$0xff] %vm3429, %v3406
      %3472 = vst.msk [vmem:[%s202 + $0x150] sm:$0xff] %vm3429, %v3407
      %3473 = vst.msk [vmem:[%s202 + $0x158] sm:$0xff] %vm3429, %v3408
      %3474 = vst.msk [vmem:[%s202 + $0x160] sm:$0xff] %vm3429, %v3409
      %3475 = vst.msk [vmem:[%s202 + $0x168] sm:$0xff] %vm3429, %v3410
      %3476 = vst.msk [vmem:[%s202 + $0x170] sm:$0xff] %vm3429, %v3411
      %3477 = vst.msk [vmem:[%s202 + $0x178] sm:$0xff] %vm3429, %v3412
      %3478 = vst.msk [vmem:[%s202 + $0x180] sm:$0xff] %vm3429, %v3413
      %3479 = vst.msk [vmem:[%s202 + $0x188] sm:$0xff] %vm3429, %v3414
      %3480 = vst.msk [vmem:[%s202 + $0x190] sm:$0xff] %vm3429, %v3415
      %3481 = vst.msk [vmem:[%s202 + $0x198] sm:$0xff] %vm3429, %v3416
      %3482 = vst.msk [vmem:[%s202 + $0x1a0] sm:$0xff] %vm3429, %v3417
      %3483 = vst.msk [vmem:[%s202 + $0x1a8] sm:$0xff] %vm3429, %v3418
      %3484 = vst.msk [vmem:[%s202 + $0x1b0] sm:$0xff] %vm3429, %v3419
      %3485 = vst.msk [vmem:[%s202 + $0x1b8] sm:$0xff] %vm3429, %v3420
      %3486 = vst.msk [vmem:[%s202 + $0x1c0] sm:$0xff] %vm3429, %v3421
      %3487 = vst.msk [vmem:[%s202 + $0x1c8] sm:$0xff] %vm3429, %v3422
      %3488 = vst.msk [vmem:[%s202 + $0x1d0] sm:$0xff] %vm3429, %v3423
      %3489 = vst.msk [vmem:[%s202 + $0x1d8] sm:$0xff] %vm3429, %v3424
      %3490 = vst.msk [vmem:[%s202 + $0x1e0] sm:$0xff] %vm3429, %v3425
      %3491 = vst.msk [vmem:[%s202 + $0x1e8] sm:$0xff] %vm3429, %v3426
      %3492 = vst.msk [vmem:[%s202 + $0x1f0] sm:$0xff] %vm3429, %v3427
      %3493 = vst.msk [vmem:[%s202 + $0x1f8] sm:$0xff] %vm3429, %v3428
      %s3494 = smul.u32 64, %s15
      %p3495 = scmp.lt.s32.totalorder %s3494, 511
      %s3496 = scalar_select %p3495, %s3494, 511
      %s3497 = smul.addr %s3496, 8
      %s3498 = scalar_lea.vmem %s4, %s3497
      // Predicated region
      $region37: #{_lambda_.11} parent=35 // pred_check
        %p3499 = pneg %p122
      $region38: #{_lambda_.11} parent=35 // pred_check_branch
        %3501 = sbr.rel (%p3499) target = $region40
      $region39: #{_lambda_.11} parent=35 // pred_region
        %s3502 = smul.u32 64, %s15
      $region40: #{_lambda_.11} parent=35 // pred_fallthru
        _
    $region36: #{_lambda_.11} parent=5 // pred_fallthru
      _
    %p3503 = scmp.le.s32.totalorder 2, %s10
    // Predicated region
    $region41: #{_lambda_.11} parent=5 // pred_check
      %p3504 = pneg %p3503
    $region42: #{_lambda_.11} parent=5 // pred_check_branch
      %3506 = sbr.rel (%p3504) target = $region44
    $region43: #{_lambda_.11} parent=5 // pred_region
      %s3507 = ssub.s32 %s10, 2
      // Predicated region
      $region45: #{_lambda_.11} parent=43 // pred_check
        %p3508 = pneg %p128
      $region46: #{_lambda_.11} parent=43 // pred_check_branch
        %3510 = sbr.rel (%p3508) target = $region48
      $region47: #{_lambda_.11} parent=43 // pred_region
        %s3511 = smul.u32 64, %s16
        %p3512 = scmp.lt.s32.totalorder %s3511, 511
        %s3513 = scalar_select %p3512, %s3511, 511
        %s3514 = smul.addr %s3513, 8
        %s3515 = scalar_lea.vmem %s4, %s3514
      $region48: #{_lambda_.11} parent=43 // pred_fallthru
        _
    $region44: #{_lambda_.11} parent=5 // pred_fallthru
      _
  $region6: #{_lambda_.11} parent=0 // loop_footer
    %s14 = sadd.s32 1, %s10
  $region7: #{_lambda_.11} parent=0 // loop_footer_branch
    %9 = sbr.rel target = $region3
  $region8: #{_lambda_.11} parent=0 // loop_exit
    _

</llo_original>
